<compile_context>
chip_gen: v7x
topology: tpu7x:2x2x1
jax: 0.10.0
libtpu: 0.0.40
codegen_flags: <defaults>
</compile_context>

<pallas_src>
import functools

import jax
import jax.numpy as jnp
from jax.experimental import pallas as pl
from jax.experimental.pallas import tpu as pltpu

C_IN_PAD = 8      # input image channels padded 3 -> 8 (im2col K = 72)
C_PAD = 128       # conv-stage output channels padded to one full lane tile
BN_EPS = 1e-5


# ------------------------------ Pallas kernels ------------------------------

def _conv_stage_kernel(p_ref, w_ref, b_ref, g_ref, bt_ref, o_ref, *, eps):
    """Fused encoder stage: patches @ W + bias -> ReLU -> BatchNorm2d (training stats).

    p_ref: (M, K) bf16 im2col patches, w_ref: (K, 128) bf16, b/g/bt: (1, 128) f32,
    o_ref: (M, 128) bf16 (lane-dense store)."""
    acc = jnp.dot(p_ref[...], w_ref[...], preferred_element_type=jnp.float32)
    acc = jnp.maximum(acc + b_ref[...], 0.0)                   # bias + ReLU
    m = acc.shape[0]
    s1 = jnp.sum(acc, axis=0, keepdims=True)                   # one-pass sum / sumsq
    s2 = jnp.sum(acc * acc, axis=0, keepdims=True)
    mean = s1 * (1.0 / m)
    var = s2 * (1.0 / m) - mean * mean                         # biased var (torch training BN)
    y = (acc - mean) * (jax.lax.rsqrt(var + eps) * g_ref[...]) + bt_ref[...]
    o_ref[...] = y.astype(o_ref.dtype)


def _mlp_decoder_kernel(x_ref, w1_ref, b1_ref, g4_ref, be4_ref,
                        w2_ref, b2_ref, w3_ref, b3_ref, g5_ref, be5_ref,
                        w4_ref, b4_ref, wd_ref, bd_ref,
                        enc_ref, dec_ref, *, eps):
    """Whole FC stack + composed decoder2 in one kernel.  All weights resident in VMEM."""

    def bn(h, g, b):
        m = h.shape[0]
        mean = jnp.sum(h, axis=0, keepdims=True) * (1.0 / m)
        var = jnp.sum(h * h, axis=0, keepdims=True) * (1.0 / m) - mean * mean
        return (h - mean) * (jax.lax.rsqrt(var + eps) * g) + b

    def mm(a_f32, w_ref_):          # bf16 matmul operands, f32 accumulation
        return jnp.dot(a_f32.astype(jnp.bfloat16), w_ref_[...],
                       preferred_element_type=jnp.float32)

    # encoder2: Linear -> ReLU -> BatchNorm1d -> Linear
    h1 = jnp.dot(x_ref[...], w1_ref[...],
                 preferred_element_type=jnp.float32) + b1_ref[...]
    h1 = bn(jnp.maximum(h1, 0.0), g4_ref[...], be4_ref[...])
    enc = mm(h1, w2_ref) + b2_ref[...]
    enc_ref[...] = enc.astype(enc_ref.dtype)

    # decoder1: Linear -> BatchNorm1d -> ReLU -> Linear
    h3 = mm(enc, w3_ref) + b3_ref[...]
    h3 = jnp.maximum(bn(h3, g5_ref[...], be5_ref[...]), 0.0)
    d = mm(h3, w4_ref) + b4_ref[...]                           # (B, 512), NCHW flatten order

    # decoder2: three ConvTranspose(k=2, s=2) composed into one per-pixel affine map,
    # applied as a single block-diagonal matmul; tanh fused.  Output is lane-dense (B, 3072).
    dec = mm(d, wd_ref) + bd_ref[...]
    dec_ref[...] = jnp.tanh(dec).astype(dec_ref.dtype)


# ------------------------------ pallas_call wrappers -------------------------

def _fb(shape):
    """Full-array single-block BlockSpec (grid=(1,))."""
    nd = len(shape)
    return pl.BlockSpec(shape, lambda i, _nd=nd: (0,) * _nd)


def conv_bn_relu_stage(x_nhwc, stage):
    """x_nhwc: (B, H, W, Cp) bf16, channel-padded.  Returns (B*Ho*Wo, 128) bf16."""
    w, b, g, bt = stage
    B, H, W, C = x_nhwc.shape
    Ho, Wo = H // 2, W // 2
    # im2col for Conv2d(k=3, s=2, p=1): one small XLA fusion (pad + 9 strided slices).
    xp = jnp.pad(x_nhwc, ((0, 0), (1, 1), (1, 1), (0, 0)))
    cols = [xp[:, ky:ky + 2 * Ho:2, kx:kx + 2 * Wo:2, :]
            for ky in range(3) for kx in range(3)]
    patches = jnp.concatenate(cols, axis=-1).reshape(B * Ho * Wo, 9 * C)

    M, K = patches.shape
    N = w.shape[1]
    kernel = functools.partial(_conv_stage_kernel, eps=BN_EPS)
    return pl.pallas_call(
        kernel,
        out_shape=jax.ShapeDtypeStruct((M, N), jnp.bfloat16),
        grid=(1,),
        in_specs=[_fb((M, K)), _fb((K, N)), _fb((1, N)), _fb((1, N)), _fb((1, N))],
        out_specs=_fb((M, N)),
        compiler_params=pltpu.CompilerParams(dimension_semantics=("arbitrary",)),
    )(patches, w, b, g, bt)


def mlp_decoder(x2d, p):
    """x2d: (B, 16*128) bf16.  Returns encoded (B, dim) f32 and dec (B, 3072) f32."""
    B = x2d.shape[0]
    dim = p["fc2_w"].shape[1]
    n_dec = p["dec_w"].shape[1]
    args = (x2d, p["fc1_w"], p["fc1_b"], p["bn4_g"], p["bn4_b"],
            p["fc2_w"], p["fc2_b"], p["fc3_w"], p["fc3_b"],
            p["bn5_g"], p["bn5_b"], p["fc4_w"], p["fc4_b"],
            p["dec_w"], p["dec_b"])
    kernel = functools.partial(_mlp_decoder_kernel, eps=BN_EPS)
    return pl.pallas_call(
        kernel,
        out_shape=(jax.ShapeDtypeStruct((B, dim), jnp.float32),
                   jax.ShapeDtypeStruct((B, n_dec), jnp.float32)),
        grid=(1,),
        in_specs=[_fb(a.shape) for a in args],
        out_specs=(_fb((B, dim)), _fb((B, n_dec))),
        compiler_params=pltpu.CompilerParams(dimension_semantics=("arbitrary",)),
    )(*args)


# ------------------------------ model forward --------------------------------

def autoencoder_forward(prep, x_nchw):
    B = x_nchw.shape[0]
    # NCHW -> NHWC only at the edge; pad image channels 3 -> 8; bf16 matmul operands.
    x = jnp.transpose(x_nchw, (0, 2, 3, 1)).astype(jnp.bfloat16)
    x = jnp.pad(x, ((0, 0), (0, 0), (0, 0), (0, C_IN_PAD - x.shape[-1])))

    # encoder1: three fused (conv + bias + ReLU + BN) stages; all stores are (*, 128).
    h = conv_bn_relu_stage(x, prep["c1"])                               # (B*16*16, 128)
    h = conv_bn_relu_stage(h.reshape(B, 16, 16, C_PAD), prep["c2"])     # (B*8*8, 128)
    h = conv_bn_relu_stage(h.reshape(B, 8, 8, C_PAD), prep["c3"])       # (B*4*4, 128)

    # encoder2 + decoder1 + decoder2 in ONE fused kernel.  The PyTorch .view(-1, 4*4*32)
    # NCHW flatten is folded into fc1's weight rows, so this reshape is free/contiguous.
    enc_in = h.reshape(B, 16 * C_PAD)
    encoded, dec = mlp_decoder(enc_in, prep)

    # dec columns are (pixel q=h*4+w, dy, dx, channel); one tiny edge transpose to NCHW.
    decoded = dec.reshape(B, 4, 4, 8, 8, 3)
    decoded = jnp.transpose(decoded, (0, 5, 1, 3, 2, 4)).reshape(B, 3, 32, 32)
    return encoded, decoded


# --------------------------- one-time weight preparation ----------------------

def prepare_params(p):
    """Fold layout changes / padding / layer composition into the weights (outside jit)."""
    f32, bf16 = jnp.float32, jnp.bfloat16

    def conv_stage(w_oihw, bias, gamma, beta, cin_p):
        cout, cin = w_oihw.shape[0], w_oihw.shape[1]
        w = jnp.transpose(w_oihw, (2, 3, 1, 0))                          # (ky, kx, ci, co)
        w = jnp.pad(w, ((0, 0), (0, 0), (0, cin_p - cin), (0, C_PAD - cout)))
        w = w.reshape(9 * cin_p, C_PAD).astype(bf16)
        b = jnp.pad(bias, (0, C_PAD - cout)).reshape(1, C_PAD).astype(f32)
        g = jnp.pad(gamma, (0, C_PAD - cout), constant_values=1.0).reshape(1, C_PAD).astype(f32)
        bt = jnp.pad(beta, (0, C_PAD - cout)).reshape(1, C_PAD).astype(f32)
        return (w, b, g, bt)   # padded channels stay exactly 0 through bias/ReLU/BN

    prep = {
        "c1": conv_stage(p["c1_w"], p["c1_b"], p["bn1_g"], p["bn1_b"], C_IN_PAD),
        "c2": conv_stage(p["c2_w"], p["c2_b"], p["bn2_g"], p["bn2_b"], C_PAD),
        "c3": conv_stage(p["c3_w"], p["c3_b"], p["bn3_g"], p["bn3_b"], C_PAD),
    }

    # fc1: fold the NCHW .view(-1, 512) flatten (row index c*16 + h*4 + w) into the weight
    # rows so the kernel consumes the ((h*4+w), padded-c) activation layout directly.
    w1 = p["fc1_w"].reshape(32, 16, 256)             # (c, hw, out)
    w1 = jnp.transpose(w1, (1, 0, 2))                # (hw, c, out)
    w1 = jnp.pad(w1, ((0, 0), (0, C_PAD - 32), (0, 0))).reshape(16 * C_PAD, 256)
    prep["fc1_w"] = w1.astype(bf16)
    prep["fc1_b"] = p["fc1_b"].reshape(1, -1).astype(f32)
    prep["bn4_g"] = p["bn4_g"].reshape(1, -1).astype(f32)
    prep["bn4_b"] = p["bn4_b"].reshape(1, -1).astype(f32)
    prep["fc2_w"] = p["fc2_w"].astype(bf16)
    prep["fc2_b"] = p["fc2_b"].reshape(1, -1).astype(f32)
    prep["fc3_w"] = p["fc3_w"].astype(bf16)
    prep["fc3_b"] = p["fc3_b"].reshape(1, -1).astype(f32)
    prep["bn5_g"] = p["bn5_g"].reshape(1, -1).astype(f32)
    prep["bn5_b"] = p["bn5_b"].reshape(1, -1).astype(f32)
    prep["fc4_w"] = p["fc4_w"].astype(bf16)
    prep["fc4_b"] = p["fc4_b"].reshape(1, -1).astype(f32)

    # decoder2: ConvTranspose(32->16) -> (16->8) -> (8->3), all k=2, s=2 (non-overlapping,
    # no nonlinearity in between) => compose exactly into one per-pixel affine map
    # (32,) -> (8, 8, 3), then expand to a block-diagonal (512, 3072) matrix acting on the
    # NCHW-flattened fc4 output; columns ordered (pixel q=h*4+w, dy, dx, cout).
    w1d, b1d = p["d1_w"], p["d1_b"]
    w2d, b2d = p["d2_w"], p["d2_b"]
    w3d, b3d = p["d3_w"], p["d3_b"]
    c0, c3 = w1d.shape[0], w3d.shape[1]
    wc = jnp.einsum("pqad,qrbe,rscf->pabcdefs", w1d, w2d, w3d)   # (c0, a1,a2,a3, b1,b2,b3, c3)
    wc = wc.reshape(c0, 8, 8, c3)                                # [cin, dy, dx, cout]
    t3 = jnp.einsum("q,qrbe,rscf->bcefs", b1d, w2d, w3d)         # (a2, a3, b2, b3, cout)
    t2 = jnp.einsum("r,rscf->cfs", b2d, w3d)                     # (a3, b3, cout)
    bc = b3d[None, None, None, None, :] + t2[None, :, None, :, :] + t3
    bc = jnp.broadcast_to(bc[None, :, :, None, :, :, :], (2, 2, 2, 2, 2, 2, c3))
    bc = bc.reshape(8, 8, c3)                                    # [dy, dx, cout]
    eye = jnp.eye(16, dtype=wc.dtype)
    wbig = jnp.einsum("pq,cm->cpqm", eye, wc.reshape(c0, 8 * 8 * c3))
    prep["dec_w"] = wbig.reshape(c0 * 16, 16 * 8 * 8 * c3).astype(bf16)          # (512, 3072)
    prep["dec_b"] = jnp.tile(bc.reshape(8 * 8 * c3), 16).reshape(1, -1).astype(f32)
    return prep


# --------------------------- parameter construction ---------------------------

def init_params(key, dim):
    ks = jax.random.split(key, 20)

    def w(k, shape, scale=0.1):
        return scale * jax.random.normal(k, shape, dtype=jnp.float32)

    p = {}
    # conv weights in PyTorch OIHW layout; linear weights stored as (in, out)
    p["c1_w"] = w(ks[0], (8, 3, 3, 3));    p["c1_b"] = w(ks[1], (8,))
    p["c2_w"] = w(ks[2], (16, 8, 3, 3));   p["c2_b"] = w(ks[3], (16,))
    p["c3_w"] = w(ks[4], (32, 16, 3, 3));  p["c3_b"] = w(ks[5], (32,))
    p["bn1_g"] = jnp.ones((8,), jnp.float32);   p["bn1_b"] = jnp.zeros((8,), jnp.float32)
    p["bn2_g"] = jnp.ones((16,), jnp.float32);  p["bn2_b"] = jnp.zeros((16,), jnp.float32)
    p["bn3_g"] = jnp.ones((32,), jnp.float32);  p["bn3_b"] = jnp.zeros((32,), jnp.float32)
    p["fc1_w"] = w(ks[6], (512, 256));     p["fc1_b"] = w(ks[7], (256,))
    p["bn4_g"] = jnp.ones((256,), jnp.float32); p["bn4_b"] = jnp.zeros((256,), jnp.float32)
    p["fc2_w"] = w(ks[8], (256, dim));     p["fc2_b"] = w(ks[9], (dim,))
    p["fc3_w"] = w(ks[10], (dim, 256));    p["fc3_b"] = w(ks[11], (256,))
    p["bn5_g"] = jnp.ones((256,), jnp.float32); p["bn5_b"] = jnp.zeros((256,), jnp.float32)
    p["fc4_w"] = w(ks[12], (256, 512));    p["fc4_b"] = w(ks[13], (512,))
    # ConvTranspose weights in PyTorch (Cin, Cout, kH, kW) layout
    p["d1_w"] = w(ks[14], (32, 16, 2, 2)); p["d1_b"] = w(ks[15], (16,))
    p["d2_w"] = w(ks[16], (16, 8, 2, 2));  p["d2_b"] = w(ks[17], (8,))
    p["d3_w"] = w(ks[18], (8, 3, 2, 2));   p["d3_b"] = w(ks[19], (3,))
    return p


# ----------------------------------- main -------------------------------------

if __name__ == "__main__":
    dim = 32
    key = jax.random.PRNGKey(0)
    kp, kx = jax.random.split(key)
    params = init_params(kp, dim)
    prep = prepare_params(params)          # one-time weight re-layout (outside hot path)

    # 32x32 input is implied by the 4*4*32 flatten after three stride-2 convs.
    x = jax.random.normal(kx, (2, 3, 32, 32), dtype=jnp.float32)

    fwd = jax.jit(autoencoder_forward)
    encoded, decoded = fwd(prep, x)
    jax.block_until_ready((encoded, decoded))

    assert encoded.shape == (2, dim)
    assert decoded.shape == (2, 3, 32, 32)
    assert bool(jnp.all(jnp.isfinite(encoded))) and bool(jnp.all(jnp.isfinite(decoded)))
    print("KERNEL_OK")
</pallas_src>

<mosaic_0001>
module attributes {stable_mosaic.version = 11 : i64} {
  func.func @_conv_stage_kernel(%arg0: i32, %arg1: memref<512x72xbf16, #tpu.memory_space<vmem>>, %arg2: memref<72x128xbf16, #tpu.memory_space<vmem>>, %arg3: memref<1x128xf32, #tpu.memory_space<vmem>>, %arg4: memref<1x128xf32, #tpu.memory_space<vmem>>, %arg5: memref<1x128xf32, #tpu.memory_space<vmem>>, %arg6: memref<512x128xbf16, #tpu.memory_space<vmem>>) attributes {dimension_semantics = [#tpu.dimension_semantics<arbitrary>], iteration_bounds = array<i64: 1>, scalar_prefetch = 0 : i64, scratch_operands = 0 : i64, tpu.core_type = #tpu.core_type<tc>, window_params = [{pipeline_mode = #tpu.pipeline_mode<synchronous>, transform_indices = @transform_0, window_bounds = array<i64: 512, 72>}, {pipeline_mode = #tpu.pipeline_mode<synchronous>, transform_indices = @transform_1, window_bounds = array<i64: 72, 128>}, {pipeline_mode = #tpu.pipeline_mode<synchronous>, transform_indices = @transform_2, window_bounds = array<i64: 1, 128>}, {pipeline_mode = #tpu.pipeline_mode<synchronous>, transform_indices = @transform_3, window_bounds = array<i64: 1, 128>}, {pipeline_mode = #tpu.pipeline_mode<synchronous>, transform_indices = @transform_4, window_bounds = array<i64: 1, 128>}, {pipeline_mode = #tpu.pipeline_mode<synchronous>, transform_indices = @transform_5, window_bounds = array<i64: 512, 128>}]} {
    %c0 = arith.constant 0 : index
    %c0_0 = arith.constant 0 : index
    %0 = vector.load %arg1[%c0, %c0_0] : memref<512x72xbf16, #tpu.memory_space<vmem>>, vector<512x72xbf16>
    %c0_1 = arith.constant 0 : index
    %c0_2 = arith.constant 0 : index
    %1 = vector.load %arg2[%c0_1, %c0_2] : memref<72x128xbf16, #tpu.memory_space<vmem>>, vector<72x128xbf16>
    %cst = arith.constant dense<0.000000e+00> : vector<512x128xf32>
    %2 = tpu.matmul %0, %1, %cst {dimension_numbers = #tpu.dot_dimension_numbers<[1], [0], [0], [1], [0, 0, 1, 1], [], []>} : vector<512x72xbf16>, vector<72x128xbf16>, vector<512x128xf32> -> vector<512x128xf32>
    %c0_3 = arith.constant 0 : index
    %c0_4 = arith.constant 0 : index
    %3 = vector.load %arg3[%c0_3, %c0_4] : memref<1x128xf32, #tpu.memory_space<vmem>>, vector<1x128xf32>
    %4 = vector.broadcast %3 : vector<1x128xf32> to vector<512x128xf32>
    %5 = arith.addf %2, %4 : vector<512x128xf32>
    %cst_5 = arith.constant 0.000000e+00 : f32
    %6 = vector.broadcast %cst_5 : f32 to vector<512x128xf32>
    %7 = arith.maximumf %5, %6 : vector<512x128xf32>
    %cst_6 = arith.constant dense<0.000000e+00> : vector<128xf32>
    %8 = vector.multi_reduction <add>, %7, %cst_6 [0] : vector<512x128xf32> to vector<128xf32>
    %9 = vector.shape_cast %8 : vector<128xf32> to vector<1x128xf32>
    %10 = arith.mulf %7, %7 : vector<512x128xf32>
    %cst_7 = arith.constant dense<0.000000e+00> : vector<128xf32>
    %11 = vector.multi_reduction <add>, %10, %cst_7 [0] : vector<512x128xf32> to vector<128xf32>
    %12 = vector.shape_cast %11 : vector<128xf32> to vector<1x128xf32>
    %cst_8 = arith.constant 0.001953125 : f32
    %13 = vector.broadcast %cst_8 : f32 to vector<1x128xf32>
    %14 = arith.mulf %9, %13 : vector<1x128xf32>
    %cst_9 = arith.constant 0.001953125 : f32
    %15 = vector.broadcast %cst_9 : f32 to vector<1x128xf32>
    %16 = arith.mulf %12, %15 : vector<1x128xf32>
    %17 = arith.mulf %14, %14 : vector<1x128xf32>
    %18 = arith.subf %16, %17 : vector<1x128xf32>
    %19 = vector.broadcast %14 : vector<1x128xf32> to vector<512x128xf32>
    %20 = arith.subf %7, %19 : vector<512x128xf32>
    %cst_10 = arith.constant 9.99999974E-6 : f32
    %21 = vector.broadcast %cst_10 : f32 to vector<1x128xf32>
    %22 = arith.addf %18, %21 : vector<1x128xf32>
    %23 = math.rsqrt %22 : vector<1x128xf32>
    %c0_11 = arith.constant 0 : index
    %c0_12 = arith.constant 0 : index
    %24 = vector.load %arg4[%c0_11, %c0_12] : memref<1x128xf32, #tpu.memory_space<vmem>>, vector<1x128xf32>
    %25 = arith.mulf %23, %24 : vector<1x128xf32>
    %26 = vector.broadcast %25 : vector<1x128xf32> to vector<512x128xf32>
    %27 = arith.mulf %20, %26 : vector<512x128xf32>
    %c0_13 = arith.constant 0 : index
    %c0_14 = arith.constant 0 : index
    %28 = vector.load %arg5[%c0_13, %c0_14] : memref<1x128xf32, #tpu.memory_space<vmem>>, vector<1x128xf32>
    %29 = vector.broadcast %28 : vector<1x128xf32> to vector<512x128xf32>
    %30 = arith.addf %27, %29 : vector<512x128xf32>
    %31 = arith.truncf %30 : vector<512x128xf32> to vector<512x128xbf16>
    %c0_15 = arith.constant 0 : index
    %c0_16 = arith.constant 0 : index
    %32 = vector.load %arg6[%c0_15, %c0_16] : memref<512x128xbf16, #tpu.memory_space<vmem>>, vector<512x128xbf16>
    tpu.vector_store %arg6[%c0_15, %c0_16], %31 {strides = array<i32>} : memref<512x128xbf16, #tpu.memory_space<vmem>>, vector<512x128xbf16>,
    return
  }
  func.func @transform_0(%arg0: i32) -> (i32, i32) {
    %c0_i32 = arith.constant 0 : i32
    %c0_i32_0 = arith.constant 0 : i32
    %c0_i32_1 = arith.constant 0 : i32
    return %c0_i32, %c0_i32_0 : i32, i32
  }
  func.func @transform_1(%arg0: i32) -> (i32, i32) {
    %c0_i32 = arith.constant 0 : i32
    %c0_i32_0 = arith.constant 0 : i32
    %c0_i32_1 = arith.constant 0 : i32
    return %c0_i32, %c0_i32_0 : i32, i32
  }
  func.func @transform_2(%arg0: i32) -> (i32, i32) {
    %c0_i32 = arith.constant 0 : i32
    %c0_i32_0 = arith.constant 0 : i32
    %c0_i32_1 = arith.constant 0 : i32
    return %c0_i32, %c0_i32_0 : i32, i32
  }
  func.func @transform_3(%arg0: i32) -> (i32, i32) {
    %c0_i32 = arith.constant 0 : i32
    %c0_i32_0 = arith.constant 0 : i32
    %c0_i32_1 = arith.constant 0 : i32
    return %c0_i32, %c0_i32_0 : i32, i32
  }
  func.func @transform_4(%arg0: i32) -> (i32, i32) {
    %c0_i32 = arith.constant 0 : i32
    %c0_i32_0 = arith.constant 0 : i32
    %c0_i32_1 = arith.constant 0 : i32
    return %c0_i32, %c0_i32_0 : i32, i32
  }
  func.func @transform_5(%arg0: i32) -> (i32, i32) {
    %c0_i32 = arith.constant 0 : i32
    %c0_i32_0 = arith.constant 0 : i32
    %c0_i32_1 = arith.constant 0 : i32
    return %c0_i32, %c0_i32_0 : i32, i32
  }
}

module attributes {stable_mosaic.version = 11 : i64} {
  func.func @_conv_stage_kernel(%arg0: i32, %arg1: memref<128x1152xbf16, #tpu.memory_space<vmem>>, %arg2: memref<1152x128xbf16, #tpu.memory_space<vmem>>, %arg3: memref<1x128xf32, #tpu.memory_space<vmem>>, %arg4: memref<1x128xf32, #tpu.memory_space<vmem>>, %arg5: memref<1x128xf32, #tpu.memory_space<vmem>>, %arg6: memref<128x128xbf16, #tpu.memory_space<vmem>>) attributes {dimension_semantics = [#tpu.dimension_semantics<arbitrary>], iteration_bounds = array<i64: 1>, scalar_prefetch = 0 : i64, scratch_operands = 0 : i64, tpu.core_type = #tpu.core_type<tc>, window_params = [{pipeline_mode = #tpu.pipeline_mode<synchronous>, transform_indices = @transform_0, window_bounds = array<i64: 128, 1152>}, {pipeline_mode = #tpu.pipeline_mode<synchronous>, transform_indices = @transform_1, window_bounds = array<i64: 1152, 128>}, {pipeline_mode = #tpu.pipeline_mode<synchronous>, transform_indices = @transform_2, window_bounds = array<i64: 1, 128>}, {pipeline_mode = #tpu.pipeline_mode<synchronous>, transform_indices = @transform_3, window_bounds = array<i64: 1, 128>}, {pipeline_mode = #tpu.pipeline_mode<synchronous>, transform_indices = @transform_4, window_bounds = array<i64: 1, 128>}, {pipeline_mode = #tpu.pipeline_mode<synchronous>, transform_indices = @transform_5, window_bounds = array<i64: 128, 128>}]} {
    %c0 = arith.constant 0 : index
    %c0_0 = arith.constant 0 : index
    %0 = vector.load %arg1[%c0, %c0_0] : memref<128x1152xbf16, #tpu.memory_space<vmem>>, vector<128x1152xbf16>
    %c0_1 = arith.constant 0 : index
    %c0_2 = arith.constant 0 : index
    %1 = vector.load %arg2[%c0_1, %c0_2] : memref<1152x128xbf16, #tpu.memory_space<vmem>>, vector<1152x128xbf16>
    %cst = arith.constant dense<0.000000e+00> : vector<128x128xf32>
    %2 = tpu.matmul %0, %1, %cst {dimension_numbers = #tpu.dot_dimension_numbers<[1], [0], [0], [1], [0, 0, 1, 1], [], []>} : vector<128x1152xbf16>, vector<1152x128xbf16>, vector<128x128xf32> -> vector<128x128xf32>
    %c0_3 = arith.constant 0 : index
    %c0_4 = arith.constant 0 : index
    %3 = vector.load %arg3[%c0_3, %c0_4] : memref<1x128xf32, #tpu.memory_space<vmem>>, vector<1x128xf32>
    %4 = vector.broadcast %3 : vector<1x128xf32> to vector<128x128xf32>
    %5 = arith.addf %2, %4 : vector<128x128xf32>
    %cst_5 = arith.constant 0.000000e+00 : f32
    %6 = vector.broadcast %cst_5 : f32 to vector<128x128xf32>
    %7 = arith.maximumf %5, %6 : vector<128x128xf32>
    %cst_6 = arith.constant dense<0.000000e+00> : vector<128xf32>
    %8 = vector.multi_reduction <add>, %7, %cst_6 [0] : vector<128x128xf32> to vector<128xf32>
    %9 = vector.shape_cast %8 : vector<128xf32> to vector<1x128xf32>
    %10 = arith.mulf %7, %7 : vector<128x128xf32>
    %cst_7 = arith.constant dense<0.000000e+00> : vector<128xf32>
    %11 = vector.multi_reduction <add>, %10, %cst_7 [0] : vector<128x128xf32> to vector<128xf32>
    %12 = vector.shape_cast %11 : vector<128xf32> to vector<1x128xf32>
    %cst_8 = arith.constant 7.812500e-03 : f32
    %13 = vector.broadcast %cst_8 : f32 to vector<1x128xf32>
    %14 = arith.mulf %9, %13 : vector<1x128xf32>
    %cst_9 = arith.constant 7.812500e-03 : f32
    %15 = vector.broadcast %cst_9 : f32 to vector<1x128xf32>
    %16 = arith.mulf %12, %15 : vector<1x128xf32>
    %17 = arith.mulf %14, %14 : vector<1x128xf32>
    %18 = arith.subf %16, %17 : vector<1x128xf32>
    %19 = vector.broadcast %14 : vector<1x128xf32> to vector<128x128xf32>
    %20 = arith.subf %7, %19 : vector<128x128xf32>
    %cst_10 = arith.constant 9.99999974E-6 : f32
    %21 = vector.broadcast %cst_10 : f32 to vector<1x128xf32>
    %22 = arith.addf %18, %21 : vector<1x128xf32>
    %23 = math.rsqrt %22 : vector<1x128xf32>
    %c0_11 = arith.constant 0 : index
    %c0_12 = arith.constant 0 : index
    %24 = vector.load %arg4[%c0_11, %c0_12] : memref<1x128xf32, #tpu.memory_space<vmem>>, vector<1x128xf32>
    %25 = arith.mulf %23, %24 : vector<1x128xf32>
    %26 = vector.broadcast %25 : vector<1x128xf32> to vector<128x128xf32>
    %27 = arith.mulf %20, %26 : vector<128x128xf32>
    %c0_13 = arith.constant 0 : index
    %c0_14 = arith.constant 0 : index
    %28 = vector.load %arg5[%c0_13, %c0_14] : memref<1x128xf32, #tpu.memory_space<vmem>>, vector<1x128xf32>
    %29 = vector.broadcast %28 : vector<1x128xf32> to vector<128x128xf32>
    %30 = arith.addf %27, %29 : vector<128x128xf32>
    %31 = arith.truncf %30 : vector<128x128xf32> to vector<128x128xbf16>
    %c0_15 = arith.constant 0 : index
    %c0_16 = arith.constant 0 : index
    %32 = vector.load %arg6[%c0_15, %c0_16] : memref<128x128xbf16, #tpu.memory_space<vmem>>, vector<128x128xbf16>
    tpu.vector_store %arg6[%c0_15, %c0_16], %31 {strides = array<i32>} : memref<128x128xbf16, #tpu.memory_space<vmem>>, vector<128x128xbf16>,
    return
  }
  func.func @transform_0(%arg0: i32) -> (i32, i32) {
    %c0_i32 = arith.constant 0 : i32
    %c0_i32_0 = arith.constant 0 : i32
    %c0_i32_1 = arith.constant 0 : i32
    return %c0_i32, %c0_i32_0 : i32, i32
  }
  func.func @transform_1(%arg0: i32) -> (i32, i32) {
    %c0_i32 = arith.constant 0 : i32
    %c0_i32_0 = arith.constant 0 : i32
    %c0_i32_1 = arith.constant 0 : i32
    return %c0_i32, %c0_i32_0 : i32, i32
  }
  func.func @transform_2(%arg0: i32) -> (i32, i32) {
    %c0_i32 = arith.constant 0 : i32
    %c0_i32_0 = arith.constant 0 : i32
    %c0_i32_1 = arith.constant 0 : i32
    return %c0_i32, %c0_i32_0 : i32, i32
  }
  func.func @transform_3(%arg0: i32) -> (i32, i32) {
    %c0_i32 = arith.constant 0 : i32
    %c0_i32_0 = arith.constant 0 : i32
    %c0_i32_1 = arith.constant 0 : i32
    return %c0_i32, %c0_i32_0 : i32, i32
  }
  func.func @transform_4(%arg0: i32) -> (i32, i32) {
    %c0_i32 = arith.constant 0 : i32
    %c0_i32_0 = arith.constant 0 : i32
    %c0_i32_1 = arith.constant 0 : i32
    return %c0_i32, %c0_i32_0 : i32, i32
  }
  func.func @transform_5(%arg0: i32) -> (i32, i32) {
    %c0_i32 = arith.constant 0 : i32
    %c0_i32_0 = arith.constant 0 : i32
    %c0_i32_1 = arith.constant 0 : i32
    return %c0_i32, %c0_i32_0 : i32, i32
  }
}

module attributes {stable_mosaic.version = 11 : i64} {
  func.func @_conv_stage_kernel(%arg0: i32, %arg1: memref<32x1152xbf16, #tpu.memory_space<vmem>>, %arg2: memref<1152x128xbf16, #tpu.memory_space<vmem>>, %arg3: memref<1x128xf32, #tpu.memory_space<vmem>>, %arg4: memref<1x128xf32, #tpu.memory_space<vmem>>, %arg5: memref<1x128xf32, #tpu.memory_space<vmem>>, %arg6: memref<32x128xbf16, #tpu.memory_space<vmem>>) attributes {dimension_semantics = [#tpu.dimension_semantics<arbitrary>], iteration_bounds = array<i64: 1>, scalar_prefetch = 0 : i64, scratch_operands = 0 : i64, tpu.core_type = #tpu.core_type<tc>, window_params = [{pipeline_mode = #tpu.pipeline_mode<synchronous>, transform_indices = @transform_0, window_bounds = array<i64: 32, 1152>}, {pipeline_mode = #tpu.pipeline_mode<synchronous>, transform_indices = @transform_1, window_bounds = array<i64: 1152, 128>}, {pipeline_mode = #tpu.pipeline_mode<synchronous>, transform_indices = @transform_2, window_bounds = array<i64: 1, 128>}, {pipeline_mode = #tpu.pipeline_mode<synchronous>, transform_indices = @transform_3, window_bounds = array<i64: 1, 128>}, {pipeline_mode = #tpu.pipeline_mode<synchronous>, transform_indices = @transform_4, window_bounds = array<i64: 1, 128>}, {pipeline_mode = #tpu.pipeline_mode<synchronous>, transform_indices = @transform_5, window_bounds = array<i64: 32, 128>}]} {
    %c0 = arith.constant 0 : index
    %c0_0 = arith.constant 0 : index
    %0 = vector.load %arg1[%c0, %c0_0] : memref<32x1152xbf16, #tpu.memory_space<vmem>>, vector<32x1152xbf16>
    %c0_1 = arith.constant 0 : index
    %c0_2 = arith.constant 0 : index
    %1 = vector.load %arg2[%c0_1, %c0_2] : memref<1152x128xbf16, #tpu.memory_space<vmem>>, vector<1152x128xbf16>
    %cst = arith.constant dense<0.000000e+00> : vector<32x128xf32>
    %2 = tpu.matmul %0, %1, %cst {dimension_numbers = #tpu.dot_dimension_numbers<[1], [0], [0], [1], [0, 0, 1, 1], [], []>} : vector<32x1152xbf16>, vector<1152x128xbf16>, vector<32x128xf32> -> vector<32x128xf32>
    %c0_3 = arith.constant 0 : index
    %c0_4 = arith.constant 0 : index
    %3 = vector.load %arg3[%c0_3, %c0_4] : memref<1x128xf32, #tpu.memory_space<vmem>>, vector<1x128xf32>
    %4 = vector.broadcast %3 : vector<1x128xf32> to vector<32x128xf32>
    %5 = arith.addf %2, %4 : vector<32x128xf32>
    %cst_5 = arith.constant 0.000000e+00 : f32
    %6 = vector.broadcast %cst_5 : f32 to vector<32x128xf32>
    %7 = arith.maximumf %5, %6 : vector<32x128xf32>
    %cst_6 = arith.constant dense<0.000000e+00> : vector<128xf32>
    %8 = vector.multi_reduction <add>, %7, %cst_6 [0] : vector<32x128xf32> to vector<128xf32>
    %9 = vector.shape_cast %8 : vector<128xf32> to vector<1x128xf32>
    %10 = arith.mulf %7, %7 : vector<32x128xf32>
    %cst_7 = arith.constant dense<0.000000e+00> : vector<128xf32>
    %11 = vector.multi_reduction <add>, %10, %cst_7 [0] : vector<32x128xf32> to vector<128xf32>
    %12 = vector.shape_cast %11 : vector<128xf32> to vector<1x128xf32>
    %cst_8 = arith.constant 3.125000e-02 : f32
    %13 = vector.broadcast %cst_8 : f32 to vector<1x128xf32>
    %14 = arith.mulf %9, %13 : vector<1x128xf32>
    %cst_9 = arith.constant 3.125000e-02 : f32
    %15 = vector.broadcast %cst_9 : f32 to vector<1x128xf32>
    %16 = arith.mulf %12, %15 : vector<1x128xf32>
    %17 = arith.mulf %14, %14 : vector<1x128xf32>
    %18 = arith.subf %16, %17 : vector<1x128xf32>
    %19 = vector.broadcast %14 : vector<1x128xf32> to vector<32x128xf32>
    %20 = arith.subf %7, %19 : vector<32x128xf32>
    %cst_10 = arith.constant 9.99999974E-6 : f32
    %21 = vector.broadcast %cst_10 : f32 to vector<1x128xf32>
    %22 = arith.addf %18, %21 : vector<1x128xf32>
    %23 = math.rsqrt %22 : vector<1x128xf32>
    %c0_11 = arith.constant 0 : index
    %c0_12 = arith.constant 0 : index
    %24 = vector.load %arg4[%c0_11, %c0_12] : memref<1x128xf32, #tpu.memory_space<vmem>>, vector<1x128xf32>
    %25 = arith.mulf %23, %24 : vector<1x128xf32>
    %26 = vector.broadcast %25 : vector<1x128xf32> to vector<32x128xf32>
    %27 = arith.mulf %20, %26 : vector<32x128xf32>
    %c0_13 = arith.constant 0 : index
    %c0_14 = arith.constant 0 : index
    %28 = vector.load %arg5[%c0_13, %c0_14] : memref<1x128xf32, #tpu.memory_space<vmem>>, vector<1x128xf32>
    %29 = vector.broadcast %28 : vector<1x128xf32> to vector<32x128xf32>
    %30 = arith.addf %27, %29 : vector<32x128xf32>
    %31 = arith.truncf %30 : vector<32x128xf32> to vector<32x128xbf16>
    %c0_15 = arith.constant 0 : index
    %c0_16 = arith.constant 0 : index
    %32 = vector.load %arg6[%c0_15, %c0_16] : memref<32x128xbf16, #tpu.memory_space<vmem>>, vector<32x128xbf16>
    tpu.vector_store %arg6[%c0_15, %c0_16], %31 {strides = array<i32>} : memref<32x128xbf16, #tpu.memory_space<vmem>>, vector<32x128xbf16>,
    return
  }
  func.func @transform_0(%arg0: i32) -> (i32, i32) {
    %c0_i32 = arith.constant 0 : i32
    %c0_i32_0 = arith.constant 0 : i32
    %c0_i32_1 = arith.constant 0 : i32
    return %c0_i32, %c0_i32_0 : i32, i32
  }
  func.func @transform_1(%arg0: i32) -> (i32, i32) {
    %c0_i32 = arith.constant 0 : i32
    %c0_i32_0 = arith.constant 0 : i32
    %c0_i32_1 = arith.constant 0 : i32
    return %c0_i32, %c0_i32_0 : i32, i32
  }
  func.func @transform_2(%arg0: i32) -> (i32, i32) {
    %c0_i32 = arith.constant 0 : i32
    %c0_i32_0 = arith.constant 0 : i32
    %c0_i32_1 = arith.constant 0 : i32
    return %c0_i32, %c0_i32_0 : i32, i32
  }
  func.func @transform_3(%arg0: i32) -> (i32, i32) {
    %c0_i32 = arith.constant 0 : i32
    %c0_i32_0 = arith.constant 0 : i32
    %c0_i32_1 = arith.constant 0 : i32
    return %c0_i32, %c0_i32_0 : i32, i32
  }
  func.func @transform_4(%arg0: i32) -> (i32, i32) {
    %c0_i32 = arith.constant 0 : i32
    %c0_i32_0 = arith.constant 0 : i32
    %c0_i32_1 = arith.constant 0 : i32
    return %c0_i32, %c0_i32_0 : i32, i32
  }
  func.func @transform_5(%arg0: i32) -> (i32, i32) {
    %c0_i32 = arith.constant 0 : i32
    %c0_i32_0 = arith.constant 0 : i32
    %c0_i32_1 = arith.constant 0 : i32
    return %c0_i32, %c0_i32_0 : i32, i32
  }
}

module attributes {stable_mosaic.version = 11 : i64} {
  func.func @_mlp_decoder_kernel(%arg0: i32, %arg1: memref<2x2048xbf16, #tpu.memory_space<vmem>>, %arg2: memref<2048x256xbf16, #tpu.memory_space<vmem>>, %arg3: memref<1x256xf32, #tpu.memory_space<vmem>>, %arg4: memref<1x256xf32, #tpu.memory_space<vmem>>, %arg5: memref<1x256xf32, #tpu.memory_space<vmem>>, %arg6: memref<256x32xbf16, #tpu.memory_space<vmem>>, %arg7: memref<1x32xf32, #tpu.memory_space<vmem>>, %arg8: memref<32x256xbf16, #tpu.memory_space<vmem>>, %arg9: memref<1x256xf32, #tpu.memory_space<vmem>>, %arg10: memref<1x256xf32, #tpu.memory_space<vmem>>, %arg11: memref<1x256xf32, #tpu.memory_space<vmem>>, %arg12: memref<256x512xbf16, #tpu.memory_space<vmem>>, %arg13: memref<1x512xf32, #tpu.memory_space<vmem>>, %arg14: memref<512x3072xbf16, #tpu.memory_space<vmem>>, %arg15: memref<1x3072xf32, #tpu.memory_space<vmem>>, %arg16: memref<2x32xf32, #tpu.memory_space<vmem>>, %arg17: memref<2x3072xf32, #tpu.memory_space<vmem>>) attributes {dimension_semantics = [#tpu.dimension_semantics<arbitrary>], iteration_bounds = array<i64: 1>, scalar_prefetch = 0 : i64, scratch_operands = 0 : i64, tpu.core_type = #tpu.core_type<tc>, window_params = [{pipeline_mode = #tpu.pipeline_mode<synchronous>, transform_indices = @transform_0, window_bounds = array<i64: 2, 2048>}, {pipeline_mode = #tpu.pipeline_mode<synchronous>, transform_indices = @transform_1, window_bounds = array<i64: 2048, 256>}, {pipeline_mode = #tpu.pipeline_mode<synchronous>, transform_indices = @transform_2, window_bounds = array<i64: 1, 256>}, {pipeline_mode = #tpu.pipeline_mode<synchronous>, transform_indices = @transform_3, window_bounds = array<i64: 1, 256>}, {pipeline_mode = #tpu.pipeline_mode<synchronous>, transform_indices = @transform_4, window_bounds = array<i64: 1, 256>}, {pipeline_mode = #tpu.pipeline_mode<synchronous>, transform_indices = @transform_5, window_bounds = array<i64: 256, 32>}, {pipeline_mode = #tpu.pipeline_mode<synchronous>, transform_indices = @transform_6, window_bounds = array<i64: 1, 32>}, {pipeline_mode = #tpu.pipeline_mode<synchronous>, transform_indices = @transform_7, window_bounds = array<i64: 32, 256>}, {pipeline_mode = #tpu.pipeline_mode<synchronous>, transform_indices = @transform_8, window_bounds = array<i64: 1, 256>}, {pipeline_mode = #tpu.pipeline_mode<synchronous>, transform_indices = @transform_9, window_bounds = array<i64: 1, 256>}, {pipeline_mode = #tpu.pipeline_mode<synchronous>, transform_indices = @transform_10, window_bounds = array<i64: 1, 256>}, {pipeline_mode = #tpu.pipeline_mode<synchronous>, transform_indices = @transform_11, window_bounds = array<i64: 256, 512>}, {pipeline_mode = #tpu.pipeline_mode<synchronous>, transform_indices = @transform_12, window_bounds = array<i64: 1, 512>}, {pipeline_mode = #tpu.pipeline_mode<synchronous>, transform_indices = @transform_13, window_bounds = array<i64: 512, 3072>}, {pipeline_mode = #tpu.pipeline_mode<synchronous>, transform_indices = @transform_14, window_bounds = array<i64: 1, 3072>}, {pipeline_mode = #tpu.pipeline_mode<synchronous>, transform_indices = @transform_15, window_bounds = array<i64: 2, 32>}, {pipeline_mode = #tpu.pipeline_mode<synchronous>, transform_indices = @transform_16, window_bounds = array<i64: 2, 3072>}]} {
    %c0 = arith.constant 0 : index
    %c0_0 = arith.constant 0 : index
    %0 = vector.load %arg1[%c0, %c0_0] : memref<2x2048xbf16, #tpu.memory_space<vmem>>, vector<2x2048xbf16>
    %c0_1 = arith.constant 0 : index
    %c0_2 = arith.constant 0 : index
    %1 = vector.load %arg2[%c0_1, %c0_2] : memref<2048x256xbf16, #tpu.memory_space<vmem>>, vector<2048x256xbf16>
    %cst = arith.constant dense<0.000000e+00> : vector<2x256xf32>
    %2 = tpu.matmul %0, %1, %cst {dimension_numbers = #tpu.dot_dimension_numbers<[1], [0], [0], [1], [0, 0, 1, 1], [], []>} : vector<2x2048xbf16>, vector<2048x256xbf16>, vector<2x256xf32> -> vector<2x256xf32>
    %c0_3 = arith.constant 0 : index
    %c0_4 = arith.constant 0 : index
    %3 = vector.load %arg3[%c0_3, %c0_4] : memref<1x256xf32, #tpu.memory_space<vmem>>, vector<1x256xf32>
    %4 = vector.broadcast %3 : vector<1x256xf32> to vector<2x256xf32>
    %5 = arith.addf %2, %4 : vector<2x256xf32>
    %cst_5 = arith.constant 0.000000e+00 : f32
    %6 = vector.broadcast %cst_5 : f32 to vector<2x256xf32>
    %7 = arith.maximumf %5, %6 : vector<2x256xf32>
    %c0_6 = arith.constant 0 : index
    %c0_7 = arith.constant 0 : index
    %8 = vector.load %arg4[%c0_6, %c0_7] : memref<1x256xf32, #tpu.memory_space<vmem>>, vector<1x256xf32>
    %c0_8 = arith.constant 0 : index
    %c0_9 = arith.constant 0 : index
    %9 = vector.load %arg5[%c0_8, %c0_9] : memref<1x256xf32, #tpu.memory_space<vmem>>, vector<1x256xf32>
    %cst_10 = arith.constant dense<0.000000e+00> : vector<256xf32>
    %10 = vector.multi_reduction <add>, %7, %cst_10 [0] : vector<2x256xf32> to vector<256xf32>
    %11 = vector.shape_cast %10 : vector<256xf32> to vector<1x256xf32>
    %cst_11 = arith.constant 5.000000e-01 : f32
    %12 = vector.broadcast %cst_11 : f32 to vector<1x256xf32>
    %13 = arith.mulf %11, %12 : vector<1x256xf32>
    %14 = arith.mulf %7, %7 : vector<2x256xf32>
    %cst_12 = arith.constant dense<0.000000e+00> : vector<256xf32>
    %15 = vector.multi_reduction <add>, %14, %cst_12 [0] : vector<2x256xf32> to vector<256xf32>
    %16 = vector.shape_cast %15 : vector<256xf32> to vector<1x256xf32>
    %cst_13 = arith.constant 5.000000e-01 : f32
    %17 = vector.broadcast %cst_13 : f32 to vector<1x256xf32>
    %18 = arith.mulf %16, %17 : vector<1x256xf32>
    %19 = arith.mulf %13, %13 : vector<1x256xf32>
    %20 = arith.subf %18, %19 : vector<1x256xf32>
    %21 = vector.broadcast %13 : vector<1x256xf32> to vector<2x256xf32>
    %22 = arith.subf %7, %21 : vector<2x256xf32>
    %cst_14 = arith.constant 9.99999974E-6 : f32
    %23 = vector.broadcast %cst_14 : f32 to vector<1x256xf32>
    %24 = arith.addf %20, %23 : vector<1x256xf32>
    %25 = math.rsqrt %24 : vector<1x256xf32>
    %26 = arith.mulf %25, %8 : vector<1x256xf32>
    %27 = vector.broadcast %26 : vector<1x256xf32> to vector<2x256xf32>
    %28 = arith.mulf %22, %27 : vector<2x256xf32>
    %29 = vector.broadcast %9 : vector<1x256xf32> to vector<2x256xf32>
    %30 = arith.addf %28, %29 : vector<2x256xf32>
    %31 = arith.truncf %30 : vector<2x256xf32> to vector<2x256xbf16>
    %c0_15 = arith.constant 0 : index
    %c0_16 = arith.constant 0 : index
    %32 = vector.load %arg6[%c0_15, %c0_16] : memref<256x32xbf16, #tpu.memory_space<vmem>>, vector<256x32xbf16>
    %cst_17 = arith.constant dense<0.000000e+00> : vector<2x32xf32>
    %33 = tpu.matmul %31, %32, %cst_17 {dimension_numbers = #tpu.dot_dimension_numbers<[1], [0], [0], [1], [0, 0, 1, 1], [], []>} : vector<2x256xbf16>, vector<256x32xbf16>, vector<2x32xf32> -> vector<2x32xf32>
    %c0_18 = arith.constant 0 : index
    %c0_19 = arith.constant 0 : index
    %34 = vector.load %arg7[%c0_18, %c0_19] : memref<1x32xf32, #tpu.memory_space<vmem>>, vector<1x32xf32>
    %35 = vector.broadcast %34 : vector<1x32xf32> to vector<2x32xf32>
    %36 = arith.addf %33, %35 : vector<2x32xf32>
    %c0_20 = arith.constant 0 : index
    %c0_21 = arith.constant 0 : index
    %37 = vector.load %arg16[%c0_20, %c0_21] : memref<2x32xf32, #tpu.memory_space<vmem>>, vector<2x32xf32>
    tpu.vector_store %arg16[%c0_20, %c0_21], %36 {strides = array<i32>} : memref<2x32xf32, #tpu.memory_space<vmem>>, vector<2x32xf32>,
    %38 = arith.truncf %36 : vector<2x32xf32> to vector<2x32xbf16>
    %c0_22 = arith.constant 0 : index
    %c0_23 = arith.constant 0 : index
    %39 = vector.load %arg8[%c0_22, %c0_23] : memref<32x256xbf16, #tpu.memory_space<vmem>>, vector<32x256xbf16>
    %cst_24 = arith.constant dense<0.000000e+00> : vector<2x256xf32>
    %40 = tpu.matmul %38, %39, %cst_24 {dimension_numbers = #tpu.dot_dimension_numbers<[1], [0], [0], [1], [0, 0, 1, 1], [], []>} : vector<2x32xbf16>, vector<32x256xbf16>, vector<2x256xf32> -> vector<2x256xf32>
    %c0_25 = arith.constant 0 : index
    %c0_26 = arith.constant 0 : index
    %41 = vector.load %arg9[%c0_25, %c0_26] : memref<1x256xf32, #tpu.memory_space<vmem>>, vector<1x256xf32>
    %42 = vector.broadcast %41 : vector<1x256xf32> to vector<2x256xf32>
    %43 = arith.addf %40, %42 : vector<2x256xf32>
    %c0_27 = arith.constant 0 : index
    %c0_28 = arith.constant 0 : index
    %44 = vector.load %arg10[%c0_27, %c0_28] : memref<1x256xf32, #tpu.memory_space<vmem>>, vector<1x256xf32>
    %c0_29 = arith.constant 0 : index
    %c0_30 = arith.constant 0 : index
    %45 = vector.load %arg11[%c0_29, %c0_30] : memref<1x256xf32, #tpu.memory_space<vmem>>, vector<1x256xf32>
    %cst_31 = arith.constant dense<0.000000e+00> : vector<256xf32>
    %46 = vector.multi_reduction <add>, %43, %cst_31 [0] : vector<2x256xf32> to vector<256xf32>
    %47 = vector.shape_cast %46 : vector<256xf32> to vector<1x256xf32>
    %cst_32 = arith.constant 5.000000e-01 : f32
    %48 = vector.broadcast %cst_32 : f32 to vector<1x256xf32>
    %49 = arith.mulf %47, %48 : vector<1x256xf32>
    %50 = arith.mulf %43, %43 : vector<2x256xf32>
    %cst_33 = arith.constant dense<0.000000e+00> : vector<256xf32>
    %51 = vector.multi_reduction <add>, %50, %cst_33 [0] : vector<2x256xf32> to vector<256xf32>
    %52 = vector.shape_cast %51 : vector<256xf32> to vector<1x256xf32>
    %cst_34 = arith.constant 5.000000e-01 : f32
    %53 = vector.broadcast %cst_34 : f32 to vector<1x256xf32>
    %54 = arith.mulf %52, %53 : vector<1x256xf32>
    %55 = arith.mulf %49, %49 : vector<1x256xf32>
    %56 = arith.subf %54, %55 : vector<1x256xf32>
    %57 = vector.broadcast %49 : vector<1x256xf32> to vector<2x256xf32>
    %58 = arith.subf %43, %57 : vector<2x256xf32>
    %cst_35 = arith.constant 9.99999974E-6 : f32
    %59 = vector.broadcast %cst_35 : f32 to vector<1x256xf32>
    %60 = arith.addf %56, %59 : vector<1x256xf32>
    %61 = math.rsqrt %60 : vector<1x256xf32>
    %62 = arith.mulf %61, %44 : vector<1x256xf32>
    %63 = vector.broadcast %62 : vector<1x256xf32> to vector<2x256xf32>
    %64 = arith.mulf %58, %63 : vector<2x256xf32>
    %65 = vector.broadcast %45 : vector<1x256xf32> to vector<2x256xf32>
    %66 = arith.addf %64, %65 : vector<2x256xf32>
    %cst_36 = arith.constant 0.000000e+00 : f32
    %67 = vector.broadcast %cst_36 : f32 to vector<2x256xf32>
    %68 = arith.maximumf %66, %67 : vector<2x256xf32>
    %69 = arith.truncf %68 : vector<2x256xf32> to vector<2x256xbf16>
    %c0_37 = arith.constant 0 : index
    %c0_38 = arith.constant 0 : index
    %70 = vector.load %arg12[%c0_37, %c0_38] : memref<256x512xbf16, #tpu.memory_space<vmem>>, vector<256x512xbf16>
    %cst_39 = arith.constant dense<0.000000e+00> : vector<2x512xf32>
    %71 = tpu.matmul %69, %70, %cst_39 {dimension_numbers = #tpu.dot_dimension_numbers<[1], [0], [0], [1], [0, 0, 1, 1], [], []>} : vector<2x256xbf16>, vector<256x512xbf16>, vector<2x512xf32> -> vector<2x512xf32>
    %c0_40 = arith.constant 0 : index
    %c0_41 = arith.constant 0 : index
    %72 = vector.load %arg13[%c0_40, %c0_41] : memref<1x512xf32, #tpu.memory_space<vmem>>, vector<1x512xf32>
    %73 = vector.broadcast %72 : vector<1x512xf32> to vector<2x512xf32>
    %74 = arith.addf %71, %73 : vector<2x512xf32>
    %75 = arith.truncf %74 : vector<2x512xf32> to vector<2x512xbf16>
    %c0_42 = arith.constant 0 : index
    %c0_43 = arith.constant 0 : index
    %76 = vector.load %arg14[%c0_42, %c0_43] : memref<512x3072xbf16, #tpu.memory_space<vmem>>, vector<512x3072xbf16>
    %cst_44 = arith.constant dense<0.000000e+00> : vector<2x3072xf32>
    %77 = tpu.matmul %75, %76, %cst_44 {dimension_numbers = #tpu.dot_dimension_numbers<[1], [0], [0], [1], [0, 0, 1, 1], [], []>} : vector<2x512xbf16>, vector<512x3072xbf16>, vector<2x3072xf32> -> vector<2x3072xf32>
    %c0_45 = arith.constant 0 : index
    %c0_46 = arith.constant 0 : index
    %78 = vector.load %arg15[%c0_45, %c0_46] : memref<1x3072xf32, #tpu.memory_space<vmem>>, vector<1x3072xf32>
    %79 = vector.broadcast %78 : vector<1x3072xf32> to vector<2x3072xf32>
    %80 = arith.addf %77, %79 : vector<2x3072xf32>
    %81 = math.tanh %80 : vector<2x3072xf32>
    %c0_47 = arith.constant 0 : index
    %c0_48 = arith.constant 0 : index
    %82 = vector.load %arg17[%c0_47, %c0_48] : memref<2x3072xf32, #tpu.memory_space<vmem>>, vector<2x3072xf32>
    tpu.vector_store %arg17[%c0_47, %c0_48], %81 {strides = array<i32>} : memref<2x3072xf32, #tpu.memory_space<vmem>>, vector<2x3072xf32>,
    return
  }
  func.func @transform_0(%arg0: i32) -> (i32, i32) {
    %c0_i32 = arith.constant 0 : i32
    %c0_i32_0 = arith.constant 0 : i32
    %c0_i32_1 = arith.constant 0 : i32
    return %c0_i32, %c0_i32_0 : i32, i32
  }
  func.func @transform_1(%arg0: i32) -> (i32, i32) {
    %c0_i32 = arith.constant 0 : i32
    %c0_i32_0 = arith.constant 0 : i32
    %c0_i32_1 = arith.constant 0 : i32
    return %c0_i32, %c0_i32_0 : i32, i32
  }
  func.func @transform_2(%arg0: i32) -> (i32, i32) {
    %c0_i32 = arith.constant 0 : i32
    %c0_i32_0 = arith.constant 0 : i32
    %c0_i32_1 = arith.constant 0 : i32
    return %c0_i32, %c0_i32_0 : i32, i32
  }
  func.func @transform_3(%arg0: i32) -> (i32, i32) {
    %c0_i32 = arith.constant 0 : i32
    %c0_i32_0 = arith.constant 0 : i32
    %c0_i32_1 = arith.constant 0 : i32
    return %c0_i32, %c0_i32_0 : i32, i32
  }
  func.func @transform_4(%arg0: i32) -> (i32, i32) {
    %c0_i32 = arith.constant 0 : i32
    %c0_i32_0 = arith.constant 0 : i32
    %c0_i32_1 = arith.constant 0 : i32
    return %c0_i32, %c0_i32_0 : i32, i32
  }
  func.func @transform_5(%arg0: i32) -> (i32, i32) {
    %c0_i32 = arith.constant 0 : i32
    %c0_i32_0 = arith.constant 0 : i32
    %c0_i32_1 = arith.constant 0 : i32
    return %c0_i32, %c0_i32_0 : i32, i32
  }
  func.func @transform_6(%arg0: i32) -> (i32, i32) {
    %c0_i32 = arith.constant 0 : i32
    %c0_i32_0 = arith.constant 0 : i32
    %c0_i32_1 = arith.constant 0 : i32
    return %c0_i32, %c0_i32_0 : i32, i32
  }
  func.func @transform_7(%arg0: i32) -> (i32, i32) {
    %c0_i32 = arith.constant 0 : i32
    %c0_i32_0 = arith.constant 0 : i32
    %c0_i32_1 = arith.constant 0 : i32
    return %c0_i32, %c0_i32_0 : i32, i32
  }
  func.func @transform_8(%arg0: i32) -> (i32, i32) {
    %c0_i32 = arith.constant 0 : i32
    %c0_i32_0 = arith.constant 0 : i32
    %c0_i32_1 = arith.constant 0 : i32
    return %c0_i32, %c0_i32_0 : i32, i32
  }
  func.func @transform_9(%arg0: i32) -> (i32, i32) {
    %c0_i32 = arith.constant 0 : i32
    %c0_i32_0 = arith.constant 0 : i32
    %c0_i32_1 = arith.constant 0 : i32
    return %c0_i32, %c0_i32_0 : i32, i32
  }
  func.func @transform_10(%arg0: i32) -> (i32, i32) {
    %c0_i32 = arith.constant 0 : i32
    %c0_i32_0 = arith.constant 0 : i32
    %c0_i32_1 = arith.constant 0 : i32
    return %c0_i32, %c0_i32_0 : i32, i32
  }
  func.func @transform_11(%arg0: i32) -> (i32, i32) {
    %c0_i32 = arith.constant 0 : i32
    %c0_i32_0 = arith.constant 0 : i32
    %c0_i32_1 = arith.constant 0 : i32
    return %c0_i32, %c0_i32_0 : i32, i32
  }
  func.func @transform_12(%arg0: i32) -> (i32, i32) {
    %c0_i32 = arith.constant 0 : i32
    %c0_i32_0 = arith.constant 0 : i32
    %c0_i32_1 = arith.constant 0 : i32
    return %c0_i32, %c0_i32_0 : i32, i32
  }
  func.func @transform_13(%arg0: i32) -> (i32, i32) {
    %c0_i32 = arith.constant 0 : i32
    %c0_i32_0 = arith.constant 0 : i32
    %c0_i32_1 = arith.constant 0 : i32
    return %c0_i32, %c0_i32_0 : i32, i32
  }
  func.func @transform_14(%arg0: i32) -> (i32, i32) {
    %c0_i32 = arith.constant 0 : i32
    %c0_i32_0 = arith.constant 0 : i32
    %c0_i32_1 = arith.constant 0 : i32
    return %c0_i32, %c0_i32_0 : i32, i32
  }
  func.func @transform_15(%arg0: i32) -> (i32, i32) {
    %c0_i32 = arith.constant 0 : i32
    %c0_i32_0 = arith.constant 0 : i32
    %c0_i32_1 = arith.constant 0 : i32
    return %c0_i32, %c0_i32_0 : i32, i32
  }
  func.func @transform_16(%arg0: i32) -> (i32, i32) {
    %c0_i32 = arith.constant 0 : i32
    %c0_i32_0 = arith.constant 0 : i32
    %c0_i32_1 = arith.constant 0 : i32
    return %c0_i32, %c0_i32_0 : i32, i32
  }
}

</mosaic_0001>

<llo_original>
// kernel: autoencoder_forward.4
$region0: #{autoencoder_forward.4}
  #allocation0 [shape = 'u32[]', space=smem, size = 0x4, offset = 0x4, fixed_abs, tag = 'smem constant byte address 0x4 - core index']
  #allocation1 [shape = 'u32[144,128]{1,0:T(1,128)}', space=vmem, size = 0x12000, scoped, tag = 'internal scratch']
  %s0 = inlined_call_operand.vmem [shape: bf16[512,72], index: 0, kind: input, shape index: {}]
  %s1 = inlined_call_operand.vmem [shape: bf16[72,128], index: 1, kind: input, shape index: {}]
  %s2 = inlined_call_operand.vmem [shape: f32[1,128], index: 2, kind: input, shape index: {}]
  %s3 = inlined_call_operand.vmem [shape: f32[1,128], index: 3, kind: input, shape index: {}]
  %s4 = inlined_call_operand.vmem [shape: f32[1,128], index: 4, kind: input, shape index: {}]
  %s5 = inlined_call_operand.vmem [shape: bf16[512,128], index: 5, kind: output, shape index: {}]
  %s6 = sld [smem:[#allocation0]]
  $region30: #{autoencoder_forward.4} parent=0
    _
  %s8 = ssub.s32 1, %s6
  %s9 = scalar_select 0, %s8, %s6
  // Predicated region
  $region2: #{autoencoder_forward.4} parent=0 // pred_check
    _
  $region3: #{autoencoder_forward.4} parent=0 // pred_check_branch
    %11 = sbr.rel (0) target = $region5
  $region4: #{autoencoder_forward.4} parent=0 // pred_region
    _
  $region5: #{autoencoder_forward.4} parent=0 // pred_fallthru
    _
  // Predicated region
  $region6: #{autoencoder_forward.4} parent=0 // pred_check
    _
  $region7: #{autoencoder_forward.4} parent=0 // pred_check_branch
    %13 = sbr.rel (0) target = $region9
  $region8: #{autoencoder_forward.4} parent=0 // pred_region
    _
  $region9: #{autoencoder_forward.4} parent=0 // pred_fallthru
    _
  // Predicated region
  $region10: #{autoencoder_forward.4} parent=0 // pred_check
    _
  $region11: #{autoencoder_forward.4} parent=0 // pred_check_branch
    %15 = sbr.rel (0) target = $region13
  $region12: #{autoencoder_forward.4} parent=0 // pred_region
    _
  $region13: #{autoencoder_forward.4} parent=0 // pred_fallthru
    _
  // Predicated region
  $region14: #{autoencoder_forward.4} parent=0 // pred_check
    _
  $region15: #{autoencoder_forward.4} parent=0 // pred_check_branch
    %17 = sbr.rel (0) target = $region17
  $region16: #{autoencoder_forward.4} parent=0 // pred_region
    _
  $region17: #{autoencoder_forward.4} parent=0 // pred_fallthru
    _
  // Predicated region
  $region18: #{autoencoder_forward.4} parent=0 // pred_check
    _
  $region19: #{autoencoder_forward.4} parent=0 // pred_check_branch
    %19 = sbr.rel (0) target = $region21
  $region20: #{autoencoder_forward.4} parent=0 // pred_region
    _
  $region21: #{autoencoder_forward.4} parent=0 // pred_fallthru
    _
  %v21 = vld [vmem:[%s0] sm:$0xf]
  %v22 = vld [vmem:[%s0 + $0x4] sm:$0xf]
  %v23 = vld [vmem:[%s0 + $0x8] sm:$0xf]
  %v24 = vld [vmem:[%s0 + $0xc] sm:$0xf]
  %v25 = vld [vmem:[%s0 + $0x10] sm:$0xf]
  %v26 = vld [vmem:[%s0 + $0x14] sm:$0xf]
  %v27 = vld [vmem:[%s0 + $0x18] sm:$0xf]
  %v28 = vld [vmem:[%s0 + $0x1c] sm:$0xf]
  %v29 = vld [vmem:[%s0 + $0x20] sm:$0xf]
  %v30 = vld [vmem:[%s0 + $0x24] sm:$0xf]
  %v31 = vld [vmem:[%s0 + $0x28] sm:$0xf]
  %v32 = vld [vmem:[%s0 + $0x2c] sm:$0xf]
  %v33 = vld [vmem:[%s0 + $0x30] sm:$0xf]
  %v34 = vld [vmem:[%s0 + $0x34] sm:$0xf]
  %v35 = vld [vmem:[%s0 + $0x38] sm:$0xf]
  %v36 = vld [vmem:[%s0 + $0x3c] sm:$0xf]
  %v37 = vld [vmem:[%s0 + $0x40] sm:$0xf]
  %v38 = vld [vmem:[%s0 + $0x44] sm:$0xf]
  %v39 = vld [vmem:[%s0 + $0x48] sm:$0xf]
  %v40 = vld [vmem:[%s0 + $0x4c] sm:$0xf]
  %v41 = vld [vmem:[%s0 + $0x50] sm:$0xf]
  %v42 = vld [vmem:[%s0 + $0x54] sm:$0xf]
  %v43 = vld [vmem:[%s0 + $0x58] sm:$0xf]
  %v44 = vld [vmem:[%s0 + $0x5c] sm:$0xf]
  %v45 = vld [vmem:[%s0 + $0x60] sm:$0xf]
  %v46 = vld [vmem:[%s0 + $0x64] sm:$0xf]
  %v47 = vld [vmem:[%s0 + $0x68] sm:$0xf]
  %v48 = vld [vmem:[%s0 + $0x6c] sm:$0xf]
  %v49 = vld [vmem:[%s0 + $0x70] sm:$0xf]
  %v50 = vld [vmem:[%s0 + $0x74] sm:$0xf]
  %v51 = vld [vmem:[%s0 + $0x78] sm:$0xf]
  %v52 = vld [vmem:[%s0 + $0x7c] sm:$0xf]
  %v53 = vld [vmem:[%s0 + $0x80] sm:$0xf]
  %v54 = vld [vmem:[%s0 + $0x84] sm:$0xf]
  %v55 = vld [vmem:[%s0 + $0x88] sm:$0xf]
  %v56 = vld [vmem:[%s0 + $0x8c] sm:$0xf]
  %v57 = vld [vmem:[%s0 + $0x90] sm:$0xf]
  %v58 = vld [vmem:[%s0 + $0x94] sm:$0xf]
  %v59 = vld [vmem:[%s0 + $0x98] sm:$0xf]
  %v60 = vld [vmem:[%s0 + $0x9c] sm:$0xf]
  %v61 = vld [vmem:[%s0 + $0xa0] sm:$0xf]
  %v62 = vld [vmem:[%s0 + $0xa4] sm:$0xf]
  %v63 = vld [vmem:[%s0 + $0xa8] sm:$0xf]
  %v64 = vld [vmem:[%s0 + $0xac] sm:$0xf]
  %v65 = vld [vmem:[%s0 + $0xb0] sm:$0xf]
  %v66 = vld [vmem:[%s0 + $0xb4] sm:$0xf]
  %v67 = vld [vmem:[%s0 + $0xb8] sm:$0xf]
  %v68 = vld [vmem:[%s0 + $0xbc] sm:$0xf]
  %v69 = vld [vmem:[%s0 + $0xc0] sm:$0xf]
  %v70 = vld [vmem:[%s0 + $0xc4] sm:$0xf]
  %v71 = vld [vmem:[%s0 + $0xc8] sm:$0xf]
  %v72 = vld [vmem:[%s0 + $0xcc] sm:$0xf]
  %v73 = vld [vmem:[%s0 + $0xd0] sm:$0xf]
  %v74 = vld [vmem:[%s0 + $0xd4] sm:$0xf]
  %v75 = vld [vmem:[%s0 + $0xd8] sm:$0xf]
  %v76 = vld [vmem:[%s0 + $0xdc] sm:$0xf]
  %v77 = vld [vmem:[%s0 + $0xe0] sm:$0xf]
  %v78 = vld [vmem:[%s0 + $0xe4] sm:$0xf]
  %v79 = vld [vmem:[%s0 + $0xe8] sm:$0xf]
  %v80 = vld [vmem:[%s0 + $0xec] sm:$0xf]
  %v81 = vld [vmem:[%s0 + $0xf0] sm:$0xf]
  %v82 = vld [vmem:[%s0 + $0xf4] sm:$0xf]
  %v83 = vld [vmem:[%s0 + $0xf8] sm:$0xf]
  %v84 = vld [vmem:[%s0 + $0xfc] sm:$0xf]
  %v85 = vld [vmem:[%s1] sm:$0xf]
  %v86 = vld [vmem:[%s1 + $0x4] sm:$0xf]
  %v87 = vld [vmem:[%s1 + $0x8] sm:$0xf]
  %v88 = vld [vmem:[%s1 + $0xc] sm:$0xf]
  %v89 = vld [vmem:[%s1 + $0x10] sm:$0xf]
  %v90 = vld [vmem:[%s1 + $0x14] sm:$0xf]
  %v91 = vld [vmem:[%s1 + $0x18] sm:$0xf]
  %v92 = vld [vmem:[%s1 + $0x1c] sm:$0xf]
  %v93 = vld [vmem:[%s1 + $0x20] sm:$0xf]
  %v94 = vld [vmem:[%s2] sm:$0x1]
  %v96 = vlaneseq
  %v97 = vshrl.u32 %v96, 7
  %v98 = vsub.s32 0, %v97
  %v99 = vrot.slane %v94, %v98
  %v165 = vunpack.c.l.b16 %v21
  %v166 = vunpack.c.l.b16 %v22
  %v167 = vunpack.c.l.b16 %v23
  %v168 = vunpack.c.l.b16 %v24
  %v169 = vunpack.c.l.b16 %v25
  %v170 = vunpack.c.l.b16 %v26
  %v171 = vunpack.c.l.b16 %v27
  %v172 = vunpack.c.l.b16 %v28
  %v173 = vunpack.c.l.b16 %v29
  %v174 = vunpack.c.l.b16 %v30
  %v175 = vunpack.c.l.b16 %v31
  %v176 = vunpack.c.l.b16 %v32
  %v177 = vunpack.c.l.b16 %v33
  %v178 = vunpack.c.l.b16 %v34
  %v179 = vunpack.c.l.b16 %v35
  %v180 = vunpack.c.l.b16 %v36
  %v181 = vunpack.c.l.b16 %v37
  %v182 = vunpack.c.l.b16 %v38
  %v183 = vunpack.c.l.b16 %v39
  %v184 = vunpack.c.l.b16 %v40
  %v185 = vunpack.c.l.b16 %v41
  %v186 = vunpack.c.l.b16 %v42
  %v187 = vunpack.c.l.b16 %v43
  %v188 = vunpack.c.l.b16 %v44
  %v189 = vunpack.c.l.b16 %v45
  %v190 = vunpack.c.l.b16 %v46
  %v191 = vunpack.c.l.b16 %v47
  %v192 = vunpack.c.l.b16 %v48
  %v193 = vunpack.c.l.b16 %v49
  %v194 = vunpack.c.l.b16 %v50
  %v195 = vunpack.c.l.b16 %v51
  %v196 = vunpack.c.l.b16 %v52
  %v197 = vunpack.c.l.b16 %v53
  %v198 = vunpack.c.l.b16 %v54
  %v199 = vunpack.c.l.b16 %v55
  %v200 = vunpack.c.l.b16 %v56
  %v201 = vunpack.c.l.b16 %v57
  %v202 = vunpack.c.l.b16 %v58
  %v203 = vunpack.c.l.b16 %v59
  %v204 = vunpack.c.l.b16 %v60
  %v205 = vunpack.c.l.b16 %v61
  %v206 = vunpack.c.l.b16 %v62
  %v207 = vunpack.c.l.b16 %v63
  %v208 = vunpack.c.l.b16 %v64
  %v209 = vunpack.c.l.b16 %v65
  %v210 = vunpack.c.l.b16 %v66
  %v211 = vunpack.c.l.b16 %v67
  %v212 = vunpack.c.l.b16 %v68
  %v213 = vunpack.c.l.b16 %v69
  %v214 = vunpack.c.l.b16 %v70
  %v215 = vunpack.c.l.b16 %v71
  %v216 = vunpack.c.l.b16 %v72
  %v217 = vunpack.c.l.b16 %v73
  %v218 = vunpack.c.l.b16 %v74
  %v219 = vunpack.c.l.b16 %v75
  %v220 = vunpack.c.l.b16 %v76
  %v221 = vunpack.c.l.b16 %v77
  %v222 = vunpack.c.l.b16 %v78
  %v223 = vunpack.c.l.b16 %v79
  %v224 = vunpack.c.l.b16 %v80
  %v225 = vunpack.c.l.b16 %v81
  %v226 = vunpack.c.l.b16 %v82
  %v227 = vunpack.c.l.b16 %v83
  %v228 = vunpack.c.l.b16 %v84
  %v229 = vpack.c.b16 %v166, %v165
  %v230 = vpack.c.b16 %v168, %v167
  %v231 = vpack.c.b16 %v170, %v169
  %v232 = vpack.c.b16 %v172, %v171
  %v233 = vpack.c.b16 %v174, %v173
  %v234 = vpack.c.b16 %v176, %v175
  %v235 = vpack.c.b16 %v178, %v177
  %v236 = vpack.c.b16 %v180, %v179
  %v237 = vpack.c.b16 %v182, %v181
  %v238 = vpack.c.b16 %v184, %v183
  %v239 = vpack.c.b16 %v186, %v185
  %v240 = vpack.c.b16 %v188, %v187
  %v241 = vpack.c.b16 %v190, %v189
  %v242 = vpack.c.b16 %v192, %v191
  %v243 = vpack.c.b16 %v194, %v193
  %v244 = vpack.c.b16 %v196, %v195
  %v245 = vpack.c.b16 %v198, %v197
  %v246 = vpack.c.b16 %v200, %v199
  %v247 = vpack.c.b16 %v202, %v201
  %v248 = vpack.c.b16 %v204, %v203
  %v249 = vpack.c.b16 %v206, %v205
  %v250 = vpack.c.b16 %v208, %v207
  %v251 = vpack.c.b16 %v210, %v209
  %v252 = vpack.c.b16 %v212, %v211
  %v253 = vpack.c.b16 %v214, %v213
  %v254 = vpack.c.b16 %v216, %v215
  %v255 = vpack.c.b16 %v218, %v217
  %v256 = vpack.c.b16 %v220, %v219
  %v257 = vpack.c.b16 %v222, %v221
  %v258 = vpack.c.b16 %v224, %v223
  %v259 = vpack.c.b16 %v226, %v225
  %v260 = vpack.c.b16 %v228, %v227
  %v270 = vunpack.c.l.b16 %v85
  %v271 = vunpack.c.l.b16 %v86
  %v272 = vunpack.c.l.b16 %v87
  %v273 = vunpack.c.l.b16 %v88
  %v274 = vunpack.c.l.b16 %v89
  %v275 = vunpack.c.l.b16 %v90
  %v276 = vunpack.c.l.b16 %v91
  %v277 = vunpack.c.l.b16 %v92
  %v278 = vunpack.c.l.b16 %v93
  %v279 = vpack.c.b16 %v271, %v270
  %v280 = vpack.c.b16 %v273, %v272
  %v281 = vpack.c.b16 %v275, %v274
  %v282 = vpack.c.b16 %v277, %v276
  %v283 = vpack.c.b16 %v278, %v278
  %vm288 = vcmask 588800
  %v290 = vsel %vm288, %v229, 0
  %v293 = vsel %vm288, %v230, 0
  %v296 = vsel %vm288, %v231, 0
  %v299 = vsel %vm288, %v232, 0
  %v302 = vsel %vm288, %v233, 0
  %v305 = vsel %vm288, %v234, 0
  %v308 = vsel %vm288, %v235, 0
  %v311 = vsel %vm288, %v236, 0
  %v314 = vsel %vm288, %v237, 0
  %v317 = vsel %vm288, %v238, 0
  %v320 = vsel %vm288, %v239, 0
  %v323 = vsel %vm288, %v240, 0
  %v326 = vsel %vm288, %v241, 0
  %v329 = vsel %vm288, %v242, 0
  %v332 = vsel %vm288, %v243, 0
  %v335 = vsel %vm288, %v244, 0
  %v338 = vsel %vm288, %v245, 0
  %v341 = vsel %vm288, %v246, 0
  %v344 = vsel %vm288, %v247, 0
  %v347 = vsel %vm288, %v248, 0
  %v350 = vsel %vm288, %v249, 0
  %v353 = vsel %vm288, %v250, 0
  %v356 = vsel %vm288, %v251, 0
  %v359 = vsel %vm288, %v252, 0
  %v362 = vsel %vm288, %v253, 0
  %v365 = vsel %vm288, %v254, 0
  %v368 = vsel %vm288, %v255, 0
  %v371 = vsel %vm288, %v256, 0
  %v374 = vsel %vm288, %v257, 0
  %v377 = vsel %vm288, %v258, 0
  %v380 = vsel %vm288, %v259, 0
  %v383 = vsel %vm288, %v260, 0
  %vm385 = vcmask 1043456
  %v387 = vsel %vm385, %v283, 0
  %389 = vmatprep.subr.bf16.mxu0 0
  %390 = vmatpush1.bf16.msra.mxu0 %v279
  %391 = vmatprep.subr.bf16.mxu0 0
  %392 = vmatpush1.bf16.msra.mxu0 %v280
  %393 = vmatprep.subr.bf16.mxu0 0
  %394 = vmatpush1.bf16.msra.mxu0 %v281
  %395 = vmatprep.subr.bf16.mxu0 0
  %396 = vmatpush1.bf16.msra.mxu0 %v282
  %397 = vmatprep.subr.bf16.mxu0 0
  %398 = vmatpush1.bf16.msra.mxu0 %v387
  %399 = vmatprep.subr.bf16.mxu0 0
  %400 = vmatpush1.bf16.msra.mxu0 0
  %401 = vmatprep.subr.bf16.mxu0 0
  %402 = vmatpush1.bf16.msra.mxu0 0
  %403 = vmatprep.subr.bf16.mxu0 0
  %404 = vmatpush1.bf16.msra.mxu0 0
  %405 = vmatprep.subr.bf16.mxu0 0
  %406 = vmatpush1.bf16.msra.mxu0 0
  %407 = vmatprep.subr.bf16.mxu0 0
  %408 = vmatpush1.bf16.msra.mxu0 0
  %409 = vmatprep.subr.bf16.mxu0 0
  %410 = vmatpush1.bf16.msra.mxu0 0
  %411 = vmatprep.subr.bf16.mxu0 0
  %412 = vmatpush1.bf16.msra.mxu0 0
  %413 = vmatprep.subr.bf16.mxu0 0
  %414 = vmatpush1.bf16.msra.mxu0 0
  %415 = vmatprep.subr.bf16.mxu0 0
  %416 = vmatpush1.bf16.msra.mxu0 0
  %417 = vmatprep.subr.bf16.mxu0 0
  %418 = vmatpush1.bf16.msra.mxu0 0
  %419 = vmatprep.subr.bf16.mxu0 0
  %420 = vmatpush1.bf16.msra.mxu0 0
  %421 = vmatprep.mubr.bf16.mxu0 0
  %422 = vmatmul.mubr.bf16.gmra.mrb[0].mxu0 %v290
  %v423 = vpop.f32.mrb[0].mxu0
  %v424 = vadd.f32 %v99, %v423
  %v425 = vpop.f32.mrb[0].mxu0
  %v426 = vpop.f32.mrb[0].mxu0
  %v427 = vadd.f32 %v99, %v426
  %v428 = vpop.f32.mrb[0].mxu0
  %429 = vmatprep.mubr.bf16.mxu0 0
  %430 = vmatmul.mubr.bf16.gmra.mrb[0].mxu0 %v293
  %v431 = vpop.f32.mrb[0].mxu0
  %v432 = vadd.f32 %v99, %v431
  %v433 = vpop.f32.mrb[0].mxu0
  %v434 = vpop.f32.mrb[0].mxu0
  %v435 = vadd.f32 %v99, %v434
  %v436 = vpop.f32.mrb[0].mxu0
  %437 = vmatprep.mubr.bf16.mxu0 0
  %438 = vmatmul.mubr.bf16.gmra.mrb[0].mxu0 %v296
  %v439 = vpop.f32.mrb[0].mxu0
  %v440 = vadd.f32 %v99, %v439
  %v441 = vpop.f32.mrb[0].mxu0
  %v442 = vpop.f32.mrb[0].mxu0
  %v443 = vadd.f32 %v99, %v442
  %v444 = vpop.f32.mrb[0].mxu0
  %445 = vmatprep.mubr.bf16.mxu0 0
  %446 = vmatmul.mubr.bf16.gmra.mrb[0].mxu0 %v299
  %v447 = vpop.f32.mrb[0].mxu0
  %v448 = vadd.f32 %v99, %v447
  %v449 = vpop.f32.mrb[0].mxu0
  %v450 = vpop.f32.mrb[0].mxu0
  %v451 = vadd.f32 %v99, %v450
  %v452 = vpop.f32.mrb[0].mxu0
  %453 = vmatprep.mubr.bf16.mxu0 0
  %454 = vmatmul.mubr.bf16.gmra.mrb[0].mxu0 %v302
  %v455 = vpop.f32.mrb[0].mxu0
  %v456 = vadd.f32 %v99, %v455
  %v457 = vpop.f32.mrb[0].mxu0
  %v458 = vpop.f32.mrb[0].mxu0
  %v459 = vadd.f32 %v99, %v458
  %v460 = vpop.f32.mrb[0].mxu0
  %461 = vmatprep.mubr.bf16.mxu0 0
  %462 = vmatmul.mubr.bf16.gmra.mrb[0].mxu0 %v305
  %v463 = vpop.f32.mrb[0].mxu0
  %v464 = vadd.f32 %v99, %v463
  %v465 = vpop.f32.mrb[0].mxu0
  %v466 = vpop.f32.mrb[0].mxu0
  %v467 = vadd.f32 %v99, %v466
  %v468 = vpop.f32.mrb[0].mxu0
  %469 = vmatprep.mubr.bf16.mxu0 0
  %470 = vmatmul.mubr.bf16.gmra.mrb[0].mxu0 %v308
  %v471 = vpop.f32.mrb[0].mxu0
  %v472 = vadd.f32 %v99, %v471
  %v473 = vpop.f32.mrb[0].mxu0
  %v474 = vpop.f32.mrb[0].mxu0
  %v475 = vadd.f32 %v99, %v474
  %v476 = vpop.f32.mrb[0].mxu0
  %477 = vmatprep.mubr.bf16.mxu0 0
  %478 = vmatmul.mubr.bf16.gmra.mrb[0].mxu0 %v311
  %v479 = vpop.f32.mrb[0].mxu0
  %v480 = vadd.f32 %v99, %v479
  %v481 = vpop.f32.mrb[0].mxu0
  %v482 = vpop.f32.mrb[0].mxu0
  %v483 = vadd.f32 %v99, %v482
  %v484 = vpop.f32.mrb[0].mxu0
  %485 = vmatprep.mubr.bf16.mxu0 0
  %486 = vmatmul.mubr.bf16.gmra.mrb[0].mxu0 %v314
  %v487 = vpop.f32.mrb[0].mxu0
  %v488 = vadd.f32 %v99, %v487
  %v489 = vpop.f32.mrb[0].mxu0
  %v490 = vpop.f32.mrb[0].mxu0
  %v491 = vadd.f32 %v99, %v490
  %v492 = vpop.f32.mrb[0].mxu0
  %493 = vmatprep.mubr.bf16.mxu0 0
  %494 = vmatmul.mubr.bf16.gmra.mrb[0].mxu0 %v317
  %v495 = vpop.f32.mrb[0].mxu0
  %v496 = vadd.f32 %v99, %v495
  %v497 = vpop.f32.mrb[0].mxu0
  %v498 = vpop.f32.mrb[0].mxu0
  %v499 = vadd.f32 %v99, %v498
  %v500 = vpop.f32.mrb[0].mxu0
  %501 = vmatprep.mubr.bf16.mxu0 0
  %502 = vmatmul.mubr.bf16.gmra.mrb[0].mxu0 %v320
  %v503 = vpop.f32.mrb[0].mxu0
  %v504 = vadd.f32 %v99, %v503
  %v505 = vpop.f32.mrb[0].mxu0
  %v506 = vpop.f32.mrb[0].mxu0
  %v507 = vadd.f32 %v99, %v506
  %v508 = vpop.f32.mrb[0].mxu0
  %509 = vmatprep.mubr.bf16.mxu0 0
  %510 = vmatmul.mubr.bf16.gmra.mrb[0].mxu0 %v323
  %v511 = vpop.f32.mrb[0].mxu0
  %v512 = vadd.f32 %v99, %v511
  %v513 = vpop.f32.mrb[0].mxu0
  %v514 = vpop.f32.mrb[0].mxu0
  %v515 = vadd.f32 %v99, %v514
  %v516 = vpop.f32.mrb[0].mxu0
  %517 = vmatprep.mubr.bf16.mxu0 0
  %518 = vmatmul.mubr.bf16.gmra.mrb[0].mxu0 %v326
  %v519 = vpop.f32.mrb[0].mxu0
  %v520 = vadd.f32 %v99, %v519
  %v521 = vpop.f32.mrb[0].mxu0
  %v522 = vpop.f32.mrb[0].mxu0
  %v523 = vadd.f32 %v99, %v522
  %v524 = vpop.f32.mrb[0].mxu0
  %525 = vmatprep.mubr.bf16.mxu0 0
  %526 = vmatmul.mubr.bf16.gmra.mrb[0].mxu0 %v329
  %v527 = vpop.f32.mrb[0].mxu0
  %v528 = vadd.f32 %v99, %v527
  %v529 = vpop.f32.mrb[0].mxu0
  %v530 = vpop.f32.mrb[0].mxu0
  %v531 = vadd.f32 %v99, %v530
  %v532 = vpop.f32.mrb[0].mxu0
  %533 = vmatprep.mubr.bf16.mxu0 0
  %534 = vmatmul.mubr.bf16.gmra.mrb[0].mxu0 %v332
  %v535 = vpop.f32.mrb[0].mxu0
  %v536 = vadd.f32 %v99, %v535
  %v537 = vpop.f32.mrb[0].mxu0
  %v538 = vpop.f32.mrb[0].mxu0
  %v539 = vadd.f32 %v99, %v538
  %v540 = vpop.f32.mrb[0].mxu0
  %541 = vmatprep.mubr.bf16.mxu0 0
  %542 = vmatmul.mubr.bf16.gmra.mrb[0].mxu0 %v335
  %v543 = vpop.f32.mrb[0].mxu0
  %v544 = vadd.f32 %v99, %v543
  %v545 = vpop.f32.mrb[0].mxu0
  %v546 = vpop.f32.mrb[0].mxu0
  %v547 = vadd.f32 %v99, %v546
  %v548 = vpop.f32.mrb[0].mxu0
  %549 = vmatprep.mubr.bf16.mxu0 0
  %550 = vmatmul.mubr.bf16.gmra.mrb[0].mxu0 %v338
  %v551 = vpop.f32.mrb[0].mxu0
  %v552 = vadd.f32 %v99, %v551
  %v553 = vpop.f32.mrb[0].mxu0
  %v554 = vpop.f32.mrb[0].mxu0
  %v555 = vadd.f32 %v99, %v554
  %v556 = vpop.f32.mrb[0].mxu0
  %557 = vmatprep.mubr.bf16.mxu0 0
  %558 = vmatmul.mubr.bf16.gmra.mrb[0].mxu0 %v341
  %v559 = vpop.f32.mrb[0].mxu0
  %v560 = vadd.f32 %v99, %v559
  %v561 = vpop.f32.mrb[0].mxu0
  %v562 = vpop.f32.mrb[0].mxu0
  %v563 = vadd.f32 %v99, %v562
  %v564 = vpop.f32.mrb[0].mxu0
  %565 = vmatprep.mubr.bf16.mxu0 0
  %566 = vmatmul.mubr.bf16.gmra.mrb[0].mxu0 %v344
  %v567 = vpop.f32.mrb[0].mxu0
  %v568 = vadd.f32 %v99, %v567
  %v569 = vpop.f32.mrb[0].mxu0
  %v570 = vpop.f32.mrb[0].mxu0
  %v571 = vadd.f32 %v99, %v570
  %v572 = vpop.f32.mrb[0].mxu0
  %573 = vmatprep.mubr.bf16.mxu0 0
  %574 = vmatmul.mubr.bf16.gmra.mrb[0].mxu0 %v347
  %v575 = vpop.f32.mrb[0].mxu0
  %v576 = vadd.f32 %v99, %v575
  %v577 = vpop.f32.mrb[0].mxu0
  %v578 = vpop.f32.mrb[0].mxu0
  %v579 = vadd.f32 %v99, %v578
  %v580 = vpop.f32.mrb[0].mxu0
  %581 = vmatprep.mubr.bf16.mxu0 0
  %582 = vmatmul.mubr.bf16.gmra.mrb[0].mxu0 %v350
  %v583 = vpop.f32.mrb[0].mxu0
  %v584 = vadd.f32 %v99, %v583
  %v585 = vpop.f32.mrb[0].mxu0
  %v586 = vpop.f32.mrb[0].mxu0
  %v587 = vadd.f32 %v99, %v586
  %v588 = vpop.f32.mrb[0].mxu0
  %589 = vmatprep.mubr.bf16.mxu0 0
  %590 = vmatmul.mubr.bf16.gmra.mrb[0].mxu0 %v353
  %v591 = vpop.f32.mrb[0].mxu0
  %v592 = vadd.f32 %v99, %v591
  %v593 = vpop.f32.mrb[0].mxu0
  %v594 = vpop.f32.mrb[0].mxu0
  %v595 = vadd.f32 %v99, %v594
  %v596 = vpop.f32.mrb[0].mxu0
  %597 = vmatprep.mubr.bf16.mxu0 0
  %598 = vmatmul.mubr.bf16.gmra.mrb[0].mxu0 %v356
  %v599 = vpop.f32.mrb[0].mxu0
  %v600 = vadd.f32 %v99, %v599
  %v601 = vpop.f32.mrb[0].mxu0
  %v602 = vpop.f32.mrb[0].mxu0
  %v603 = vadd.f32 %v99, %v602
  %v604 = vpop.f32.mrb[0].mxu0
  %605 = vmatprep.mubr.bf16.mxu0 0
  %606 = vmatmul.mubr.bf16.gmra.mrb[0].mxu0 %v359
  %v607 = vpop.f32.mrb[0].mxu0
  %v608 = vadd.f32 %v99, %v607
  %v609 = vpop.f32.mrb[0].mxu0
  %v610 = vpop.f32.mrb[0].mxu0
  %v611 = vadd.f32 %v99, %v610
  %v612 = vpop.f32.mrb[0].mxu0
  %613 = vmatprep.mubr.bf16.mxu0 0
  %614 = vmatmul.mubr.bf16.gmra.mrb[0].mxu0 %v362
  %v615 = vpop.f32.mrb[0].mxu0
  %v616 = vadd.f32 %v99, %v615
  %v617 = vpop.f32.mrb[0].mxu0
  %v618 = vpop.f32.mrb[0].mxu0
  %v619 = vadd.f32 %v99, %v618
  %v620 = vpop.f32.mrb[0].mxu0
  %621 = vmatprep.mubr.bf16.mxu0 0
  %622 = vmatmul.mubr.bf16.gmra.mrb[0].mxu0 %v365
  %v623 = vpop.f32.mrb[0].mxu0
  %v624 = vadd.f32 %v99, %v623
  %v625 = vpop.f32.mrb[0].mxu0
  %v626 = vpop.f32.mrb[0].mxu0
  %v627 = vadd.f32 %v99, %v626
  %v628 = vpop.f32.mrb[0].mxu0
  %629 = vmatprep.mubr.bf16.mxu0 0
  %630 = vmatmul.mubr.bf16.gmra.mrb[0].mxu0 %v368
  %v631 = vpop.f32.mrb[0].mxu0
  %v632 = vadd.f32 %v99, %v631
  %v633 = vpop.f32.mrb[0].mxu0
  %v634 = vpop.f32.mrb[0].mxu0
  %v635 = vadd.f32 %v99, %v634
  %v636 = vpop.f32.mrb[0].mxu0
  %637 = vmatprep.mubr.bf16.mxu0 0
  %638 = vmatmul.mubr.bf16.gmra.mrb[0].mxu0 %v371
  %v639 = vpop.f32.mrb[0].mxu0
  %v640 = vadd.f32 %v99, %v639
  %v641 = vpop.f32.mrb[0].mxu0
  %v642 = vpop.f32.mrb[0].mxu0
  %v643 = vadd.f32 %v99, %v642
  %v644 = vpop.f32.mrb[0].mxu0
  %645 = vmatprep.mubr.bf16.mxu0 0
  %646 = vmatmul.mubr.bf16.gmra.mrb[0].mxu0 %v374
  %v647 = vpop.f32.mrb[0].mxu0
  %v648 = vadd.f32 %v99, %v647
  %v649 = vpop.f32.mrb[0].mxu0
  %v650 = vpop.f32.mrb[0].mxu0
  %v651 = vadd.f32 %v99, %v650
  %v652 = vpop.f32.mrb[0].mxu0
  %653 = vmatprep.mubr.bf16.mxu0 0
  %654 = vmatmul.mubr.bf16.gmra.mrb[0].mxu0 %v377
  %v655 = vpop.f32.mrb[0].mxu0
  %v656 = vadd.f32 %v99, %v655
  %v657 = vpop.f32.mrb[0].mxu0
  %v658 = vpop.f32.mrb[0].mxu0
  %v659 = vadd.f32 %v99, %v658
  %v660 = vpop.f32.mrb[0].mxu0
  %661 = vmatprep.mubr.bf16.mxu0 0
  %662 = vmatmul.mubr.bf16.gmra.mrb[0].mxu0 %v380
  %v663 = vpop.f32.mrb[0].mxu0
  %v664 = vadd.f32 %v99, %v663
  %v665 = vpop.f32.mrb[0].mxu0
  %v666 = vpop.f32.mrb[0].mxu0
  %v667 = vadd.f32 %v99, %v666
  %v668 = vpop.f32.mrb[0].mxu0
  %669 = vmatprep.mubr.bf16.mxu0 0
  %670 = vmatmul.mubr.bf16.gmra.mrb[0].mxu0 %v383
  %v671 = vpop.f32.mrb[0].mxu0
  %v672 = vadd.f32 %v99, %v671
  %v673 = vpop.f32.mrb[0].mxu0
  %v674 = vpop.f32.mrb[0].mxu0
  %v675 = vadd.f32 %v99, %v674
  %v676 = vpop.f32.mrb[0].mxu0
  %677 = vdwg.mxu0
  %v678 = vmax.f32 %v424, 0.0
  %v679 = vmax.f32 %v427, 0.0
  %v680 = vmax.f32 %v432, 0.0
  %v681 = vmax.f32 %v435, 0.0
  %v682 = vmax.f32 %v440, 0.0
  %v683 = vmax.f32 %v443, 0.0
  %v684 = vmax.f32 %v448, 0.0
  %v685 = vmax.f32 %v451, 0.0
  %v686 = vmax.f32 %v456, 0.0
  %v687 = vmax.f32 %v459, 0.0
  %v688 = vmax.f32 %v464, 0.0
  %v689 = vmax.f32 %v467, 0.0
  %v690 = vmax.f32 %v472, 0.0
  %v691 = vmax.f32 %v475, 0.0
  %v692 = vmax.f32 %v480, 0.0
  %v693 = vmax.f32 %v483, 0.0
  %v694 = vmax.f32 %v488, 0.0
  %v695 = vmax.f32 %v491, 0.0
  %v696 = vmax.f32 %v496, 0.0
  %v697 = vmax.f32 %v499, 0.0
  %v698 = vmax.f32 %v504, 0.0
  %v699 = vmax.f32 %v507, 0.0
  %v700 = vmax.f32 %v512, 0.0
  %v701 = vmax.f32 %v515, 0.0
  %v702 = vmax.f32 %v520, 0.0
  %v703 = vmax.f32 %v523, 0.0
  %v704 = vmax.f32 %v528, 0.0
  %v705 = vmax.f32 %v531, 0.0
  %v706 = vmax.f32 %v536, 0.0
  %v707 = vmax.f32 %v539, 0.0
  %v708 = vmax.f32 %v544, 0.0
  %v709 = vmax.f32 %v547, 0.0
  %v710 = vmax.f32 %v552, 0.0
  %v711 = vmax.f32 %v555, 0.0
  %v712 = vmax.f32 %v560, 0.0
  %v713 = vmax.f32 %v563, 0.0
  %v714 = vmax.f32 %v568, 0.0
  %v715 = vmax.f32 %v571, 0.0
  %v716 = vmax.f32 %v576, 0.0
  %v717 = vmax.f32 %v579, 0.0
  %v718 = vmax.f32 %v584, 0.0
  %v719 = vmax.f32 %v587, 0.0
  %v720 = vmax.f32 %v592, 0.0
  %v721 = vmax.f32 %v595, 0.0
  %v722 = vmax.f32 %v600, 0.0
  %v723 = vmax.f32 %v603, 0.0
  %v724 = vmax.f32 %v608, 0.0
  %v725 = vmax.f32 %v611, 0.0
  %v726 = vmax.f32 %v616, 0.0
  %v727 = vmax.f32 %v619, 0.0
  %v728 = vmax.f32 %v624, 0.0
  %v729 = vmax.f32 %v627, 0.0
  %v730 = vmax.f32 %v632, 0.0
  %v731 = vmax.f32 %v635, 0.0
  %v732 = vmax.f32 %v640, 0.0
  %v733 = vmax.f32 %v643, 0.0
  %v734 = vmax.f32 %v648, 0.0
  %v735 = vmax.f32 %v651, 0.0
  %v736 = vmax.f32 %v656, 0.0
  %v737 = vmax.f32 %v659, 0.0
  %v738 = vmax.f32 %v664, 0.0
  %v739 = vmax.f32 %v667, 0.0
  %v740 = vmax.f32 %v672, 0.0
  %v741 = vmax.f32 %v675, 0.0
  %v742 = vadd.f32 %v678, %v679
  %v743 = vadd.f32 %v742, %v680
  %v744 = vadd.f32 %v743, %v681
  %v745 = vadd.f32 %v744, %v682
  %v746 = vadd.f32 %v745, %v683
  %v747 = vadd.f32 %v746, %v684
  %v748 = vadd.f32 %v747, %v685
  %v749 = vadd.f32 %v748, %v686
  %v750 = vadd.f32 %v749, %v687
  %v751 = vadd.f32 %v750, %v688
  %v752 = vadd.f32 %v751, %v689
  %v753 = vadd.f32 %v752, %v690
  %v754 = vadd.f32 %v753, %v691
  %v755 = vadd.f32 %v754, %v692
  %v756 = vadd.f32 %v755, %v693
  %v757 = vadd.f32 %v756, %v694
  %v758 = vadd.f32 %v757, %v695
  %v759 = vadd.f32 %v758, %v696
  %v760 = vadd.f32 %v759, %v697
  %v761 = vadd.f32 %v760, %v698
  %v762 = vadd.f32 %v761, %v699
  %v763 = vadd.f32 %v762, %v700
  %v764 = vadd.f32 %v763, %v701
  %v765 = vadd.f32 %v764, %v702
  %v766 = vadd.f32 %v765, %v703
  %v767 = vadd.f32 %v766, %v704
  %v768 = vadd.f32 %v767, %v705
  %v769 = vadd.f32 %v768, %v706
  %v770 = vadd.f32 %v769, %v707
  %v771 = vadd.f32 %v770, %v708
  %v772 = vadd.f32 %v771, %v709
  %v773 = vadd.f32 %v772, %v710
  %v774 = vadd.f32 %v773, %v711
  %v775 = vadd.f32 %v774, %v712
  %v776 = vadd.f32 %v775, %v713
  %v777 = vadd.f32 %v776, %v714
  %v778 = vadd.f32 %v777, %v715
  %v779 = vadd.f32 %v778, %v716
  %v780 = vadd.f32 %v779, %v717
  %v781 = vadd.f32 %v780, %v718
  %v782 = vadd.f32 %v781, %v719
  %v783 = vadd.f32 %v782, %v720
  %v784 = vadd.f32 %v783, %v721
  %v785 = vadd.f32 %v784, %v722
  %v786 = vadd.f32 %v785, %v723
  %v787 = vadd.f32 %v786, %v724
  %v788 = vadd.f32 %v787, %v725
  %v789 = vadd.f32 %v788, %v726
  %v790 = vadd.f32 %v789, %v727
  %v791 = vadd.f32 %v790, %v728
  %v792 = vadd.f32 %v791, %v729
  %v793 = vadd.f32 %v792, %v730
  %v794 = vadd.f32 %v793, %v731
  %v795 = vadd.f32 %v794, %v732
  %v796 = vadd.f32 %v795, %v733
  %v797 = vadd.f32 %v796, %v734
  %v798 = vadd.f32 %v797, %v735
  %v799 = vadd.f32 %v798, %v736
  %v800 = vadd.f32 %v799, %v737
  %v801 = vadd.f32 %v800, %v738
  %v802 = vadd.f32 %v801, %v739
  %v803 = vadd.f32 %v802, %v740
  %v804 = vadd.f32 %v803, %v741
  %v805 = vrot.slane %v804, 4
  %v806 = vadd.f32 %v804, %v805
  %v807 = vrot.slane %v806, 2
  %v808 = vadd.f32 %v806, %v807
  %v809 = vrot.slane %v808, 1
  %v810 = vadd.f32 %v808, %v809
  %v811 = vmul.f32 %v678, %v678
  %v812 = vmul.f32 %v679, %v679
  %v813 = vmul.f32 %v680, %v680
  %v814 = vmul.f32 %v681, %v681
  %v815 = vmul.f32 %v682, %v682
  %v816 = vmul.f32 %v683, %v683
  %v817 = vmul.f32 %v684, %v684
  %v818 = vmul.f32 %v685, %v685
  %v819 = vmul.f32 %v686, %v686
  %v820 = vmul.f32 %v687, %v687
  %v821 = vmul.f32 %v688, %v688
  %v822 = vmul.f32 %v689, %v689
  %v823 = vmul.f32 %v690, %v690
  %v824 = vmul.f32 %v691, %v691
  %v825 = vmul.f32 %v692, %v692
  %v826 = vmul.f32 %v693, %v693
  %v827 = vmul.f32 %v694, %v694
  %v828 = vmul.f32 %v695, %v695
  %v829 = vmul.f32 %v696, %v696
  %v830 = vmul.f32 %v697, %v697
  %v831 = vmul.f32 %v698, %v698
  %v832 = vmul.f32 %v699, %v699
  %v833 = vmul.f32 %v700, %v700
  %v834 = vmul.f32 %v701, %v701
  %v835 = vmul.f32 %v702, %v702
  %v836 = vmul.f32 %v703, %v703
  %v837 = vmul.f32 %v704, %v704
  %v838 = vmul.f32 %v705, %v705
  %v839 = vmul.f32 %v706, %v706
  %v840 = vmul.f32 %v707, %v707
  %v841 = vmul.f32 %v708, %v708
  %v842 = vmul.f32 %v709, %v709
  %v843 = vmul.f32 %v710, %v710
  %v844 = vmul.f32 %v711, %v711
  %v845 = vmul.f32 %v712, %v712
  %v846 = vmul.f32 %v713, %v713
  %v847 = vmul.f32 %v714, %v714
  %v848 = vmul.f32 %v715, %v715
  %v849 = vmul.f32 %v716, %v716
  %v850 = vmul.f32 %v717, %v717
  %v851 = vmul.f32 %v718, %v718
  %v852 = vmul.f32 %v719, %v719
  %v853 = vmul.f32 %v720, %v720
  %v854 = vmul.f32 %v721, %v721
  %v855 = vmul.f32 %v722, %v722
  %v856 = vmul.f32 %v723, %v723
  %v857 = vmul.f32 %v724, %v724
  %v858 = vmul.f32 %v725, %v725
  %v859 = vmul.f32 %v726, %v726
  %v860 = vmul.f32 %v727, %v727
  %v861 = vmul.f32 %v728, %v728
  %v862 = vmul.f32 %v729, %v729
  %v863 = vmul.f32 %v730, %v730
  %v864 = vmul.f32 %v731, %v731
  %v865 = vmul.f32 %v732, %v732
  %v866 = vmul.f32 %v733, %v733
  %v867 = vmul.f32 %v734, %v734
  %v868 = vmul.f32 %v735, %v735
  %v869 = vmul.f32 %v736, %v736
  %v870 = vmul.f32 %v737, %v737
  %v871 = vmul.f32 %v738, %v738
  %v872 = vmul.f32 %v739, %v739
  %v873 = vmul.f32 %v740, %v740
  %v874 = vmul.f32 %v741, %v741
  %v875 = vadd.f32 %v811, %v812
  %v876 = vadd.f32 %v875, %v813
  %v877 = vadd.f32 %v876, %v814
  %v878 = vadd.f32 %v877, %v815
  %v879 = vadd.f32 %v878, %v816
  %v880 = vadd.f32 %v879, %v817
  %v881 = vadd.f32 %v880, %v818
  %v882 = vadd.f32 %v881, %v819
  %v883 = vadd.f32 %v882, %v820
  %v884 = vadd.f32 %v883, %v821
  %v885 = vadd.f32 %v884, %v822
  %v886 = vadd.f32 %v885, %v823
  %v887 = vadd.f32 %v886, %v824
  %v888 = vadd.f32 %v887, %v825
  %v889 = vadd.f32 %v888, %v826
  %v890 = vadd.f32 %v889, %v827
  %v891 = vadd.f32 %v890, %v828
  %v892 = vadd.f32 %v891, %v829
  %v893 = vadd.f32 %v892, %v830
  %v894 = vadd.f32 %v893, %v831
  %v895 = vadd.f32 %v894, %v832
  %v896 = vadd.f32 %v895, %v833
  %v897 = vadd.f32 %v896, %v834
  %v898 = vadd.f32 %v897, %v835
  %v899 = vadd.f32 %v898, %v836
  %v900 = vadd.f32 %v899, %v837
  %v901 = vadd.f32 %v900, %v838
  %v902 = vadd.f32 %v901, %v839
  %v903 = vadd.f32 %v902, %v840
  %v904 = vadd.f32 %v903, %v841
  %v905 = vadd.f32 %v904, %v842
  %v906 = vadd.f32 %v905, %v843
  %v907 = vadd.f32 %v906, %v844
  %v908 = vadd.f32 %v907, %v845
  %v909 = vadd.f32 %v908, %v846
  %v910 = vadd.f32 %v909, %v847
  %v911 = vadd.f32 %v910, %v848
  %v912 = vadd.f32 %v911, %v849
  %v913 = vadd.f32 %v912, %v850
  %v914 = vadd.f32 %v913, %v851
  %v915 = vadd.f32 %v914, %v852
  %v916 = vadd.f32 %v915, %v853
  %v917 = vadd.f32 %v916, %v854
  %v918 = vadd.f32 %v917, %v855
  %v919 = vadd.f32 %v918, %v856
  %v920 = vadd.f32 %v919, %v857
  %v921 = vadd.f32 %v920, %v858
  %v922 = vadd.f32 %v921, %v859
  %v923 = vadd.f32 %v922, %v860
  %v924 = vadd.f32 %v923, %v861
  %v925 = vadd.f32 %v924, %v862
  %v926 = vadd.f32 %v925, %v863
  %v927 = vadd.f32 %v926, %v864
  %v928 = vadd.f32 %v927, %v865
  %v929 = vadd.f32 %v928, %v866
  %v930 = vadd.f32 %v929, %v867
  %v931 = vadd.f32 %v930, %v868
  %v932 = vadd.f32 %v931, %v869
  %v933 = vadd.f32 %v932, %v870
  %v934 = vadd.f32 %v933, %v871
  %v935 = vadd.f32 %v934, %v872
  %v936 = vadd.f32 %v935, %v873
  %v937 = vadd.f32 %v936, %v874
  %v938 = vrot.slane %v937, 4
  %v939 = vadd.f32 %v937, %v938
  %v940 = vrot.slane %v939, 2
  %v941 = vadd.f32 %v939, %v940
  %v942 = vrot.slane %v941, 1
  %v943 = vadd.f32 %v941, %v942
  %v944 = vmul.f32 %v810, 0.001953125
  %v945 = vmul.f32 %v943, 0.001953125
  %v946 = vmul.f32 %v944, %v944
  %v947 = vsub.f32 %v945, %v946
  %v948 = vsub.f32 %v678, %v944
  %v949 = vsub.f32 %v679, %v944
  %v950 = vsub.f32 %v680, %v944
  %v951 = vsub.f32 %v681, %v944
  %v952 = vsub.f32 %v682, %v944
  %v953 = vsub.f32 %v683, %v944
  %v954 = vsub.f32 %v684, %v944
  %v955 = vsub.f32 %v685, %v944
  %v956 = vsub.f32 %v686, %v944
  %v957 = vsub.f32 %v687, %v944
  %v958 = vsub.f32 %v688, %v944
  %v959 = vsub.f32 %v689, %v944
  %v960 = vsub.f32 %v690, %v944
  %v961 = vsub.f32 %v691, %v944
  %v962 = vsub.f32 %v692, %v944
  %v963 = vsub.f32 %v693, %v944
  %v964 = vsub.f32 %v694, %v944
  %v965 = vsub.f32 %v695, %v944
  %v966 = vsub.f32 %v696, %v944
  %v967 = vsub.f32 %v697, %v944
  %v968 = vsub.f32 %v698, %v944
  %v969 = vsub.f32 %v699, %v944
  %v970 = vsub.f32 %v700, %v944
  %v971 = vsub.f32 %v701, %v944
  %v972 = vsub.f32 %v702, %v944
  %v973 = vsub.f32 %v703, %v944
  %v974 = vsub.f32 %v704, %v944
  %v975 = vsub.f32 %v705, %v944
  %v976 = vsub.f32 %v706, %v944
  %v977 = vsub.f32 %v707, %v944
  %v978 = vsub.f32 %v708, %v944
  %v979 = vsub.f32 %v709, %v944
  %v980 = vsub.f32 %v710, %v944
  %v981 = vsub.f32 %v711, %v944
  %v982 = vsub.f32 %v712, %v944
  %v983 = vsub.f32 %v713, %v944
  %v984 = vsub.f32 %v714, %v944
  %v985 = vsub.f32 %v715, %v944
  %v986 = vsub.f32 %v716, %v944
  %v987 = vsub.f32 %v717, %v944
  %v988 = vsub.f32 %v718, %v944
  %v989 = vsub.f32 %v719, %v944
  %v990 = vsub.f32 %v720, %v944
  %v991 = vsub.f32 %v721, %v944
  %v992 = vsub.f32 %v722, %v944
  %v993 = vsub.f32 %v723, %v944
  %v994 = vsub.f32 %v724, %v944
  %v995 = vsub.f32 %v725, %v944
  %v996 = vsub.f32 %v726, %v944
  %v997 = vsub.f32 %v727, %v944
  %v998 = vsub.f32 %v728, %v944
  %v999 = vsub.f32 %v729, %v944
  %v1000 = vsub.f32 %v730, %v944
  %v1001 = vsub.f32 %v731, %v944
  %v1002 = vsub.f32 %v732, %v944
  %v1003 = vsub.f32 %v733, %v944
  %v1004 = vsub.f32 %v734, %v944
  %v1005 = vsub.f32 %v735, %v944
  %v1006 = vsub.f32 %v736, %v944
  %v1007 = vsub.f32 %v737, %v944
  %v1008 = vsub.f32 %v738, %v944
  %v1009 = vsub.f32 %v739, %v944
  %v1010 = vsub.f32 %v740, %v944
  %v1011 = vsub.f32 %v741, %v944
  %v1012 = vadd.f32 %v947, 1e-05
  %v1013 = vrsqrt.pop %v1012
  %v1014 = vld [vmem:[%s3] sm:$0x1]
  %v1015 = vmul.f32 %v1013, %v1014
  %v1016 = vlaneseq
  %v1017 = vshrl.u32 %v1016, 7
  %v1018 = vsub.s32 0, %v1017
  %v1019 = vrot.slane %v1015, %v1018
  %v1020 = vmul.f32 %v948, %v1019
  %v1021 = vmul.f32 %v949, %v1019
  %v1022 = vmul.f32 %v950, %v1019
  %v1023 = vmul.f32 %v951, %v1019
  %v1024 = vmul.f32 %v952, %v1019
  %v1025 = vmul.f32 %v953, %v1019
  %v1026 = vmul.f32 %v954, %v1019
  %v1027 = vmul.f32 %v955, %v1019
  %v1028 = vmul.f32 %v956, %v1019
  %v1029 = vmul.f32 %v957, %v1019
  %v1030 = vmul.f32 %v958, %v1019
  %v1031 = vmul.f32 %v959, %v1019
  %v1032 = vmul.f32 %v960, %v1019
  %v1033 = vmul.f32 %v961, %v1019
  %v1034 = vmul.f32 %v962, %v1019
  %v1035 = vmul.f32 %v963, %v1019
  %v1036 = vmul.f32 %v964, %v1019
  %v1037 = vmul.f32 %v965, %v1019
  %v1038 = vmul.f32 %v966, %v1019
  %v1039 = vmul.f32 %v967, %v1019
  %v1040 = vmul.f32 %v968, %v1019
  %v1041 = vmul.f32 %v969, %v1019
  %v1042 = vmul.f32 %v970, %v1019
  %v1043 = vmul.f32 %v971, %v1019
  %v1044 = vmul.f32 %v972, %v1019
  %v1045 = vmul.f32 %v973, %v1019
  %v1046 = vmul.f32 %v974, %v1019
  %v1047 = vmul.f32 %v975, %v1019
  %v1048 = vmul.f32 %v976, %v1019
  %v1049 = vmul.f32 %v977, %v1019
  %v1050 = vmul.f32 %v978, %v1019
  %v1051 = vmul.f32 %v979, %v1019
  %v1052 = vmul.f32 %v980, %v1019
  %v1053 = vmul.f32 %v981, %v1019
  %v1054 = vmul.f32 %v982, %v1019
  %v1055 = vmul.f32 %v983, %v1019
  %v1056 = vmul.f32 %v984, %v1019
  %v1057 = vmul.f32 %v985, %v1019
  %v1058 = vmul.f32 %v986, %v1019
  %v1059 = vmul.f32 %v987, %v1019
  %v1060 = vmul.f32 %v988, %v1019
  %v1061 = vmul.f32 %v989, %v1019
  %v1062 = vmul.f32 %v990, %v1019
  %v1063 = vmul.f32 %v991, %v1019
  %v1064 = vmul.f32 %v992, %v1019
  %v1065 = vmul.f32 %v993, %v1019
  %v1066 = vmul.f32 %v994, %v1019
  %v1067 = vmul.f32 %v995, %v1019
  %v1068 = vmul.f32 %v996, %v1019
  %v1069 = vmul.f32 %v997, %v1019
  %v1070 = vmul.f32 %v998, %v1019
  %v1071 = vmul.f32 %v999, %v1019
  %v1072 = vmul.f32 %v1000, %v1019
  %v1073 = vmul.f32 %v1001, %v1019
  %v1074 = vmul.f32 %v1002, %v1019
  %v1075 = vmul.f32 %v1003, %v1019
  %v1076 = vmul.f32 %v1004, %v1019
  %v1077 = vmul.f32 %v1005, %v1019
  %v1078 = vmul.f32 %v1006, %v1019
  %v1079 = vmul.f32 %v1007, %v1019
  %v1080 = vmul.f32 %v1008, %v1019
  %v1081 = vmul.f32 %v1009, %v1019
  %v1082 = vmul.f32 %v1010, %v1019
  %v1083 = vmul.f32 %v1011, %v1019
  %v1084 = vld [vmem:[%s4] sm:$0x1]
  %v1086 = vlaneseq
  %v1087 = vshrl.u32 %v1086, 7
  %v1088 = vsub.s32 0, %v1087
  %v1089 = vrot.slane %v1084, %v1088
  %v1091 = vadd.f32 %v1020, %v1089
  %v1092 = vadd.f32 %v1021, %v1089
  %v1093 = vadd.f32 %v1022, %v1089
  %v1094 = vadd.f32 %v1023, %v1089
  %v1095 = vadd.f32 %v1024, %v1089
  %v1096 = vadd.f32 %v1025, %v1089
  %v1097 = vadd.f32 %v1026, %v1089
  %v1098 = vadd.f32 %v1027, %v1089
  %v1099 = vadd.f32 %v1028, %v1089
  %v1100 = vadd.f32 %v1029, %v1089
  %v1101 = vadd.f32 %v1030, %v1089
  %v1102 = vadd.f32 %v1031, %v1089
  %v1103 = vadd.f32 %v1032, %v1089
  %v1104 = vadd.f32 %v1033, %v1089
  %v1105 = vadd.f32 %v1034, %v1089
  %v1106 = vadd.f32 %v1035, %v1089
  %v1107 = vadd.f32 %v1036, %v1089
  %v1108 = vadd.f32 %v1037, %v1089
  %v1109 = vadd.f32 %v1038, %v1089
  %v1110 = vadd.f32 %v1039, %v1089
  %v1111 = vadd.f32 %v1040, %v1089
  %v1112 = vadd.f32 %v1041, %v1089
  %v1113 = vadd.f32 %v1042, %v1089
  %v1114 = vadd.f32 %v1043, %v1089
  %v1115 = vadd.f32 %v1044, %v1089
  %v1116 = vadd.f32 %v1045, %v1089
  %v1117 = vadd.f32 %v1046, %v1089
  %v1118 = vadd.f32 %v1047, %v1089
  %v1119 = vadd.f32 %v1048, %v1089
  %v1120 = vadd.f32 %v1049, %v1089
  %v1121 = vadd.f32 %v1050, %v1089
  %v1122 = vadd.f32 %v1051, %v1089
  %v1123 = vadd.f32 %v1052, %v1089
  %v1124 = vadd.f32 %v1053, %v1089
  %v1125 = vadd.f32 %v1054, %v1089
  %v1126 = vadd.f32 %v1055, %v1089
  %v1127 = vadd.f32 %v1056, %v1089
  %v1128 = vadd.f32 %v1057, %v1089
  %v1129 = vadd.f32 %v1058, %v1089
  %v1130 = vadd.f32 %v1059, %v1089
  %v1131 = vadd.f32 %v1060, %v1089
  %v1132 = vadd.f32 %v1061, %v1089
  %v1133 = vadd.f32 %v1062, %v1089
  %v1134 = vadd.f32 %v1063, %v1089
  %v1135 = vadd.f32 %v1064, %v1089
  %v1136 = vadd.f32 %v1065, %v1089
  %v1137 = vadd.f32 %v1066, %v1089
  %v1138 = vadd.f32 %v1067, %v1089
  %v1139 = vadd.f32 %v1068, %v1089
  %v1140 = vadd.f32 %v1069, %v1089
  %v1141 = vadd.f32 %v1070, %v1089
  %v1142 = vadd.f32 %v1071, %v1089
  %v1143 = vadd.f32 %v1072, %v1089
  %v1144 = vadd.f32 %v1073, %v1089
  %v1145 = vadd.f32 %v1074, %v1089
  %v1146 = vadd.f32 %v1075, %v1089
  %v1147 = vadd.f32 %v1076, %v1089
  %v1148 = vadd.f32 %v1077, %v1089
  %v1149 = vadd.f32 %v1078, %v1089
  %v1150 = vadd.f32 %v1079, %v1089
  %v1151 = vadd.f32 %v1080, %v1089
  %v1152 = vadd.f32 %v1081, %v1089
  %v1153 = vadd.f32 %v1082, %v1089
  %v1154 = vadd.f32 %v1083, %v1089
  %v1155 = vpack.c.bf16 %v1092, %v1091
  %v1156 = vpack.c.bf16 %v1094, %v1093
  %v1157 = vpack.c.bf16 %v1096, %v1095
  %v1158 = vpack.c.bf16 %v1098, %v1097
  %v1159 = vpack.c.bf16 %v1100, %v1099
  %v1160 = vpack.c.bf16 %v1102, %v1101
  %v1161 = vpack.c.bf16 %v1104, %v1103
  %v1162 = vpack.c.bf16 %v1106, %v1105
  %v1163 = vpack.c.bf16 %v1108, %v1107
  %v1164 = vpack.c.bf16 %v1110, %v1109
  %v1165 = vpack.c.bf16 %v1112, %v1111
  %v1166 = vpack.c.bf16 %v1114, %v1113
  %v1167 = vpack.c.bf16 %v1116, %v1115
  %v1168 = vpack.c.bf16 %v1118, %v1117
  %v1169 = vpack.c.bf16 %v1120, %v1119
  %v1170 = vpack.c.bf16 %v1122, %v1121
  %v1171 = vpack.c.bf16 %v1124, %v1123
  %v1172 = vpack.c.bf16 %v1126, %v1125
  %v1173 = vpack.c.bf16 %v1128, %v1127
  %v1174 = vpack.c.bf16 %v1130, %v1129
  %v1175 = vpack.c.bf16 %v1132, %v1131
  %v1176 = vpack.c.bf16 %v1134, %v1133
  %v1177 = vpack.c.bf16 %v1136, %v1135
  %v1178 = vpack.c.bf16 %v1138, %v1137
  %v1179 = vpack.c.bf16 %v1140, %v1139
  %v1180 = vpack.c.bf16 %v1142, %v1141
  %v1181 = vpack.c.bf16 %v1144, %v1143
  %v1182 = vpack.c.bf16 %v1146, %v1145
  %v1183 = vpack.c.bf16 %v1148, %v1147
  %v1184 = vpack.c.bf16 %v1150, %v1149
  %v1185 = vpack.c.bf16 %v1152, %v1151
  %v1186 = vpack.c.bf16 %v1154, %v1153
  %v1219 = vunpack.c.l.b16 %v1155
  %v1220 = vunpack.c.h.b16 %v1155
  %v1221 = vunpack.c.l.b16 %v1156
  %v1222 = vunpack.c.h.b16 %v1156
  %v1223 = vunpack.c.l.b16 %v1157
  %v1224 = vunpack.c.h.b16 %v1157
  %v1225 = vunpack.c.l.b16 %v1158
  %v1226 = vunpack.c.h.b16 %v1158
  %v1227 = vunpack.c.l.b16 %v1159
  %v1228 = vunpack.c.h.b16 %v1159
  %v1229 = vunpack.c.l.b16 %v1160
  %v1230 = vunpack.c.h.b16 %v1160
  %v1231 = vunpack.c.l.b16 %v1161
  %v1232 = vunpack.c.h.b16 %v1161
  %v1233 = vunpack.c.l.b16 %v1162
  %v1234 = vunpack.c.h.b16 %v1162
  %v1235 = vunpack.c.l.b16 %v1163
  %v1236 = vunpack.c.h.b16 %v1163
  %v1237 = vunpack.c.l.b16 %v1164
  %v1238 = vunpack.c.h.b16 %v1164
  %v1239 = vunpack.c.l.b16 %v1165
  %v1240 = vunpack.c.h.b16 %v1165
  %v1241 = vunpack.c.l.b16 %v1166
  %v1242 = vunpack.c.h.b16 %v1166
  %v1243 = vunpack.c.l.b16 %v1167
  %v1244 = vunpack.c.h.b16 %v1167
  %v1245 = vunpack.c.l.b16 %v1168
  %v1246 = vunpack.c.h.b16 %v1168
  %v1247 = vunpack.c.l.b16 %v1169
  %v1248 = vunpack.c.h.b16 %v1169
  %v1249 = vunpack.c.l.b16 %v1170
  %v1250 = vunpack.c.h.b16 %v1170
  %v1251 = vunpack.c.l.b16 %v1171
  %v1252 = vunpack.c.h.b16 %v1171
  %v1253 = vunpack.c.l.b16 %v1172
  %v1254 = vunpack.c.h.b16 %v1172
  %v1255 = vunpack.c.l.b16 %v1173
  %v1256 = vunpack.c.h.b16 %v1173
  %v1257 = vunpack.c.l.b16 %v1174
  %v1258 = vunpack.c.h.b16 %v1174
  %v1259 = vunpack.c.l.b16 %v1175
  %v1260 = vunpack.c.h.b16 %v1175
  %v1261 = vunpack.c.l.b16 %v1176
  %v1262 = vunpack.c.h.b16 %v1176
  %v1263 = vunpack.c.l.b16 %v1177
  %v1264 = vunpack.c.h.b16 %v1177
  %v1265 = vunpack.c.l.b16 %v1178
  %v1266 = vunpack.c.h.b16 %v1178
  %v1267 = vunpack.c.l.b16 %v1179
  %v1268 = vunpack.c.h.b16 %v1179
  %v1269 = vunpack.c.l.b16 %v1180
  %v1270 = vunpack.c.h.b16 %v1180
  %v1271 = vunpack.c.l.b16 %v1181
  %v1272 = vunpack.c.h.b16 %v1181
  %v1273 = vunpack.c.l.b16 %v1182
  %v1274 = vunpack.c.h.b16 %v1182
  %v1275 = vunpack.c.l.b16 %v1183
  %v1276 = vunpack.c.h.b16 %v1183
  %v1277 = vunpack.c.l.b16 %v1184
  %v1278 = vunpack.c.h.b16 %v1184
  %v1279 = vunpack.c.l.b16 %v1185
  %v1280 = vunpack.c.h.b16 %v1185
  %v1281 = vunpack.c.l.b16 %v1186
  %v1282 = vunpack.c.h.b16 %v1186
  %v1283 = vpack.c.b16 %v1219, %v1219
  %v1284 = vpack.c.b16 %v1220, %v1220
  %v1285 = vpack.c.b16 %v1221, %v1221
  %v1286 = vpack.c.b16 %v1222, %v1222
  %v1287 = vpack.c.b16 %v1223, %v1223
  %v1288 = vpack.c.b16 %v1224, %v1224
  %v1289 = vpack.c.b16 %v1225, %v1225
  %v1290 = vpack.c.b16 %v1226, %v1226
  %v1291 = vpack.c.b16 %v1227, %v1227
  %v1292 = vpack.c.b16 %v1228, %v1228
  %v1293 = vpack.c.b16 %v1229, %v1229
  %v1294 = vpack.c.b16 %v1230, %v1230
  %v1295 = vpack.c.b16 %v1231, %v1231
  %v1296 = vpack.c.b16 %v1232, %v1232
  %v1297 = vpack.c.b16 %v1233, %v1233
  %v1298 = vpack.c.b16 %v1234, %v1234
  %v1299 = vpack.c.b16 %v1235, %v1235
  %v1300 = vpack.c.b16 %v1236, %v1236
  %v1301 = vpack.c.b16 %v1237, %v1237
  %v1302 = vpack.c.b16 %v1238, %v1238
  %v1303 = vpack.c.b16 %v1239, %v1239
  %v1304 = vpack.c.b16 %v1240, %v1240
  %v1305 = vpack.c.b16 %v1241, %v1241
  %v1306 = vpack.c.b16 %v1242, %v1242
  %v1307 = vpack.c.b16 %v1243, %v1243
  %v1308 = vpack.c.b16 %v1244, %v1244
  %v1309 = vpack.c.b16 %v1245, %v1245
  %v1310 = vpack.c.b16 %v1246, %v1246
  %v1311 = vpack.c.b16 %v1247, %v1247
  %v1312 = vpack.c.b16 %v1248, %v1248
  %v1313 = vpack.c.b16 %v1249, %v1249
  %v1314 = vpack.c.b16 %v1250, %v1250
  %v1315 = vpack.c.b16 %v1251, %v1251
  %v1316 = vpack.c.b16 %v1252, %v1252
  %v1317 = vpack.c.b16 %v1253, %v1253
  %v1318 = vpack.c.b16 %v1254, %v1254
  %v1319 = vpack.c.b16 %v1255, %v1255
  %v1320 = vpack.c.b16 %v1256, %v1256
  %v1321 = vpack.c.b16 %v1257, %v1257
  %v1322 = vpack.c.b16 %v1258, %v1258
  %v1323 = vpack.c.b16 %v1259, %v1259
  %v1324 = vpack.c.b16 %v1260, %v1260
  %v1325 = vpack.c.b16 %v1261, %v1261
  %v1326 = vpack.c.b16 %v1262, %v1262
  %v1327 = vpack.c.b16 %v1263, %v1263
  %v1328 = vpack.c.b16 %v1264, %v1264
  %v1329 = vpack.c.b16 %v1265, %v1265
  %v1330 = vpack.c.b16 %v1266, %v1266
  %v1331 = vpack.c.b16 %v1267, %v1267
  %v1332 = vpack.c.b16 %v1268, %v1268
  %v1333 = vpack.c.b16 %v1269, %v1269
  %v1334 = vpack.c.b16 %v1270, %v1270
  %v1335 = vpack.c.b16 %v1271, %v1271
  %v1336 = vpack.c.b16 %v1272, %v1272
  %v1337 = vpack.c.b16 %v1273, %v1273
  %v1338 = vpack.c.b16 %v1274, %v1274
  %v1339 = vpack.c.b16 %v1275, %v1275
  %v1340 = vpack.c.b16 %v1276, %v1276
  %v1341 = vpack.c.b16 %v1277, %v1277
  %v1342 = vpack.c.b16 %v1278, %v1278
  %v1343 = vpack.c.b16 %v1279, %v1279
  %v1344 = vpack.c.b16 %v1280, %v1280
  %v1345 = vpack.c.b16 %v1281, %v1281
  %v1346 = vpack.c.b16 %v1282, %v1282
  %1411 = vst [vmem:[%s5] sm:$0xf] %v1283
  %1412 = vst [vmem:[%s5 + $0x4] sm:$0xf] %v1284
  %1413 = vst [vmem:[%s5 + $0x8] sm:$0xf] %v1285
  %1414 = vst [vmem:[%s5 + $0xc] sm:$0xf] %v1286
  %1415 = vst [vmem:[%s5 + $0x10] sm:$0xf] %v1287
  %1416 = vst [vmem:[%s5 + $0x14] sm:$0xf] %v1288
  %1417 = vst [vmem:[%s5 + $0x18] sm:$0xf] %v1289
  %1418 = vst [vmem:[%s5 + $0x1c] sm:$0xf] %v1290
  %1419 = vst [vmem:[%s5 + $0x20] sm:$0xf] %v1291
  %1420 = vst [vmem:[%s5 + $0x24] sm:$0xf] %v1292
  %1421 = vst [vmem:[%s5 + $0x28] sm:$0xf] %v1293
  %1422 = vst [vmem:[%s5 + $0x2c] sm:$0xf] %v1294
  %1423 = vst [vmem:[%s5 + $0x30] sm:$0xf] %v1295
  %1424 = vst [vmem:[%s5 + $0x34] sm:$0xf] %v1296
  %1425 = vst [vmem:[%s5 + $0x38] sm:$0xf] %v1297
  %1426 = vst [vmem:[%s5 + $0x3c] sm:$0xf] %v1298
  %1427 = vst [vmem:[%s5 + $0x40] sm:$0xf] %v1299
  %1428 = vst [vmem:[%s5 + $0x44] sm:$0xf] %v1300
  %1429 = vst [vmem:[%s5 + $0x48] sm:$0xf] %v1301
  %1430 = vst [vmem:[%s5 + $0x4c] sm:$0xf] %v1302
  %1431 = vst [vmem:[%s5 + $0x50] sm:$0xf] %v1303
  %1432 = vst [vmem:[%s5 + $0x54] sm:$0xf] %v1304
  %1433 = vst [vmem:[%s5 + $0x58] sm:$0xf] %v1305
  %1434 = vst [vmem:[%s5 + $0x5c] sm:$0xf] %v1306
  %1435 = vst [vmem:[%s5 + $0x60] sm:$0xf] %v1307
  %1436 = vst [vmem:[%s5 + $0x64] sm:$0xf] %v1308
  %1437 = vst [vmem:[%s5 + $0x68] sm:$0xf] %v1309
  %1438 = vst [vmem:[%s5 + $0x6c] sm:$0xf] %v1310
  %1439 = vst [vmem:[%s5 + $0x70] sm:$0xf] %v1311
  %1440 = vst [vmem:[%s5 + $0x74] sm:$0xf] %v1312
  %1441 = vst [vmem:[%s5 + $0x78] sm:$0xf] %v1313
  %1442 = vst [vmem:[%s5 + $0x7c] sm:$0xf] %v1314
  %1443 = vst [vmem:[%s5 + $0x80] sm:$0xf] %v1315
  %1444 = vst [vmem:[%s5 + $0x84] sm:$0xf] %v1316
  %1445 = vst [vmem:[%s5 + $0x88] sm:$0xf] %v1317
  %1446 = vst [vmem:[%s5 + $0x8c] sm:$0xf] %v1318
  %1447 = vst [vmem:[%s5 + $0x90] sm:$0xf] %v1319
  %1448 = vst [vmem:[%s5 + $0x94] sm:$0xf] %v1320
  %1449 = vst [vmem:[%s5 + $0x98] sm:$0xf] %v1321
  %1450 = vst [vmem:[%s5 + $0x9c] sm:$0xf] %v1322
  %1451 = vst [vmem:[%s5 + $0xa0] sm:$0xf] %v1323
  %1452 = vst [vmem:[%s5 + $0xa4] sm:$0xf] %v1324
  %1453 = vst [vmem:[%s5 + $0xa8] sm:$0xf] %v1325
  %1454 = vst [vmem:[%s5 + $0xac] sm:$0xf] %v1326
  %1455 = vst [vmem:[%s5 + $0xb0] sm:$0xf] %v1327
  %1456 = vst [vmem:[%s5 + $0xb4] sm:$0xf] %v1328
  %1457 = vst [vmem:[%s5 + $0xb8] sm:$0xf] %v1329
  %1458 = vst [vmem:[%s5 + $0xbc] sm:$0xf] %v1330
  %1459 = vst [vmem:[%s5 + $0xc0] sm:$0xf] %v1331
  %1460 = vst [vmem:[%s5 + $0xc4] sm:$0xf] %v1332
  %1461 = vst [vmem:[%s5 + $0xc8] sm:$0xf] %v1333
  %1462 = vst [vmem:[%s5 + $0xcc] sm:$0xf] %v1334
  %1463 = vst [vmem:[%s5 + $0xd0] sm:$0xf] %v1335
  %1464 = vst [vmem:[%s5 + $0xd4] sm:$0xf] %v1336
  %1465 = vst [vmem:[%s5 + $0xd8] sm:$0xf] %v1337
  %1466 = vst [vmem:[%s5 + $0xdc] sm:$0xf] %v1338
  %1467 = vst [vmem:[%s5 + $0xe0] sm:$0xf] %v1339
  %1468 = vst [vmem:[%s5 + $0xe4] sm:$0xf] %v1340
  %1469 = vst [vmem:[%s5 + $0xe8] sm:$0xf] %v1341
  %1470 = vst [vmem:[%s5 + $0xec] sm:$0xf] %v1342
  %1471 = vst [vmem:[%s5 + $0xf0] sm:$0xf] %v1343
  %1472 = vst [vmem:[%s5 + $0xf4] sm:$0xf] %v1344
  %1473 = vst [vmem:[%s5 + $0xf8] sm:$0xf] %v1345
  %1474 = vst [vmem:[%s5 + $0xfc] sm:$0xf] %v1346
  // Predicated region
  $region22: #{autoencoder_forward.4} parent=0 // pred_check
    _
  $region23: #{autoencoder_forward.4} parent=0 // pred_check_branch
    %1476 = sbr.rel (0) target = $region25
  $region24: #{autoencoder_forward.4} parent=0 // pred_region
    _
  $region25: #{autoencoder_forward.4} parent=0 // pred_fallthru
    _
  // Predicated region
  $region26: #{autoencoder_forward.4} parent=0 // pred_check
    _
  $region27: #{autoencoder_forward.4} parent=0 // pred_check_branch
    %1478 = sbr.rel (0) target = $region29
  $region28: #{autoencoder_forward.4} parent=0 // pred_region
    _
  $region29: #{autoencoder_forward.4} parent=0 // pred_fallthru
    _

// kernel: autoencoder_forward.5
$region0: #{autoencoder_forward.5}
  #allocation0 [shape = 'u32[]', space=smem, size = 0x4, offset = 0x4, fixed_abs, tag = 'smem constant byte address 0x4 - core index']
  #allocation1 [shape = 'u32[144,128]{1,0:T(1,128)}', space=vmem, size = 0x12000, scoped, tag = 'internal scratch']
  %s0 = inlined_call_operand.vmem [shape: bf16[128,1152], index: 0, kind: input, shape index: {}]
  %s1 = inlined_call_operand.vmem [shape: bf16[1152,128], index: 1, kind: input, shape index: {}]
  %s2 = inlined_call_operand.vmem [shape: f32[1,128], index: 2, kind: input, shape index: {}]
  %s3 = inlined_call_operand.vmem [shape: f32[1,128], index: 3, kind: input, shape index: {}]
  %s4 = inlined_call_operand.vmem [shape: f32[1,128], index: 4, kind: input, shape index: {}]
  %s5 = inlined_call_operand.vmem [shape: bf16[128,128], index: 5, kind: output, shape index: {}]
  %s6 = sld [smem:[#allocation0]]
  $region30: #{autoencoder_forward.5} parent=0
    _
  %s8 = ssub.s32 1, %s6
  %s9 = scalar_select 0, %s8, %s6
  // Predicated region
  $region2: #{autoencoder_forward.5} parent=0 // pred_check
    _
  $region3: #{autoencoder_forward.5} parent=0 // pred_check_branch
    %11 = sbr.rel (0) target = $region5
  $region4: #{autoencoder_forward.5} parent=0 // pred_region
    _
  $region5: #{autoencoder_forward.5} parent=0 // pred_fallthru
    _
  // Predicated region
  $region6: #{autoencoder_forward.5} parent=0 // pred_check
    _
  $region7: #{autoencoder_forward.5} parent=0 // pred_check_branch
    %13 = sbr.rel (0) target = $region9
  $region8: #{autoencoder_forward.5} parent=0 // pred_region
    _
  $region9: #{autoencoder_forward.5} parent=0 // pred_fallthru
    _
  // Predicated region
  $region10: #{autoencoder_forward.5} parent=0 // pred_check
    _
  $region11: #{autoencoder_forward.5} parent=0 // pred_check_branch
    %15 = sbr.rel (0) target = $region13
  $region12: #{autoencoder_forward.5} parent=0 // pred_region
    _
  $region13: #{autoencoder_forward.5} parent=0 // pred_fallthru
    _
  // Predicated region
  $region14: #{autoencoder_forward.5} parent=0 // pred_check
    _
  $region15: #{autoencoder_forward.5} parent=0 // pred_check_branch
    %17 = sbr.rel (0) target = $region17
  $region16: #{autoencoder_forward.5} parent=0 // pred_region
    _
  $region17: #{autoencoder_forward.5} parent=0 // pred_fallthru
    _
  // Predicated region
  $region18: #{autoencoder_forward.5} parent=0 // pred_check
    _
  $region19: #{autoencoder_forward.5} parent=0 // pred_check_branch
    %19 = sbr.rel (0) target = $region21
  $region20: #{autoencoder_forward.5} parent=0 // pred_region
    _
  $region21: #{autoencoder_forward.5} parent=0 // pred_fallthru
    _
  %v21 = vld [vmem:[%s0] sm:$0xff]
  %v22 = vld [vmem:[%s0 + $0x8] sm:$0xff]
  %v23 = vld [vmem:[%s0 + $0x10] sm:$0xff]
  %v24 = vld [vmem:[%s0 + $0x18] sm:$0xff]
  %v25 = vld [vmem:[%s0 + $0x20] sm:$0xf]
  %v26 = vld [vmem:[%s0 + $0x24] sm:$0xff]
  %v27 = vld [vmem:[%s0 + $0x2c] sm:$0xff]
  %v28 = vld [vmem:[%s0 + $0x34] sm:$0xff]
  %v29 = vld [vmem:[%s0 + $0x3c] sm:$0xff]
  %v30 = vld [vmem:[%s0 + $0x44] sm:$0xf]
  %v31 = vld [vmem:[%s0 + $0x48] sm:$0xff]
  %v32 = vld [vmem:[%s0 + $0x50] sm:$0xff]
  %v33 = vld [vmem:[%s0 + $0x58] sm:$0xff]
  %v34 = vld [vmem:[%s0 + $0x60] sm:$0xff]
  %v35 = vld [vmem:[%s0 + $0x68] sm:$0xf]
  %v36 = vld [vmem:[%s0 + $0x6c] sm:$0xff]
  %v37 = vld [vmem:[%s0 + $0x74] sm:$0xff]
  %v38 = vld [vmem:[%s0 + $0x7c] sm:$0xff]
  %v39 = vld [vmem:[%s0 + $0x84] sm:$0xff]
  %v40 = vld [vmem:[%s0 + $0x8c] sm:$0xf]
  %v41 = vld [vmem:[%s0 + $0x90] sm:$0xff]
  %v42 = vld [vmem:[%s0 + $0x98] sm:$0xff]
  %v43 = vld [vmem:[%s0 + $0xa0] sm:$0xff]
  %v44 = vld [vmem:[%s0 + $0xa8] sm:$0xff]
  %v45 = vld [vmem:[%s0 + $0xb0] sm:$0xf]
  %v46 = vld [vmem:[%s0 + $0xb4] sm:$0xff]
  %v47 = vld [vmem:[%s0 + $0xbc] sm:$0xff]
  %v48 = vld [vmem:[%s0 + $0xc4] sm:$0xff]
  %v49 = vld [vmem:[%s0 + $0xcc] sm:$0xff]
  %v50 = vld [vmem:[%s0 + $0xd4] sm:$0xf]
  %v51 = vld [vmem:[%s0 + $0xd8] sm:$0xff]
  %v52 = vld [vmem:[%s0 + $0xe0] sm:$0xff]
  %v53 = vld [vmem:[%s0 + $0xe8] sm:$0xff]
  %v54 = vld [vmem:[%s0 + $0xf0] sm:$0xff]
  %v55 = vld [vmem:[%s0 + $0xf8] sm:$0xf]
  %v56 = vld [vmem:[%s0 + $0xfc] sm:$0xff]
  %v57 = vld [vmem:[%s0 + $0x104] sm:$0xff]
  %v58 = vld [vmem:[%s0 + $0x10c] sm:$0xff]
  %v59 = vld [vmem:[%s0 + $0x114] sm:$0xff]
  %v60 = vld [vmem:[%s0 + $0x11c] sm:$0xf]
  %v61 = vld [vmem:[%s0 + $0x120] sm:$0xff]
  %v62 = vld [vmem:[%s0 + $0x128] sm:$0xff]
  %v63 = vld [vmem:[%s0 + $0x130] sm:$0xff]
  %v64 = vld [vmem:[%s0 + $0x138] sm:$0xff]
  %v65 = vld [vmem:[%s0 + $0x140] sm:$0xf]
  %v66 = vld [vmem:[%s0 + $0x144] sm:$0xff]
  %v67 = vld [vmem:[%s0 + $0x14c] sm:$0xff]
  %v68 = vld [vmem:[%s0 + $0x154] sm:$0xff]
  %v69 = vld [vmem:[%s0 + $0x15c] sm:$0xff]
  %v70 = vld [vmem:[%s0 + $0x164] sm:$0xf]
  %v71 = vld [vmem:[%s0 + $0x168] sm:$0xff]
  %v72 = vld [vmem:[%s0 + $0x170] sm:$0xff]
  %v73 = vld [vmem:[%s0 + $0x178] sm:$0xff]
  %v74 = vld [vmem:[%s0 + $0x180] sm:$0xff]
  %v75 = vld [vmem:[%s0 + $0x188] sm:$0xf]
  %v76 = vld [vmem:[%s0 + $0x18c] sm:$0xff]
  %v77 = vld [vmem:[%s0 + $0x194] sm:$0xff]
  %v78 = vld [vmem:[%s0 + $0x19c] sm:$0xff]
  %v79 = vld [vmem:[%s0 + $0x1a4] sm:$0xff]
  %v80 = vld [vmem:[%s0 + $0x1ac] sm:$0xf]
  %v81 = vld [vmem:[%s0 + $0x1b0] sm:$0xff]
  %v82 = vld [vmem:[%s0 + $0x1b8] sm:$0xff]
  %v83 = vld [vmem:[%s0 + $0x1c0] sm:$0xff]
  %v84 = vld [vmem:[%s0 + $0x1c8] sm:$0xff]
  %v85 = vld [vmem:[%s0 + $0x1d0] sm:$0xf]
  %v86 = vld [vmem:[%s0 + $0x1d4] sm:$0xff]
  %v87 = vld [vmem:[%s0 + $0x1dc] sm:$0xff]
  %v88 = vld [vmem:[%s0 + $0x1e4] sm:$0xff]
  %v89 = vld [vmem:[%s0 + $0x1ec] sm:$0xff]
  %v90 = vld [vmem:[%s0 + $0x1f4] sm:$0xf]
  %v91 = vld [vmem:[%s0 + $0x1f8] sm:$0xff]
  %v92 = vld [vmem:[%s0 + $0x200] sm:$0xff]
  %v93 = vld [vmem:[%s0 + $0x208] sm:$0xff]
  %v94 = vld [vmem:[%s0 + $0x210] sm:$0xff]
  %v95 = vld [vmem:[%s0 + $0x218] sm:$0xf]
  %v96 = vld [vmem:[%s0 + $0x21c] sm:$0xff]
  %v97 = vld [vmem:[%s0 + $0x224] sm:$0xff]
  %v98 = vld [vmem:[%s0 + $0x22c] sm:$0xff]
  %v99 = vld [vmem:[%s0 + $0x234] sm:$0xff]
  %v100 = vld [vmem:[%s0 + $0x23c] sm:$0xf]
  %v101 = vld [vmem:[%s1] sm:$0xf]
  %v102 = vld [vmem:[%s1 + $0x4] sm:$0xf]
  %v103 = vld [vmem:[%s1 + $0x8] sm:$0xf]
  %v104 = vld [vmem:[%s1 + $0xc] sm:$0xf]
  %v105 = vld [vmem:[%s1 + $0x10] sm:$0xf]
  %v106 = vld [vmem:[%s1 + $0x14] sm:$0xf]
  %v107 = vld [vmem:[%s1 + $0x18] sm:$0xf]
  %v108 = vld [vmem:[%s1 + $0x1c] sm:$0xf]
  %v109 = vld [vmem:[%s1 + $0x20] sm:$0xf]
  %v110 = vld [vmem:[%s1 + $0x24] sm:$0xf]
  %v111 = vld [vmem:[%s1 + $0x28] sm:$0xf]
  %v112 = vld [vmem:[%s1 + $0x2c] sm:$0xf]
  %v113 = vld [vmem:[%s1 + $0x30] sm:$0xf]
  %v114 = vld [vmem:[%s1 + $0x34] sm:$0xf]
  %v115 = vld [vmem:[%s1 + $0x38] sm:$0xf]
  %v116 = vld [vmem:[%s1 + $0x3c] sm:$0xf]
  %v117 = vld [vmem:[%s1 + $0x40] sm:$0xf]
  %v118 = vld [vmem:[%s1 + $0x44] sm:$0xf]
  %v119 = vld [vmem:[%s1 + $0x48] sm:$0xf]
  %v120 = vld [vmem:[%s1 + $0x4c] sm:$0xf]
  %v121 = vld [vmem:[%s1 + $0x50] sm:$0xf]
  %v122 = vld [vmem:[%s1 + $0x54] sm:$0xf]
  %v123 = vld [vmem:[%s1 + $0x58] sm:$0xf]
  %v124 = vld [vmem:[%s1 + $0x5c] sm:$0xf]
  %v125 = vld [vmem:[%s1 + $0x60] sm:$0xf]
  %v126 = vld [vmem:[%s1 + $0x64] sm:$0xf]
  %v127 = vld [vmem:[%s1 + $0x68] sm:$0xf]
  %v128 = vld [vmem:[%s1 + $0x6c] sm:$0xf]
  %v129 = vld [vmem:[%s1 + $0x70] sm:$0xf]
  %v130 = vld [vmem:[%s1 + $0x74] sm:$0xf]
  %v131 = vld [vmem:[%s1 + $0x78] sm:$0xf]
  %v132 = vld [vmem:[%s1 + $0x7c] sm:$0xf]
  %v133 = vld [vmem:[%s1 + $0x80] sm:$0xf]
  %v134 = vld [vmem:[%s1 + $0x84] sm:$0xf]
  %v135 = vld [vmem:[%s1 + $0x88] sm:$0xf]
  %v136 = vld [vmem:[%s1 + $0x8c] sm:$0xf]
  %v137 = vld [vmem:[%s1 + $0x90] sm:$0xf]
  %v138 = vld [vmem:[%s1 + $0x94] sm:$0xf]
  %v139 = vld [vmem:[%s1 + $0x98] sm:$0xf]
  %v140 = vld [vmem:[%s1 + $0x9c] sm:$0xf]
  %v141 = vld [vmem:[%s1 + $0xa0] sm:$0xf]
  %v142 = vld [vmem:[%s1 + $0xa4] sm:$0xf]
  %v143 = vld [vmem:[%s1 + $0xa8] sm:$0xf]
  %v144 = vld [vmem:[%s1 + $0xac] sm:$0xf]
  %v145 = vld [vmem:[%s1 + $0xb0] sm:$0xf]
  %v146 = vld [vmem:[%s1 + $0xb4] sm:$0xf]
  %v147 = vld [vmem:[%s1 + $0xb8] sm:$0xf]
  %v148 = vld [vmem:[%s1 + $0xbc] sm:$0xf]
  %v149 = vld [vmem:[%s1 + $0xc0] sm:$0xf]
  %v150 = vld [vmem:[%s1 + $0xc4] sm:$0xf]
  %v151 = vld [vmem:[%s1 + $0xc8] sm:$0xf]
  %v152 = vld [vmem:[%s1 + $0xcc] sm:$0xf]
  %v153 = vld [vmem:[%s1 + $0xd0] sm:$0xf]
  %v154 = vld [vmem:[%s1 + $0xd4] sm:$0xf]
  %v155 = vld [vmem:[%s1 + $0xd8] sm:$0xf]
  %v156 = vld [vmem:[%s1 + $0xdc] sm:$0xf]
  %v157 = vld [vmem:[%s1 + $0xe0] sm:$0xf]
  %v158 = vld [vmem:[%s1 + $0xe4] sm:$0xf]
  %v159 = vld [vmem:[%s1 + $0xe8] sm:$0xf]
  %v160 = vld [vmem:[%s1 + $0xec] sm:$0xf]
  %v161 = vld [vmem:[%s1 + $0xf0] sm:$0xf]
  %v162 = vld [vmem:[%s1 + $0xf4] sm:$0xf]
  %v163 = vld [vmem:[%s1 + $0xf8] sm:$0xf]
  %v164 = vld [vmem:[%s1 + $0xfc] sm:$0xf]
  %v165 = vld [vmem:[%s1 + $0x100] sm:$0xf]
  %v166 = vld [vmem:[%s1 + $0x104] sm:$0xf]
  %v167 = vld [vmem:[%s1 + $0x108] sm:$0xf]
  %v168 = vld [vmem:[%s1 + $0x10c] sm:$0xf]
  %v169 = vld [vmem:[%s1 + $0x110] sm:$0xf]
  %v170 = vld [vmem:[%s1 + $0x114] sm:$0xf]
  %v171 = vld [vmem:[%s1 + $0x118] sm:$0xf]
  %v172 = vld [vmem:[%s1 + $0x11c] sm:$0xf]
  %v173 = vld [vmem:[%s1 + $0x120] sm:$0xf]
  %v174 = vld [vmem:[%s1 + $0x124] sm:$0xf]
  %v175 = vld [vmem:[%s1 + $0x128] sm:$0xf]
  %v176 = vld [vmem:[%s1 + $0x12c] sm:$0xf]
  %v177 = vld [vmem:[%s1 + $0x130] sm:$0xf]
  %v178 = vld [vmem:[%s1 + $0x134] sm:$0xf]
  %v179 = vld [vmem:[%s1 + $0x138] sm:$0xf]
  %v180 = vld [vmem:[%s1 + $0x13c] sm:$0xf]
  %v181 = vld [vmem:[%s1 + $0x140] sm:$0xf]
  %v182 = vld [vmem:[%s1 + $0x144] sm:$0xf]
  %v183 = vld [vmem:[%s1 + $0x148] sm:$0xf]
  %v184 = vld [vmem:[%s1 + $0x14c] sm:$0xf]
  %v185 = vld [vmem:[%s1 + $0x150] sm:$0xf]
  %v186 = vld [vmem:[%s1 + $0x154] sm:$0xf]
  %v187 = vld [vmem:[%s1 + $0x158] sm:$0xf]
  %v188 = vld [vmem:[%s1 + $0x15c] sm:$0xf]
  %v189 = vld [vmem:[%s1 + $0x160] sm:$0xf]
  %v190 = vld [vmem:[%s1 + $0x164] sm:$0xf]
  %v191 = vld [vmem:[%s1 + $0x168] sm:$0xf]
  %v192 = vld [vmem:[%s1 + $0x16c] sm:$0xf]
  %v193 = vld [vmem:[%s1 + $0x170] sm:$0xf]
  %v194 = vld [vmem:[%s1 + $0x174] sm:$0xf]
  %v195 = vld [vmem:[%s1 + $0x178] sm:$0xf]
  %v196 = vld [vmem:[%s1 + $0x17c] sm:$0xf]
  %v197 = vld [vmem:[%s1 + $0x180] sm:$0xf]
  %v198 = vld [vmem:[%s1 + $0x184] sm:$0xf]
  %v199 = vld [vmem:[%s1 + $0x188] sm:$0xf]
  %v200 = vld [vmem:[%s1 + $0x18c] sm:$0xf]
  %v201 = vld [vmem:[%s1 + $0x190] sm:$0xf]
  %v202 = vld [vmem:[%s1 + $0x194] sm:$0xf]
  %v203 = vld [vmem:[%s1 + $0x198] sm:$0xf]
  %v204 = vld [vmem:[%s1 + $0x19c] sm:$0xf]
  %v205 = vld [vmem:[%s1 + $0x1a0] sm:$0xf]
  %v206 = vld [vmem:[%s1 + $0x1a4] sm:$0xf]
  %v207 = vld [vmem:[%s1 + $0x1a8] sm:$0xf]
  %v208 = vld [vmem:[%s1 + $0x1ac] sm:$0xf]
  %v209 = vld [vmem:[%s1 + $0x1b0] sm:$0xf]
  %v210 = vld [vmem:[%s1 + $0x1b4] sm:$0xf]
  %v211 = vld [vmem:[%s1 + $0x1b8] sm:$0xf]
  %v212 = vld [vmem:[%s1 + $0x1bc] sm:$0xf]
  %v213 = vld [vmem:[%s1 + $0x1c0] sm:$0xf]
  %v214 = vld [vmem:[%s1 + $0x1c4] sm:$0xf]
  %v215 = vld [vmem:[%s1 + $0x1c8] sm:$0xf]
  %v216 = vld [vmem:[%s1 + $0x1cc] sm:$0xf]
  %v217 = vld [vmem:[%s1 + $0x1d0] sm:$0xf]
  %v218 = vld [vmem:[%s1 + $0x1d4] sm:$0xf]
  %v219 = vld [vmem:[%s1 + $0x1d8] sm:$0xf]
  %v220 = vld [vmem:[%s1 + $0x1dc] sm:$0xf]
  %v221 = vld [vmem:[%s1 + $0x1e0] sm:$0xf]
  %v222 = vld [vmem:[%s1 + $0x1e4] sm:$0xf]
  %v223 = vld [vmem:[%s1 + $0x1e8] sm:$0xf]
  %v224 = vld [vmem:[%s1 + $0x1ec] sm:$0xf]
  %v225 = vld [vmem:[%s1 + $0x1f0] sm:$0xf]
  %v226 = vld [vmem:[%s1 + $0x1f4] sm:$0xf]
  %v227 = vld [vmem:[%s1 + $0x1f8] sm:$0xf]
  %v228 = vld [vmem:[%s1 + $0x1fc] sm:$0xf]
  %v229 = vld [vmem:[%s1 + $0x200] sm:$0xf]
  %v230 = vld [vmem:[%s1 + $0x204] sm:$0xf]
  %v231 = vld [vmem:[%s1 + $0x208] sm:$0xf]
  %v232 = vld [vmem:[%s1 + $0x20c] sm:$0xf]
  %v233 = vld [vmem:[%s1 + $0x210] sm:$0xf]
  %v234 = vld [vmem:[%s1 + $0x214] sm:$0xf]
  %v235 = vld [vmem:[%s1 + $0x218] sm:$0xf]
  %v236 = vld [vmem:[%s1 + $0x21c] sm:$0xf]
  %v237 = vld [vmem:[%s1 + $0x220] sm:$0xf]
  %v238 = vld [vmem:[%s1 + $0x224] sm:$0xf]
  %v239 = vld [vmem:[%s1 + $0x228] sm:$0xf]
  %v240 = vld [vmem:[%s1 + $0x22c] sm:$0xf]
  %v241 = vld [vmem:[%s1 + $0x230] sm:$0xf]
  %v242 = vld [vmem:[%s1 + $0x234] sm:$0xf]
  %v243 = vld [vmem:[%s1 + $0x238] sm:$0xf]
  %v244 = vld [vmem:[%s1 + $0x23c] sm:$0xf]
  %v245 = vld [vmem:[%s2] sm:$0x1]
  %v247 = vlaneseq
  %v248 = vshrl.u32 %v247, 7
  %v249 = vsub.s32 0, %v248
  %v250 = vrot.slane %v245, %v249
  %v332 = vunpack.c.l.b16 %v21
  %v333 = vunpack.c.h.b16 %v21
  %v334 = vunpack.c.l.b16 %v22
  %v335 = vunpack.c.h.b16 %v22
  %v336 = vunpack.c.l.b16 %v23
  %v337 = vunpack.c.h.b16 %v23
  %v338 = vunpack.c.l.b16 %v24
  %v339 = vunpack.c.h.b16 %v24
  %v340 = vunpack.c.l.b16 %v25
  %v341 = vunpack.c.l.b16 %v26
  %v342 = vunpack.c.h.b16 %v26
  %v343 = vunpack.c.l.b16 %v27
  %v344 = vunpack.c.h.b16 %v27
  %v345 = vunpack.c.l.b16 %v28
  %v346 = vunpack.c.h.b16 %v28
  %v347 = vunpack.c.l.b16 %v29
  %v348 = vunpack.c.h.b16 %v29
  %v349 = vunpack.c.l.b16 %v30
  %v350 = vunpack.c.l.b16 %v31
  %v351 = vunpack.c.h.b16 %v31
  %v352 = vunpack.c.l.b16 %v32
  %v353 = vunpack.c.h.b16 %v32
  %v354 = vunpack.c.l.b16 %v33
  %v355 = vunpack.c.h.b16 %v33
  %v356 = vunpack.c.l.b16 %v34
  %v357 = vunpack.c.h.b16 %v34
  %v358 = vunpack.c.l.b16 %v35
  %v359 = vunpack.c.l.b16 %v36
  %v360 = vunpack.c.h.b16 %v36
  %v361 = vunpack.c.l.b16 %v37
  %v362 = vunpack.c.h.b16 %v37
  %v363 = vunpack.c.l.b16 %v38
  %v364 = vunpack.c.h.b16 %v38
  %v365 = vunpack.c.l.b16 %v39
  %v366 = vunpack.c.h.b16 %v39
  %v367 = vunpack.c.l.b16 %v40
  %v368 = vunpack.c.l.b16 %v41
  %v369 = vunpack.c.h.b16 %v41
  %v370 = vunpack.c.l.b16 %v42
  %v371 = vunpack.c.h.b16 %v42
  %v372 = vunpack.c.l.b16 %v43
  %v373 = vunpack.c.h.b16 %v43
  %v374 = vunpack.c.l.b16 %v44
  %v375 = vunpack.c.h.b16 %v44
  %v376 = vunpack.c.l.b16 %v45
  %v377 = vunpack.c.l.b16 %v46
  %v378 = vunpack.c.h.b16 %v46
  %v379 = vunpack.c.l.b16 %v47
  %v380 = vunpack.c.h.b16 %v47
  %v381 = vunpack.c.l.b16 %v48
  %v382 = vunpack.c.h.b16 %v48
  %v383 = vunpack.c.l.b16 %v49
  %v384 = vunpack.c.h.b16 %v49
  %v385 = vunpack.c.l.b16 %v50
  %v386 = vunpack.c.l.b16 %v51
  %v387 = vunpack.c.h.b16 %v51
  %v388 = vunpack.c.l.b16 %v52
  %v389 = vunpack.c.h.b16 %v52
  %v390 = vunpack.c.l.b16 %v53
  %v391 = vunpack.c.h.b16 %v53
  %v392 = vunpack.c.l.b16 %v54
  %v393 = vunpack.c.h.b16 %v54
  %v394 = vunpack.c.l.b16 %v55
  %v395 = vunpack.c.l.b16 %v56
  %v396 = vunpack.c.h.b16 %v56
  %v397 = vunpack.c.l.b16 %v57
  %v398 = vunpack.c.h.b16 %v57
  %v399 = vunpack.c.l.b16 %v58
  %v400 = vunpack.c.h.b16 %v58
  %v401 = vunpack.c.l.b16 %v59
  %v402 = vunpack.c.h.b16 %v59
  %v403 = vunpack.c.l.b16 %v60
  %v404 = vunpack.c.l.b16 %v61
  %v405 = vunpack.c.h.b16 %v61
  %v406 = vunpack.c.l.b16 %v62
  %v407 = vunpack.c.h.b16 %v62
  %v408 = vunpack.c.l.b16 %v63
  %v409 = vunpack.c.h.b16 %v63
  %v410 = vunpack.c.l.b16 %v64
  %v411 = vunpack.c.h.b16 %v64
  %v412 = vunpack.c.l.b16 %v65
  %v413 = vunpack.c.l.b16 %v66
  %v414 = vunpack.c.h.b16 %v66
  %v415 = vunpack.c.l.b16 %v67
  %v416 = vunpack.c.h.b16 %v67
  %v417 = vunpack.c.l.b16 %v68
  %v418 = vunpack.c.h.b16 %v68
  %v419 = vunpack.c.l.b16 %v69
  %v420 = vunpack.c.h.b16 %v69
  %v421 = vunpack.c.l.b16 %v70
  %v422 = vunpack.c.l.b16 %v71
  %v423 = vunpack.c.h.b16 %v71
  %v424 = vunpack.c.l.b16 %v72
  %v425 = vunpack.c.h.b16 %v72
  %v426 = vunpack.c.l.b16 %v73
  %v427 = vunpack.c.h.b16 %v73
  %v428 = vunpack.c.l.b16 %v74
  %v429 = vunpack.c.h.b16 %v74
  %v430 = vunpack.c.l.b16 %v75
  %v431 = vunpack.c.l.b16 %v76
  %v432 = vunpack.c.h.b16 %v76
  %v433 = vunpack.c.l.b16 %v77
  %v434 = vunpack.c.h.b16 %v77
  %v435 = vunpack.c.l.b16 %v78
  %v436 = vunpack.c.h.b16 %v78
  %v437 = vunpack.c.l.b16 %v79
  %v438 = vunpack.c.h.b16 %v79
  %v439 = vunpack.c.l.b16 %v80
  %v440 = vunpack.c.l.b16 %v81
  %v441 = vunpack.c.h.b16 %v81
  %v442 = vunpack.c.l.b16 %v82
  %v443 = vunpack.c.h.b16 %v82
  %v444 = vunpack.c.l.b16 %v83
  %v445 = vunpack.c.h.b16 %v83
  %v446 = vunpack.c.l.b16 %v84
  %v447 = vunpack.c.h.b16 %v84
  %v448 = vunpack.c.l.b16 %v85
  %v449 = vunpack.c.l.b16 %v86
  %v450 = vunpack.c.h.b16 %v86
  %v451 = vunpack.c.l.b16 %v87
  %v452 = vunpack.c.h.b16 %v87
  %v453 = vunpack.c.l.b16 %v88
  %v454 = vunpack.c.h.b16 %v88
  %v455 = vunpack.c.l.b16 %v89
  %v456 = vunpack.c.h.b16 %v89
  %v457 = vunpack.c.l.b16 %v90
  %v458 = vunpack.c.l.b16 %v91
  %v459 = vunpack.c.h.b16 %v91
  %v460 = vunpack.c.l.b16 %v92
  %v461 = vunpack.c.h.b16 %v92
  %v462 = vunpack.c.l.b16 %v93
  %v463 = vunpack.c.h.b16 %v93
  %v464 = vunpack.c.l.b16 %v94
  %v465 = vunpack.c.h.b16 %v94
  %v466 = vunpack.c.l.b16 %v95
  %v467 = vunpack.c.l.b16 %v96
  %v468 = vunpack.c.h.b16 %v96
  %v469 = vunpack.c.l.b16 %v97
  %v470 = vunpack.c.h.b16 %v97
  %v471 = vunpack.c.l.b16 %v98
  %v472 = vunpack.c.h.b16 %v98
  %v473 = vunpack.c.l.b16 %v99
  %v474 = vunpack.c.h.b16 %v99
  %v475 = vunpack.c.l.b16 %v100
  %v476 = vpack.c.b16 %v341, %v332
  %v477 = vpack.c.b16 %v342, %v333
  %v478 = vpack.c.b16 %v343, %v334
  %v479 = vpack.c.b16 %v344, %v335
  %v480 = vpack.c.b16 %v345, %v336
  %v481 = vpack.c.b16 %v346, %v337
  %v482 = vpack.c.b16 %v347, %v338
  %v483 = vpack.c.b16 %v348, %v339
  %v484 = vpack.c.b16 %v349, %v340
  %v485 = vpack.c.b16 %v359, %v350
  %v486 = vpack.c.b16 %v360, %v351
  %v487 = vpack.c.b16 %v361, %v352
  %v488 = vpack.c.b16 %v362, %v353
  %v489 = vpack.c.b16 %v363, %v354
  %v490 = vpack.c.b16 %v364, %v355
  %v491 = vpack.c.b16 %v365, %v356
  %v492 = vpack.c.b16 %v366, %v357
  %v493 = vpack.c.b16 %v367, %v358
  %v494 = vpack.c.b16 %v377, %v368
  %v495 = vpack.c.b16 %v378, %v369
  %v496 = vpack.c.b16 %v379, %v370
  %v497 = vpack.c.b16 %v380, %v371
  %v498 = vpack.c.b16 %v381, %v372
  %v499 = vpack.c.b16 %v382, %v373
  %v500 = vpack.c.b16 %v383, %v374
  %v501 = vpack.c.b16 %v384, %v375
  %v502 = vpack.c.b16 %v385, %v376
  %v503 = vpack.c.b16 %v395, %v386
  %v504 = vpack.c.b16 %v396, %v387
  %v505 = vpack.c.b16 %v397, %v388
  %v506 = vpack.c.b16 %v398, %v389
  %v507 = vpack.c.b16 %v399, %v390
  %v508 = vpack.c.b16 %v400, %v391
  %v509 = vpack.c.b16 %v401, %v392
  %v510 = vpack.c.b16 %v402, %v393
  %v511 = vpack.c.b16 %v403, %v394
  %v512 = vpack.c.b16 %v413, %v404
  %v513 = vpack.c.b16 %v414, %v405
  %v514 = vpack.c.b16 %v415, %v406
  %v515 = vpack.c.b16 %v416, %v407
  %v516 = vpack.c.b16 %v417, %v408
  %v517 = vpack.c.b16 %v418, %v409
  %v518 = vpack.c.b16 %v419, %v410
  %v519 = vpack.c.b16 %v420, %v411
  %v520 = vpack.c.b16 %v421, %v412
  %v521 = vpack.c.b16 %v431, %v422
  %v522 = vpack.c.b16 %v432, %v423
  %v523 = vpack.c.b16 %v433, %v424
  %v524 = vpack.c.b16 %v434, %v425
  %v525 = vpack.c.b16 %v435, %v426
  %v526 = vpack.c.b16 %v436, %v427
  %v527 = vpack.c.b16 %v437, %v428
  %v528 = vpack.c.b16 %v438, %v429
  %v529 = vpack.c.b16 %v439, %v430
  %v530 = vpack.c.b16 %v449, %v440
  %v531 = vpack.c.b16 %v450, %v441
  %v532 = vpack.c.b16 %v451, %v442
  %v533 = vpack.c.b16 %v452, %v443
  %v534 = vpack.c.b16 %v453, %v444
  %v535 = vpack.c.b16 %v454, %v445
  %v536 = vpack.c.b16 %v455, %v446
  %v537 = vpack.c.b16 %v456, %v447
  %v538 = vpack.c.b16 %v457, %v448
  %v539 = vpack.c.b16 %v467, %v458
  %v540 = vpack.c.b16 %v468, %v459
  %v541 = vpack.c.b16 %v469, %v460
  %v542 = vpack.c.b16 %v470, %v461
  %v543 = vpack.c.b16 %v471, %v462
  %v544 = vpack.c.b16 %v472, %v463
  %v545 = vpack.c.b16 %v473, %v464
  %v546 = vpack.c.b16 %v474, %v465
  %v547 = vpack.c.b16 %v475, %v466
  %v764 = vunpack.c.l.b16 %v101
  %v765 = vunpack.c.l.b16 %v102
  %v766 = vunpack.c.l.b16 %v103
  %v767 = vunpack.c.l.b16 %v104
  %v768 = vunpack.c.l.b16 %v105
  %v769 = vunpack.c.l.b16 %v106
  %v770 = vunpack.c.l.b16 %v107
  %v771 = vunpack.c.l.b16 %v108
  %v772 = vunpack.c.l.b16 %v109
  %v773 = vunpack.c.l.b16 %v110
  %v774 = vunpack.c.l.b16 %v111
  %v775 = vunpack.c.l.b16 %v112
  %v776 = vunpack.c.l.b16 %v113
  %v777 = vunpack.c.l.b16 %v114
  %v778 = vunpack.c.l.b16 %v115
  %v779 = vunpack.c.l.b16 %v116
  %v780 = vunpack.c.l.b16 %v117
  %v781 = vunpack.c.l.b16 %v118
  %v782 = vunpack.c.l.b16 %v119
  %v783 = vunpack.c.l.b16 %v120
  %v784 = vunpack.c.l.b16 %v121
  %v785 = vunpack.c.l.b16 %v122
  %v786 = vunpack.c.l.b16 %v123
  %v787 = vunpack.c.l.b16 %v124
  %v788 = vunpack.c.l.b16 %v125
  %v789 = vunpack.c.l.b16 %v126
  %v790 = vunpack.c.l.b16 %v127
  %v791 = vunpack.c.l.b16 %v128
  %v792 = vunpack.c.l.b16 %v129
  %v793 = vunpack.c.l.b16 %v130
  %v794 = vunpack.c.l.b16 %v131
  %v795 = vunpack.c.l.b16 %v132
  %v796 = vunpack.c.l.b16 %v133
  %v797 = vunpack.c.l.b16 %v134
  %v798 = vunpack.c.l.b16 %v135
  %v799 = vunpack.c.l.b16 %v136
  %v800 = vunpack.c.l.b16 %v137
  %v801 = vunpack.c.l.b16 %v138
  %v802 = vunpack.c.l.b16 %v139
  %v803 = vunpack.c.l.b16 %v140
  %v804 = vunpack.c.l.b16 %v141
  %v805 = vunpack.c.l.b16 %v142
  %v806 = vunpack.c.l.b16 %v143
  %v807 = vunpack.c.l.b16 %v144
  %v808 = vunpack.c.l.b16 %v145
  %v809 = vunpack.c.l.b16 %v146
  %v810 = vunpack.c.l.b16 %v147
  %v811 = vunpack.c.l.b16 %v148
  %v812 = vunpack.c.l.b16 %v149
  %v813 = vunpack.c.l.b16 %v150
  %v814 = vunpack.c.l.b16 %v151
  %v815 = vunpack.c.l.b16 %v152
  %v816 = vunpack.c.l.b16 %v153
  %v817 = vunpack.c.l.b16 %v154
  %v818 = vunpack.c.l.b16 %v155
  %v819 = vunpack.c.l.b16 %v156
  %v820 = vunpack.c.l.b16 %v157
  %v821 = vunpack.c.l.b16 %v158
  %v822 = vunpack.c.l.b16 %v159
  %v823 = vunpack.c.l.b16 %v160
  %v824 = vunpack.c.l.b16 %v161
  %v825 = vunpack.c.l.b16 %v162
  %v826 = vunpack.c.l.b16 %v163
  %v827 = vunpack.c.l.b16 %v164
  %v828 = vunpack.c.l.b16 %v165
  %v829 = vunpack.c.l.b16 %v166
  %v830 = vunpack.c.l.b16 %v167
  %v831 = vunpack.c.l.b16 %v168
  %v832 = vunpack.c.l.b16 %v169
  %v833 = vunpack.c.l.b16 %v170
  %v834 = vunpack.c.l.b16 %v171
  %v835 = vunpack.c.l.b16 %v172
  %v836 = vunpack.c.l.b16 %v173
  %v837 = vunpack.c.l.b16 %v174
  %v838 = vunpack.c.l.b16 %v175
  %v839 = vunpack.c.l.b16 %v176
  %v840 = vunpack.c.l.b16 %v177
  %v841 = vunpack.c.l.b16 %v178
  %v842 = vunpack.c.l.b16 %v179
  %v843 = vunpack.c.l.b16 %v180
  %v844 = vunpack.c.l.b16 %v181
  %v845 = vunpack.c.l.b16 %v182
  %v846 = vunpack.c.l.b16 %v183
  %v847 = vunpack.c.l.b16 %v184
  %v848 = vunpack.c.l.b16 %v185
  %v849 = vunpack.c.l.b16 %v186
  %v850 = vunpack.c.l.b16 %v187
  %v851 = vunpack.c.l.b16 %v188
  %v852 = vunpack.c.l.b16 %v189
  %v853 = vunpack.c.l.b16 %v190
  %v854 = vunpack.c.l.b16 %v191
  %v855 = vunpack.c.l.b16 %v192
  %v856 = vunpack.c.l.b16 %v193
  %v857 = vunpack.c.l.b16 %v194
  %v858 = vunpack.c.l.b16 %v195
  %v859 = vunpack.c.l.b16 %v196
  %v860 = vunpack.c.l.b16 %v197
  %v861 = vunpack.c.l.b16 %v198
  %v862 = vunpack.c.l.b16 %v199
  %v863 = vunpack.c.l.b16 %v200
  %v864 = vunpack.c.l.b16 %v201
  %v865 = vunpack.c.l.b16 %v202
  %v866 = vunpack.c.l.b16 %v203
  %v867 = vunpack.c.l.b16 %v204
  %v868 = vunpack.c.l.b16 %v205
  %v869 = vunpack.c.l.b16 %v206
  %v870 = vunpack.c.l.b16 %v207
  %v871 = vunpack.c.l.b16 %v208
  %v872 = vunpack.c.l.b16 %v209
  %v873 = vunpack.c.l.b16 %v210
  %v874 = vunpack.c.l.b16 %v211
  %v875 = vunpack.c.l.b16 %v212
  %v876 = vunpack.c.l.b16 %v213
  %v877 = vunpack.c.l.b16 %v214
  %v878 = vunpack.c.l.b16 %v215
  %v879 = vunpack.c.l.b16 %v216
  %v880 = vunpack.c.l.b16 %v217
  %v881 = vunpack.c.l.b16 %v218
  %v882 = vunpack.c.l.b16 %v219
  %v883 = vunpack.c.l.b16 %v220
  %v884 = vunpack.c.l.b16 %v221
  %v885 = vunpack.c.l.b16 %v222
  %v886 = vunpack.c.l.b16 %v223
  %v887 = vunpack.c.l.b16 %v224
  %v888 = vunpack.c.l.b16 %v225
  %v889 = vunpack.c.l.b16 %v226
  %v890 = vunpack.c.l.b16 %v227
  %v891 = vunpack.c.l.b16 %v228
  %v892 = vunpack.c.l.b16 %v229
  %v893 = vunpack.c.l.b16 %v230
  %v894 = vunpack.c.l.b16 %v231
  %v895 = vunpack.c.l.b16 %v232
  %v896 = vunpack.c.l.b16 %v233
  %v897 = vunpack.c.l.b16 %v234
  %v898 = vunpack.c.l.b16 %v235
  %v899 = vunpack.c.l.b16 %v236
  %v900 = vunpack.c.l.b16 %v237
  %v901 = vunpack.c.l.b16 %v238
  %v902 = vunpack.c.l.b16 %v239
  %v903 = vunpack.c.l.b16 %v240
  %v904 = vunpack.c.l.b16 %v241
  %v905 = vunpack.c.l.b16 %v242
  %v906 = vunpack.c.l.b16 %v243
  %v907 = vunpack.c.l.b16 %v244
  %v908 = vpack.c.b16 %v765, %v764
  %v909 = vpack.c.b16 %v767, %v766
  %v910 = vpack.c.b16 %v769, %v768
  %v911 = vpack.c.b16 %v771, %v770
  %v912 = vpack.c.b16 %v773, %v772
  %v913 = vpack.c.b16 %v775, %v774
  %v914 = vpack.c.b16 %v777, %v776
  %v915 = vpack.c.b16 %v779, %v778
  %v916 = vpack.c.b16 %v781, %v780
  %v917 = vpack.c.b16 %v783, %v782
  %v918 = vpack.c.b16 %v785, %v784
  %v919 = vpack.c.b16 %v787, %v786
  %v920 = vpack.c.b16 %v789, %v788
  %v921 = vpack.c.b16 %v791, %v790
  %v922 = vpack.c.b16 %v793, %v792
  %v923 = vpack.c.b16 %v795, %v794
  %v924 = vpack.c.b16 %v797, %v796
  %v925 = vpack.c.b16 %v799, %v798
  %v926 = vpack.c.b16 %v801, %v800
  %v927 = vpack.c.b16 %v803, %v802
  %v928 = vpack.c.b16 %v805, %v804
  %v929 = vpack.c.b16 %v807, %v806
  %v930 = vpack.c.b16 %v809, %v808
  %v931 = vpack.c.b16 %v811, %v810
  %v932 = vpack.c.b16 %v813, %v812
  %v933 = vpack.c.b16 %v815, %v814
  %v934 = vpack.c.b16 %v817, %v816
  %v935 = vpack.c.b16 %v819, %v818
  %v936 = vpack.c.b16 %v821, %v820
  %v937 = vpack.c.b16 %v823, %v822
  %v938 = vpack.c.b16 %v825, %v824
  %v939 = vpack.c.b16 %v827, %v826
  %v940 = vpack.c.b16 %v829, %v828
  %v941 = vpack.c.b16 %v831, %v830
  %v942 = vpack.c.b16 %v833, %v832
  %v943 = vpack.c.b16 %v835, %v834
  %v944 = vpack.c.b16 %v837, %v836
  %v945 = vpack.c.b16 %v839, %v838
  %v946 = vpack.c.b16 %v841, %v840
  %v947 = vpack.c.b16 %v843, %v842
  %v948 = vpack.c.b16 %v845, %v844
  %v949 = vpack.c.b16 %v847, %v846
  %v950 = vpack.c.b16 %v849, %v848
  %v951 = vpack.c.b16 %v851, %v850
  %v952 = vpack.c.b16 %v853, %v852
  %v953 = vpack.c.b16 %v855, %v854
  %v954 = vpack.c.b16 %v857, %v856
  %v955 = vpack.c.b16 %v859, %v858
  %v956 = vpack.c.b16 %v861, %v860
  %v957 = vpack.c.b16 %v863, %v862
  %v958 = vpack.c.b16 %v865, %v864
  %v959 = vpack.c.b16 %v867, %v866
  %v960 = vpack.c.b16 %v869, %v868
  %v961 = vpack.c.b16 %v871, %v870
  %v962 = vpack.c.b16 %v873, %v872
  %v963 = vpack.c.b16 %v875, %v874
  %v964 = vpack.c.b16 %v877, %v876
  %v965 = vpack.c.b16 %v879, %v878
  %v966 = vpack.c.b16 %v881, %v880
  %v967 = vpack.c.b16 %v883, %v882
  %v968 = vpack.c.b16 %v885, %v884
  %v969 = vpack.c.b16 %v887, %v886
  %v970 = vpack.c.b16 %v889, %v888
  %v971 = vpack.c.b16 %v891, %v890
  %v972 = vpack.c.b16 %v893, %v892
  %v973 = vpack.c.b16 %v895, %v894
  %v974 = vpack.c.b16 %v897, %v896
  %v975 = vpack.c.b16 %v899, %v898
  %v976 = vpack.c.b16 %v901, %v900
  %v977 = vpack.c.b16 %v903, %v902
  %v978 = vpack.c.b16 %v905, %v904
  %v979 = vpack.c.b16 %v907, %v906
  %1052 = vmatprep.subr.bf16.mxu0 0
  %1053 = vmatpush1.bf16.msra.mxu0 %v908
  %1054 = vmatprep.subr.bf16.mxu0 0
  %1055 = vmatpush1.bf16.msra.mxu0 %v909
  %1056 = vmatprep.subr.bf16.mxu0 0
  %1057 = vmatpush1.bf16.msra.mxu0 %v910
  %1058 = vmatprep.subr.bf16.mxu0 0
  %1059 = vmatpush1.bf16.msra.mxu0 %v911
  %1060 = vmatprep.subr.bf16.mxu0 0
  %1061 = vmatpush1.bf16.msra.mxu0 %v912
  %1062 = vmatprep.subr.bf16.mxu0 0
  %1063 = vmatpush1.bf16.msra.mxu0 %v913
  %1064 = vmatprep.subr.bf16.mxu0 0
  %1065 = vmatpush1.bf16.msra.mxu0 %v914
  %1066 = vmatprep.subr.bf16.mxu0 0
  %1067 = vmatpush1.bf16.msra.mxu0 %v915
  %1068 = vmatprep.subr.bf16.mxu0 0
  %1069 = vmatpush1.bf16.msra.mxu0 %v916
  %1070 = vmatprep.subr.bf16.mxu0 0
  %1071 = vmatpush1.bf16.msra.mxu0 %v917
  %1072 = vmatprep.subr.bf16.mxu0 0
  %1073 = vmatpush1.bf16.msra.mxu0 %v918
  %1074 = vmatprep.subr.bf16.mxu0 0
  %1075 = vmatpush1.bf16.msra.mxu0 %v919
  %1076 = vmatprep.subr.bf16.mxu0 0
  %1077 = vmatpush1.bf16.msra.mxu0 %v920
  %1078 = vmatprep.subr.bf16.mxu0 0
  %1079 = vmatpush1.bf16.msra.mxu0 %v921
  %1080 = vmatprep.subr.bf16.mxu0 0
  %1081 = vmatpush1.bf16.msra.mxu0 %v922
  %1082 = vmatprep.subr.bf16.mxu0 0
  %1083 = vmatpush1.bf16.msra.mxu0 %v923
  %1084 = vmatprep.mubr.bf16.mxu0 %v477
  %1085 = vmatmul.mubr.bf16.gmra.mrb[0].mxu0 %v476
  %v1086 = vpop.f32.mrb[0].mxu0
  %v1087 = vadd.f32 %v250, %v1086
  %v1088 = vpop.f32.mrb[0].mxu0
  %v1089 = vpop.f32.mrb[0].mxu0
  %v1090 = vadd.f32 %v250, %v1089
  %v1091 = vpop.f32.mrb[0].mxu0
  %1092 = vmatprep.mubr.bf16.mxu0 %v486
  %1093 = vmatmul.mubr.bf16.gmra.mrb[0].mxu0 %v485
  %v1094 = vpop.f32.mrb[0].mxu0
  %v1095 = vadd.f32 %v250, %v1094
  %v1096 = vpop.f32.mrb[0].mxu0
  %v1097 = vpop.f32.mrb[0].mxu0
  %v1098 = vadd.f32 %v250, %v1097
  %v1099 = vpop.f32.mrb[0].mxu0
  %1100 = vmatprep.mubr.bf16.mxu0 %v495
  %1101 = vmatmul.mubr.bf16.gmra.mrb[0].mxu0 %v494
  %v1102 = vpop.f32.mrb[0].mxu0
  %v1103 = vadd.f32 %v250, %v1102
  %v1104 = vpop.f32.mrb[0].mxu0
  %v1105 = vpop.f32.mrb[0].mxu0
  %v1106 = vadd.f32 %v250, %v1105
  %v1107 = vpop.f32.mrb[0].mxu0
  %1108 = vmatprep.mubr.bf16.mxu0 %v504
  %1109 = vmatmul.mubr.bf16.gmra.mrb[0].mxu0 %v503
  %v1110 = vpop.f32.mrb[0].mxu0
  %v1111 = vadd.f32 %v250, %v1110
  %v1112 = vpop.f32.mrb[0].mxu0
  %v1113 = vpop.f32.mrb[0].mxu0
  %v1114 = vadd.f32 %v250, %v1113
  %v1115 = vpop.f32.mrb[0].mxu0
  %1116 = vmatprep.mubr.bf16.mxu0 %v513
  %1117 = vmatmul.mubr.bf16.gmra.mrb[0].mxu0 %v512
  %v1118 = vpop.f32.mrb[0].mxu0
  %v1119 = vadd.f32 %v250, %v1118
  %v1120 = vpop.f32.mrb[0].mxu0
  %v1121 = vpop.f32.mrb[0].mxu0
  %v1122 = vadd.f32 %v250, %v1121
  %v1123 = vpop.f32.mrb[0].mxu0
  %1124 = vmatprep.mubr.bf16.mxu0 %v522
  %1125 = vmatmul.mubr.bf16.gmra.mrb[0].mxu0 %v521
  %v1126 = vpop.f32.mrb[0].mxu0
  %v1127 = vadd.f32 %v250, %v1126
  %v1128 = vpop.f32.mrb[0].mxu0
  %v1129 = vpop.f32.mrb[0].mxu0
  %v1130 = vadd.f32 %v250, %v1129
  %v1131 = vpop.f32.mrb[0].mxu0
  %1132 = vmatprep.mubr.bf16.mxu0 %v531
  %1133 = vmatmul.mubr.bf16.gmra.mrb[0].mxu0 %v530
  %v1134 = vpop.f32.mrb[0].mxu0
  %v1135 = vadd.f32 %v250, %v1134
  %v1136 = vpop.f32.mrb[0].mxu0
  %v1137 = vpop.f32.mrb[0].mxu0
  %v1138 = vadd.f32 %v250, %v1137
  %v1139 = vpop.f32.mrb[0].mxu0
  %1140 = vmatprep.mubr.bf16.mxu0 %v540
  %1141 = vmatmul.mubr.bf16.gmra.mrb[0].mxu0 %v539
  %v1142 = vpop.f32.mrb[0].mxu0
  %v1143 = vadd.f32 %v250, %v1142
  %v1144 = vpop.f32.mrb[0].mxu0
  %v1145 = vpop.f32.mrb[0].mxu0
  %v1146 = vadd.f32 %v250, %v1145
  %v1147 = vpop.f32.mrb[0].mxu0
  %1148 = vdwg.mxu0
  %1149 = vmatprep.subr.bf16.mxu0 0
  %1150 = vmatpush1.bf16.msra.mxu0 %v924
  %1151 = vmatprep.subr.bf16.mxu0 0
  %1152 = vmatpush1.bf16.msra.mxu0 %v925
  %1153 = vmatprep.subr.bf16.mxu0 0
  %1154 = vmatpush1.bf16.msra.mxu0 %v926
  %1155 = vmatprep.subr.bf16.mxu0 0
  %1156 = vmatpush1.bf16.msra.mxu0 %v927
  %1157 = vmatprep.subr.bf16.mxu0 0
  %1158 = vmatpush1.bf16.msra.mxu0 %v928
  %1159 = vmatprep.subr.bf16.mxu0 0
  %1160 = vmatpush1.bf16.msra.mxu0 %v929
  %1161 = vmatprep.subr.bf16.mxu0 0
  %1162 = vmatpush1.bf16.msra.mxu0 %v930
  %1163 = vmatprep.subr.bf16.mxu0 0
  %1164 = vmatpush1.bf16.msra.mxu0 %v931
  %1165 = vmatprep.subr.bf16.mxu0 0
  %1166 = vmatpush1.bf16.msra.mxu0 %v932
  %1167 = vmatprep.subr.bf16.mxu0 0
  %1168 = vmatpush1.bf16.msra.mxu0 %v933
  %1169 = vmatprep.subr.bf16.mxu0 0
  %1170 = vmatpush1.bf16.msra.mxu0 %v934
  %1171 = vmatprep.subr.bf16.mxu0 0
  %1172 = vmatpush1.bf16.msra.mxu0 %v935
  %1173 = vmatprep.subr.bf16.mxu0 0
  %1174 = vmatpush1.bf16.msra.mxu0 %v936
  %1175 = vmatprep.subr.bf16.mxu0 0
  %1176 = vmatpush1.bf16.msra.mxu0 %v937
  %1177 = vmatprep.subr.bf16.mxu0 0
  %1178 = vmatpush1.bf16.msra.mxu0 %v938
  %1179 = vmatprep.subr.bf16.mxu0 0
  %1180 = vmatpush1.bf16.msra.mxu0 %v939
  %1181 = vmatprep.mubr.bf16.mxu0 %v479
  %1182 = vmatmul.mubr.bf16.gmra.mrb[0].mxu0 %v478
  %v1183 = vpop.f32.mrb[0].mxu0
  %v1184 = vadd.f32 %v1087, %v1183
  %v1185 = vpop.f32.mrb[0].mxu0
  %v1186 = vpop.f32.mrb[0].mxu0
  %v1187 = vadd.f32 %v1090, %v1186
  %v1188 = vpop.f32.mrb[0].mxu0
  %1189 = vmatprep.mubr.bf16.mxu0 %v488
  %1190 = vmatmul.mubr.bf16.gmra.mrb[0].mxu0 %v487
  %v1191 = vpop.f32.mrb[0].mxu0
  %v1192 = vadd.f32 %v1095, %v1191
  %v1193 = vpop.f32.mrb[0].mxu0
  %v1194 = vpop.f32.mrb[0].mxu0
  %v1195 = vadd.f32 %v1098, %v1194
  %v1196 = vpop.f32.mrb[0].mxu0
  %1197 = vmatprep.mubr.bf16.mxu0 %v497
  %1198 = vmatmul.mubr.bf16.gmra.mrb[0].mxu0 %v496
  %v1199 = vpop.f32.mrb[0].mxu0
  %v1200 = vadd.f32 %v1103, %v1199
  %v1201 = vpop.f32.mrb[0].mxu0
  %v1202 = vpop.f32.mrb[0].mxu0
  %v1203 = vadd.f32 %v1106, %v1202
  %v1204 = vpop.f32.mrb[0].mxu0
  %1205 = vmatprep.mubr.bf16.mxu0 %v506
  %1206 = vmatmul.mubr.bf16.gmra.mrb[0].mxu0 %v505
  %v1207 = vpop.f32.mrb[0].mxu0
  %v1208 = vadd.f32 %v1111, %v1207
  %v1209 = vpop.f32.mrb[0].mxu0
  %v1210 = vpop.f32.mrb[0].mxu0
  %v1211 = vadd.f32 %v1114, %v1210
  %v1212 = vpop.f32.mrb[0].mxu0
  %1213 = vmatprep.mubr.bf16.mxu0 %v515
  %1214 = vmatmul.mubr.bf16.gmra.mrb[0].mxu0 %v514
  %v1215 = vpop.f32.mrb[0].mxu0
  %v1216 = vadd.f32 %v1119, %v1215
  %v1217 = vpop.f32.mrb[0].mxu0
  %v1218 = vpop.f32.mrb[0].mxu0
  %v1219 = vadd.f32 %v1122, %v1218
  %v1220 = vpop.f32.mrb[0].mxu0
  %1221 = vmatprep.mubr.bf16.mxu0 %v524
  %1222 = vmatmul.mubr.bf16.gmra.mrb[0].mxu0 %v523
  %v1223 = vpop.f32.mrb[0].mxu0
  %v1224 = vadd.f32 %v1127, %v1223
  %v1225 = vpop.f32.mrb[0].mxu0
  %v1226 = vpop.f32.mrb[0].mxu0
  %v1227 = vadd.f32 %v1130, %v1226
  %v1228 = vpop.f32.mrb[0].mxu0
  %1229 = vmatprep.mubr.bf16.mxu0 %v533
  %1230 = vmatmul.mubr.bf16.gmra.mrb[0].mxu0 %v532
  %v1231 = vpop.f32.mrb[0].mxu0
  %v1232 = vadd.f32 %v1135, %v1231
  %v1233 = vpop.f32.mrb[0].mxu0
  %v1234 = vpop.f32.mrb[0].mxu0
  %v1235 = vadd.f32 %v1138, %v1234
  %v1236 = vpop.f32.mrb[0].mxu0
  %1237 = vmatprep.mubr.bf16.mxu0 %v542
  %1238 = vmatmul.mubr.bf16.gmra.mrb[0].mxu0 %v541
  %v1239 = vpop.f32.mrb[0].mxu0
  %v1240 = vadd.f32 %v1143, %v1239
  %v1241 = vpop.f32.mrb[0].mxu0
  %v1242 = vpop.f32.mrb[0].mxu0
  %v1243 = vadd.f32 %v1146, %v1242
  %v1244 = vpop.f32.mrb[0].mxu0
  %1245 = vdwg.mxu0
  %1246 = vmatprep.subr.bf16.mxu0 0
  %1247 = vmatpush1.bf16.msra.mxu0 %v940
  %1248 = vmatprep.subr.bf16.mxu0 0
  %1249 = vmatpush1.bf16.msra.mxu0 %v941
  %1250 = vmatprep.subr.bf16.mxu0 0
  %1251 = vmatpush1.bf16.msra.mxu0 %v942
  %1252 = vmatprep.subr.bf16.mxu0 0
  %1253 = vmatpush1.bf16.msra.mxu0 %v943
  %1254 = vmatprep.subr.bf16.mxu0 0
  %1255 = vmatpush1.bf16.msra.mxu0 %v944
  %1256 = vmatprep.subr.bf16.mxu0 0
  %1257 = vmatpush1.bf16.msra.mxu0 %v945
  %1258 = vmatprep.subr.bf16.mxu0 0
  %1259 = vmatpush1.bf16.msra.mxu0 %v946
  %1260 = vmatprep.subr.bf16.mxu0 0
  %1261 = vmatpush1.bf16.msra.mxu0 %v947
  %1262 = vmatprep.subr.bf16.mxu0 0
  %1263 = vmatpush1.bf16.msra.mxu0 %v948
  %1264 = vmatprep.subr.bf16.mxu0 0
  %1265 = vmatpush1.bf16.msra.mxu0 %v949
  %1266 = vmatprep.subr.bf16.mxu0 0
  %1267 = vmatpush1.bf16.msra.mxu0 %v950
  %1268 = vmatprep.subr.bf16.mxu0 0
  %1269 = vmatpush1.bf16.msra.mxu0 %v951
  %1270 = vmatprep.subr.bf16.mxu0 0
  %1271 = vmatpush1.bf16.msra.mxu0 %v952
  %1272 = vmatprep.subr.bf16.mxu0 0
  %1273 = vmatpush1.bf16.msra.mxu0 %v953
  %1274 = vmatprep.subr.bf16.mxu0 0
  %1275 = vmatpush1.bf16.msra.mxu0 %v954
  %1276 = vmatprep.subr.bf16.mxu0 0
  %1277 = vmatpush1.bf16.msra.mxu0 %v955
  %1278 = vmatprep.mubr.bf16.mxu0 %v481
  %1279 = vmatmul.mubr.bf16.gmra.mrb[0].mxu0 %v480
  %v1280 = vpop.f32.mrb[0].mxu0
  %v1281 = vadd.f32 %v1184, %v1280
  %v1282 = vpop.f32.mrb[0].mxu0
  %v1283 = vpop.f32.mrb[0].mxu0
  %v1284 = vadd.f32 %v1187, %v1283
  %v1285 = vpop.f32.mrb[0].mxu0
  %1286 = vmatprep.mubr.bf16.mxu0 %v490
  %1287 = vmatmul.mubr.bf16.gmra.mrb[0].mxu0 %v489
  %v1288 = vpop.f32.mrb[0].mxu0
  %v1289 = vadd.f32 %v1192, %v1288
  %v1290 = vpop.f32.mrb[0].mxu0
  %v1291 = vpop.f32.mrb[0].mxu0
  %v1292 = vadd.f32 %v1195, %v1291
  %v1293 = vpop.f32.mrb[0].mxu0
  %1294 = vmatprep.mubr.bf16.mxu0 %v499
  %1295 = vmatmul.mubr.bf16.gmra.mrb[0].mxu0 %v498
  %v1296 = vpop.f32.mrb[0].mxu0
  %v1297 = vadd.f32 %v1200, %v1296
  %v1298 = vpop.f32.mrb[0].mxu0
  %v1299 = vpop.f32.mrb[0].mxu0
  %v1300 = vadd.f32 %v1203, %v1299
  %v1301 = vpop.f32.mrb[0].mxu0
  %1302 = vmatprep.mubr.bf16.mxu0 %v508
  %1303 = vmatmul.mubr.bf16.gmra.mrb[0].mxu0 %v507
  %v1304 = vpop.f32.mrb[0].mxu0
  %v1305 = vadd.f32 %v1208, %v1304
  %v1306 = vpop.f32.mrb[0].mxu0
  %v1307 = vpop.f32.mrb[0].mxu0
  %v1308 = vadd.f32 %v1211, %v1307
  %v1309 = vpop.f32.mrb[0].mxu0
  %1310 = vmatprep.mubr.bf16.mxu0 %v517
  %1311 = vmatmul.mubr.bf16.gmra.mrb[0].mxu0 %v516
  %v1312 = vpop.f32.mrb[0].mxu0
  %v1313 = vadd.f32 %v1216, %v1312
  %v1314 = vpop.f32.mrb[0].mxu0
  %v1315 = vpop.f32.mrb[0].mxu0
  %v1316 = vadd.f32 %v1219, %v1315
  %v1317 = vpop.f32.mrb[0].mxu0
  %1318 = vmatprep.mubr.bf16.mxu0 %v526
  %1319 = vmatmul.mubr.bf16.gmra.mrb[0].mxu0 %v525
  %v1320 = vpop.f32.mrb[0].mxu0
  %v1321 = vadd.f32 %v1224, %v1320
  %v1322 = vpop.f32.mrb[0].mxu0
  %v1323 = vpop.f32.mrb[0].mxu0
  %v1324 = vadd.f32 %v1227, %v1323
  %v1325 = vpop.f32.mrb[0].mxu0
  %1326 = vmatprep.mubr.bf16.mxu0 %v535
  %1327 = vmatmul.mubr.bf16.gmra.mrb[0].mxu0 %v534
  %v1328 = vpop.f32.mrb[0].mxu0
  %v1329 = vadd.f32 %v1232, %v1328
  %v1330 = vpop.f32.mrb[0].mxu0
  %v1331 = vpop.f32.mrb[0].mxu0
  %v1332 = vadd.f32 %v1235, %v1331
  %v1333 = vpop.f32.mrb[0].mxu0
  %1334 = vmatprep.mubr.bf16.mxu0 %v544
  %1335 = vmatmul.mubr.bf16.gmra.mrb[0].mxu0 %v543
  %v1336 = vpop.f32.mrb[0].mxu0
  %v1337 = vadd.f32 %v1240, %v1336
  %v1338 = vpop.f32.mrb[0].mxu0
  %v1339 = vpop.f32.mrb[0].mxu0
  %v1340 = vadd.f32 %v1243, %v1339
  %v1341 = vpop.f32.mrb[0].mxu0
  %1342 = vdwg.mxu0
  %1343 = vmatprep.subr.bf16.mxu0 0
  %1344 = vmatpush1.bf16.msra.mxu0 %v956
  %1345 = vmatprep.subr.bf16.mxu0 0
  %1346 = vmatpush1.bf16.msra.mxu0 %v957
  %1347 = vmatprep.subr.bf16.mxu0 0
  %1348 = vmatpush1.bf16.msra.mxu0 %v958
  %1349 = vmatprep.subr.bf16.mxu0 0
  %1350 = vmatpush1.bf16.msra.mxu0 %v959
  %1351 = vmatprep.subr.bf16.mxu0 0
  %1352 = vmatpush1.bf16.msra.mxu0 %v960
  %1353 = vmatprep.subr.bf16.mxu0 0
  %1354 = vmatpush1.bf16.msra.mxu0 %v961
  %1355 = vmatprep.subr.bf16.mxu0 0
  %1356 = vmatpush1.bf16.msra.mxu0 %v962
  %1357 = vmatprep.subr.bf16.mxu0 0
  %1358 = vmatpush1.bf16.msra.mxu0 %v963
  %1359 = vmatprep.subr.bf16.mxu0 0
  %1360 = vmatpush1.bf16.msra.mxu0 %v964
  %1361 = vmatprep.subr.bf16.mxu0 0
  %1362 = vmatpush1.bf16.msra.mxu0 %v965
  %1363 = vmatprep.subr.bf16.mxu0 0
  %1364 = vmatpush1.bf16.msra.mxu0 %v966
  %1365 = vmatprep.subr.bf16.mxu0 0
  %1366 = vmatpush1.bf16.msra.mxu0 %v967
  %1367 = vmatprep.subr.bf16.mxu0 0
  %1368 = vmatpush1.bf16.msra.mxu0 %v968
  %1369 = vmatprep.subr.bf16.mxu0 0
  %1370 = vmatpush1.bf16.msra.mxu0 %v969
  %1371 = vmatprep.subr.bf16.mxu0 0
  %1372 = vmatpush1.bf16.msra.mxu0 %v970
  %1373 = vmatprep.subr.bf16.mxu0 0
  %1374 = vmatpush1.bf16.msra.mxu0 %v971
  %1375 = vmatprep.mubr.bf16.mxu0 %v483
  %1376 = vmatmul.mubr.bf16.gmra.mrb[0].mxu0 %v482
  %v1377 = vpop.f32.mrb[0].mxu0
  %v1378 = vadd.f32 %v1281, %v1377
  %v1379 = vpop.f32.mrb[0].mxu0
  %v1380 = vpop.f32.mrb[0].mxu0
  %v1381 = vadd.f32 %v1284, %v1380
  %v1382 = vpop.f32.mrb[0].mxu0
  %1383 = vmatprep.mubr.bf16.mxu0 %v492
  %1384 = vmatmul.mubr.bf16.gmra.mrb[0].mxu0 %v491
  %v1385 = vpop.f32.mrb[0].mxu0
  %v1386 = vadd.f32 %v1289, %v1385
  %v1387 = vpop.f32.mrb[0].mxu0
  %v1388 = vpop.f32.mrb[0].mxu0
  %v1389 = vadd.f32 %v1292, %v1388
  %v1390 = vpop.f32.mrb[0].mxu0
  %1391 = vmatprep.mubr.bf16.mxu0 %v501
  %1392 = vmatmul.mubr.bf16.gmra.mrb[0].mxu0 %v500
  %v1393 = vpop.f32.mrb[0].mxu0
  %v1394 = vadd.f32 %v1297, %v1393
  %v1395 = vpop.f32.mrb[0].mxu0
  %v1396 = vpop.f32.mrb[0].mxu0
  %v1397 = vadd.f32 %v1300, %v1396
  %v1398 = vpop.f32.mrb[0].mxu0
  %1399 = vmatprep.mubr.bf16.mxu0 %v510
  %1400 = vmatmul.mubr.bf16.gmra.mrb[0].mxu0 %v509
  %v1401 = vpop.f32.mrb[0].mxu0
  %v1402 = vadd.f32 %v1305, %v1401
  %v1403 = vpop.f32.mrb[0].mxu0
  %v1404 = vpop.f32.mrb[0].mxu0
  %v1405 = vadd.f32 %v1308, %v1404
  %v1406 = vpop.f32.mrb[0].mxu0
  %1407 = vmatprep.mubr.bf16.mxu0 %v519
  %1408 = vmatmul.mubr.bf16.gmra.mrb[0].mxu0 %v518
  %v1409 = vpop.f32.mrb[0].mxu0
  %v1410 = vadd.f32 %v1313, %v1409
  %v1411 = vpop.f32.mrb[0].mxu0
  %v1412 = vpop.f32.mrb[0].mxu0
  %v1413 = vadd.f32 %v1316, %v1412
  %v1414 = vpop.f32.mrb[0].mxu0
  %1415 = vmatprep.mubr.bf16.mxu0 %v528
  %1416 = vmatmul.mubr.bf16.gmra.mrb[0].mxu0 %v527
  %v1417 = vpop.f32.mrb[0].mxu0
  %v1418 = vadd.f32 %v1321, %v1417
  %v1419 = vpop.f32.mrb[0].mxu0
  %v1420 = vpop.f32.mrb[0].mxu0
  %v1421 = vadd.f32 %v1324, %v1420
  %v1422 = vpop.f32.mrb[0].mxu0
  %1423 = vmatprep.mubr.bf16.mxu0 %v537
  %1424 = vmatmul.mubr.bf16.gmra.mrb[0].mxu0 %v536
  %v1425 = vpop.f32.mrb[0].mxu0
  %v1426 = vadd.f32 %v1329, %v1425
  %v1427 = vpop.f32.mrb[0].mxu0
  %v1428 = vpop.f32.mrb[0].mxu0
  %v1429 = vadd.f32 %v1332, %v1428
  %v1430 = vpop.f32.mrb[0].mxu0
  %1431 = vmatprep.mubr.bf16.mxu0 %v546
  %1432 = vmatmul.mubr.bf16.gmra.mrb[0].mxu0 %v545
  %v1433 = vpop.f32.mrb[0].mxu0
  %v1434 = vadd.f32 %v1337, %v1433
  %v1435 = vpop.f32.mrb[0].mxu0
  %v1436 = vpop.f32.mrb[0].mxu0
  %v1437 = vadd.f32 %v1340, %v1436
  %v1438 = vpop.f32.mrb[0].mxu0
  %1439 = vdwg.mxu0
  %1440 = vmatprep.subr.bf16.mxu0 0
  %1441 = vmatpush1.bf16.msra.mxu0 %v972
  %1442 = vmatprep.subr.bf16.mxu0 0
  %1443 = vmatpush1.bf16.msra.mxu0 %v973
  %1444 = vmatprep.subr.bf16.mxu0 0
  %1445 = vmatpush1.bf16.msra.mxu0 %v974
  %1446 = vmatprep.subr.bf16.mxu0 0
  %1447 = vmatpush1.bf16.msra.mxu0 %v975
  %1448 = vmatprep.subr.bf16.mxu0 0
  %1449 = vmatpush1.bf16.msra.mxu0 %v976
  %1450 = vmatprep.subr.bf16.mxu0 0
  %1451 = vmatpush1.bf16.msra.mxu0 %v977
  %1452 = vmatprep.subr.bf16.mxu0 0
  %1453 = vmatpush1.bf16.msra.mxu0 %v978
  %1454 = vmatprep.subr.bf16.mxu0 0
  %1455 = vmatpush1.bf16.msra.mxu0 %v979
  %1456 = vmatprep.subr.bf16.mxu0 0
  %1457 = vmatpush1.bf16.msra.mxu0 0
  %1458 = vmatprep.subr.bf16.mxu0 0
  %1459 = vmatpush1.bf16.msra.mxu0 0
  %1460 = vmatprep.subr.bf16.mxu0 0
  %1461 = vmatpush1.bf16.msra.mxu0 0
  %1462 = vmatprep.subr.bf16.mxu0 0
  %1463 = vmatpush1.bf16.msra.mxu0 0
  %1464 = vmatprep.subr.bf16.mxu0 0
  %1465 = vmatpush1.bf16.msra.mxu0 0
  %1466 = vmatprep.subr.bf16.mxu0 0
  %1467 = vmatpush1.bf16.msra.mxu0 0
  %1468 = vmatprep.subr.bf16.mxu0 0
  %1469 = vmatpush1.bf16.msra.mxu0 0
  %1470 = vmatprep.subr.bf16.mxu0 0
  %1471 = vmatpush1.bf16.msra.mxu0 0
  %1472 = vmatprep.mubr.bf16.mxu0 0
  %1473 = vmatmul.mubr.bf16.gmra.mrb[0].mxu0 %v484
  %v1474 = vpop.f32.mrb[0].mxu0
  %v1475 = vadd.f32 %v1378, %v1474
  %v1476 = vpop.f32.mrb[0].mxu0
  %v1477 = vpop.f32.mrb[0].mxu0
  %v1478 = vadd.f32 %v1381, %v1477
  %v1479 = vpop.f32.mrb[0].mxu0
  %1480 = vmatprep.mubr.bf16.mxu0 0
  %1481 = vmatmul.mubr.bf16.gmra.mrb[0].mxu0 %v493
  %v1482 = vpop.f32.mrb[0].mxu0
  %v1483 = vadd.f32 %v1386, %v1482
  %v1484 = vpop.f32.mrb[0].mxu0
  %v1485 = vpop.f32.mrb[0].mxu0
  %v1486 = vadd.f32 %v1389, %v1485
  %v1487 = vpop.f32.mrb[0].mxu0
  %1488 = vmatprep.mubr.bf16.mxu0 0
  %1489 = vmatmul.mubr.bf16.gmra.mrb[0].mxu0 %v502
  %v1490 = vpop.f32.mrb[0].mxu0
  %v1491 = vadd.f32 %v1394, %v1490
  %v1492 = vpop.f32.mrb[0].mxu0
  %v1493 = vpop.f32.mrb[0].mxu0
  %v1494 = vadd.f32 %v1397, %v1493
  %v1495 = vpop.f32.mrb[0].mxu0
  %1496 = vmatprep.mubr.bf16.mxu0 0
  %1497 = vmatmul.mubr.bf16.gmra.mrb[0].mxu0 %v511
  %v1498 = vpop.f32.mrb[0].mxu0
  %v1499 = vadd.f32 %v1402, %v1498
  %v1500 = vpop.f32.mrb[0].mxu0
  %v1501 = vpop.f32.mrb[0].mxu0
  %v1502 = vadd.f32 %v1405, %v1501
  %v1503 = vpop.f32.mrb[0].mxu0
  %1504 = vmatprep.mubr.bf16.mxu0 0
  %1505 = vmatmul.mubr.bf16.gmra.mrb[0].mxu0 %v520
  %v1506 = vpop.f32.mrb[0].mxu0
  %v1507 = vadd.f32 %v1410, %v1506
  %v1508 = vpop.f32.mrb[0].mxu0
  %v1509 = vpop.f32.mrb[0].mxu0
  %v1510 = vadd.f32 %v1413, %v1509
  %v1511 = vpop.f32.mrb[0].mxu0
  %1512 = vmatprep.mubr.bf16.mxu0 0
  %1513 = vmatmul.mubr.bf16.gmra.mrb[0].mxu0 %v529
  %v1514 = vpop.f32.mrb[0].mxu0
  %v1515 = vadd.f32 %v1418, %v1514
  %v1516 = vpop.f32.mrb[0].mxu0
  %v1517 = vpop.f32.mrb[0].mxu0
  %v1518 = vadd.f32 %v1421, %v1517
  %v1519 = vpop.f32.mrb[0].mxu0
  %1520 = vmatprep.mubr.bf16.mxu0 0
  %1521 = vmatmul.mubr.bf16.gmra.mrb[0].mxu0 %v538
  %v1522 = vpop.f32.mrb[0].mxu0
  %v1523 = vadd.f32 %v1426, %v1522
  %v1524 = vpop.f32.mrb[0].mxu0
  %v1525 = vpop.f32.mrb[0].mxu0
  %v1526 = vadd.f32 %v1429, %v1525
  %v1527 = vpop.f32.mrb[0].mxu0
  %1528 = vmatprep.mubr.bf16.mxu0 0
  %1529 = vmatmul.mubr.bf16.gmra.mrb[0].mxu0 %v547
  %v1530 = vpop.f32.mrb[0].mxu0
  %v1531 = vadd.f32 %v1434, %v1530
  %v1532 = vpop.f32.mrb[0].mxu0
  %v1533 = vpop.f32.mrb[0].mxu0
  %v1534 = vadd.f32 %v1437, %v1533
  %v1535 = vpop.f32.mrb[0].mxu0
  %1536 = vdwg.mxu0
  %v1537 = vmax.f32 %v1475, 0.0
  %v1538 = vmax.f32 %v1478, 0.0
  %v1539 = vmax.f32 %v1483, 0.0
  %v1540 = vmax.f32 %v1486, 0.0
  %v1541 = vmax.f32 %v1491, 0.0
  %v1542 = vmax.f32 %v1494, 0.0
  %v1543 = vmax.f32 %v1499, 0.0
  %v1544 = vmax.f32 %v1502, 0.0
  %v1545 = vmax.f32 %v1507, 0.0
  %v1546 = vmax.f32 %v1510, 0.0
  %v1547 = vmax.f32 %v1515, 0.0
  %v1548 = vmax.f32 %v1518, 0.0
  %v1549 = vmax.f32 %v1523, 0.0
  %v1550 = vmax.f32 %v1526, 0.0
  %v1551 = vmax.f32 %v1531, 0.0
  %v1552 = vmax.f32 %v1534, 0.0
  %v1553 = vadd.f32 %v1537, %v1538
  %v1554 = vadd.f32 %v1553, %v1539
  %v1555 = vadd.f32 %v1554, %v1540
  %v1556 = vadd.f32 %v1555, %v1541
  %v1557 = vadd.f32 %v1556, %v1542
  %v1558 = vadd.f32 %v1557, %v1543
  %v1559 = vadd.f32 %v1558, %v1544
  %v1560 = vadd.f32 %v1559, %v1545
  %v1561 = vadd.f32 %v1560, %v1546
  %v1562 = vadd.f32 %v1561, %v1547
  %v1563 = vadd.f32 %v1562, %v1548
  %v1564 = vadd.f32 %v1563, %v1549
  %v1565 = vadd.f32 %v1564, %v1550
  %v1566 = vadd.f32 %v1565, %v1551
  %v1567 = vadd.f32 %v1566, %v1552
  %v1568 = vrot.slane %v1567, 4
  %v1569 = vadd.f32 %v1567, %v1568
  %v1570 = vrot.slane %v1569, 2
  %v1571 = vadd.f32 %v1569, %v1570
  %v1572 = vrot.slane %v1571, 1
  %v1573 = vadd.f32 %v1571, %v1572
  %v1574 = vmul.f32 %v1537, %v1537
  %v1575 = vmul.f32 %v1538, %v1538
  %v1576 = vmul.f32 %v1539, %v1539
  %v1577 = vmul.f32 %v1540, %v1540
  %v1578 = vmul.f32 %v1541, %v1541
  %v1579 = vmul.f32 %v1542, %v1542
  %v1580 = vmul.f32 %v1543, %v1543
  %v1581 = vmul.f32 %v1544, %v1544
  %v1582 = vmul.f32 %v1545, %v1545
  %v1583 = vmul.f32 %v1546, %v1546
  %v1584 = vmul.f32 %v1547, %v1547
  %v1585 = vmul.f32 %v1548, %v1548
  %v1586 = vmul.f32 %v1549, %v1549
  %v1587 = vmul.f32 %v1550, %v1550
  %v1588 = vmul.f32 %v1551, %v1551
  %v1589 = vmul.f32 %v1552, %v1552
  %v1590 = vadd.f32 %v1574, %v1575
  %v1591 = vadd.f32 %v1590, %v1576
  %v1592 = vadd.f32 %v1591, %v1577
  %v1593 = vadd.f32 %v1592, %v1578
  %v1594 = vadd.f32 %v1593, %v1579
  %v1595 = vadd.f32 %v1594, %v1580
  %v1596 = vadd.f32 %v1595, %v1581
  %v1597 = vadd.f32 %v1596, %v1582
  %v1598 = vadd.f32 %v1597, %v1583
  %v1599 = vadd.f32 %v1598, %v1584
  %v1600 = vadd.f32 %v1599, %v1585
  %v1601 = vadd.f32 %v1600, %v1586
  %v1602 = vadd.f32 %v1601, %v1587
  %v1603 = vadd.f32 %v1602, %v1588
  %v1604 = vadd.f32 %v1603, %v1589
  %v1605 = vrot.slane %v1604, 4
  %v1606 = vadd.f32 %v1604, %v1605
  %v1607 = vrot.slane %v1606, 2
  %v1608 = vadd.f32 %v1606, %v1607
  %v1609 = vrot.slane %v1608, 1
  %v1610 = vadd.f32 %v1608, %v1609
  %v1611 = vmul.f32 %v1573, 0.0078125
  %v1612 = vmul.f32 %v1610, 0.0078125
  %v1613 = vmul.f32 %v1611, %v1611
  %v1614 = vsub.f32 %v1612, %v1613
  %v1615 = vsub.f32 %v1537, %v1611
  %v1616 = vsub.f32 %v1538, %v1611
  %v1617 = vsub.f32 %v1539, %v1611
  %v1618 = vsub.f32 %v1540, %v1611
  %v1619 = vsub.f32 %v1541, %v1611
  %v1620 = vsub.f32 %v1542, %v1611
  %v1621 = vsub.f32 %v1543, %v1611
  %v1622 = vsub.f32 %v1544, %v1611
  %v1623 = vsub.f32 %v1545, %v1611
  %v1624 = vsub.f32 %v1546, %v1611
  %v1625 = vsub.f32 %v1547, %v1611
  %v1626 = vsub.f32 %v1548, %v1611
  %v1627 = vsub.f32 %v1549, %v1611
  %v1628 = vsub.f32 %v1550, %v1611
  %v1629 = vsub.f32 %v1551, %v1611
  %v1630 = vsub.f32 %v1552, %v1611
  %v1631 = vadd.f32 %v1614, 1e-05
  %v1632 = vrsqrt.pop %v1631
  %v1633 = vld [vmem:[%s3] sm:$0x1]
  %v1634 = vmul.f32 %v1632, %v1633
  %v1635 = vlaneseq
  %v1636 = vshrl.u32 %v1635, 7
  %v1637 = vsub.s32 0, %v1636
  %v1638 = vrot.slane %v1634, %v1637
  %v1639 = vmul.f32 %v1615, %v1638
  %v1640 = vmul.f32 %v1616, %v1638
  %v1641 = vmul.f32 %v1617, %v1638
  %v1642 = vmul.f32 %v1618, %v1638
  %v1643 = vmul.f32 %v1619, %v1638
  %v1644 = vmul.f32 %v1620, %v1638
  %v1645 = vmul.f32 %v1621, %v1638
  %v1646 = vmul.f32 %v1622, %v1638
  %v1647 = vmul.f32 %v1623, %v1638
  %v1648 = vmul.f32 %v1624, %v1638
  %v1649 = vmul.f32 %v1625, %v1638
  %v1650 = vmul.f32 %v1626, %v1638
  %v1651 = vmul.f32 %v1627, %v1638
  %v1652 = vmul.f32 %v1628, %v1638
  %v1653 = vmul.f32 %v1629, %v1638
  %v1654 = vmul.f32 %v1630, %v1638
  %v1655 = vld [vmem:[%s4] sm:$0x1]
  %v1657 = vlaneseq
  %v1658 = vshrl.u32 %v1657, 7
  %v1659 = vsub.s32 0, %v1658
  %v1660 = vrot.slane %v1655, %v1659
  %v1662 = vadd.f32 %v1639, %v1660
  %v1663 = vadd.f32 %v1640, %v1660
  %v1664 = vadd.f32 %v1641, %v1660
  %v1665 = vadd.f32 %v1642, %v1660
  %v1666 = vadd.f32 %v1643, %v1660
  %v1667 = vadd.f32 %v1644, %v1660
  %v1668 = vadd.f32 %v1645, %v1660
  %v1669 = vadd.f32 %v1646, %v1660
  %v1670 = vadd.f32 %v1647, %v1660
  %v1671 = vadd.f32 %v1648, %v1660
  %v1672 = vadd.f32 %v1649, %v1660
  %v1673 = vadd.f32 %v1650, %v1660
  %v1674 = vadd.f32 %v1651, %v1660
  %v1675 = vadd.f32 %v1652, %v1660
  %v1676 = vadd.f32 %v1653, %v1660
  %v1677 = vadd.f32 %v1654, %v1660
  %v1678 = vpack.c.bf16 %v1663, %v1662
  %v1679 = vpack.c.bf16 %v1665, %v1664
  %v1680 = vpack.c.bf16 %v1667, %v1666
  %v1681 = vpack.c.bf16 %v1669, %v1668
  %v1682 = vpack.c.bf16 %v1671, %v1670
  %v1683 = vpack.c.bf16 %v1673, %v1672
  %v1684 = vpack.c.bf16 %v1675, %v1674
  %v1685 = vpack.c.bf16 %v1677, %v1676
  %v1694 = vunpack.c.l.b16 %v1678
  %v1695 = vunpack.c.h.b16 %v1678
  %v1696 = vunpack.c.l.b16 %v1679
  %v1697 = vunpack.c.h.b16 %v1679
  %v1698 = vunpack.c.l.b16 %v1680
  %v1699 = vunpack.c.h.b16 %v1680
  %v1700 = vunpack.c.l.b16 %v1681
  %v1701 = vunpack.c.h.b16 %v1681
  %v1702 = vunpack.c.l.b16 %v1682
  %v1703 = vunpack.c.h.b16 %v1682
  %v1704 = vunpack.c.l.b16 %v1683
  %v1705 = vunpack.c.h.b16 %v1683
  %v1706 = vunpack.c.l.b16 %v1684
  %v1707 = vunpack.c.h.b16 %v1684
  %v1708 = vunpack.c.l.b16 %v1685
  %v1709 = vunpack.c.h.b16 %v1685
  %v1710 = vpack.c.b16 %v1694, %v1694
  %v1711 = vpack.c.b16 %v1695, %v1695
  %v1712 = vpack.c.b16 %v1696, %v1696
  %v1713 = vpack.c.b16 %v1697, %v1697
  %v1714 = vpack.c.b16 %v1698, %v1698
  %v1715 = vpack.c.b16 %v1699, %v1699
  %v1716 = vpack.c.b16 %v1700, %v1700
  %v1717 = vpack.c.b16 %v1701, %v1701
  %v1718 = vpack.c.b16 %v1702, %v1702
  %v1719 = vpack.c.b16 %v1703, %v1703
  %v1720 = vpack.c.b16 %v1704, %v1704
  %v1721 = vpack.c.b16 %v1705, %v1705
  %v1722 = vpack.c.b16 %v1706, %v1706
  %v1723 = vpack.c.b16 %v1707, %v1707
  %v1724 = vpack.c.b16 %v1708, %v1708
  %v1725 = vpack.c.b16 %v1709, %v1709
  %1742 = vst [vmem:[%s5] sm:$0xf] %v1710
  %1743 = vst [vmem:[%s5 + $0x4] sm:$0xf] %v1711
  %1744 = vst [vmem:[%s5 + $0x8] sm:$0xf] %v1712
  %1745 = vst [vmem:[%s5 + $0xc] sm:$0xf] %v1713
  %1746 = vst [vmem:[%s5 + $0x10] sm:$0xf] %v1714
  %1747 = vst [vmem:[%s5 + $0x14] sm:$0xf] %v1715
  %1748 = vst [vmem:[%s5 + $0x18] sm:$0xf] %v1716
  %1749 = vst [vmem:[%s5 + $0x1c] sm:$0xf] %v1717
  %1750 = vst [vmem:[%s5 + $0x20] sm:$0xf] %v1718
  %1751 = vst [vmem:[%s5 + $0x24] sm:$0xf] %v1719
  %1752 = vst [vmem:[%s5 + $0x28] sm:$0xf] %v1720
  %1753 = vst [vmem:[%s5 + $0x2c] sm:$0xf] %v1721
  %1754 = vst [vmem:[%s5 + $0x30] sm:$0xf] %v1722
  %1755 = vst [vmem:[%s5 + $0x34] sm:$0xf] %v1723
  %1756 = vst [vmem:[%s5 + $0x38] sm:$0xf] %v1724
  %1757 = vst [vmem:[%s5 + $0x3c] sm:$0xf] %v1725
  // Predicated region
  $region22: #{autoencoder_forward.5} parent=0 // pred_check
    _
  $region23: #{autoencoder_forward.5} parent=0 // pred_check_branch
    %1759 = sbr.rel (0) target = $region25
  $region24: #{autoencoder_forward.5} parent=0 // pred_region
    _
  $region25: #{autoencoder_forward.5} parent=0 // pred_fallthru
    _
  // Predicated region
  $region26: #{autoencoder_forward.5} parent=0 // pred_check
    _
  $region27: #{autoencoder_forward.5} parent=0 // pred_check_branch
    %1761 = sbr.rel (0) target = $region29
  $region28: #{autoencoder_forward.5} parent=0 // pred_region
    _
  $region29: #{autoencoder_forward.5} parent=0 // pred_fallthru
    _

// kernel: autoencoder_forward.6
$region0: #{autoencoder_forward.6}
  #allocation0 [shape = 'u32[]', space=smem, size = 0x4, offset = 0x4, fixed_abs, tag = 'smem constant byte address 0x4 - core index']
  #allocation1 [shape = 'u32[144,128]{1,0:T(1,128)}', space=vmem, size = 0x12000, scoped, tag = 'internal scratch']
  %s0 = inlined_call_operand.vmem [shape: bf16[32,1152], index: 0, kind: input, shape index: {}]
  %s1 = inlined_call_operand.vmem [shape: bf16[1152,128], index: 1, kind: input, shape index: {}]
  %s2 = inlined_call_operand.vmem [shape: f32[1,128], index: 2, kind: input, shape index: {}]
  %s3 = inlined_call_operand.vmem [shape: f32[1,128], index: 3, kind: input, shape index: {}]
  %s4 = inlined_call_operand.vmem [shape: f32[1,128], index: 4, kind: input, shape index: {}]
  %s5 = inlined_call_operand.vmem [shape: bf16[32,128], index: 5, kind: output, shape index: {}]
  %s6 = sld [smem:[#allocation0]]
  $region30: #{autoencoder_forward.6} parent=0
    _
  %s8 = ssub.s32 1, %s6
  %s9 = scalar_select 0, %s8, %s6
  // Predicated region
  $region2: #{autoencoder_forward.6} parent=0 // pred_check
    _
  $region3: #{autoencoder_forward.6} parent=0 // pred_check_branch
    %11 = sbr.rel (0) target = $region5
  $region4: #{autoencoder_forward.6} parent=0 // pred_region
    _
  $region5: #{autoencoder_forward.6} parent=0 // pred_fallthru
    _
  // Predicated region
  $region6: #{autoencoder_forward.6} parent=0 // pred_check
    _
  $region7: #{autoencoder_forward.6} parent=0 // pred_check_branch
    %13 = sbr.rel (0) target = $region9
  $region8: #{autoencoder_forward.6} parent=0 // pred_region
    _
  $region9: #{autoencoder_forward.6} parent=0 // pred_fallthru
    _
  // Predicated region
  $region10: #{autoencoder_forward.6} parent=0 // pred_check
    _
  $region11: #{autoencoder_forward.6} parent=0 // pred_check_branch
    %15 = sbr.rel (0) target = $region13
  $region12: #{autoencoder_forward.6} parent=0 // pred_region
    _
  $region13: #{autoencoder_forward.6} parent=0 // pred_fallthru
    _
  // Predicated region
  $region14: #{autoencoder_forward.6} parent=0 // pred_check
    _
  $region15: #{autoencoder_forward.6} parent=0 // pred_check_branch
    %17 = sbr.rel (0) target = $region17
  $region16: #{autoencoder_forward.6} parent=0 // pred_region
    _
  $region17: #{autoencoder_forward.6} parent=0 // pred_fallthru
    _
  // Predicated region
  $region18: #{autoencoder_forward.6} parent=0 // pred_check
    _
  $region19: #{autoencoder_forward.6} parent=0 // pred_check_branch
    %19 = sbr.rel (0) target = $region21
  $region20: #{autoencoder_forward.6} parent=0 // pred_region
    _
  $region21: #{autoencoder_forward.6} parent=0 // pred_fallthru
    _
  %v21 = vld [vmem:[%s0] sm:$0xff]
  %v22 = vld [vmem:[%s0 + $0x8] sm:$0xff]
  %v23 = vld [vmem:[%s0 + $0x10] sm:$0xff]
  %v24 = vld [vmem:[%s0 + $0x18] sm:$0xff]
  %v25 = vld [vmem:[%s0 + $0x20] sm:$0xf]
  %v26 = vld [vmem:[%s0 + $0x24] sm:$0xff]
  %v27 = vld [vmem:[%s0 + $0x2c] sm:$0xff]
  %v28 = vld [vmem:[%s0 + $0x34] sm:$0xff]
  %v29 = vld [vmem:[%s0 + $0x3c] sm:$0xff]
  %v30 = vld [vmem:[%s0 + $0x44] sm:$0xf]
  %v31 = vld [vmem:[%s0 + $0x48] sm:$0xff]
  %v32 = vld [vmem:[%s0 + $0x50] sm:$0xff]
  %v33 = vld [vmem:[%s0 + $0x58] sm:$0xff]
  %v34 = vld [vmem:[%s0 + $0x60] sm:$0xff]
  %v35 = vld [vmem:[%s0 + $0x68] sm:$0xf]
  %v36 = vld [vmem:[%s0 + $0x6c] sm:$0xff]
  %v37 = vld [vmem:[%s0 + $0x74] sm:$0xff]
  %v38 = vld [vmem:[%s0 + $0x7c] sm:$0xff]
  %v39 = vld [vmem:[%s0 + $0x84] sm:$0xff]
  %v40 = vld [vmem:[%s0 + $0x8c] sm:$0xf]
  %v41 = vld [vmem:[%s1] sm:$0xf]
  %v42 = vld [vmem:[%s1 + $0x4] sm:$0xf]
  %v43 = vld [vmem:[%s1 + $0x8] sm:$0xf]
  %v44 = vld [vmem:[%s1 + $0xc] sm:$0xf]
  %v45 = vld [vmem:[%s1 + $0x10] sm:$0xf]
  %v46 = vld [vmem:[%s1 + $0x14] sm:$0xf]
  %v47 = vld [vmem:[%s1 + $0x18] sm:$0xf]
  %v48 = vld [vmem:[%s1 + $0x1c] sm:$0xf]
  %v49 = vld [vmem:[%s1 + $0x20] sm:$0xf]
  %v50 = vld [vmem:[%s1 + $0x24] sm:$0xf]
  %v51 = vld [vmem:[%s1 + $0x28] sm:$0xf]
  %v52 = vld [vmem:[%s1 + $0x2c] sm:$0xf]
  %v53 = vld [vmem:[%s1 + $0x30] sm:$0xf]
  %v54 = vld [vmem:[%s1 + $0x34] sm:$0xf]
  %v55 = vld [vmem:[%s1 + $0x38] sm:$0xf]
  %v56 = vld [vmem:[%s1 + $0x3c] sm:$0xf]
  %v57 = vld [vmem:[%s1 + $0x40] sm:$0xf]
  %v58 = vld [vmem:[%s1 + $0x44] sm:$0xf]
  %v59 = vld [vmem:[%s1 + $0x48] sm:$0xf]
  %v60 = vld [vmem:[%s1 + $0x4c] sm:$0xf]
  %v61 = vld [vmem:[%s1 + $0x50] sm:$0xf]
  %v62 = vld [vmem:[%s1 + $0x54] sm:$0xf]
  %v63 = vld [vmem:[%s1 + $0x58] sm:$0xf]
  %v64 = vld [vmem:[%s1 + $0x5c] sm:$0xf]
  %v65 = vld [vmem:[%s1 + $0x60] sm:$0xf]
  %v66 = vld [vmem:[%s1 + $0x64] sm:$0xf]
  %v67 = vld [vmem:[%s1 + $0x68] sm:$0xf]
  %v68 = vld [vmem:[%s1 + $0x6c] sm:$0xf]
  %v69 = vld [vmem:[%s1 + $0x70] sm:$0xf]
  %v70 = vld [vmem:[%s1 + $0x74] sm:$0xf]
  %v71 = vld [vmem:[%s1 + $0x78] sm:$0xf]
  %v72 = vld [vmem:[%s1 + $0x7c] sm:$0xf]
  %v73 = vld [vmem:[%s1 + $0x80] sm:$0xf]
  %v74 = vld [vmem:[%s1 + $0x84] sm:$0xf]
  %v75 = vld [vmem:[%s1 + $0x88] sm:$0xf]
  %v76 = vld [vmem:[%s1 + $0x8c] sm:$0xf]
  %v77 = vld [vmem:[%s1 + $0x90] sm:$0xf]
  %v78 = vld [vmem:[%s1 + $0x94] sm:$0xf]
  %v79 = vld [vmem:[%s1 + $0x98] sm:$0xf]
  %v80 = vld [vmem:[%s1 + $0x9c] sm:$0xf]
  %v81 = vld [vmem:[%s1 + $0xa0] sm:$0xf]
  %v82 = vld [vmem:[%s1 + $0xa4] sm:$0xf]
  %v83 = vld [vmem:[%s1 + $0xa8] sm:$0xf]
  %v84 = vld [vmem:[%s1 + $0xac] sm:$0xf]
  %v85 = vld [vmem:[%s1 + $0xb0] sm:$0xf]
  %v86 = vld [vmem:[%s1 + $0xb4] sm:$0xf]
  %v87 = vld [vmem:[%s1 + $0xb8] sm:$0xf]
  %v88 = vld [vmem:[%s1 + $0xbc] sm:$0xf]
  %v89 = vld [vmem:[%s1 + $0xc0] sm:$0xf]
  %v90 = vld [vmem:[%s1 + $0xc4] sm:$0xf]
  %v91 = vld [vmem:[%s1 + $0xc8] sm:$0xf]
  %v92 = vld [vmem:[%s1 + $0xcc] sm:$0xf]
  %v93 = vld [vmem:[%s1 + $0xd0] sm:$0xf]
  %v94 = vld [vmem:[%s1 + $0xd4] sm:$0xf]
  %v95 = vld [vmem:[%s1 + $0xd8] sm:$0xf]
  %v96 = vld [vmem:[%s1 + $0xdc] sm:$0xf]
  %v97 = vld [vmem:[%s1 + $0xe0] sm:$0xf]
  %v98 = vld [vmem:[%s1 + $0xe4] sm:$0xf]
  %v99 = vld [vmem:[%s1 + $0xe8] sm:$0xf]
  %v100 = vld [vmem:[%s1 + $0xec] sm:$0xf]
  %v101 = vld [vmem:[%s1 + $0xf0] sm:$0xf]
  %v102 = vld [vmem:[%s1 + $0xf4] sm:$0xf]
  %v103 = vld [vmem:[%s1 + $0xf8] sm:$0xf]
  %v104 = vld [vmem:[%s1 + $0xfc] sm:$0xf]
  %v105 = vld [vmem:[%s1 + $0x100] sm:$0xf]
  %v106 = vld [vmem:[%s1 + $0x104] sm:$0xf]
  %v107 = vld [vmem:[%s1 + $0x108] sm:$0xf]
  %v108 = vld [vmem:[%s1 + $0x10c] sm:$0xf]
  %v109 = vld [vmem:[%s1 + $0x110] sm:$0xf]
  %v110 = vld [vmem:[%s1 + $0x114] sm:$0xf]
  %v111 = vld [vmem:[%s1 + $0x118] sm:$0xf]
  %v112 = vld [vmem:[%s1 + $0x11c] sm:$0xf]
  %v113 = vld [vmem:[%s1 + $0x120] sm:$0xf]
  %v114 = vld [vmem:[%s1 + $0x124] sm:$0xf]
  %v115 = vld [vmem:[%s1 + $0x128] sm:$0xf]
  %v116 = vld [vmem:[%s1 + $0x12c] sm:$0xf]
  %v117 = vld [vmem:[%s1 + $0x130] sm:$0xf]
  %v118 = vld [vmem:[%s1 + $0x134] sm:$0xf]
  %v119 = vld [vmem:[%s1 + $0x138] sm:$0xf]
  %v120 = vld [vmem:[%s1 + $0x13c] sm:$0xf]
  %v121 = vld [vmem:[%s1 + $0x140] sm:$0xf]
  %v122 = vld [vmem:[%s1 + $0x144] sm:$0xf]
  %v123 = vld [vmem:[%s1 + $0x148] sm:$0xf]
  %v124 = vld [vmem:[%s1 + $0x14c] sm:$0xf]
  %v125 = vld [vmem:[%s1 + $0x150] sm:$0xf]
  %v126 = vld [vmem:[%s1 + $0x154] sm:$0xf]
  %v127 = vld [vmem:[%s1 + $0x158] sm:$0xf]
  %v128 = vld [vmem:[%s1 + $0x15c] sm:$0xf]
  %v129 = vld [vmem:[%s1 + $0x160] sm:$0xf]
  %v130 = vld [vmem:[%s1 + $0x164] sm:$0xf]
  %v131 = vld [vmem:[%s1 + $0x168] sm:$0xf]
  %v132 = vld [vmem:[%s1 + $0x16c] sm:$0xf]
  %v133 = vld [vmem:[%s1 + $0x170] sm:$0xf]
  %v134 = vld [vmem:[%s1 + $0x174] sm:$0xf]
  %v135 = vld [vmem:[%s1 + $0x178] sm:$0xf]
  %v136 = vld [vmem:[%s1 + $0x17c] sm:$0xf]
  %v137 = vld [vmem:[%s1 + $0x180] sm:$0xf]
  %v138 = vld [vmem:[%s1 + $0x184] sm:$0xf]
  %v139 = vld [vmem:[%s1 + $0x188] sm:$0xf]
  %v140 = vld [vmem:[%s1 + $0x18c] sm:$0xf]
  %v141 = vld [vmem:[%s1 + $0x190] sm:$0xf]
  %v142 = vld [vmem:[%s1 + $0x194] sm:$0xf]
  %v143 = vld [vmem:[%s1 + $0x198] sm:$0xf]
  %v144 = vld [vmem:[%s1 + $0x19c] sm:$0xf]
  %v145 = vld [vmem:[%s1 + $0x1a0] sm:$0xf]
  %v146 = vld [vmem:[%s1 + $0x1a4] sm:$0xf]
  %v147 = vld [vmem:[%s1 + $0x1a8] sm:$0xf]
  %v148 = vld [vmem:[%s1 + $0x1ac] sm:$0xf]
  %v149 = vld [vmem:[%s1 + $0x1b0] sm:$0xf]
  %v150 = vld [vmem:[%s1 + $0x1b4] sm:$0xf]
  %v151 = vld [vmem:[%s1 + $0x1b8] sm:$0xf]
  %v152 = vld [vmem:[%s1 + $0x1bc] sm:$0xf]
  %v153 = vld [vmem:[%s1 + $0x1c0] sm:$0xf]
  %v154 = vld [vmem:[%s1 + $0x1c4] sm:$0xf]
  %v155 = vld [vmem:[%s1 + $0x1c8] sm:$0xf]
  %v156 = vld [vmem:[%s1 + $0x1cc] sm:$0xf]
  %v157 = vld [vmem:[%s1 + $0x1d0] sm:$0xf]
  %v158 = vld [vmem:[%s1 + $0x1d4] sm:$0xf]
  %v159 = vld [vmem:[%s1 + $0x1d8] sm:$0xf]
  %v160 = vld [vmem:[%s1 + $0x1dc] sm:$0xf]
  %v161 = vld [vmem:[%s1 + $0x1e0] sm:$0xf]
  %v162 = vld [vmem:[%s1 + $0x1e4] sm:$0xf]
  %v163 = vld [vmem:[%s1 + $0x1e8] sm:$0xf]
  %v164 = vld [vmem:[%s1 + $0x1ec] sm:$0xf]
  %v165 = vld [vmem:[%s1 + $0x1f0] sm:$0xf]
  %v166 = vld [vmem:[%s1 + $0x1f4] sm:$0xf]
  %v167 = vld [vmem:[%s1 + $0x1f8] sm:$0xf]
  %v168 = vld [vmem:[%s1 + $0x1fc] sm:$0xf]
  %v169 = vld [vmem:[%s1 + $0x200] sm:$0xf]
  %v170 = vld [vmem:[%s1 + $0x204] sm:$0xf]
  %v171 = vld [vmem:[%s1 + $0x208] sm:$0xf]
  %v172 = vld [vmem:[%s1 + $0x20c] sm:$0xf]
  %v173 = vld [vmem:[%s1 + $0x210] sm:$0xf]
  %v174 = vld [vmem:[%s1 + $0x214] sm:$0xf]
  %v175 = vld [vmem:[%s1 + $0x218] sm:$0xf]
  %v176 = vld [vmem:[%s1 + $0x21c] sm:$0xf]
  %v177 = vld [vmem:[%s1 + $0x220] sm:$0xf]
  %v178 = vld [vmem:[%s1 + $0x224] sm:$0xf]
  %v179 = vld [vmem:[%s1 + $0x228] sm:$0xf]
  %v180 = vld [vmem:[%s1 + $0x22c] sm:$0xf]
  %v181 = vld [vmem:[%s1 + $0x230] sm:$0xf]
  %v182 = vld [vmem:[%s1 + $0x234] sm:$0xf]
  %v183 = vld [vmem:[%s1 + $0x238] sm:$0xf]
  %v184 = vld [vmem:[%s1 + $0x23c] sm:$0xf]
  %v185 = vld [vmem:[%s2] sm:$0x1]
  %v187 = vlaneseq
  %v188 = vshrl.u32 %v187, 7
  %v189 = vsub.s32 0, %v188
  %v190 = vrot.slane %v185, %v189
  %v212 = vunpack.c.l.b16 %v21
  %v213 = vunpack.c.h.b16 %v21
  %v214 = vunpack.c.l.b16 %v22
  %v215 = vunpack.c.h.b16 %v22
  %v216 = vunpack.c.l.b16 %v23
  %v217 = vunpack.c.h.b16 %v23
  %v218 = vunpack.c.l.b16 %v24
  %v219 = vunpack.c.h.b16 %v24
  %v220 = vunpack.c.l.b16 %v25
  %v221 = vunpack.c.l.b16 %v26
  %v222 = vunpack.c.h.b16 %v26
  %v223 = vunpack.c.l.b16 %v27
  %v224 = vunpack.c.h.b16 %v27
  %v225 = vunpack.c.l.b16 %v28
  %v226 = vunpack.c.h.b16 %v28
  %v227 = vunpack.c.l.b16 %v29
  %v228 = vunpack.c.h.b16 %v29
  %v229 = vunpack.c.l.b16 %v30
  %v230 = vunpack.c.l.b16 %v31
  %v231 = vunpack.c.h.b16 %v31
  %v232 = vunpack.c.l.b16 %v32
  %v233 = vunpack.c.h.b16 %v32
  %v234 = vunpack.c.l.b16 %v33
  %v235 = vunpack.c.h.b16 %v33
  %v236 = vunpack.c.l.b16 %v34
  %v237 = vunpack.c.h.b16 %v34
  %v238 = vunpack.c.l.b16 %v35
  %v239 = vunpack.c.l.b16 %v36
  %v240 = vunpack.c.h.b16 %v36
  %v241 = vunpack.c.l.b16 %v37
  %v242 = vunpack.c.h.b16 %v37
  %v243 = vunpack.c.l.b16 %v38
  %v244 = vunpack.c.h.b16 %v38
  %v245 = vunpack.c.l.b16 %v39
  %v246 = vunpack.c.h.b16 %v39
  %v247 = vunpack.c.l.b16 %v40
  %v248 = vpack.c.b16 %v221, %v212
  %v249 = vpack.c.b16 %v222, %v213
  %v250 = vpack.c.b16 %v223, %v214
  %v251 = vpack.c.b16 %v224, %v215
  %v252 = vpack.c.b16 %v225, %v216
  %v253 = vpack.c.b16 %v226, %v217
  %v254 = vpack.c.b16 %v227, %v218
  %v255 = vpack.c.b16 %v228, %v219
  %v256 = vpack.c.b16 %v229, %v220
  %v257 = vpack.c.b16 %v239, %v230
  %v258 = vpack.c.b16 %v240, %v231
  %v259 = vpack.c.b16 %v241, %v232
  %v260 = vpack.c.b16 %v242, %v233
  %v261 = vpack.c.b16 %v243, %v234
  %v262 = vpack.c.b16 %v244, %v235
  %v263 = vpack.c.b16 %v245, %v236
  %v264 = vpack.c.b16 %v246, %v237
  %v265 = vpack.c.b16 %v247, %v238
  %v428 = vunpack.c.l.b16 %v41
  %v429 = vunpack.c.l.b16 %v42
  %v430 = vunpack.c.l.b16 %v43
  %v431 = vunpack.c.l.b16 %v44
  %v432 = vunpack.c.l.b16 %v45
  %v433 = vunpack.c.l.b16 %v46
  %v434 = vunpack.c.l.b16 %v47
  %v435 = vunpack.c.l.b16 %v48
  %v436 = vunpack.c.l.b16 %v49
  %v437 = vunpack.c.l.b16 %v50
  %v438 = vunpack.c.l.b16 %v51
  %v439 = vunpack.c.l.b16 %v52
  %v440 = vunpack.c.l.b16 %v53
  %v441 = vunpack.c.l.b16 %v54
  %v442 = vunpack.c.l.b16 %v55
  %v443 = vunpack.c.l.b16 %v56
  %v444 = vunpack.c.l.b16 %v57
  %v445 = vunpack.c.l.b16 %v58
  %v446 = vunpack.c.l.b16 %v59
  %v447 = vunpack.c.l.b16 %v60
  %v448 = vunpack.c.l.b16 %v61
  %v449 = vunpack.c.l.b16 %v62
  %v450 = vunpack.c.l.b16 %v63
  %v451 = vunpack.c.l.b16 %v64
  %v452 = vunpack.c.l.b16 %v65
  %v453 = vunpack.c.l.b16 %v66
  %v454 = vunpack.c.l.b16 %v67
  %v455 = vunpack.c.l.b16 %v68
  %v456 = vunpack.c.l.b16 %v69
  %v457 = vunpack.c.l.b16 %v70
  %v458 = vunpack.c.l.b16 %v71
  %v459 = vunpack.c.l.b16 %v72
  %v460 = vunpack.c.l.b16 %v73
  %v461 = vunpack.c.l.b16 %v74
  %v462 = vunpack.c.l.b16 %v75
  %v463 = vunpack.c.l.b16 %v76
  %v464 = vunpack.c.l.b16 %v77
  %v465 = vunpack.c.l.b16 %v78
  %v466 = vunpack.c.l.b16 %v79
  %v467 = vunpack.c.l.b16 %v80
  %v468 = vunpack.c.l.b16 %v81
  %v469 = vunpack.c.l.b16 %v82
  %v470 = vunpack.c.l.b16 %v83
  %v471 = vunpack.c.l.b16 %v84
  %v472 = vunpack.c.l.b16 %v85
  %v473 = vunpack.c.l.b16 %v86
  %v474 = vunpack.c.l.b16 %v87
  %v475 = vunpack.c.l.b16 %v88
  %v476 = vunpack.c.l.b16 %v89
  %v477 = vunpack.c.l.b16 %v90
  %v478 = vunpack.c.l.b16 %v91
  %v479 = vunpack.c.l.b16 %v92
  %v480 = vunpack.c.l.b16 %v93
  %v481 = vunpack.c.l.b16 %v94
  %v482 = vunpack.c.l.b16 %v95
  %v483 = vunpack.c.l.b16 %v96
  %v484 = vunpack.c.l.b16 %v97
  %v485 = vunpack.c.l.b16 %v98
  %v486 = vunpack.c.l.b16 %v99
  %v487 = vunpack.c.l.b16 %v100
  %v488 = vunpack.c.l.b16 %v101
  %v489 = vunpack.c.l.b16 %v102
  %v490 = vunpack.c.l.b16 %v103
  %v491 = vunpack.c.l.b16 %v104
  %v492 = vunpack.c.l.b16 %v105
  %v493 = vunpack.c.l.b16 %v106
  %v494 = vunpack.c.l.b16 %v107
  %v495 = vunpack.c.l.b16 %v108
  %v496 = vunpack.c.l.b16 %v109
  %v497 = vunpack.c.l.b16 %v110
  %v498 = vunpack.c.l.b16 %v111
  %v499 = vunpack.c.l.b16 %v112
  %v500 = vunpack.c.l.b16 %v113
  %v501 = vunpack.c.l.b16 %v114
  %v502 = vunpack.c.l.b16 %v115
  %v503 = vunpack.c.l.b16 %v116
  %v504 = vunpack.c.l.b16 %v117
  %v505 = vunpack.c.l.b16 %v118
  %v506 = vunpack.c.l.b16 %v119
  %v507 = vunpack.c.l.b16 %v120
  %v508 = vunpack.c.l.b16 %v121
  %v509 = vunpack.c.l.b16 %v122
  %v510 = vunpack.c.l.b16 %v123
  %v511 = vunpack.c.l.b16 %v124
  %v512 = vunpack.c.l.b16 %v125
  %v513 = vunpack.c.l.b16 %v126
  %v514 = vunpack.c.l.b16 %v127
  %v515 = vunpack.c.l.b16 %v128
  %v516 = vunpack.c.l.b16 %v129
  %v517 = vunpack.c.l.b16 %v130
  %v518 = vunpack.c.l.b16 %v131
  %v519 = vunpack.c.l.b16 %v132
  %v520 = vunpack.c.l.b16 %v133
  %v521 = vunpack.c.l.b16 %v134
  %v522 = vunpack.c.l.b16 %v135
  %v523 = vunpack.c.l.b16 %v136
  %v524 = vunpack.c.l.b16 %v137
  %v525 = vunpack.c.l.b16 %v138
  %v526 = vunpack.c.l.b16 %v139
  %v527 = vunpack.c.l.b16 %v140
  %v528 = vunpack.c.l.b16 %v141
  %v529 = vunpack.c.l.b16 %v142
  %v530 = vunpack.c.l.b16 %v143
  %v531 = vunpack.c.l.b16 %v144
  %v532 = vunpack.c.l.b16 %v145
  %v533 = vunpack.c.l.b16 %v146
  %v534 = vunpack.c.l.b16 %v147
  %v535 = vunpack.c.l.b16 %v148
  %v536 = vunpack.c.l.b16 %v149
  %v537 = vunpack.c.l.b16 %v150
  %v538 = vunpack.c.l.b16 %v151
  %v539 = vunpack.c.l.b16 %v152
  %v540 = vunpack.c.l.b16 %v153
  %v541 = vunpack.c.l.b16 %v154
  %v542 = vunpack.c.l.b16 %v155
  %v543 = vunpack.c.l.b16 %v156
  %v544 = vunpack.c.l.b16 %v157
  %v545 = vunpack.c.l.b16 %v158
  %v546 = vunpack.c.l.b16 %v159
  %v547 = vunpack.c.l.b16 %v160
  %v548 = vunpack.c.l.b16 %v161
  %v549 = vunpack.c.l.b16 %v162
  %v550 = vunpack.c.l.b16 %v163
  %v551 = vunpack.c.l.b16 %v164
  %v552 = vunpack.c.l.b16 %v165
  %v553 = vunpack.c.l.b16 %v166
  %v554 = vunpack.c.l.b16 %v167
  %v555 = vunpack.c.l.b16 %v168
  %v556 = vunpack.c.l.b16 %v169
  %v557 = vunpack.c.l.b16 %v170
  %v558 = vunpack.c.l.b16 %v171
  %v559 = vunpack.c.l.b16 %v172
  %v560 = vunpack.c.l.b16 %v173
  %v561 = vunpack.c.l.b16 %v174
  %v562 = vunpack.c.l.b16 %v175
  %v563 = vunpack.c.l.b16 %v176
  %v564 = vunpack.c.l.b16 %v177
  %v565 = vunpack.c.l.b16 %v178
  %v566 = vunpack.c.l.b16 %v179
  %v567 = vunpack.c.l.b16 %v180
  %v568 = vunpack.c.l.b16 %v181
  %v569 = vunpack.c.l.b16 %v182
  %v570 = vunpack.c.l.b16 %v183
  %v571 = vunpack.c.l.b16 %v184
  %v572 = vpack.c.b16 %v429, %v428
  %v573 = vpack.c.b16 %v431, %v430
  %v574 = vpack.c.b16 %v433, %v432
  %v575 = vpack.c.b16 %v435, %v434
  %v576 = vpack.c.b16 %v437, %v436
  %v577 = vpack.c.b16 %v439, %v438
  %v578 = vpack.c.b16 %v441, %v440
  %v579 = vpack.c.b16 %v443, %v442
  %v580 = vpack.c.b16 %v445, %v444
  %v581 = vpack.c.b16 %v447, %v446
  %v582 = vpack.c.b16 %v449, %v448
  %v583 = vpack.c.b16 %v451, %v450
  %v584 = vpack.c.b16 %v453, %v452
  %v585 = vpack.c.b16 %v455, %v454
  %v586 = vpack.c.b16 %v457, %v456
  %v587 = vpack.c.b16 %v459, %v458
  %v588 = vpack.c.b16 %v461, %v460
  %v589 = vpack.c.b16 %v463, %v462
  %v590 = vpack.c.b16 %v465, %v464
  %v591 = vpack.c.b16 %v467, %v466
  %v592 = vpack.c.b16 %v469, %v468
  %v593 = vpack.c.b16 %v471, %v470
  %v594 = vpack.c.b16 %v473, %v472
  %v595 = vpack.c.b16 %v475, %v474
  %v596 = vpack.c.b16 %v477, %v476
  %v597 = vpack.c.b16 %v479, %v478
  %v598 = vpack.c.b16 %v481, %v480
  %v599 = vpack.c.b16 %v483, %v482
  %v600 = vpack.c.b16 %v485, %v484
  %v601 = vpack.c.b16 %v487, %v486
  %v602 = vpack.c.b16 %v489, %v488
  %v603 = vpack.c.b16 %v491, %v490
  %v604 = vpack.c.b16 %v493, %v492
  %v605 = vpack.c.b16 %v495, %v494
  %v606 = vpack.c.b16 %v497, %v496
  %v607 = vpack.c.b16 %v499, %v498
  %v608 = vpack.c.b16 %v501, %v500
  %v609 = vpack.c.b16 %v503, %v502
  %v610 = vpack.c.b16 %v505, %v504
  %v611 = vpack.c.b16 %v507, %v506
  %v612 = vpack.c.b16 %v509, %v508
  %v613 = vpack.c.b16 %v511, %v510
  %v614 = vpack.c.b16 %v513, %v512
  %v615 = vpack.c.b16 %v515, %v514
  %v616 = vpack.c.b16 %v517, %v516
  %v617 = vpack.c.b16 %v519, %v518
  %v618 = vpack.c.b16 %v521, %v520
  %v619 = vpack.c.b16 %v523, %v522
  %v620 = vpack.c.b16 %v525, %v524
  %v621 = vpack.c.b16 %v527, %v526
  %v622 = vpack.c.b16 %v529, %v528
  %v623 = vpack.c.b16 %v531, %v530
  %v624 = vpack.c.b16 %v533, %v532
  %v625 = vpack.c.b16 %v535, %v534
  %v626 = vpack.c.b16 %v537, %v536
  %v627 = vpack.c.b16 %v539, %v538
  %v628 = vpack.c.b16 %v541, %v540
  %v629 = vpack.c.b16 %v543, %v542
  %v630 = vpack.c.b16 %v545, %v544
  %v631 = vpack.c.b16 %v547, %v546
  %v632 = vpack.c.b16 %v549, %v548
  %v633 = vpack.c.b16 %v551, %v550
  %v634 = vpack.c.b16 %v553, %v552
  %v635 = vpack.c.b16 %v555, %v554
  %v636 = vpack.c.b16 %v557, %v556
  %v637 = vpack.c.b16 %v559, %v558
  %v638 = vpack.c.b16 %v561, %v560
  %v639 = vpack.c.b16 %v563, %v562
  %v640 = vpack.c.b16 %v565, %v564
  %v641 = vpack.c.b16 %v567, %v566
  %v642 = vpack.c.b16 %v569, %v568
  %v643 = vpack.c.b16 %v571, %v570
  %716 = vmatprep.subr.bf16.mxu0 0
  %717 = vmatpush1.bf16.msra.mxu0 %v572
  %718 = vmatprep.subr.bf16.mxu0 0
  %719 = vmatpush1.bf16.msra.mxu0 %v573
  %720 = vmatprep.subr.bf16.mxu0 0
  %721 = vmatpush1.bf16.msra.mxu0 %v574
  %722 = vmatprep.subr.bf16.mxu0 0
  %723 = vmatpush1.bf16.msra.mxu0 %v575
  %724 = vmatprep.subr.bf16.mxu0 0
  %725 = vmatpush1.bf16.msra.mxu0 %v576
  %726 = vmatprep.subr.bf16.mxu0 0
  %727 = vmatpush1.bf16.msra.mxu0 %v577
  %728 = vmatprep.subr.bf16.mxu0 0
  %729 = vmatpush1.bf16.msra.mxu0 %v578
  %730 = vmatprep.subr.bf16.mxu0 0
  %731 = vmatpush1.bf16.msra.mxu0 %v579
  %732 = vmatprep.subr.bf16.mxu0 0
  %733 = vmatpush1.bf16.msra.mxu0 %v580
  %734 = vmatprep.subr.bf16.mxu0 0
  %735 = vmatpush1.bf16.msra.mxu0 %v581
  %736 = vmatprep.subr.bf16.mxu0 0
  %737 = vmatpush1.bf16.msra.mxu0 %v582
  %738 = vmatprep.subr.bf16.mxu0 0
  %739 = vmatpush1.bf16.msra.mxu0 %v583
  %740 = vmatprep.subr.bf16.mxu0 0
  %741 = vmatpush1.bf16.msra.mxu0 %v584
  %742 = vmatprep.subr.bf16.mxu0 0
  %743 = vmatpush1.bf16.msra.mxu0 %v585
  %744 = vmatprep.subr.bf16.mxu0 0
  %745 = vmatpush1.bf16.msra.mxu0 %v586
  %746 = vmatprep.subr.bf16.mxu0 0
  %747 = vmatpush1.bf16.msra.mxu0 %v587
  %748 = vmatprep.mubr.bf16.mxu0 %v249
  %749 = vmatmul.mubr.bf16.gmra.mrb[0].mxu0 %v248
  %v750 = vpop.f32.mrb[0].mxu0
  %v751 = vadd.f32 %v190, %v750
  %v752 = vpop.f32.mrb[0].mxu0
  %v753 = vpop.f32.mrb[0].mxu0
  %v754 = vadd.f32 %v190, %v753
  %v755 = vpop.f32.mrb[0].mxu0
  %756 = vmatprep.mubr.bf16.mxu0 %v258
  %757 = vmatmul.mubr.bf16.gmra.mrb[0].mxu0 %v257
  %v758 = vpop.f32.mrb[0].mxu0
  %v759 = vadd.f32 %v190, %v758
  %v760 = vpop.f32.mrb[0].mxu0
  %v761 = vpop.f32.mrb[0].mxu0
  %v762 = vadd.f32 %v190, %v761
  %v763 = vpop.f32.mrb[0].mxu0
  %764 = vdwg.mxu0
  %765 = vmatprep.subr.bf16.mxu0 0
  %766 = vmatpush1.bf16.msra.mxu0 %v588
  %767 = vmatprep.subr.bf16.mxu0 0
  %768 = vmatpush1.bf16.msra.mxu0 %v589
  %769 = vmatprep.subr.bf16.mxu0 0
  %770 = vmatpush1.bf16.msra.mxu0 %v590
  %771 = vmatprep.subr.bf16.mxu0 0
  %772 = vmatpush1.bf16.msra.mxu0 %v591
  %773 = vmatprep.subr.bf16.mxu0 0
  %774 = vmatpush1.bf16.msra.mxu0 %v592
  %775 = vmatprep.subr.bf16.mxu0 0
  %776 = vmatpush1.bf16.msra.mxu0 %v593
  %777 = vmatprep.subr.bf16.mxu0 0
  %778 = vmatpush1.bf16.msra.mxu0 %v594
  %779 = vmatprep.subr.bf16.mxu0 0
  %780 = vmatpush1.bf16.msra.mxu0 %v595
  %781 = vmatprep.subr.bf16.mxu0 0
  %782 = vmatpush1.bf16.msra.mxu0 %v596
  %783 = vmatprep.subr.bf16.mxu0 0
  %784 = vmatpush1.bf16.msra.mxu0 %v597
  %785 = vmatprep.subr.bf16.mxu0 0
  %786 = vmatpush1.bf16.msra.mxu0 %v598
  %787 = vmatprep.subr.bf16.mxu0 0
  %788 = vmatpush1.bf16.msra.mxu0 %v599
  %789 = vmatprep.subr.bf16.mxu0 0
  %790 = vmatpush1.bf16.msra.mxu0 %v600
  %791 = vmatprep.subr.bf16.mxu0 0
  %792 = vmatpush1.bf16.msra.mxu0 %v601
  %793 = vmatprep.subr.bf16.mxu0 0
  %794 = vmatpush1.bf16.msra.mxu0 %v602
  %795 = vmatprep.subr.bf16.mxu0 0
  %796 = vmatpush1.bf16.msra.mxu0 %v603
  %797 = vmatprep.mubr.bf16.mxu0 %v251
  %798 = vmatmul.mubr.bf16.gmra.mrb[0].mxu0 %v250
  %v799 = vpop.f32.mrb[0].mxu0
  %v800 = vadd.f32 %v751, %v799
  %v801 = vpop.f32.mrb[0].mxu0
  %v802 = vpop.f32.mrb[0].mxu0
  %v803 = vadd.f32 %v754, %v802
  %v804 = vpop.f32.mrb[0].mxu0
  %805 = vmatprep.mubr.bf16.mxu0 %v260
  %806 = vmatmul.mubr.bf16.gmra.mrb[0].mxu0 %v259
  %v807 = vpop.f32.mrb[0].mxu0
  %v808 = vadd.f32 %v759, %v807
  %v809 = vpop.f32.mrb[0].mxu0
  %v810 = vpop.f32.mrb[0].mxu0
  %v811 = vadd.f32 %v762, %v810
  %v812 = vpop.f32.mrb[0].mxu0
  %813 = vdwg.mxu0
  %814 = vmatprep.subr.bf16.mxu0 0
  %815 = vmatpush1.bf16.msra.mxu0 %v604
  %816 = vmatprep.subr.bf16.mxu0 0
  %817 = vmatpush1.bf16.msra.mxu0 %v605
  %818 = vmatprep.subr.bf16.mxu0 0
  %819 = vmatpush1.bf16.msra.mxu0 %v606
  %820 = vmatprep.subr.bf16.mxu0 0
  %821 = vmatpush1.bf16.msra.mxu0 %v607
  %822 = vmatprep.subr.bf16.mxu0 0
  %823 = vmatpush1.bf16.msra.mxu0 %v608
  %824 = vmatprep.subr.bf16.mxu0 0
  %825 = vmatpush1.bf16.msra.mxu0 %v609
  %826 = vmatprep.subr.bf16.mxu0 0
  %827 = vmatpush1.bf16.msra.mxu0 %v610
  %828 = vmatprep.subr.bf16.mxu0 0
  %829 = vmatpush1.bf16.msra.mxu0 %v611
  %830 = vmatprep.subr.bf16.mxu0 0
  %831 = vmatpush1.bf16.msra.mxu0 %v612
  %832 = vmatprep.subr.bf16.mxu0 0
  %833 = vmatpush1.bf16.msra.mxu0 %v613
  %834 = vmatprep.subr.bf16.mxu0 0
  %835 = vmatpush1.bf16.msra.mxu0 %v614
  %836 = vmatprep.subr.bf16.mxu0 0
  %837 = vmatpush1.bf16.msra.mxu0 %v615
  %838 = vmatprep.subr.bf16.mxu0 0
  %839 = vmatpush1.bf16.msra.mxu0 %v616
  %840 = vmatprep.subr.bf16.mxu0 0
  %841 = vmatpush1.bf16.msra.mxu0 %v617
  %842 = vmatprep.subr.bf16.mxu0 0
  %843 = vmatpush1.bf16.msra.mxu0 %v618
  %844 = vmatprep.subr.bf16.mxu0 0
  %845 = vmatpush1.bf16.msra.mxu0 %v619
  %846 = vmatprep.mubr.bf16.mxu0 %v253
  %847 = vmatmul.mubr.bf16.gmra.mrb[0].mxu0 %v252
  %v848 = vpop.f32.mrb[0].mxu0
  %v849 = vadd.f32 %v800, %v848
  %v850 = vpop.f32.mrb[0].mxu0
  %v851 = vpop.f32.mrb[0].mxu0
  %v852 = vadd.f32 %v803, %v851
  %v853 = vpop.f32.mrb[0].mxu0
  %854 = vmatprep.mubr.bf16.mxu0 %v262
  %855 = vmatmul.mubr.bf16.gmra.mrb[0].mxu0 %v261
  %v856 = vpop.f32.mrb[0].mxu0
  %v857 = vadd.f32 %v808, %v856
  %v858 = vpop.f32.mrb[0].mxu0
  %v859 = vpop.f32.mrb[0].mxu0
  %v860 = vadd.f32 %v811, %v859
  %v861 = vpop.f32.mrb[0].mxu0
  %862 = vdwg.mxu0
  %863 = vmatprep.subr.bf16.mxu0 0
  %864 = vmatpush1.bf16.msra.mxu0 %v620
  %865 = vmatprep.subr.bf16.mxu0 0
  %866 = vmatpush1.bf16.msra.mxu0 %v621
  %867 = vmatprep.subr.bf16.mxu0 0
  %868 = vmatpush1.bf16.msra.mxu0 %v622
  %869 = vmatprep.subr.bf16.mxu0 0
  %870 = vmatpush1.bf16.msra.mxu0 %v623
  %871 = vmatprep.subr.bf16.mxu0 0
  %872 = vmatpush1.bf16.msra.mxu0 %v624
  %873 = vmatprep.subr.bf16.mxu0 0
  %874 = vmatpush1.bf16.msra.mxu0 %v625
  %875 = vmatprep.subr.bf16.mxu0 0
  %876 = vmatpush1.bf16.msra.mxu0 %v626
  %877 = vmatprep.subr.bf16.mxu0 0
  %878 = vmatpush1.bf16.msra.mxu0 %v627
  %879 = vmatprep.subr.bf16.mxu0 0
  %880 = vmatpush1.bf16.msra.mxu0 %v628
  %881 = vmatprep.subr.bf16.mxu0 0
  %882 = vmatpush1.bf16.msra.mxu0 %v629
  %883 = vmatprep.subr.bf16.mxu0 0
  %884 = vmatpush1.bf16.msra.mxu0 %v630
  %885 = vmatprep.subr.bf16.mxu0 0
  %886 = vmatpush1.bf16.msra.mxu0 %v631
  %887 = vmatprep.subr.bf16.mxu0 0
  %888 = vmatpush1.bf16.msra.mxu0 %v632
  %889 = vmatprep.subr.bf16.mxu0 0
  %890 = vmatpush1.bf16.msra.mxu0 %v633
  %891 = vmatprep.subr.bf16.mxu0 0
  %892 = vmatpush1.bf16.msra.mxu0 %v634
  %893 = vmatprep.subr.bf16.mxu0 0
  %894 = vmatpush1.bf16.msra.mxu0 %v635
  %895 = vmatprep.mubr.bf16.mxu0 %v255
  %896 = vmatmul.mubr.bf16.gmra.mrb[0].mxu0 %v254
  %v897 = vpop.f32.mrb[0].mxu0
  %v898 = vadd.f32 %v849, %v897
  %v899 = vpop.f32.mrb[0].mxu0
  %v900 = vpop.f32.mrb[0].mxu0
  %v901 = vadd.f32 %v852, %v900
  %v902 = vpop.f32.mrb[0].mxu0
  %903 = vmatprep.mubr.bf16.mxu0 %v264
  %904 = vmatmul.mubr.bf16.gmra.mrb[0].mxu0 %v263
  %v905 = vpop.f32.mrb[0].mxu0
  %v906 = vadd.f32 %v857, %v905
  %v907 = vpop.f32.mrb[0].mxu0
  %v908 = vpop.f32.mrb[0].mxu0
  %v909 = vadd.f32 %v860, %v908
  %v910 = vpop.f32.mrb[0].mxu0
  %911 = vdwg.mxu0
  %912 = vmatprep.subr.bf16.mxu0 0
  %913 = vmatpush1.bf16.msra.mxu0 %v636
  %914 = vmatprep.subr.bf16.mxu0 0
  %915 = vmatpush1.bf16.msra.mxu0 %v637
  %916 = vmatprep.subr.bf16.mxu0 0
  %917 = vmatpush1.bf16.msra.mxu0 %v638
  %918 = vmatprep.subr.bf16.mxu0 0
  %919 = vmatpush1.bf16.msra.mxu0 %v639
  %920 = vmatprep.subr.bf16.mxu0 0
  %921 = vmatpush1.bf16.msra.mxu0 %v640
  %922 = vmatprep.subr.bf16.mxu0 0
  %923 = vmatpush1.bf16.msra.mxu0 %v641
  %924 = vmatprep.subr.bf16.mxu0 0
  %925 = vmatpush1.bf16.msra.mxu0 %v642
  %926 = vmatprep.subr.bf16.mxu0 0
  %927 = vmatpush1.bf16.msra.mxu0 %v643
  %928 = vmatprep.subr.bf16.mxu0 0
  %929 = vmatpush1.bf16.msra.mxu0 0
  %930 = vmatprep.subr.bf16.mxu0 0
  %931 = vmatpush1.bf16.msra.mxu0 0
  %932 = vmatprep.subr.bf16.mxu0 0
  %933 = vmatpush1.bf16.msra.mxu0 0
  %934 = vmatprep.subr.bf16.mxu0 0
  %935 = vmatpush1.bf16.msra.mxu0 0
  %936 = vmatprep.subr.bf16.mxu0 0
  %937 = vmatpush1.bf16.msra.mxu0 0
  %938 = vmatprep.subr.bf16.mxu0 0
  %939 = vmatpush1.bf16.msra.mxu0 0
  %940 = vmatprep.subr.bf16.mxu0 0
  %941 = vmatpush1.bf16.msra.mxu0 0
  %942 = vmatprep.subr.bf16.mxu0 0
  %943 = vmatpush1.bf16.msra.mxu0 0
  %944 = vmatprep.mubr.bf16.mxu0 0
  %945 = vmatmul.mubr.bf16.gmra.mrb[0].mxu0 %v256
  %v946 = vpop.f32.mrb[0].mxu0
  %v947 = vadd.f32 %v898, %v946
  %v948 = vpop.f32.mrb[0].mxu0
  %v949 = vpop.f32.mrb[0].mxu0
  %v950 = vadd.f32 %v901, %v949
  %v951 = vpop.f32.mrb[0].mxu0
  %952 = vmatprep.mubr.bf16.mxu0 0
  %953 = vmatmul.mubr.bf16.gmra.mrb[0].mxu0 %v265
  %v954 = vpop.f32.mrb[0].mxu0
  %v955 = vadd.f32 %v906, %v954
  %v956 = vpop.f32.mrb[0].mxu0
  %v957 = vpop.f32.mrb[0].mxu0
  %v958 = vadd.f32 %v909, %v957
  %v959 = vpop.f32.mrb[0].mxu0
  %960 = vdwg.mxu0
  %v961 = vmax.f32 %v947, 0.0
  %v962 = vmax.f32 %v950, 0.0
  %v963 = vmax.f32 %v955, 0.0
  %v964 = vmax.f32 %v958, 0.0
  %v965 = vadd.f32 %v961, %v962
  %v966 = vadd.f32 %v965, %v963
  %v967 = vadd.f32 %v966, %v964
  %v968 = vrot.slane %v967, 4
  %v969 = vadd.f32 %v967, %v968
  %v970 = vrot.slane %v969, 2
  %v971 = vadd.f32 %v969, %v970
  %v972 = vrot.slane %v971, 1
  %v973 = vadd.f32 %v971, %v972
  %v974 = vmul.f32 %v961, %v961
  %v975 = vmul.f32 %v962, %v962
  %v976 = vmul.f32 %v963, %v963
  %v977 = vmul.f32 %v964, %v964
  %v978 = vadd.f32 %v974, %v975
  %v979 = vadd.f32 %v978, %v976
  %v980 = vadd.f32 %v979, %v977
  %v981 = vrot.slane %v980, 4
  %v982 = vadd.f32 %v980, %v981
  %v983 = vrot.slane %v982, 2
  %v984 = vadd.f32 %v982, %v983
  %v985 = vrot.slane %v984, 1
  %v986 = vadd.f32 %v984, %v985
  %v987 = vmul.f32 %v973, 0.03125
  %v988 = vmul.f32 %v986, 0.03125
  %v989 = vmul.f32 %v987, %v987
  %v990 = vsub.f32 %v988, %v989
  %v991 = vsub.f32 %v961, %v987
  %v992 = vsub.f32 %v962, %v987
  %v993 = vsub.f32 %v963, %v987
  %v994 = vsub.f32 %v964, %v987
  %v995 = vadd.f32 %v990, 1e-05
  %v996 = vrsqrt.pop %v995
  %v997 = vld [vmem:[%s3] sm:$0x1]
  %v998 = vmul.f32 %v996, %v997
  %v999 = vlaneseq
  %v1000 = vshrl.u32 %v999, 7
  %v1001 = vsub.s32 0, %v1000
  %v1002 = vrot.slane %v998, %v1001
  %v1003 = vmul.f32 %v991, %v1002
  %v1004 = vmul.f32 %v992, %v1002
  %v1005 = vmul.f32 %v993, %v1002
  %v1006 = vmul.f32 %v994, %v1002
  %v1007 = vld [vmem:[%s4] sm:$0x1]
  %v1009 = vlaneseq
  %v1010 = vshrl.u32 %v1009, 7
  %v1011 = vsub.s32 0, %v1010
  %v1012 = vrot.slane %v1007, %v1011
  %v1014 = vadd.f32 %v1003, %v1012
  %v1015 = vadd.f32 %v1004, %v1012
  %v1016 = vadd.f32 %v1005, %v1012
  %v1017 = vadd.f32 %v1006, %v1012
  %v1018 = vpack.c.bf16 %v1015, %v1014
  %v1019 = vpack.c.bf16 %v1017, %v1016
  %v1022 = vunpack.c.l.b16 %v1018
  %v1023 = vunpack.c.h.b16 %v1018
  %v1024 = vunpack.c.l.b16 %v1019
  %v1025 = vunpack.c.h.b16 %v1019
  %v1026 = vpack.c.b16 %v1022, %v1022
  %v1027 = vpack.c.b16 %v1023, %v1023
  %v1028 = vpack.c.b16 %v1024, %v1024
  %v1029 = vpack.c.b16 %v1025, %v1025
  %1034 = vst [vmem:[%s5] sm:$0xf] %v1026
  %1035 = vst [vmem:[%s5 + $0x4] sm:$0xf] %v1027
  %1036 = vst [vmem:[%s5 + $0x8] sm:$0xf] %v1028
  %1037 = vst [vmem:[%s5 + $0xc] sm:$0xf] %v1029
  // Predicated region
  $region22: #{autoencoder_forward.6} parent=0 // pred_check
    _
  $region23: #{autoencoder_forward.6} parent=0 // pred_check_branch
    %1039 = sbr.rel (0) target = $region25
  $region24: #{autoencoder_forward.6} parent=0 // pred_region
    _
  $region25: #{autoencoder_forward.6} parent=0 // pred_fallthru
    _
  // Predicated region
  $region26: #{autoencoder_forward.6} parent=0 // pred_check
    _
  $region27: #{autoencoder_forward.6} parent=0 // pred_check_branch
    %1041 = sbr.rel (0) target = $region29
  $region28: #{autoencoder_forward.6} parent=0 // pred_region
    _
  $region29: #{autoencoder_forward.6} parent=0 // pred_fallthru
    _

// kernel: autoencoder_forward.7
$region0: #{autoencoder_forward.7}
  #allocation0 [shape = 'u32[]', space=smem, size = 0x4, offset = 0x4, fixed_abs, tag = 'smem constant byte address 0x4 - core index']
  #allocation1 [shape = 'u32[144,128]{1,0:T(1,128)}', space=vmem, size = 0x12000, scoped, tag = 'internal scratch']
  %s0 = inlined_call_operand.vmem [shape: bf16[2,2048], index: 0, kind: input, shape index: {}]
  %s1 = inlined_call_operand.vmem [shape: bf16[2048,256], index: 1, kind: input, shape index: {}]
  %s2 = inlined_call_operand.vmem [shape: f32[1,256], index: 2, kind: input, shape index: {}]
  %s3 = inlined_call_operand.vmem [shape: f32[1,256], index: 3, kind: input, shape index: {}]
  %s4 = inlined_call_operand.vmem [shape: f32[1,256], index: 4, kind: input, shape index: {}]
  %s5 = inlined_call_operand.vmem [shape: bf16[256,32], index: 5, kind: input, shape index: {}]
  %s6 = inlined_call_operand.vmem [shape: f32[1,32], index: 6, kind: input, shape index: {}]
  %s7 = inlined_call_operand.vmem [shape: bf16[32,256], index: 7, kind: input, shape index: {}]
  %s8 = inlined_call_operand.vmem [shape: f32[1,256], index: 8, kind: input, shape index: {}]
  %s9 = inlined_call_operand.vmem [shape: f32[1,256], index: 9, kind: input, shape index: {}]
  %s10 = inlined_call_operand.vmem [shape: f32[1,256], index: 10, kind: input, shape index: {}]
  %s11 = inlined_call_operand.vmem [shape: bf16[256,512], index: 11, kind: input, shape index: {}]
  %s12 = inlined_call_operand.vmem [shape: f32[1,512], index: 12, kind: input, shape index: {}]
  %s13 = inlined_call_operand.vmem [shape: bf16[512,3072], index: 13, kind: input, shape index: {}]
  %s14 = inlined_call_operand.vmem [shape: f32[1,3072], index: 14, kind: input, shape index: {}]
  %s15 = inlined_call_operand.hbm [shape: f32[2,32], index: 15, kind: output, shape index: {0}]
  %s16 = inlined_call_operand.vmem [shape: f32[2,3072], index: 16, kind: output, shape index: {1}]
  %17 = xla_tuple %s15, %s16
  %s18 = sld [smem:[#allocation0]]
  $region78: #{autoencoder_forward.7} parent=0
    _
  %s20 = ssub.s32 1, %s18
  %s21 = scalar_select 0, %s20, %s18
  $region1: #{autoencoder_forward.7} parent=0
    #allocation2 [shape = 'u8[1024]{0}', space=vmem, size = 0x400, scoped, tag = 'output window, operand 0, single buffered']
    #allocation3 [shape = 's32[1]{0}', space=sflag, size = 0x4, scoped, tag = 'scoped memory for autoencoder_forward.7']
    %22 = vsyncpa [#allocation3], 0
    // Predicated region
    $region2: #{autoencoder_forward.7} parent=1 // pred_check
      _
    $region3: #{autoencoder_forward.7} parent=1 // pred_check_branch
      %24 = sbr.rel (0) target = $region5
    $region4: #{autoencoder_forward.7} parent=1 // pred_region
      _
    $region5: #{autoencoder_forward.7} parent=1 // pred_fallthru
      _
    // Predicated region
    $region6: #{autoencoder_forward.7} parent=1 // pred_check
      _
    $region7: #{autoencoder_forward.7} parent=1 // pred_check_branch
      %26 = sbr.rel (0) target = $region9
    $region8: #{autoencoder_forward.7} parent=1 // pred_region
      _
    $region9: #{autoencoder_forward.7} parent=1 // pred_fallthru
      _
    // Predicated region
    $region10: #{autoencoder_forward.7} parent=1 // pred_check
      _
    $region11: #{autoencoder_forward.7} parent=1 // pred_check_branch
      %28 = sbr.rel (0) target = $region13
    $region12: #{autoencoder_forward.7} parent=1 // pred_region
      _
    $region13: #{autoencoder_forward.7} parent=1 // pred_fallthru
      _
    // Predicated region
    $region14: #{autoencoder_forward.7} parent=1 // pred_check
      _
    $region15: #{autoencoder_forward.7} parent=1 // pred_check_branch
      %30 = sbr.rel (0) target = $region17
    $region16: #{autoencoder_forward.7} parent=1 // pred_region
      _
    $region17: #{autoencoder_forward.7} parent=1 // pred_fallthru
      _
    // Predicated region
    $region18: #{autoencoder_forward.7} parent=1 // pred_check
      _
    $region19: #{autoencoder_forward.7} parent=1 // pred_check_branch
      %32 = sbr.rel (0) target = $region21
    $region20: #{autoencoder_forward.7} parent=1 // pred_region
      _
    $region21: #{autoencoder_forward.7} parent=1 // pred_fallthru
      _
    // Predicated region
    $region22: #{autoencoder_forward.7} parent=1 // pred_check
      _
    $region23: #{autoencoder_forward.7} parent=1 // pred_check_branch
      %34 = sbr.rel (0) target = $region25
    $region24: #{autoencoder_forward.7} parent=1 // pred_region
      _
    $region25: #{autoencoder_forward.7} parent=1 // pred_fallthru
      _
    // Predicated region
    $region26: #{autoencoder_forward.7} parent=1 // pred_check
      _
    $region27: #{autoencoder_forward.7} parent=1 // pred_check_branch
      %36 = sbr.rel (0) target = $region29
    $region28: #{autoencoder_forward.7} parent=1 // pred_region
      _
    $region29: #{autoencoder_forward.7} parent=1 // pred_fallthru
      _
    // Predicated region
    $region30: #{autoencoder_forward.7} parent=1 // pred_check
      _
    $region31: #{autoencoder_forward.7} parent=1 // pred_check_branch
      %38 = sbr.rel (0) target = $region33
    $region32: #{autoencoder_forward.7} parent=1 // pred_region
      _
    $region33: #{autoencoder_forward.7} parent=1 // pred_fallthru
      _
    // Predicated region
    $region34: #{autoencoder_forward.7} parent=1 // pred_check
      _
    $region35: #{autoencoder_forward.7} parent=1 // pred_check_branch
      %40 = sbr.rel (0) target = $region37
    $region36: #{autoencoder_forward.7} parent=1 // pred_region
      _
    $region37: #{autoencoder_forward.7} parent=1 // pred_fallthru
      _
    // Predicated region
    $region38: #{autoencoder_forward.7} parent=1 // pred_check
      _
    $region39: #{autoencoder_forward.7} parent=1 // pred_check_branch
      %42 = sbr.rel (0) target = $region41
    $region40: #{autoencoder_forward.7} parent=1 // pred_region
      _
    $region41: #{autoencoder_forward.7} parent=1 // pred_fallthru
      _
    // Predicated region
    $region42: #{autoencoder_forward.7} parent=1 // pred_check
      _
    $region43: #{autoencoder_forward.7} parent=1 // pred_check_branch
      %44 = sbr.rel (0) target = $region45
    $region44: #{autoencoder_forward.7} parent=1 // pred_region
      _
    $region45: #{autoencoder_forward.7} parent=1 // pred_fallthru
      _
    // Predicated region
    $region46: #{autoencoder_forward.7} parent=1 // pred_check
      _
    $region47: #{autoencoder_forward.7} parent=1 // pred_check_branch
      %46 = sbr.rel (0) target = $region49
    $region48: #{autoencoder_forward.7} parent=1 // pred_region
      _
    $region49: #{autoencoder_forward.7} parent=1 // pred_fallthru
      _
    // Predicated region
    $region50: #{autoencoder_forward.7} parent=1 // pred_check
      _
    $region51: #{autoencoder_forward.7} parent=1 // pred_check_branch
      %48 = sbr.rel (0) target = $region53
    $region52: #{autoencoder_forward.7} parent=1 // pred_region
      _
    $region53: #{autoencoder_forward.7} parent=1 // pred_fallthru
      _
    // Predicated region
    $region54: #{autoencoder_forward.7} parent=1 // pred_check
      _
    $region55: #{autoencoder_forward.7} parent=1 // pred_check_branch
      %50 = sbr.rel (0) target = $region57
    $region56: #{autoencoder_forward.7} parent=1 // pred_region
      _
    $region57: #{autoencoder_forward.7} parent=1 // pred_fallthru
      _
    // Predicated region
    $region58: #{autoencoder_forward.7} parent=1 // pred_check
      _
    $region59: #{autoencoder_forward.7} parent=1 // pred_check_branch
      %52 = sbr.rel (0) target = $region61
    $region60: #{autoencoder_forward.7} parent=1 // pred_region
      _
    $region61: #{autoencoder_forward.7} parent=1 // pred_fallthru
      _
    %v54 = vld [vmem:[%s0] sm:$0xff]
    %v55 = vld [vmem:[%s0 + $0x8] sm:$0xff]
    %v56 = vld [vmem:[%s1] sm:$0xff]
    %v57 = vld [vmem:[%s1 + $0x8] sm:$0xff]
    %v58 = vld [vmem:[%s1 + $0x10] sm:$0xff]
    %v59 = vld [vmem:[%s1 + $0x18] sm:$0xff]
    %v60 = vld [vmem:[%s1 + $0x20] sm:$0xff]
    %v61 = vld [vmem:[%s1 + $0x28] sm:$0xff]
    %v62 = vld [vmem:[%s1 + $0x30] sm:$0xff]
    %v63 = vld [vmem:[%s1 + $0x38] sm:$0xff]
    %v64 = vld [vmem:[%s1 + $0x40] sm:$0xff]
    %v65 = vld [vmem:[%s1 + $0x48] sm:$0xff]
    %v66 = vld [vmem:[%s1 + $0x50] sm:$0xff]
    %v67 = vld [vmem:[%s1 + $0x58] sm:$0xff]
    %v68 = vld [vmem:[%s1 + $0x60] sm:$0xff]
    %v69 = vld [vmem:[%s1 + $0x68] sm:$0xff]
    %v70 = vld [vmem:[%s1 + $0x70] sm:$0xff]
    %v71 = vld [vmem:[%s1 + $0x78] sm:$0xff]
    %v72 = vld [vmem:[%s1 + $0x80] sm:$0xff]
    %v73 = vld [vmem:[%s1 + $0x88] sm:$0xff]
    %v74 = vld [vmem:[%s1 + $0x90] sm:$0xff]
    %v75 = vld [vmem:[%s1 + $0x98] sm:$0xff]
    %v76 = vld [vmem:[%s1 + $0xa0] sm:$0xff]
    %v77 = vld [vmem:[%s1 + $0xa8] sm:$0xff]
    %v78 = vld [vmem:[%s1 + $0xb0] sm:$0xff]
    %v79 = vld [vmem:[%s1 + $0xb8] sm:$0xff]
    %v80 = vld [vmem:[%s1 + $0xc0] sm:$0xff]
    %v81 = vld [vmem:[%s1 + $0xc8] sm:$0xff]
    %v82 = vld [vmem:[%s1 + $0xd0] sm:$0xff]
    %v83 = vld [vmem:[%s1 + $0xd8] sm:$0xff]
    %v84 = vld [vmem:[%s1 + $0xe0] sm:$0xff]
    %v85 = vld [vmem:[%s1 + $0xe8] sm:$0xff]
    %v86 = vld [vmem:[%s1 + $0xf0] sm:$0xff]
    %v87 = vld [vmem:[%s1 + $0xf8] sm:$0xff]
    %v88 = vld [vmem:[%s1 + $0x100] sm:$0xff]
    %v89 = vld [vmem:[%s1 + $0x108] sm:$0xff]
    %v90 = vld [vmem:[%s1 + $0x110] sm:$0xff]
    %v91 = vld [vmem:[%s1 + $0x118] sm:$0xff]
    %v92 = vld [vmem:[%s1 + $0x120] sm:$0xff]
    %v93 = vld [vmem:[%s1 + $0x128] sm:$0xff]
    %v94 = vld [vmem:[%s1 + $0x130] sm:$0xff]
    %v95 = vld [vmem:[%s1 + $0x138] sm:$0xff]
    %v96 = vld [vmem:[%s1 + $0x140] sm:$0xff]
    %v97 = vld [vmem:[%s1 + $0x148] sm:$0xff]
    %v98 = vld [vmem:[%s1 + $0x150] sm:$0xff]
    %v99 = vld [vmem:[%s1 + $0x158] sm:$0xff]
    %v100 = vld [vmem:[%s1 + $0x160] sm:$0xff]
    %v101 = vld [vmem:[%s1 + $0x168] sm:$0xff]
    %v102 = vld [vmem:[%s1 + $0x170] sm:$0xff]
    %v103 = vld [vmem:[%s1 + $0x178] sm:$0xff]
    %v104 = vld [vmem:[%s1 + $0x180] sm:$0xff]
    %v105 = vld [vmem:[%s1 + $0x188] sm:$0xff]
    %v106 = vld [vmem:[%s1 + $0x190] sm:$0xff]
    %v107 = vld [vmem:[%s1 + $0x198] sm:$0xff]
    %v108 = vld [vmem:[%s1 + $0x1a0] sm:$0xff]
    %v109 = vld [vmem:[%s1 + $0x1a8] sm:$0xff]
    %v110 = vld [vmem:[%s1 + $0x1b0] sm:$0xff]
    %v111 = vld [vmem:[%s1 + $0x1b8] sm:$0xff]
    %v112 = vld [vmem:[%s1 + $0x1c0] sm:$0xff]
    %v113 = vld [vmem:[%s1 + $0x1c8] sm:$0xff]
    %v114 = vld [vmem:[%s1 + $0x1d0] sm:$0xff]
    %v115 = vld [vmem:[%s1 + $0x1d8] sm:$0xff]
    %v116 = vld [vmem:[%s1 + $0x1e0] sm:$0xff]
    %v117 = vld [vmem:[%s1 + $0x1e8] sm:$0xff]
    %v118 = vld [vmem:[%s1 + $0x1f0] sm:$0xff]
    %v119 = vld [vmem:[%s1 + $0x1f8] sm:$0xff]
    %v120 = vld [vmem:[%s1 + $0x200] sm:$0xff]
    %v121 = vld [vmem:[%s1 + $0x208] sm:$0xff]
    %v122 = vld [vmem:[%s1 + $0x210] sm:$0xff]
    %v123 = vld [vmem:[%s1 + $0x218] sm:$0xff]
    %v124 = vld [vmem:[%s1 + $0x220] sm:$0xff]
    %v125 = vld [vmem:[%s1 + $0x228] sm:$0xff]
    %v126 = vld [vmem:[%s1 + $0x230] sm:$0xff]
    %v127 = vld [vmem:[%s1 + $0x238] sm:$0xff]
    %v128 = vld [vmem:[%s1 + $0x240] sm:$0xff]
    %v129 = vld [vmem:[%s1 + $0x248] sm:$0xff]
    %v130 = vld [vmem:[%s1 + $0x250] sm:$0xff]
    %v131 = vld [vmem:[%s1 + $0x258] sm:$0xff]
    %v132 = vld [vmem:[%s1 + $0x260] sm:$0xff]
    %v133 = vld [vmem:[%s1 + $0x268] sm:$0xff]
    %v134 = vld [vmem:[%s1 + $0x270] sm:$0xff]
    %v135 = vld [vmem:[%s1 + $0x278] sm:$0xff]
    %v136 = vld [vmem:[%s1 + $0x280] sm:$0xff]
    %v137 = vld [vmem:[%s1 + $0x288] sm:$0xff]
    %v138 = vld [vmem:[%s1 + $0x290] sm:$0xff]
    %v139 = vld [vmem:[%s1 + $0x298] sm:$0xff]
    %v140 = vld [vmem:[%s1 + $0x2a0] sm:$0xff]
    %v141 = vld [vmem:[%s1 + $0x2a8] sm:$0xff]
    %v142 = vld [vmem:[%s1 + $0x2b0] sm:$0xff]
    %v143 = vld [vmem:[%s1 + $0x2b8] sm:$0xff]
    %v144 = vld [vmem:[%s1 + $0x2c0] sm:$0xff]
    %v145 = vld [vmem:[%s1 + $0x2c8] sm:$0xff]
    %v146 = vld [vmem:[%s1 + $0x2d0] sm:$0xff]
    %v147 = vld [vmem:[%s1 + $0x2d8] sm:$0xff]
    %v148 = vld [vmem:[%s1 + $0x2e0] sm:$0xff]
    %v149 = vld [vmem:[%s1 + $0x2e8] sm:$0xff]
    %v150 = vld [vmem:[%s1 + $0x2f0] sm:$0xff]
    %v151 = vld [vmem:[%s1 + $0x2f8] sm:$0xff]
    %v152 = vld [vmem:[%s1 + $0x300] sm:$0xff]
    %v153 = vld [vmem:[%s1 + $0x308] sm:$0xff]
    %v154 = vld [vmem:[%s1 + $0x310] sm:$0xff]
    %v155 = vld [vmem:[%s1 + $0x318] sm:$0xff]
    %v156 = vld [vmem:[%s1 + $0x320] sm:$0xff]
    %v157 = vld [vmem:[%s1 + $0x328] sm:$0xff]
    %v158 = vld [vmem:[%s1 + $0x330] sm:$0xff]
    %v159 = vld [vmem:[%s1 + $0x338] sm:$0xff]
    %v160 = vld [vmem:[%s1 + $0x340] sm:$0xff]
    %v161 = vld [vmem:[%s1 + $0x348] sm:$0xff]
    %v162 = vld [vmem:[%s1 + $0x350] sm:$0xff]
    %v163 = vld [vmem:[%s1 + $0x358] sm:$0xff]
    %v164 = vld [vmem:[%s1 + $0x360] sm:$0xff]
    %v165 = vld [vmem:[%s1 + $0x368] sm:$0xff]
    %v166 = vld [vmem:[%s1 + $0x370] sm:$0xff]
    %v167 = vld [vmem:[%s1 + $0x378] sm:$0xff]
    %v168 = vld [vmem:[%s1 + $0x380] sm:$0xff]
    %v169 = vld [vmem:[%s1 + $0x388] sm:$0xff]
    %v170 = vld [vmem:[%s1 + $0x390] sm:$0xff]
    %v171 = vld [vmem:[%s1 + $0x398] sm:$0xff]
    %v172 = vld [vmem:[%s1 + $0x3a0] sm:$0xff]
    %v173 = vld [vmem:[%s1 + $0x3a8] sm:$0xff]
    %v174 = vld [vmem:[%s1 + $0x3b0] sm:$0xff]
    %v175 = vld [vmem:[%s1 + $0x3b8] sm:$0xff]
    %v176 = vld [vmem:[%s1 + $0x3c0] sm:$0xff]
    %v177 = vld [vmem:[%s1 + $0x3c8] sm:$0xff]
    %v178 = vld [vmem:[%s1 + $0x3d0] sm:$0xff]
    %v179 = vld [vmem:[%s1 + $0x3d8] sm:$0xff]
    %v180 = vld [vmem:[%s1 + $0x3e0] sm:$0xff]
    %v181 = vld [vmem:[%s1 + $0x3e8] sm:$0xff]
    %v182 = vld [vmem:[%s1 + $0x3f0] sm:$0xff]
    %v183 = vld [vmem:[%s1 + $0x3f8] sm:$0xff]
    %v184 = vld [vmem:[%s1 + $0x400] sm:$0xff]
    %v185 = vld [vmem:[%s1 + $0x408] sm:$0xff]
    %v186 = vld [vmem:[%s1 + $0x410] sm:$0xff]
    %v187 = vld [vmem:[%s1 + $0x418] sm:$0xff]
    %v188 = vld [vmem:[%s1 + $0x420] sm:$0xff]
    %v189 = vld [vmem:[%s1 + $0x428] sm:$0xff]
    %v190 = vld [vmem:[%s1 + $0x430] sm:$0xff]
    %v191 = vld [vmem:[%s1 + $0x438] sm:$0xff]
    %v192 = vld [vmem:[%s1 + $0x440] sm:$0xff]
    %v193 = vld [vmem:[%s1 + $0x448] sm:$0xff]
    %v194 = vld [vmem:[%s1 + $0x450] sm:$0xff]
    %v195 = vld [vmem:[%s1 + $0x458] sm:$0xff]
    %v196 = vld [vmem:[%s1 + $0x460] sm:$0xff]
    %v197 = vld [vmem:[%s1 + $0x468] sm:$0xff]
    %v198 = vld [vmem:[%s1 + $0x470] sm:$0xff]
    %v199 = vld [vmem:[%s1 + $0x478] sm:$0xff]
    %v200 = vld [vmem:[%s1 + $0x480] sm:$0xff]
    %v201 = vld [vmem:[%s1 + $0x488] sm:$0xff]
    %v202 = vld [vmem:[%s1 + $0x490] sm:$0xff]
    %v203 = vld [vmem:[%s1 + $0x498] sm:$0xff]
    %v204 = vld [vmem:[%s1 + $0x4a0] sm:$0xff]
    %v205 = vld [vmem:[%s1 + $0x4a8] sm:$0xff]
    %v206 = vld [vmem:[%s1 + $0x4b0] sm:$0xff]
    %v207 = vld [vmem:[%s1 + $0x4b8] sm:$0xff]
    %v208 = vld [vmem:[%s1 + $0x4c0] sm:$0xff]
    %v209 = vld [vmem:[%s1 + $0x4c8] sm:$0xff]
    %v210 = vld [vmem:[%s1 + $0x4d0] sm:$0xff]
    %v211 = vld [vmem:[%s1 + $0x4d8] sm:$0xff]
    %v212 = vld [vmem:[%s1 + $0x4e0] sm:$0xff]
    %v213 = vld [vmem:[%s1 + $0x4e8] sm:$0xff]
    %v214 = vld [vmem:[%s1 + $0x4f0] sm:$0xff]
    %v215 = vld [vmem:[%s1 + $0x4f8] sm:$0xff]
    %v216 = vld [vmem:[%s1 + $0x500] sm:$0xff]
    %v217 = vld [vmem:[%s1 + $0x508] sm:$0xff]
    %v218 = vld [vmem:[%s1 + $0x510] sm:$0xff]
    %v219 = vld [vmem:[%s1 + $0x518] sm:$0xff]
    %v220 = vld [vmem:[%s1 + $0x520] sm:$0xff]
    %v221 = vld [vmem:[%s1 + $0x528] sm:$0xff]
    %v222 = vld [vmem:[%s1 + $0x530] sm:$0xff]
    %v223 = vld [vmem:[%s1 + $0x538] sm:$0xff]
    %v224 = vld [vmem:[%s1 + $0x540] sm:$0xff]
    %v225 = vld [vmem:[%s1 + $0x548] sm:$0xff]
    %v226 = vld [vmem:[%s1 + $0x550] sm:$0xff]
    %v227 = vld [vmem:[%s1 + $0x558] sm:$0xff]
    %v228 = vld [vmem:[%s1 + $0x560] sm:$0xff]
    %v229 = vld [vmem:[%s1 + $0x568] sm:$0xff]
    %v230 = vld [vmem:[%s1 + $0x570] sm:$0xff]
    %v231 = vld [vmem:[%s1 + $0x578] sm:$0xff]
    %v232 = vld [vmem:[%s1 + $0x580] sm:$0xff]
    %v233 = vld [vmem:[%s1 + $0x588] sm:$0xff]
    %v234 = vld [vmem:[%s1 + $0x590] sm:$0xff]
    %v235 = vld [vmem:[%s1 + $0x598] sm:$0xff]
    %v236 = vld [vmem:[%s1 + $0x5a0] sm:$0xff]
    %v237 = vld [vmem:[%s1 + $0x5a8] sm:$0xff]
    %v238 = vld [vmem:[%s1 + $0x5b0] sm:$0xff]
    %v239 = vld [vmem:[%s1 + $0x5b8] sm:$0xff]
    %v240 = vld [vmem:[%s1 + $0x5c0] sm:$0xff]
    %v241 = vld [vmem:[%s1 + $0x5c8] sm:$0xff]
    %v242 = vld [vmem:[%s1 + $0x5d0] sm:$0xff]
    %v243 = vld [vmem:[%s1 + $0x5d8] sm:$0xff]
    %v244 = vld [vmem:[%s1 + $0x5e0] sm:$0xff]
    %v245 = vld [vmem:[%s1 + $0x5e8] sm:$0xff]
    %v246 = vld [vmem:[%s1 + $0x5f0] sm:$0xff]
    %v247 = vld [vmem:[%s1 + $0x5f8] sm:$0xff]
    %v248 = vld [vmem:[%s1 + $0x600] sm:$0xff]
    %v249 = vld [vmem:[%s1 + $0x608] sm:$0xff]
    %v250 = vld [vmem:[%s1 + $0x610] sm:$0xff]
    %v251 = vld [vmem:[%s1 + $0x618] sm:$0xff]
    %v252 = vld [vmem:[%s1 + $0x620] sm:$0xff]
    %v253 = vld [vmem:[%s1 + $0x628] sm:$0xff]
    %v254 = vld [vmem:[%s1 + $0x630] sm:$0xff]
    %v255 = vld [vmem:[%s1 + $0x638] sm:$0xff]
    %v256 = vld [vmem:[%s1 + $0x640] sm:$0xff]
    %v257 = vld [vmem:[%s1 + $0x648] sm:$0xff]
    %v258 = vld [vmem:[%s1 + $0x650] sm:$0xff]
    %v259 = vld [vmem:[%s1 + $0x658] sm:$0xff]
    %v260 = vld [vmem:[%s1 + $0x660] sm:$0xff]
    %v261 = vld [vmem:[%s1 + $0x668] sm:$0xff]
    %v262 = vld [vmem:[%s1 + $0x670] sm:$0xff]
    %v263 = vld [vmem:[%s1 + $0x678] sm:$0xff]
    %v264 = vld [vmem:[%s1 + $0x680] sm:$0xff]
    %v265 = vld [vmem:[%s1 + $0x688] sm:$0xff]
    %v266 = vld [vmem:[%s1 + $0x690] sm:$0xff]
    %v267 = vld [vmem:[%s1 + $0x698] sm:$0xff]
    %v268 = vld [vmem:[%s1 + $0x6a0] sm:$0xff]
    %v269 = vld [vmem:[%s1 + $0x6a8] sm:$0xff]
    %v270 = vld [vmem:[%s1 + $0x6b0] sm:$0xff]
    %v271 = vld [vmem:[%s1 + $0x6b8] sm:$0xff]
    %v272 = vld [vmem:[%s1 + $0x6c0] sm:$0xff]
    %v273 = vld [vmem:[%s1 + $0x6c8] sm:$0xff]
    %v274 = vld [vmem:[%s1 + $0x6d0] sm:$0xff]
    %v275 = vld [vmem:[%s1 + $0x6d8] sm:$0xff]
    %v276 = vld [vmem:[%s1 + $0x6e0] sm:$0xff]
    %v277 = vld [vmem:[%s1 + $0x6e8] sm:$0xff]
    %v278 = vld [vmem:[%s1 + $0x6f0] sm:$0xff]
    %v279 = vld [vmem:[%s1 + $0x6f8] sm:$0xff]
    %v280 = vld [vmem:[%s1 + $0x700] sm:$0xff]
    %v281 = vld [vmem:[%s1 + $0x708] sm:$0xff]
    %v282 = vld [vmem:[%s1 + $0x710] sm:$0xff]
    %v283 = vld [vmem:[%s1 + $0x718] sm:$0xff]
    %v284 = vld [vmem:[%s1 + $0x720] sm:$0xff]
    %v285 = vld [vmem:[%s1 + $0x728] sm:$0xff]
    %v286 = vld [vmem:[%s1 + $0x730] sm:$0xff]
    %v287 = vld [vmem:[%s1 + $0x738] sm:$0xff]
    %v288 = vld [vmem:[%s1 + $0x740] sm:$0xff]
    %v289 = vld [vmem:[%s1 + $0x748] sm:$0xff]
    %v290 = vld [vmem:[%s1 + $0x750] sm:$0xff]
    %v291 = vld [vmem:[%s1 + $0x758] sm:$0xff]
    %v292 = vld [vmem:[%s1 + $0x760] sm:$0xff]
    %v293 = vld [vmem:[%s1 + $0x768] sm:$0xff]
    %v294 = vld [vmem:[%s1 + $0x770] sm:$0xff]
    %v295 = vld [vmem:[%s1 + $0x778] sm:$0xff]
    %v296 = vld [vmem:[%s1 + $0x780] sm:$0xff]
    %v297 = vld [vmem:[%s1 + $0x788] sm:$0xff]
    %v298 = vld [vmem:[%s1 + $0x790] sm:$0xff]
    %v299 = vld [vmem:[%s1 + $0x798] sm:$0xff]
    %v300 = vld [vmem:[%s1 + $0x7a0] sm:$0xff]
    %v301 = vld [vmem:[%s1 + $0x7a8] sm:$0xff]
    %v302 = vld [vmem:[%s1 + $0x7b0] sm:$0xff]
    %v303 = vld [vmem:[%s1 + $0x7b8] sm:$0xff]
    %v304 = vld [vmem:[%s1 + $0x7c0] sm:$0xff]
    %v305 = vld [vmem:[%s1 + $0x7c8] sm:$0xff]
    %v306 = vld [vmem:[%s1 + $0x7d0] sm:$0xff]
    %v307 = vld [vmem:[%s1 + $0x7d8] sm:$0xff]
    %v308 = vld [vmem:[%s1 + $0x7e0] sm:$0xff]
    %v309 = vld [vmem:[%s1 + $0x7e8] sm:$0xff]
    %v310 = vld [vmem:[%s1 + $0x7f0] sm:$0xff]
    %v311 = vld [vmem:[%s1 + $0x7f8] sm:$0xff]
    %v312 = vld [vmem:[%s2] sm:$0x3]
    %v314 = vlaneseq
    %v315 = vshrl.u32 %v314, 7
    %v316 = vsub.s32 0, %v315
    %v317 = vrot.slane %v312, %v316
    %v318 = vlaneseq
    %v319 = vshrl.u32 %v318, 7
    %v320 = vsub.s32 1, %v319
    %v321 = vrot.slane %v312, %v320
    %v326 = vcombine.high %v54, %v54
    %v328 = vunpack.c.l.s4 1966171168
    %v329 = vunpack.c.0.s8 %v328
    %v330 = vlaneseq
    %v331 = vshrl.u32 %v330, 7
    %v332 = vsub.s32 %v329, %v331
    %v333 = vrot.slane %v54, %v332
    %v335 = vunpack.c.l.s4 1966171168
    %v336 = vunpack.c.0.s8 %v335
    %v337 = vlaneseq
    %v338 = vshrl.u32 %v337, 7
    %v339 = vsub.s32 %v336, %v338
    %v340 = vrot.slane %v326, %v339
    %v341 = vcombine.high %v333, %v333
    %v342 = vcombine.high %v340, %v340
    %v344 = vunpack.c.l.s4 1966171168
    %v345 = vunpack.c.0.s8 %v344
    %v346 = vlaneseq
    %v347 = vshrl.u32 %v346, 7
    %v348 = vsub.s32 %v345, %v347
    %v349 = vrot.slane %v333, %v348
    %v351 = vunpack.c.l.s4 1966171168
    %v352 = vunpack.c.0.s8 %v351
    %v353 = vlaneseq
    %v354 = vshrl.u32 %v353, 7
    %v355 = vsub.s32 %v352, %v354
    %v356 = vrot.slane %v340, %v355
    %v358 = vunpack.c.l.s4 1966171168
    %v359 = vunpack.c.0.s8 %v358
    %v360 = vlaneseq
    %v361 = vshrl.u32 %v360, 7
    %v362 = vsub.s32 %v359, %v361
    %v363 = vrot.slane %v341, %v362
    %v365 = vunpack.c.l.s4 1966171168
    %v366 = vunpack.c.0.s8 %v365
    %v367 = vlaneseq
    %v368 = vshrl.u32 %v367, 7
    %v369 = vsub.s32 %v366, %v368
    %v370 = vrot.slane %v342, %v369
    %v371 = vcombine.high %v349, %v349
    %v372 = vcombine.high %v356, %v356
    %v373 = vcombine.high %v363, %v363
    %v374 = vcombine.high %v370, %v370
    %v375 = vcombine.high %v55, %v55
    %v377 = vunpack.c.l.s4 1966171168
    %v378 = vunpack.c.0.s8 %v377
    %v379 = vlaneseq
    %v380 = vshrl.u32 %v379, 7
    %v381 = vsub.s32 %v378, %v380
    %v382 = vrot.slane %v55, %v381
    %v384 = vunpack.c.l.s4 1966171168
    %v385 = vunpack.c.0.s8 %v384
    %v386 = vlaneseq
    %v387 = vshrl.u32 %v386, 7
    %v388 = vsub.s32 %v385, %v387
    %v389 = vrot.slane %v375, %v388
    %v390 = vcombine.high %v382, %v382
    %v391 = vcombine.high %v389, %v389
    %v393 = vunpack.c.l.s4 1966171168
    %v394 = vunpack.c.0.s8 %v393
    %v395 = vlaneseq
    %v396 = vshrl.u32 %v395, 7
    %v397 = vsub.s32 %v394, %v396
    %v398 = vrot.slane %v382, %v397
    %v400 = vunpack.c.l.s4 1966171168
    %v401 = vunpack.c.0.s8 %v400
    %v402 = vlaneseq
    %v403 = vshrl.u32 %v402, 7
    %v404 = vsub.s32 %v401, %v403
    %v405 = vrot.slane %v389, %v404
    %v407 = vunpack.c.l.s4 1966171168
    %v408 = vunpack.c.0.s8 %v407
    %v409 = vlaneseq
    %v410 = vshrl.u32 %v409, 7
    %v411 = vsub.s32 %v408, %v410
    %v412 = vrot.slane %v390, %v411
    %v414 = vunpack.c.l.s4 1966171168
    %v415 = vunpack.c.0.s8 %v414
    %v416 = vlaneseq
    %v417 = vshrl.u32 %v416, 7
    %v418 = vsub.s32 %v415, %v417
    %v419 = vrot.slane %v391, %v418
    %v420 = vcombine.high %v398, %v398
    %v421 = vcombine.high %v405, %v405
    %v422 = vcombine.high %v412, %v412
    %v423 = vcombine.high %v419, %v419
    %v696 = vunpack.c.l.b16 %v56
    %v697 = vunpack.c.h.b16 %v56
    %v698 = vunpack.c.l.b16 %v57
    %v699 = vunpack.c.h.b16 %v57
    %v700 = vunpack.c.l.b16 %v58
    %v701 = vunpack.c.h.b16 %v58
    %v702 = vunpack.c.l.b16 %v59
    %v703 = vunpack.c.h.b16 %v59
    %v704 = vunpack.c.l.b16 %v60
    %v705 = vunpack.c.h.b16 %v60
    %v706 = vunpack.c.l.b16 %v61
    %v707 = vunpack.c.h.b16 %v61
    %v708 = vunpack.c.l.b16 %v62
    %v709 = vunpack.c.h.b16 %v62
    %v710 = vunpack.c.l.b16 %v63
    %v711 = vunpack.c.h.b16 %v63
    %v712 = vunpack.c.l.b16 %v64
    %v713 = vunpack.c.h.b16 %v64
    %v714 = vunpack.c.l.b16 %v65
    %v715 = vunpack.c.h.b16 %v65
    %v716 = vunpack.c.l.b16 %v66
    %v717 = vunpack.c.h.b16 %v66
    %v718 = vunpack.c.l.b16 %v67
    %v719 = vunpack.c.h.b16 %v67
    %v720 = vunpack.c.l.b16 %v68
    %v721 = vunpack.c.h.b16 %v68
    %v722 = vunpack.c.l.b16 %v69
    %v723 = vunpack.c.h.b16 %v69
    %v724 = vunpack.c.l.b16 %v70
    %v725 = vunpack.c.h.b16 %v70
    %v726 = vunpack.c.l.b16 %v71
    %v727 = vunpack.c.h.b16 %v71
    %v728 = vunpack.c.l.b16 %v72
    %v729 = vunpack.c.h.b16 %v72
    %v730 = vunpack.c.l.b16 %v73
    %v731 = vunpack.c.h.b16 %v73
    %v732 = vunpack.c.l.b16 %v74
    %v733 = vunpack.c.h.b16 %v74
    %v734 = vunpack.c.l.b16 %v75
    %v735 = vunpack.c.h.b16 %v75
    %v736 = vunpack.c.l.b16 %v76
    %v737 = vunpack.c.h.b16 %v76
    %v738 = vunpack.c.l.b16 %v77
    %v739 = vunpack.c.h.b16 %v77
    %v740 = vunpack.c.l.b16 %v78
    %v741 = vunpack.c.h.b16 %v78
    %v742 = vunpack.c.l.b16 %v79
    %v743 = vunpack.c.h.b16 %v79
    %v744 = vunpack.c.l.b16 %v80
    %v745 = vunpack.c.h.b16 %v80
    %v746 = vunpack.c.l.b16 %v81
    %v747 = vunpack.c.h.b16 %v81
    %v748 = vunpack.c.l.b16 %v82
    %v749 = vunpack.c.h.b16 %v82
    %v750 = vunpack.c.l.b16 %v83
    %v751 = vunpack.c.h.b16 %v83
    %v752 = vunpack.c.l.b16 %v84
    %v753 = vunpack.c.h.b16 %v84
    %v754 = vunpack.c.l.b16 %v85
    %v755 = vunpack.c.h.b16 %v85
    %v756 = vunpack.c.l.b16 %v86
    %v757 = vunpack.c.h.b16 %v86
    %v758 = vunpack.c.l.b16 %v87
    %v759 = vunpack.c.h.b16 %v87
    %v760 = vunpack.c.l.b16 %v88
    %v761 = vunpack.c.h.b16 %v88
    %v762 = vunpack.c.l.b16 %v89
    %v763 = vunpack.c.h.b16 %v89
    %v764 = vunpack.c.l.b16 %v90
    %v765 = vunpack.c.h.b16 %v90
    %v766 = vunpack.c.l.b16 %v91
    %v767 = vunpack.c.h.b16 %v91
    %v768 = vunpack.c.l.b16 %v92
    %v769 = vunpack.c.h.b16 %v92
    %v770 = vunpack.c.l.b16 %v93
    %v771 = vunpack.c.h.b16 %v93
    %v772 = vunpack.c.l.b16 %v94
    %v773 = vunpack.c.h.b16 %v94
    %v774 = vunpack.c.l.b16 %v95
    %v775 = vunpack.c.h.b16 %v95
    %v776 = vunpack.c.l.b16 %v96
    %v777 = vunpack.c.h.b16 %v96
    %v778 = vunpack.c.l.b16 %v97
    %v779 = vunpack.c.h.b16 %v97
    %v780 = vunpack.c.l.b16 %v98
    %v781 = vunpack.c.h.b16 %v98
    %v782 = vunpack.c.l.b16 %v99
    %v783 = vunpack.c.h.b16 %v99
    %v784 = vunpack.c.l.b16 %v100
    %v785 = vunpack.c.h.b16 %v100
    %v786 = vunpack.c.l.b16 %v101
    %v787 = vunpack.c.h.b16 %v101
    %v788 = vunpack.c.l.b16 %v102
    %v789 = vunpack.c.h.b16 %v102
    %v790 = vunpack.c.l.b16 %v103
    %v791 = vunpack.c.h.b16 %v103
    %v792 = vunpack.c.l.b16 %v104
    %v793 = vunpack.c.h.b16 %v104
    %v794 = vunpack.c.l.b16 %v105
    %v795 = vunpack.c.h.b16 %v105
    %v796 = vunpack.c.l.b16 %v106
    %v797 = vunpack.c.h.b16 %v106
    %v798 = vunpack.c.l.b16 %v107
    %v799 = vunpack.c.h.b16 %v107
    %v800 = vunpack.c.l.b16 %v108
    %v801 = vunpack.c.h.b16 %v108
    %v802 = vunpack.c.l.b16 %v109
    %v803 = vunpack.c.h.b16 %v109
    %v804 = vunpack.c.l.b16 %v110
    %v805 = vunpack.c.h.b16 %v110
    %v806 = vunpack.c.l.b16 %v111
    %v807 = vunpack.c.h.b16 %v111
    %v808 = vunpack.c.l.b16 %v112
    %v809 = vunpack.c.h.b16 %v112
    %v810 = vunpack.c.l.b16 %v113
    %v811 = vunpack.c.h.b16 %v113
    %v812 = vunpack.c.l.b16 %v114
    %v813 = vunpack.c.h.b16 %v114
    %v814 = vunpack.c.l.b16 %v115
    %v815 = vunpack.c.h.b16 %v115
    %v816 = vunpack.c.l.b16 %v116
    %v817 = vunpack.c.h.b16 %v116
    %v818 = vunpack.c.l.b16 %v117
    %v819 = vunpack.c.h.b16 %v117
    %v820 = vunpack.c.l.b16 %v118
    %v821 = vunpack.c.h.b16 %v118
    %v822 = vunpack.c.l.b16 %v119
    %v823 = vunpack.c.h.b16 %v119
    %v824 = vunpack.c.l.b16 %v120
    %v825 = vunpack.c.h.b16 %v120
    %v826 = vunpack.c.l.b16 %v121
    %v827 = vunpack.c.h.b16 %v121
    %v828 = vunpack.c.l.b16 %v122
    %v829 = vunpack.c.h.b16 %v122
    %v830 = vunpack.c.l.b16 %v123
    %v831 = vunpack.c.h.b16 %v123
    %v832 = vunpack.c.l.b16 %v124
    %v833 = vunpack.c.h.b16 %v124
    %v834 = vunpack.c.l.b16 %v125
    %v835 = vunpack.c.h.b16 %v125
    %v836 = vunpack.c.l.b16 %v126
    %v837 = vunpack.c.h.b16 %v126
    %v838 = vunpack.c.l.b16 %v127
    %v839 = vunpack.c.h.b16 %v127
    %v840 = vunpack.c.l.b16 %v128
    %v841 = vunpack.c.h.b16 %v128
    %v842 = vunpack.c.l.b16 %v129
    %v843 = vunpack.c.h.b16 %v129
    %v844 = vunpack.c.l.b16 %v130
    %v845 = vunpack.c.h.b16 %v130
    %v846 = vunpack.c.l.b16 %v131
    %v847 = vunpack.c.h.b16 %v131
    %v848 = vunpack.c.l.b16 %v132
    %v849 = vunpack.c.h.b16 %v132
    %v850 = vunpack.c.l.b16 %v133
    %v851 = vunpack.c.h.b16 %v133
    %v852 = vunpack.c.l.b16 %v134
    %v853 = vunpack.c.h.b16 %v134
    %v854 = vunpack.c.l.b16 %v135
    %v855 = vunpack.c.h.b16 %v135
    %v856 = vunpack.c.l.b16 %v136
    %v857 = vunpack.c.h.b16 %v136
    %v858 = vunpack.c.l.b16 %v137
    %v859 = vunpack.c.h.b16 %v137
    %v860 = vunpack.c.l.b16 %v138
    %v861 = vunpack.c.h.b16 %v138
    %v862 = vunpack.c.l.b16 %v139
    %v863 = vunpack.c.h.b16 %v139
    %v864 = vunpack.c.l.b16 %v140
    %v865 = vunpack.c.h.b16 %v140
    %v866 = vunpack.c.l.b16 %v141
    %v867 = vunpack.c.h.b16 %v141
    %v868 = vunpack.c.l.b16 %v142
    %v869 = vunpack.c.h.b16 %v142
    %v870 = vunpack.c.l.b16 %v143
    %v871 = vunpack.c.h.b16 %v143
    %v872 = vunpack.c.l.b16 %v144
    %v873 = vunpack.c.h.b16 %v144
    %v874 = vunpack.c.l.b16 %v145
    %v875 = vunpack.c.h.b16 %v145
    %v876 = vunpack.c.l.b16 %v146
    %v877 = vunpack.c.h.b16 %v146
    %v878 = vunpack.c.l.b16 %v147
    %v879 = vunpack.c.h.b16 %v147
    %v880 = vunpack.c.l.b16 %v148
    %v881 = vunpack.c.h.b16 %v148
    %v882 = vunpack.c.l.b16 %v149
    %v883 = vunpack.c.h.b16 %v149
    %v884 = vunpack.c.l.b16 %v150
    %v885 = vunpack.c.h.b16 %v150
    %v886 = vunpack.c.l.b16 %v151
    %v887 = vunpack.c.h.b16 %v151
    %v888 = vunpack.c.l.b16 %v152
    %v889 = vunpack.c.h.b16 %v152
    %v890 = vunpack.c.l.b16 %v153
    %v891 = vunpack.c.h.b16 %v153
    %v892 = vunpack.c.l.b16 %v154
    %v893 = vunpack.c.h.b16 %v154
    %v894 = vunpack.c.l.b16 %v155
    %v895 = vunpack.c.h.b16 %v155
    %v896 = vunpack.c.l.b16 %v156
    %v897 = vunpack.c.h.b16 %v156
    %v898 = vunpack.c.l.b16 %v157
    %v899 = vunpack.c.h.b16 %v157
    %v900 = vunpack.c.l.b16 %v158
    %v901 = vunpack.c.h.b16 %v158
    %v902 = vunpack.c.l.b16 %v159
    %v903 = vunpack.c.h.b16 %v159
    %v904 = vunpack.c.l.b16 %v160
    %v905 = vunpack.c.h.b16 %v160
    %v906 = vunpack.c.l.b16 %v161
    %v907 = vunpack.c.h.b16 %v161
    %v908 = vunpack.c.l.b16 %v162
    %v909 = vunpack.c.h.b16 %v162
    %v910 = vunpack.c.l.b16 %v163
    %v911 = vunpack.c.h.b16 %v163
    %v912 = vunpack.c.l.b16 %v164
    %v913 = vunpack.c.h.b16 %v164
    %v914 = vunpack.c.l.b16 %v165
    %v915 = vunpack.c.h.b16 %v165
    %v916 = vunpack.c.l.b16 %v166
    %v917 = vunpack.c.h.b16 %v166
    %v918 = vunpack.c.l.b16 %v167
    %v919 = vunpack.c.h.b16 %v167
    %v920 = vunpack.c.l.b16 %v168
    %v921 = vunpack.c.h.b16 %v168
    %v922 = vunpack.c.l.b16 %v169
    %v923 = vunpack.c.h.b16 %v169
    %v924 = vunpack.c.l.b16 %v170
    %v925 = vunpack.c.h.b16 %v170
    %v926 = vunpack.c.l.b16 %v171
    %v927 = vunpack.c.h.b16 %v171
    %v928 = vunpack.c.l.b16 %v172
    %v929 = vunpack.c.h.b16 %v172
    %v930 = vunpack.c.l.b16 %v173
    %v931 = vunpack.c.h.b16 %v173
    %v932 = vunpack.c.l.b16 %v174
    %v933 = vunpack.c.h.b16 %v174
    %v934 = vunpack.c.l.b16 %v175
    %v935 = vunpack.c.h.b16 %v175
    %v936 = vunpack.c.l.b16 %v176
    %v937 = vunpack.c.h.b16 %v176
    %v938 = vunpack.c.l.b16 %v177
    %v939 = vunpack.c.h.b16 %v177
    %v940 = vunpack.c.l.b16 %v178
    %v941 = vunpack.c.h.b16 %v178
    %v942 = vunpack.c.l.b16 %v179
    %v943 = vunpack.c.h.b16 %v179
    %v944 = vunpack.c.l.b16 %v180
    %v945 = vunpack.c.h.b16 %v180
    %v946 = vunpack.c.l.b16 %v181
    %v947 = vunpack.c.h.b16 %v181
    %v948 = vunpack.c.l.b16 %v182
    %v949 = vunpack.c.h.b16 %v182
    %v950 = vunpack.c.l.b16 %v183
    %v951 = vunpack.c.h.b16 %v183
    %v952 = vunpack.c.l.b16 %v184
    %v953 = vunpack.c.h.b16 %v184
    %v954 = vunpack.c.l.b16 %v185
    %v955 = vunpack.c.h.b16 %v185
    %v956 = vunpack.c.l.b16 %v186
    %v957 = vunpack.c.h.b16 %v186
    %v958 = vunpack.c.l.b16 %v187
    %v959 = vunpack.c.h.b16 %v187
    %v960 = vunpack.c.l.b16 %v188
    %v961 = vunpack.c.h.b16 %v188
    %v962 = vunpack.c.l.b16 %v189
    %v963 = vunpack.c.h.b16 %v189
    %v964 = vunpack.c.l.b16 %v190
    %v965 = vunpack.c.h.b16 %v190
    %v966 = vunpack.c.l.b16 %v191
    %v967 = vunpack.c.h.b16 %v191
    %v968 = vunpack.c.l.b16 %v192
    %v969 = vunpack.c.h.b16 %v192
    %v970 = vunpack.c.l.b16 %v193
    %v971 = vunpack.c.h.b16 %v193
    %v972 = vunpack.c.l.b16 %v194
    %v973 = vunpack.c.h.b16 %v194
    %v974 = vunpack.c.l.b16 %v195
    %v975 = vunpack.c.h.b16 %v195
    %v976 = vunpack.c.l.b16 %v196
    %v977 = vunpack.c.h.b16 %v196
    %v978 = vunpack.c.l.b16 %v197
    %v979 = vunpack.c.h.b16 %v197
    %v980 = vunpack.c.l.b16 %v198
    %v981 = vunpack.c.h.b16 %v198
    %v982 = vunpack.c.l.b16 %v199
    %v983 = vunpack.c.h.b16 %v199
    %v984 = vunpack.c.l.b16 %v200
    %v985 = vunpack.c.h.b16 %v200
    %v986 = vunpack.c.l.b16 %v201
    %v987 = vunpack.c.h.b16 %v201
    %v988 = vunpack.c.l.b16 %v202
    %v989 = vunpack.c.h.b16 %v202
    %v990 = vunpack.c.l.b16 %v203
    %v991 = vunpack.c.h.b16 %v203
    %v992 = vunpack.c.l.b16 %v204
    %v993 = vunpack.c.h.b16 %v204
    %v994 = vunpack.c.l.b16 %v205
    %v995 = vunpack.c.h.b16 %v205
    %v996 = vunpack.c.l.b16 %v206
    %v997 = vunpack.c.h.b16 %v206
    %v998 = vunpack.c.l.b16 %v207
    %v999 = vunpack.c.h.b16 %v207
    %v1000 = vunpack.c.l.b16 %v208
    %v1001 = vunpack.c.h.b16 %v208
    %v1002 = vunpack.c.l.b16 %v209
    %v1003 = vunpack.c.h.b16 %v209
    %v1004 = vunpack.c.l.b16 %v210
    %v1005 = vunpack.c.h.b16 %v210
    %v1006 = vunpack.c.l.b16 %v211
    %v1007 = vunpack.c.h.b16 %v211
    %v1008 = vunpack.c.l.b16 %v212
    %v1009 = vunpack.c.h.b16 %v212
    %v1010 = vunpack.c.l.b16 %v213
    %v1011 = vunpack.c.h.b16 %v213
    %v1012 = vunpack.c.l.b16 %v214
    %v1013 = vunpack.c.h.b16 %v214
    %v1014 = vunpack.c.l.b16 %v215
    %v1015 = vunpack.c.h.b16 %v215
    %v1016 = vunpack.c.l.b16 %v216
    %v1017 = vunpack.c.h.b16 %v216
    %v1018 = vunpack.c.l.b16 %v217
    %v1019 = vunpack.c.h.b16 %v217
    %v1020 = vunpack.c.l.b16 %v218
    %v1021 = vunpack.c.h.b16 %v218
    %v1022 = vunpack.c.l.b16 %v219
    %v1023 = vunpack.c.h.b16 %v219
    %v1024 = vunpack.c.l.b16 %v220
    %v1025 = vunpack.c.h.b16 %v220
    %v1026 = vunpack.c.l.b16 %v221
    %v1027 = vunpack.c.h.b16 %v221
    %v1028 = vunpack.c.l.b16 %v222
    %v1029 = vunpack.c.h.b16 %v222
    %v1030 = vunpack.c.l.b16 %v223
    %v1031 = vunpack.c.h.b16 %v223
    %v1032 = vunpack.c.l.b16 %v224
    %v1033 = vunpack.c.h.b16 %v224
    %v1034 = vunpack.c.l.b16 %v225
    %v1035 = vunpack.c.h.b16 %v225
    %v1036 = vunpack.c.l.b16 %v226
    %v1037 = vunpack.c.h.b16 %v226
    %v1038 = vunpack.c.l.b16 %v227
    %v1039 = vunpack.c.h.b16 %v227
    %v1040 = vunpack.c.l.b16 %v228
    %v1041 = vunpack.c.h.b16 %v228
    %v1042 = vunpack.c.l.b16 %v229
    %v1043 = vunpack.c.h.b16 %v229
    %v1044 = vunpack.c.l.b16 %v230
    %v1045 = vunpack.c.h.b16 %v230
    %v1046 = vunpack.c.l.b16 %v231
    %v1047 = vunpack.c.h.b16 %v231
    %v1048 = vunpack.c.l.b16 %v232
    %v1049 = vunpack.c.h.b16 %v232
    %v1050 = vunpack.c.l.b16 %v233
    %v1051 = vunpack.c.h.b16 %v233
    %v1052 = vunpack.c.l.b16 %v234
    %v1053 = vunpack.c.h.b16 %v234
    %v1054 = vunpack.c.l.b16 %v235
    %v1055 = vunpack.c.h.b16 %v235
    %v1056 = vunpack.c.l.b16 %v236
    %v1057 = vunpack.c.h.b16 %v236
    %v1058 = vunpack.c.l.b16 %v237
    %v1059 = vunpack.c.h.b16 %v237
    %v1060 = vunpack.c.l.b16 %v238
    %v1061 = vunpack.c.h.b16 %v238
    %v1062 = vunpack.c.l.b16 %v239
    %v1063 = vunpack.c.h.b16 %v239
    %v1064 = vunpack.c.l.b16 %v240
    %v1065 = vunpack.c.h.b16 %v240
    %v1066 = vunpack.c.l.b16 %v241
    %v1067 = vunpack.c.h.b16 %v241
    %v1068 = vunpack.c.l.b16 %v242
    %v1069 = vunpack.c.h.b16 %v242
    %v1070 = vunpack.c.l.b16 %v243
    %v1071 = vunpack.c.h.b16 %v243
    %v1072 = vunpack.c.l.b16 %v244
    %v1073 = vunpack.c.h.b16 %v244
    %v1074 = vunpack.c.l.b16 %v245
    %v1075 = vunpack.c.h.b16 %v245
    %v1076 = vunpack.c.l.b16 %v246
    %v1077 = vunpack.c.h.b16 %v246
    %v1078 = vunpack.c.l.b16 %v247
    %v1079 = vunpack.c.h.b16 %v247
    %v1080 = vunpack.c.l.b16 %v248
    %v1081 = vunpack.c.h.b16 %v248
    %v1082 = vunpack.c.l.b16 %v249
    %v1083 = vunpack.c.h.b16 %v249
    %v1084 = vunpack.c.l.b16 %v250
    %v1085 = vunpack.c.h.b16 %v250
    %v1086 = vunpack.c.l.b16 %v251
    %v1087 = vunpack.c.h.b16 %v251
    %v1088 = vunpack.c.l.b16 %v252
    %v1089 = vunpack.c.h.b16 %v252
    %v1090 = vunpack.c.l.b16 %v253
    %v1091 = vunpack.c.h.b16 %v253
    %v1092 = vunpack.c.l.b16 %v254
    %v1093 = vunpack.c.h.b16 %v254
    %v1094 = vunpack.c.l.b16 %v255
    %v1095 = vunpack.c.h.b16 %v255
    %v1096 = vunpack.c.l.b16 %v256
    %v1097 = vunpack.c.h.b16 %v256
    %v1098 = vunpack.c.l.b16 %v257
    %v1099 = vunpack.c.h.b16 %v257
    %v1100 = vunpack.c.l.b16 %v258
    %v1101 = vunpack.c.h.b16 %v258
    %v1102 = vunpack.c.l.b16 %v259
    %v1103 = vunpack.c.h.b16 %v259
    %v1104 = vunpack.c.l.b16 %v260
    %v1105 = vunpack.c.h.b16 %v260
    %v1106 = vunpack.c.l.b16 %v261
    %v1107 = vunpack.c.h.b16 %v261
    %v1108 = vunpack.c.l.b16 %v262
    %v1109 = vunpack.c.h.b16 %v262
    %v1110 = vunpack.c.l.b16 %v263
    %v1111 = vunpack.c.h.b16 %v263
    %v1112 = vunpack.c.l.b16 %v264
    %v1113 = vunpack.c.h.b16 %v264
    %v1114 = vunpack.c.l.b16 %v265
    %v1115 = vunpack.c.h.b16 %v265
    %v1116 = vunpack.c.l.b16 %v266
    %v1117 = vunpack.c.h.b16 %v266
    %v1118 = vunpack.c.l.b16 %v267
    %v1119 = vunpack.c.h.b16 %v267
    %v1120 = vunpack.c.l.b16 %v268
    %v1121 = vunpack.c.h.b16 %v268
    %v1122 = vunpack.c.l.b16 %v269
    %v1123 = vunpack.c.h.b16 %v269
    %v1124 = vunpack.c.l.b16 %v270
    %v1125 = vunpack.c.h.b16 %v270
    %v1126 = vunpack.c.l.b16 %v271
    %v1127 = vunpack.c.h.b16 %v271
    %v1128 = vunpack.c.l.b16 %v272
    %v1129 = vunpack.c.h.b16 %v272
    %v1130 = vunpack.c.l.b16 %v273
    %v1131 = vunpack.c.h.b16 %v273
    %v1132 = vunpack.c.l.b16 %v274
    %v1133 = vunpack.c.h.b16 %v274
    %v1134 = vunpack.c.l.b16 %v275
    %v1135 = vunpack.c.h.b16 %v275
    %v1136 = vunpack.c.l.b16 %v276
    %v1137 = vunpack.c.h.b16 %v276
    %v1138 = vunpack.c.l.b16 %v277
    %v1139 = vunpack.c.h.b16 %v277
    %v1140 = vunpack.c.l.b16 %v278
    %v1141 = vunpack.c.h.b16 %v278
    %v1142 = vunpack.c.l.b16 %v279
    %v1143 = vunpack.c.h.b16 %v279
    %v1144 = vunpack.c.l.b16 %v280
    %v1145 = vunpack.c.h.b16 %v280
    %v1146 = vunpack.c.l.b16 %v281
    %v1147 = vunpack.c.h.b16 %v281
    %v1148 = vunpack.c.l.b16 %v282
    %v1149 = vunpack.c.h.b16 %v282
    %v1150 = vunpack.c.l.b16 %v283
    %v1151 = vunpack.c.h.b16 %v283
    %v1152 = vunpack.c.l.b16 %v284
    %v1153 = vunpack.c.h.b16 %v284
    %v1154 = vunpack.c.l.b16 %v285
    %v1155 = vunpack.c.h.b16 %v285
    %v1156 = vunpack.c.l.b16 %v286
    %v1157 = vunpack.c.h.b16 %v286
    %v1158 = vunpack.c.l.b16 %v287
    %v1159 = vunpack.c.h.b16 %v287
    %v1160 = vunpack.c.l.b16 %v288
    %v1161 = vunpack.c.h.b16 %v288
    %v1162 = vunpack.c.l.b16 %v289
    %v1163 = vunpack.c.h.b16 %v289
    %v1164 = vunpack.c.l.b16 %v290
    %v1165 = vunpack.c.h.b16 %v290
    %v1166 = vunpack.c.l.b16 %v291
    %v1167 = vunpack.c.h.b16 %v291
    %v1168 = vunpack.c.l.b16 %v292
    %v1169 = vunpack.c.h.b16 %v292
    %v1170 = vunpack.c.l.b16 %v293
    %v1171 = vunpack.c.h.b16 %v293
    %v1172 = vunpack.c.l.b16 %v294
    %v1173 = vunpack.c.h.b16 %v294
    %v1174 = vunpack.c.l.b16 %v295
    %v1175 = vunpack.c.h.b16 %v295
    %v1176 = vunpack.c.l.b16 %v296
    %v1177 = vunpack.c.h.b16 %v296
    %v1178 = vunpack.c.l.b16 %v297
    %v1179 = vunpack.c.h.b16 %v297
    %v1180 = vunpack.c.l.b16 %v298
    %v1181 = vunpack.c.h.b16 %v298
    %v1182 = vunpack.c.l.b16 %v299
    %v1183 = vunpack.c.h.b16 %v299
    %v1184 = vunpack.c.l.b16 %v300
    %v1185 = vunpack.c.h.b16 %v300
    %v1186 = vunpack.c.l.b16 %v301
    %v1187 = vunpack.c.h.b16 %v301
    %v1188 = vunpack.c.l.b16 %v302
    %v1189 = vunpack.c.h.b16 %v302
    %v1190 = vunpack.c.l.b16 %v303
    %v1191 = vunpack.c.h.b16 %v303
    %v1192 = vunpack.c.l.b16 %v304
    %v1193 = vunpack.c.h.b16 %v304
    %v1194 = vunpack.c.l.b16 %v305
    %v1195 = vunpack.c.h.b16 %v305
    %v1196 = vunpack.c.l.b16 %v306
    %v1197 = vunpack.c.h.b16 %v306
    %v1198 = vunpack.c.l.b16 %v307
    %v1199 = vunpack.c.h.b16 %v307
    %v1200 = vunpack.c.l.b16 %v308
    %v1201 = vunpack.c.h.b16 %v308
    %v1202 = vunpack.c.l.b16 %v309
    %v1203 = vunpack.c.h.b16 %v309
    %v1204 = vunpack.c.l.b16 %v310
    %v1205 = vunpack.c.h.b16 %v310
    %v1206 = vunpack.c.l.b16 %v311
    %v1207 = vunpack.c.h.b16 %v311
    %v1208 = vpack.c.b16 %v698, %v696
    %v1209 = vpack.c.b16 %v699, %v697
    %v1210 = vpack.c.b16 %v702, %v700
    %v1211 = vpack.c.b16 %v703, %v701
    %v1212 = vpack.c.b16 %v706, %v704
    %v1213 = vpack.c.b16 %v707, %v705
    %v1214 = vpack.c.b16 %v710, %v708
    %v1215 = vpack.c.b16 %v711, %v709
    %v1216 = vpack.c.b16 %v714, %v712
    %v1217 = vpack.c.b16 %v715, %v713
    %v1218 = vpack.c.b16 %v718, %v716
    %v1219 = vpack.c.b16 %v719, %v717
    %v1220 = vpack.c.b16 %v722, %v720
    %v1221 = vpack.c.b16 %v723, %v721
    %v1222 = vpack.c.b16 %v726, %v724
    %v1223 = vpack.c.b16 %v727, %v725
    %v1224 = vpack.c.b16 %v730, %v728
    %v1225 = vpack.c.b16 %v731, %v729
    %v1226 = vpack.c.b16 %v734, %v732
    %v1227 = vpack.c.b16 %v735, %v733
    %v1228 = vpack.c.b16 %v738, %v736
    %v1229 = vpack.c.b16 %v739, %v737
    %v1230 = vpack.c.b16 %v742, %v740
    %v1231 = vpack.c.b16 %v743, %v741
    %v1232 = vpack.c.b16 %v746, %v744
    %v1233 = vpack.c.b16 %v747, %v745
    %v1234 = vpack.c.b16 %v750, %v748
    %v1235 = vpack.c.b16 %v751, %v749
    %v1236 = vpack.c.b16 %v754, %v752
    %v1237 = vpack.c.b16 %v755, %v753
    %v1238 = vpack.c.b16 %v758, %v756
    %v1239 = vpack.c.b16 %v759, %v757
    %v1240 = vpack.c.b16 %v762, %v760
    %v1241 = vpack.c.b16 %v763, %v761
    %v1242 = vpack.c.b16 %v766, %v764
    %v1243 = vpack.c.b16 %v767, %v765
    %v1244 = vpack.c.b16 %v770, %v768
    %v1245 = vpack.c.b16 %v771, %v769
    %v1246 = vpack.c.b16 %v774, %v772
    %v1247 = vpack.c.b16 %v775, %v773
    %v1248 = vpack.c.b16 %v778, %v776
    %v1249 = vpack.c.b16 %v779, %v777
    %v1250 = vpack.c.b16 %v782, %v780
    %v1251 = vpack.c.b16 %v783, %v781
    %v1252 = vpack.c.b16 %v786, %v784
    %v1253 = vpack.c.b16 %v787, %v785
    %v1254 = vpack.c.b16 %v790, %v788
    %v1255 = vpack.c.b16 %v791, %v789
    %v1256 = vpack.c.b16 %v794, %v792
    %v1257 = vpack.c.b16 %v795, %v793
    %v1258 = vpack.c.b16 %v798, %v796
    %v1259 = vpack.c.b16 %v799, %v797
    %v1260 = vpack.c.b16 %v802, %v800
    %v1261 = vpack.c.b16 %v803, %v801
    %v1262 = vpack.c.b16 %v806, %v804
    %v1263 = vpack.c.b16 %v807, %v805
    %v1264 = vpack.c.b16 %v810, %v808
    %v1265 = vpack.c.b16 %v811, %v809
    %v1266 = vpack.c.b16 %v814, %v812
    %v1267 = vpack.c.b16 %v815, %v813
    %v1268 = vpack.c.b16 %v818, %v816
    %v1269 = vpack.c.b16 %v819, %v817
    %v1270 = vpack.c.b16 %v822, %v820
    %v1271 = vpack.c.b16 %v823, %v821
    %v1272 = vpack.c.b16 %v826, %v824
    %v1273 = vpack.c.b16 %v827, %v825
    %v1274 = vpack.c.b16 %v830, %v828
    %v1275 = vpack.c.b16 %v831, %v829
    %v1276 = vpack.c.b16 %v834, %v832
    %v1277 = vpack.c.b16 %v835, %v833
    %v1278 = vpack.c.b16 %v838, %v836
    %v1279 = vpack.c.b16 %v839, %v837
    %v1280 = vpack.c.b16 %v842, %v840
    %v1281 = vpack.c.b16 %v843, %v841
    %v1282 = vpack.c.b16 %v846, %v844
    %v1283 = vpack.c.b16 %v847, %v845
    %v1284 = vpack.c.b16 %v850, %v848
    %v1285 = vpack.c.b16 %v851, %v849
    %v1286 = vpack.c.b16 %v854, %v852
    %v1287 = vpack.c.b16 %v855, %v853
    %v1288 = vpack.c.b16 %v858, %v856
    %v1289 = vpack.c.b16 %v859, %v857
    %v1290 = vpack.c.b16 %v862, %v860
    %v1291 = vpack.c.b16 %v863, %v861
    %v1292 = vpack.c.b16 %v866, %v864
    %v1293 = vpack.c.b16 %v867, %v865
    %v1294 = vpack.c.b16 %v870, %v868
    %v1295 = vpack.c.b16 %v871, %v869
    %v1296 = vpack.c.b16 %v874, %v872
    %v1297 = vpack.c.b16 %v875, %v873
    %v1298 = vpack.c.b16 %v878, %v876
    %v1299 = vpack.c.b16 %v879, %v877
    %v1300 = vpack.c.b16 %v882, %v880
    %v1301 = vpack.c.b16 %v883, %v881
    %v1302 = vpack.c.b16 %v886, %v884
    %v1303 = vpack.c.b16 %v887, %v885
    %v1304 = vpack.c.b16 %v890, %v888
    %v1305 = vpack.c.b16 %v891, %v889
    %v1306 = vpack.c.b16 %v894, %v892
    %v1307 = vpack.c.b16 %v895, %v893
    %v1308 = vpack.c.b16 %v898, %v896
    %v1309 = vpack.c.b16 %v899, %v897
    %v1310 = vpack.c.b16 %v902, %v900
    %v1311 = vpack.c.b16 %v903, %v901
    %v1312 = vpack.c.b16 %v906, %v904
    %v1313 = vpack.c.b16 %v907, %v905
    %v1314 = vpack.c.b16 %v910, %v908
    %v1315 = vpack.c.b16 %v911, %v909
    %v1316 = vpack.c.b16 %v914, %v912
    %v1317 = vpack.c.b16 %v915, %v913
    %v1318 = vpack.c.b16 %v918, %v916
    %v1319 = vpack.c.b16 %v919, %v917
    %v1320 = vpack.c.b16 %v922, %v920
    %v1321 = vpack.c.b16 %v923, %v921
    %v1322 = vpack.c.b16 %v926, %v924
    %v1323 = vpack.c.b16 %v927, %v925
    %v1324 = vpack.c.b16 %v930, %v928
    %v1325 = vpack.c.b16 %v931, %v929
    %v1326 = vpack.c.b16 %v934, %v932
    %v1327 = vpack.c.b16 %v935, %v933
    %v1328 = vpack.c.b16 %v938, %v936
    %v1329 = vpack.c.b16 %v939, %v937
    %v1330 = vpack.c.b16 %v942, %v940
    %v1331 = vpack.c.b16 %v943, %v941
    %v1332 = vpack.c.b16 %v946, %v944
    %v1333 = vpack.c.b16 %v947, %v945
    %v1334 = vpack.c.b16 %v950, %v948
    %v1335 = vpack.c.b16 %v951, %v949
    %v1336 = vpack.c.b16 %v954, %v952
    %v1337 = vpack.c.b16 %v955, %v953
    %v1338 = vpack.c.b16 %v958, %v956
    %v1339 = vpack.c.b16 %v959, %v957
    %v1340 = vpack.c.b16 %v962, %v960
    %v1341 = vpack.c.b16 %v963, %v961
    %v1342 = vpack.c.b16 %v966, %v964
    %v1343 = vpack.c.b16 %v967, %v965
    %v1344 = vpack.c.b16 %v970, %v968
    %v1345 = vpack.c.b16 %v971, %v969
    %v1346 = vpack.c.b16 %v974, %v972
    %v1347 = vpack.c.b16 %v975, %v973
    %v1348 = vpack.c.b16 %v978, %v976
    %v1349 = vpack.c.b16 %v979, %v977
    %v1350 = vpack.c.b16 %v982, %v980
    %v1351 = vpack.c.b16 %v983, %v981
    %v1352 = vpack.c.b16 %v986, %v984
    %v1353 = vpack.c.b16 %v987, %v985
    %v1354 = vpack.c.b16 %v990, %v988
    %v1355 = vpack.c.b16 %v991, %v989
    %v1356 = vpack.c.b16 %v994, %v992
    %v1357 = vpack.c.b16 %v995, %v993
    %v1358 = vpack.c.b16 %v998, %v996
    %v1359 = vpack.c.b16 %v999, %v997
    %v1360 = vpack.c.b16 %v1002, %v1000
    %v1361 = vpack.c.b16 %v1003, %v1001
    %v1362 = vpack.c.b16 %v1006, %v1004
    %v1363 = vpack.c.b16 %v1007, %v1005
    %v1364 = vpack.c.b16 %v1010, %v1008
    %v1365 = vpack.c.b16 %v1011, %v1009
    %v1366 = vpack.c.b16 %v1014, %v1012
    %v1367 = vpack.c.b16 %v1015, %v1013
    %v1368 = vpack.c.b16 %v1018, %v1016
    %v1369 = vpack.c.b16 %v1019, %v1017
    %v1370 = vpack.c.b16 %v1022, %v1020
    %v1371 = vpack.c.b16 %v1023, %v1021
    %v1372 = vpack.c.b16 %v1026, %v1024
    %v1373 = vpack.c.b16 %v1027, %v1025
    %v1374 = vpack.c.b16 %v1030, %v1028
    %v1375 = vpack.c.b16 %v1031, %v1029
    %v1376 = vpack.c.b16 %v1034, %v1032
    %v1377 = vpack.c.b16 %v1035, %v1033
    %v1378 = vpack.c.b16 %v1038, %v1036
    %v1379 = vpack.c.b16 %v1039, %v1037
    %v1380 = vpack.c.b16 %v1042, %v1040
    %v1381 = vpack.c.b16 %v1043, %v1041
    %v1382 = vpack.c.b16 %v1046, %v1044
    %v1383 = vpack.c.b16 %v1047, %v1045
    %v1384 = vpack.c.b16 %v1050, %v1048
    %v1385 = vpack.c.b16 %v1051, %v1049
    %v1386 = vpack.c.b16 %v1054, %v1052
    %v1387 = vpack.c.b16 %v1055, %v1053
    %v1388 = vpack.c.b16 %v1058, %v1056
    %v1389 = vpack.c.b16 %v1059, %v1057
    %v1390 = vpack.c.b16 %v1062, %v1060
    %v1391 = vpack.c.b16 %v1063, %v1061
    %v1392 = vpack.c.b16 %v1066, %v1064
    %v1393 = vpack.c.b16 %v1067, %v1065
    %v1394 = vpack.c.b16 %v1070, %v1068
    %v1395 = vpack.c.b16 %v1071, %v1069
    %v1396 = vpack.c.b16 %v1074, %v1072
    %v1397 = vpack.c.b16 %v1075, %v1073
    %v1398 = vpack.c.b16 %v1078, %v1076
    %v1399 = vpack.c.b16 %v1079, %v1077
    %v1400 = vpack.c.b16 %v1082, %v1080
    %v1401 = vpack.c.b16 %v1083, %v1081
    %v1402 = vpack.c.b16 %v1086, %v1084
    %v1403 = vpack.c.b16 %v1087, %v1085
    %v1404 = vpack.c.b16 %v1090, %v1088
    %v1405 = vpack.c.b16 %v1091, %v1089
    %v1406 = vpack.c.b16 %v1094, %v1092
    %v1407 = vpack.c.b16 %v1095, %v1093
    %v1408 = vpack.c.b16 %v1098, %v1096
    %v1409 = vpack.c.b16 %v1099, %v1097
    %v1410 = vpack.c.b16 %v1102, %v1100
    %v1411 = vpack.c.b16 %v1103, %v1101
    %v1412 = vpack.c.b16 %v1106, %v1104
    %v1413 = vpack.c.b16 %v1107, %v1105
    %v1414 = vpack.c.b16 %v1110, %v1108
    %v1415 = vpack.c.b16 %v1111, %v1109
    %v1416 = vpack.c.b16 %v1114, %v1112
    %v1417 = vpack.c.b16 %v1115, %v1113
    %v1418 = vpack.c.b16 %v1118, %v1116
    %v1419 = vpack.c.b16 %v1119, %v1117
    %v1420 = vpack.c.b16 %v1122, %v1120
    %v1421 = vpack.c.b16 %v1123, %v1121
    %v1422 = vpack.c.b16 %v1126, %v1124
    %v1423 = vpack.c.b16 %v1127, %v1125
    %v1424 = vpack.c.b16 %v1130, %v1128
    %v1425 = vpack.c.b16 %v1131, %v1129
    %v1426 = vpack.c.b16 %v1134, %v1132
    %v1427 = vpack.c.b16 %v1135, %v1133
    %v1428 = vpack.c.b16 %v1138, %v1136
    %v1429 = vpack.c.b16 %v1139, %v1137
    %v1430 = vpack.c.b16 %v1142, %v1140
    %v1431 = vpack.c.b16 %v1143, %v1141
    %v1432 = vpack.c.b16 %v1146, %v1144
    %v1433 = vpack.c.b16 %v1147, %v1145
    %v1434 = vpack.c.b16 %v1150, %v1148
    %v1435 = vpack.c.b16 %v1151, %v1149
    %v1436 = vpack.c.b16 %v1154, %v1152
    %v1437 = vpack.c.b16 %v1155, %v1153
    %v1438 = vpack.c.b16 %v1158, %v1156
    %v1439 = vpack.c.b16 %v1159, %v1157
    %v1440 = vpack.c.b16 %v1162, %v1160
    %v1441 = vpack.c.b16 %v1163, %v1161
    %v1442 = vpack.c.b16 %v1166, %v1164
    %v1443 = vpack.c.b16 %v1167, %v1165
    %v1444 = vpack.c.b16 %v1170, %v1168
    %v1445 = vpack.c.b16 %v1171, %v1169
    %v1446 = vpack.c.b16 %v1174, %v1172
    %v1447 = vpack.c.b16 %v1175, %v1173
    %v1448 = vpack.c.b16 %v1178, %v1176
    %v1449 = vpack.c.b16 %v1179, %v1177
    %v1450 = vpack.c.b16 %v1182, %v1180
    %v1451 = vpack.c.b16 %v1183, %v1181
    %v1452 = vpack.c.b16 %v1186, %v1184
    %v1453 = vpack.c.b16 %v1187, %v1185
    %v1454 = vpack.c.b16 %v1190, %v1188
    %v1455 = vpack.c.b16 %v1191, %v1189
    %v1456 = vpack.c.b16 %v1194, %v1192
    %v1457 = vpack.c.b16 %v1195, %v1193
    %v1458 = vpack.c.b16 %v1198, %v1196
    %v1459 = vpack.c.b16 %v1199, %v1197
    %v1460 = vpack.c.b16 %v1202, %v1200
    %v1461 = vpack.c.b16 %v1203, %v1201
    %v1462 = vpack.c.b16 %v1206, %v1204
    %v1463 = vpack.c.b16 %v1207, %v1205
    %1720 = vmatprep.subr.bf16.mxu0 %v1209
    %1721 = vmatpush1.bf16.msra.mxu0 %v1208
    %1722 = vmatprep.subr.bf16.mxu0 %v1211
    %1723 = vmatpush1.bf16.msra.mxu0 %v1210
    %1724 = vmatprep.subr.bf16.mxu0 %v1213
    %1725 = vmatpush1.bf16.msra.mxu0 %v1212
    %1726 = vmatprep.subr.bf16.mxu0 %v1215
    %1727 = vmatpush1.bf16.msra.mxu0 %v1214
    %1728 = vmatprep.subr.bf16.mxu0 %v1217
    %1729 = vmatpush1.bf16.msra.mxu0 %v1216
    %1730 = vmatprep.subr.bf16.mxu0 %v1219
    %1731 = vmatpush1.bf16.msra.mxu0 %v1218
    %1732 = vmatprep.subr.bf16.mxu0 %v1221
    %1733 = vmatpush1.bf16.msra.mxu0 %v1220
    %1734 = vmatprep.subr.bf16.mxu0 %v1223
    %1735 = vmatpush1.bf16.msra.mxu0 %v1222
    %1736 = vmatprep.subr.bf16.mxu0 %v1225
    %1737 = vmatpush1.bf16.msra.mxu0 %v1224
    %1738 = vmatprep.subr.bf16.mxu0 %v1227
    %1739 = vmatpush1.bf16.msra.mxu0 %v1226
    %1740 = vmatprep.subr.bf16.mxu0 %v1229
    %1741 = vmatpush1.bf16.msra.mxu0 %v1228
    %1742 = vmatprep.subr.bf16.mxu0 %v1231
    %1743 = vmatpush1.bf16.msra.mxu0 %v1230
    %1744 = vmatprep.subr.bf16.mxu0 %v1233
    %1745 = vmatpush1.bf16.msra.mxu0 %v1232
    %1746 = vmatprep.subr.bf16.mxu0 %v1235
    %1747 = vmatpush1.bf16.msra.mxu0 %v1234
    %1748 = vmatprep.subr.bf16.mxu0 %v1237
    %1749 = vmatpush1.bf16.msra.mxu0 %v1236
    %1750 = vmatprep.subr.bf16.mxu0 %v1239
    %1751 = vmatpush1.bf16.msra.mxu0 %v1238
    %1752 = vmatprep.mubr.bf16.mxu0 %v363
    %1753 = vmatmul.mubr.bf16.gmra.mrb[0].mxu0 %v349
    %v1754 = vpop.f32.mrb[0].mxu0
    %v1755 = vadd.f32 %v317, %v1754
    %v1756 = vpop.f32.mrb[0].mxu0
    %v1757 = vadd.f32 %v321, %v1756
    %v1758 = vpop.f32.mrb[0].mxu0
    %v1759 = vpop.f32.mrb[0].mxu0
    %1760 = vdwg.mxu0
    %1761 = vmatprep.subr.bf16.mxu0 %v1241
    %1762 = vmatpush1.bf16.msra.mxu0 %v1240
    %1763 = vmatprep.subr.bf16.mxu0 %v1243
    %1764 = vmatpush1.bf16.msra.mxu0 %v1242
    %1765 = vmatprep.subr.bf16.mxu0 %v1245
    %1766 = vmatpush1.bf16.msra.mxu0 %v1244
    %1767 = vmatprep.subr.bf16.mxu0 %v1247
    %1768 = vmatpush1.bf16.msra.mxu0 %v1246
    %1769 = vmatprep.subr.bf16.mxu0 %v1249
    %1770 = vmatpush1.bf16.msra.mxu0 %v1248
    %1771 = vmatprep.subr.bf16.mxu0 %v1251
    %1772 = vmatpush1.bf16.msra.mxu0 %v1250
    %1773 = vmatprep.subr.bf16.mxu0 %v1253
    %1774 = vmatpush1.bf16.msra.mxu0 %v1252
    %1775 = vmatprep.subr.bf16.mxu0 %v1255
    %1776 = vmatpush1.bf16.msra.mxu0 %v1254
    %1777 = vmatprep.subr.bf16.mxu0 %v1257
    %1778 = vmatpush1.bf16.msra.mxu0 %v1256
    %1779 = vmatprep.subr.bf16.mxu0 %v1259
    %1780 = vmatpush1.bf16.msra.mxu0 %v1258
    %1781 = vmatprep.subr.bf16.mxu0 %v1261
    %1782 = vmatpush1.bf16.msra.mxu0 %v1260
    %1783 = vmatprep.subr.bf16.mxu0 %v1263
    %1784 = vmatpush1.bf16.msra.mxu0 %v1262
    %1785 = vmatprep.subr.bf16.mxu0 %v1265
    %1786 = vmatpush1.bf16.msra.mxu0 %v1264
    %1787 = vmatprep.subr.bf16.mxu0 %v1267
    %1788 = vmatpush1.bf16.msra.mxu0 %v1266
    %1789 = vmatprep.subr.bf16.mxu0 %v1269
    %1790 = vmatpush1.bf16.msra.mxu0 %v1268
    %1791 = vmatprep.subr.bf16.mxu0 %v1271
    %1792 = vmatpush1.bf16.msra.mxu0 %v1270
    %1793 = vmatprep.mubr.bf16.mxu0 %v373
    %1794 = vmatmul.mubr.bf16.gmra.mrb[0].mxu0 %v371
    %v1795 = vpop.f32.mrb[0].mxu0
    %v1796 = vadd.f32 %v1755, %v1795
    %v1797 = vpop.f32.mrb[0].mxu0
    %v1798 = vadd.f32 %v1757, %v1797
    %v1799 = vpop.f32.mrb[0].mxu0
    %v1800 = vpop.f32.mrb[0].mxu0
    %1801 = vdwg.mxu0
    %1802 = vmatprep.subr.bf16.mxu0 %v1273
    %1803 = vmatpush1.bf16.msra.mxu0 %v1272
    %1804 = vmatprep.subr.bf16.mxu0 %v1275
    %1805 = vmatpush1.bf16.msra.mxu0 %v1274
    %1806 = vmatprep.subr.bf16.mxu0 %v1277
    %1807 = vmatpush1.bf16.msra.mxu0 %v1276
    %1808 = vmatprep.subr.bf16.mxu0 %v1279
    %1809 = vmatpush1.bf16.msra.mxu0 %v1278
    %1810 = vmatprep.subr.bf16.mxu0 %v1281
    %1811 = vmatpush1.bf16.msra.mxu0 %v1280
    %1812 = vmatprep.subr.bf16.mxu0 %v1283
    %1813 = vmatpush1.bf16.msra.mxu0 %v1282
    %1814 = vmatprep.subr.bf16.mxu0 %v1285
    %1815 = vmatpush1.bf16.msra.mxu0 %v1284
    %1816 = vmatprep.subr.bf16.mxu0 %v1287
    %1817 = vmatpush1.bf16.msra.mxu0 %v1286
    %1818 = vmatprep.subr.bf16.mxu0 %v1289
    %1819 = vmatpush1.bf16.msra.mxu0 %v1288
    %1820 = vmatprep.subr.bf16.mxu0 %v1291
    %1821 = vmatpush1.bf16.msra.mxu0 %v1290
    %1822 = vmatprep.subr.bf16.mxu0 %v1293
    %1823 = vmatpush1.bf16.msra.mxu0 %v1292
    %1824 = vmatprep.subr.bf16.mxu0 %v1295
    %1825 = vmatpush1.bf16.msra.mxu0 %v1294
    %1826 = vmatprep.subr.bf16.mxu0 %v1297
    %1827 = vmatpush1.bf16.msra.mxu0 %v1296
    %1828 = vmatprep.subr.bf16.mxu0 %v1299
    %1829 = vmatpush1.bf16.msra.mxu0 %v1298
    %1830 = vmatprep.subr.bf16.mxu0 %v1301
    %1831 = vmatpush1.bf16.msra.mxu0 %v1300
    %1832 = vmatprep.subr.bf16.mxu0 %v1303
    %1833 = vmatpush1.bf16.msra.mxu0 %v1302
    %1834 = vmatprep.mubr.bf16.mxu0 %v370
    %1835 = vmatmul.mubr.bf16.gmra.mrb[0].mxu0 %v356
    %v1836 = vpop.f32.mrb[0].mxu0
    %v1837 = vadd.f32 %v1796, %v1836
    %v1838 = vpop.f32.mrb[0].mxu0
    %v1839 = vadd.f32 %v1798, %v1838
    %v1840 = vpop.f32.mrb[0].mxu0
    %v1841 = vpop.f32.mrb[0].mxu0
    %1842 = vdwg.mxu0
    %1843 = vmatprep.subr.bf16.mxu0 %v1305
    %1844 = vmatpush1.bf16.msra.mxu0 %v1304
    %1845 = vmatprep.subr.bf16.mxu0 %v1307
    %1846 = vmatpush1.bf16.msra.mxu0 %v1306
    %1847 = vmatprep.subr.bf16.mxu0 %v1309
    %1848 = vmatpush1.bf16.msra.mxu0 %v1308
    %1849 = vmatprep.subr.bf16.mxu0 %v1311
    %1850 = vmatpush1.bf16.msra.mxu0 %v1310
    %1851 = vmatprep.subr.bf16.mxu0 %v1313
    %1852 = vmatpush1.bf16.msra.mxu0 %v1312
    %1853 = vmatprep.subr.bf16.mxu0 %v1315
    %1854 = vmatpush1.bf16.msra.mxu0 %v1314
    %1855 = vmatprep.subr.bf16.mxu0 %v1317
    %1856 = vmatpush1.bf16.msra.mxu0 %v1316
    %1857 = vmatprep.subr.bf16.mxu0 %v1319
    %1858 = vmatpush1.bf16.msra.mxu0 %v1318
    %1859 = vmatprep.subr.bf16.mxu0 %v1321
    %1860 = vmatpush1.bf16.msra.mxu0 %v1320
    %1861 = vmatprep.subr.bf16.mxu0 %v1323
    %1862 = vmatpush1.bf16.msra.mxu0 %v1322
    %1863 = vmatprep.subr.bf16.mxu0 %v1325
    %1864 = vmatpush1.bf16.msra.mxu0 %v1324
    %1865 = vmatprep.subr.bf16.mxu0 %v1327
    %1866 = vmatpush1.bf16.msra.mxu0 %v1326
    %1867 = vmatprep.subr.bf16.mxu0 %v1329
    %1868 = vmatpush1.bf16.msra.mxu0 %v1328
    %1869 = vmatprep.subr.bf16.mxu0 %v1331
    %1870 = vmatpush1.bf16.msra.mxu0 %v1330
    %1871 = vmatprep.subr.bf16.mxu0 %v1333
    %1872 = vmatpush1.bf16.msra.mxu0 %v1332
    %1873 = vmatprep.subr.bf16.mxu0 %v1335
    %1874 = vmatpush1.bf16.msra.mxu0 %v1334
    %1875 = vmatprep.mubr.bf16.mxu0 %v374
    %1876 = vmatmul.mubr.bf16.gmra.mrb[0].mxu0 %v372
    %v1877 = vpop.f32.mrb[0].mxu0
    %v1878 = vadd.f32 %v1837, %v1877
    %v1879 = vpop.f32.mrb[0].mxu0
    %v1880 = vadd.f32 %v1839, %v1879
    %v1881 = vpop.f32.mrb[0].mxu0
    %v1882 = vpop.f32.mrb[0].mxu0
    %1883 = vdwg.mxu0
    %1884 = vmatprep.subr.bf16.mxu0 %v1337
    %1885 = vmatpush1.bf16.msra.mxu0 %v1336
    %1886 = vmatprep.subr.bf16.mxu0 %v1339
    %1887 = vmatpush1.bf16.msra.mxu0 %v1338
    %1888 = vmatprep.subr.bf16.mxu0 %v1341
    %1889 = vmatpush1.bf16.msra.mxu0 %v1340
    %1890 = vmatprep.subr.bf16.mxu0 %v1343
    %1891 = vmatpush1.bf16.msra.mxu0 %v1342
    %1892 = vmatprep.subr.bf16.mxu0 %v1345
    %1893 = vmatpush1.bf16.msra.mxu0 %v1344
    %1894 = vmatprep.subr.bf16.mxu0 %v1347
    %1895 = vmatpush1.bf16.msra.mxu0 %v1346
    %1896 = vmatprep.subr.bf16.mxu0 %v1349
    %1897 = vmatpush1.bf16.msra.mxu0 %v1348
    %1898 = vmatprep.subr.bf16.mxu0 %v1351
    %1899 = vmatpush1.bf16.msra.mxu0 %v1350
    %1900 = vmatprep.subr.bf16.mxu0 %v1353
    %1901 = vmatpush1.bf16.msra.mxu0 %v1352
    %1902 = vmatprep.subr.bf16.mxu0 %v1355
    %1903 = vmatpush1.bf16.msra.mxu0 %v1354
    %1904 = vmatprep.subr.bf16.mxu0 %v1357
    %1905 = vmatpush1.bf16.msra.mxu0 %v1356
    %1906 = vmatprep.subr.bf16.mxu0 %v1359
    %1907 = vmatpush1.bf16.msra.mxu0 %v1358
    %1908 = vmatprep.subr.bf16.mxu0 %v1361
    %1909 = vmatpush1.bf16.msra.mxu0 %v1360
    %1910 = vmatprep.subr.bf16.mxu0 %v1363
    %1911 = vmatpush1.bf16.msra.mxu0 %v1362
    %1912 = vmatprep.subr.bf16.mxu0 %v1365
    %1913 = vmatpush1.bf16.msra.mxu0 %v1364
    %1914 = vmatprep.subr.bf16.mxu0 %v1367
    %1915 = vmatpush1.bf16.msra.mxu0 %v1366
    %1916 = vmatprep.mubr.bf16.mxu0 %v412
    %1917 = vmatmul.mubr.bf16.gmra.mrb[0].mxu0 %v398
    %v1918 = vpop.f32.mrb[0].mxu0
    %v1919 = vadd.f32 %v1878, %v1918
    %v1920 = vpop.f32.mrb[0].mxu0
    %v1921 = vadd.f32 %v1880, %v1920
    %v1922 = vpop.f32.mrb[0].mxu0
    %v1923 = vpop.f32.mrb[0].mxu0
    %1924 = vdwg.mxu0
    %1925 = vmatprep.subr.bf16.mxu0 %v1369
    %1926 = vmatpush1.bf16.msra.mxu0 %v1368
    %1927 = vmatprep.subr.bf16.mxu0 %v1371
    %1928 = vmatpush1.bf16.msra.mxu0 %v1370
    %1929 = vmatprep.subr.bf16.mxu0 %v1373
    %1930 = vmatpush1.bf16.msra.mxu0 %v1372
    %1931 = vmatprep.subr.bf16.mxu0 %v1375
    %1932 = vmatpush1.bf16.msra.mxu0 %v1374
    %1933 = vmatprep.subr.bf16.mxu0 %v1377
    %1934 = vmatpush1.bf16.msra.mxu0 %v1376
    %1935 = vmatprep.subr.bf16.mxu0 %v1379
    %1936 = vmatpush1.bf16.msra.mxu0 %v1378
    %1937 = vmatprep.subr.bf16.mxu0 %v1381
    %1938 = vmatpush1.bf16.msra.mxu0 %v1380
    %1939 = vmatprep.subr.bf16.mxu0 %v1383
    %1940 = vmatpush1.bf16.msra.mxu0 %v1382
    %1941 = vmatprep.subr.bf16.mxu0 %v1385
    %1942 = vmatpush1.bf16.msra.mxu0 %v1384
    %1943 = vmatprep.subr.bf16.mxu0 %v1387
    %1944 = vmatpush1.bf16.msra.mxu0 %v1386
    %1945 = vmatprep.subr.bf16.mxu0 %v1389
    %1946 = vmatpush1.bf16.msra.mxu0 %v1388
    %1947 = vmatprep.subr.bf16.mxu0 %v1391
    %1948 = vmatpush1.bf16.msra.mxu0 %v1390
    %1949 = vmatprep.subr.bf16.mxu0 %v1393
    %1950 = vmatpush1.bf16.msra.mxu0 %v1392
    %1951 = vmatprep.subr.bf16.mxu0 %v1395
    %1952 = vmatpush1.bf16.msra.mxu0 %v1394
    %1953 = vmatprep.subr.bf16.mxu0 %v1397
    %1954 = vmatpush1.bf16.msra.mxu0 %v1396
    %1955 = vmatprep.subr.bf16.mxu0 %v1399
    %1956 = vmatpush1.bf16.msra.mxu0 %v1398
    %1957 = vmatprep.mubr.bf16.mxu0 %v422
    %1958 = vmatmul.mubr.bf16.gmra.mrb[0].mxu0 %v420
    %v1959 = vpop.f32.mrb[0].mxu0
    %v1960 = vadd.f32 %v1919, %v1959
    %v1961 = vpop.f32.mrb[0].mxu0
    %v1962 = vadd.f32 %v1921, %v1961
    %v1963 = vpop.f32.mrb[0].mxu0
    %v1964 = vpop.f32.mrb[0].mxu0
    %1965 = vdwg.mxu0
    %1966 = vmatprep.subr.bf16.mxu0 %v1401
    %1967 = vmatpush1.bf16.msra.mxu0 %v1400
    %1968 = vmatprep.subr.bf16.mxu0 %v1403
    %1969 = vmatpush1.bf16.msra.mxu0 %v1402
    %1970 = vmatprep.subr.bf16.mxu0 %v1405
    %1971 = vmatpush1.bf16.msra.mxu0 %v1404
    %1972 = vmatprep.subr.bf16.mxu0 %v1407
    %1973 = vmatpush1.bf16.msra.mxu0 %v1406
    %1974 = vmatprep.subr.bf16.mxu0 %v1409
    %1975 = vmatpush1.bf16.msra.mxu0 %v1408
    %1976 = vmatprep.subr.bf16.mxu0 %v1411
    %1977 = vmatpush1.bf16.msra.mxu0 %v1410
    %1978 = vmatprep.subr.bf16.mxu0 %v1413
    %1979 = vmatpush1.bf16.msra.mxu0 %v1412
    %1980 = vmatprep.subr.bf16.mxu0 %v1415
    %1981 = vmatpush1.bf16.msra.mxu0 %v1414
    %1982 = vmatprep.subr.bf16.mxu0 %v1417
    %1983 = vmatpush1.bf16.msra.mxu0 %v1416
    %1984 = vmatprep.subr.bf16.mxu0 %v1419
    %1985 = vmatpush1.bf16.msra.mxu0 %v1418
    %1986 = vmatprep.subr.bf16.mxu0 %v1421
    %1987 = vmatpush1.bf16.msra.mxu0 %v1420
    %1988 = vmatprep.subr.bf16.mxu0 %v1423
    %1989 = vmatpush1.bf16.msra.mxu0 %v1422
    %1990 = vmatprep.subr.bf16.mxu0 %v1425
    %1991 = vmatpush1.bf16.msra.mxu0 %v1424
    %1992 = vmatprep.subr.bf16.mxu0 %v1427
    %1993 = vmatpush1.bf16.msra.mxu0 %v1426
    %1994 = vmatprep.subr.bf16.mxu0 %v1429
    %1995 = vmatpush1.bf16.msra.mxu0 %v1428
    %1996 = vmatprep.subr.bf16.mxu0 %v1431
    %1997 = vmatpush1.bf16.msra.mxu0 %v1430
    %1998 = vmatprep.mubr.bf16.mxu0 %v419
    %1999 = vmatmul.mubr.bf16.gmra.mrb[0].mxu0 %v405
    %v2000 = vpop.f32.mrb[0].mxu0
    %v2001 = vadd.f32 %v1960, %v2000
    %v2002 = vpop.f32.mrb[0].mxu0
    %v2003 = vadd.f32 %v1962, %v2002
    %v2004 = vpop.f32.mrb[0].mxu0
    %v2005 = vpop.f32.mrb[0].mxu0
    %2006 = vdwg.mxu0
    %2007 = vmatprep.subr.bf16.mxu0 %v1433
    %2008 = vmatpush1.bf16.msra.mxu0 %v1432
    %2009 = vmatprep.subr.bf16.mxu0 %v1435
    %2010 = vmatpush1.bf16.msra.mxu0 %v1434
    %2011 = vmatprep.subr.bf16.mxu0 %v1437
    %2012 = vmatpush1.bf16.msra.mxu0 %v1436
    %2013 = vmatprep.subr.bf16.mxu0 %v1439
    %2014 = vmatpush1.bf16.msra.mxu0 %v1438
    %2015 = vmatprep.subr.bf16.mxu0 %v1441
    %2016 = vmatpush1.bf16.msra.mxu0 %v1440
    %2017 = vmatprep.subr.bf16.mxu0 %v1443
    %2018 = vmatpush1.bf16.msra.mxu0 %v1442
    %2019 = vmatprep.subr.bf16.mxu0 %v1445
    %2020 = vmatpush1.bf16.msra.mxu0 %v1444
    %2021 = vmatprep.subr.bf16.mxu0 %v1447
    %2022 = vmatpush1.bf16.msra.mxu0 %v1446
    %2023 = vmatprep.subr.bf16.mxu0 %v1449
    %2024 = vmatpush1.bf16.msra.mxu0 %v1448
    %2025 = vmatprep.subr.bf16.mxu0 %v1451
    %2026 = vmatpush1.bf16.msra.mxu0 %v1450
    %2027 = vmatprep.subr.bf16.mxu0 %v1453
    %2028 = vmatpush1.bf16.msra.mxu0 %v1452
    %2029 = vmatprep.subr.bf16.mxu0 %v1455
    %2030 = vmatpush1.bf16.msra.mxu0 %v1454
    %2031 = vmatprep.subr.bf16.mxu0 %v1457
    %2032 = vmatpush1.bf16.msra.mxu0 %v1456
    %2033 = vmatprep.subr.bf16.mxu0 %v1459
    %2034 = vmatpush1.bf16.msra.mxu0 %v1458
    %2035 = vmatprep.subr.bf16.mxu0 %v1461
    %2036 = vmatpush1.bf16.msra.mxu0 %v1460
    %2037 = vmatprep.subr.bf16.mxu0 %v1463
    %2038 = vmatpush1.bf16.msra.mxu0 %v1462
    %2039 = vmatprep.mubr.bf16.mxu0 %v423
    %2040 = vmatmul.mubr.bf16.gmra.mrb[0].mxu0 %v421
    %v2041 = vpop.f32.mrb[0].mxu0
    %v2042 = vadd.f32 %v2001, %v2041
    %v2043 = vpop.f32.mrb[0].mxu0
    %v2044 = vadd.f32 %v2003, %v2043
    %v2045 = vpop.f32.mrb[0].mxu0
    %v2046 = vpop.f32.mrb[0].mxu0
    %2047 = vdwg.mxu0
    %v2048 = vmax.f32 %v2042, 0.0
    %v2049 = vmax.f32 %v2044, 0.0
    %v2050 = vld [vmem:[%s3] sm:$0x3]
    %v2051 = vld [vmem:[%s4] sm:$0x3]
    %vm2052 = vcmask 1041408
    %v2053 = vsel %vm2052, %v2048, 0.0
    %v2054 = vrot.slane %v2053, 4
    %v2055 = vadd.f32 %v2053, %v2054
    %v2056 = vrot.slane %v2055, 2
    %v2057 = vadd.f32 %v2055, %v2056
    %v2058 = vrot.slane %v2057, 1
    %v2059 = vadd.f32 %v2057, %v2058
    %v2060 = vsel %vm2052, %v2049, 0.0
    %v2061 = vrot.slane %v2060, 4
    %v2062 = vadd.f32 %v2060, %v2061
    %v2063 = vrot.slane %v2062, 2
    %v2064 = vadd.f32 %v2062, %v2063
    %v2065 = vrot.slane %v2064, 1
    %v2066 = vadd.f32 %v2064, %v2065
    %v2067 = vmul.f32 %v2059, 0.5
    %v2068 = vmul.f32 %v2066, 0.5
    %v2069 = vmul.f32 %v2048, %v2048
    %v2070 = vmul.f32 %v2049, %v2049
    %v2071 = vsel %vm2052, %v2069, 0.0
    %v2072 = vrot.slane %v2071, 4
    %v2073 = vadd.f32 %v2071, %v2072
    %v2074 = vrot.slane %v2073, 2
    %v2075 = vadd.f32 %v2073, %v2074
    %v2076 = vrot.slane %v2075, 1
    %v2077 = vadd.f32 %v2075, %v2076
    %v2078 = vsel %vm2052, %v2070, 0.0
    %v2079 = vrot.slane %v2078, 4
    %v2080 = vadd.f32 %v2078, %v2079
    %v2081 = vrot.slane %v2080, 2
    %v2082 = vadd.f32 %v2080, %v2081
    %v2083 = vrot.slane %v2082, 1
    %v2084 = vadd.f32 %v2082, %v2083
    %v2085 = vmul.f32 %v2077, 0.5
    %v2086 = vmul.f32 %v2084, 0.5
    %v2087 = vmul.f32 %v2067, %v2067
    %v2088 = vmul.f32 %v2068, %v2068
    %v2089 = vsub.f32 %v2085, %v2087
    %v2090 = vsub.f32 %v2086, %v2088
    %v2091 = vsub.f32 %v2048, %v2067
    %v2092 = vsub.f32 %v2049, %v2068
    %v2093 = vadd.f32 %v2089, 1e-05
    %v2094 = vadd.f32 %v2090, 1e-05
    %v2095 = vrsqrt.pop %v2093
    %v2096 = vrsqrt.pop %v2094
    %v2098 = vlaneseq
    %v2099 = vshrl.u32 %v2098, 7
    %v2100 = vsub.s32 0, %v2099
    %v2101 = vrot.slane %v2050, %v2100
    %v2102 = vlaneseq
    %v2103 = vshrl.u32 %v2102, 7
    %v2104 = vsub.s32 1, %v2103
    %v2105 = vrot.slane %v2050, %v2104
    %v2108 = vmul.f32 %v2095, %v2101
    %v2109 = vmul.f32 %v2096, %v2105
    %v2110 = vlaneseq
    %v2111 = vshrl.u32 %v2110, 7
    %v2112 = vsub.s32 0, %v2111
    %v2113 = vrot.slane %v2108, %v2112
    %v2114 = vlaneseq
    %v2115 = vshrl.u32 %v2114, 7
    %v2116 = vsub.s32 0, %v2115
    %v2117 = vrot.slane %v2109, %v2116
    %v2118 = vmul.f32 %v2091, %v2113
    %v2119 = vmul.f32 %v2092, %v2117
    %v2121 = vlaneseq
    %v2122 = vshrl.u32 %v2121, 7
    %v2123 = vsub.s32 0, %v2122
    %v2124 = vrot.slane %v2051, %v2123
    %v2125 = vlaneseq
    %v2126 = vshrl.u32 %v2125, 7
    %v2127 = vsub.s32 1, %v2126
    %v2128 = vrot.slane %v2051, %v2127
    %v2131 = vadd.f32 %v2118, %v2124
    %v2132 = vadd.f32 %v2119, %v2128
    %v2133 = vpack.c.bf16 %v2131, %v2131
    %v2134 = vpack.c.bf16 %v2132, %v2132
    %v2135 = vld [vmem:[%s5] sm:$0xf]
    %v2136 = vld [vmem:[%s5 + $0x4] sm:$0xf]
    %v2137 = vld [vmem:[%s5 + $0x8] sm:$0xf]
    %v2138 = vld [vmem:[%s5 + $0xc] sm:$0xf]
    %v2139 = vld [vmem:[%s5 + $0x10] sm:$0xf]
    %v2140 = vld [vmem:[%s5 + $0x14] sm:$0xf]
    %v2141 = vld [vmem:[%s5 + $0x18] sm:$0xf]
    %v2142 = vld [vmem:[%s5 + $0x1c] sm:$0xf]
    %v2143 = vld [vmem:[%s5 + $0x20] sm:$0xf]
    %v2144 = vld [vmem:[%s5 + $0x24] sm:$0xf]
    %v2145 = vld [vmem:[%s5 + $0x28] sm:$0xf]
    %v2146 = vld [vmem:[%s5 + $0x2c] sm:$0xf]
    %v2147 = vld [vmem:[%s5 + $0x30] sm:$0xf]
    %v2148 = vld [vmem:[%s5 + $0x34] sm:$0xf]
    %v2149 = vld [vmem:[%s5 + $0x38] sm:$0xf]
    %v2150 = vld [vmem:[%s5 + $0x3c] sm:$0xf]
    %v2151 = vld [vmem:[%s5 + $0x40] sm:$0xf]
    %v2152 = vld [vmem:[%s5 + $0x44] sm:$0xf]
    %v2153 = vld [vmem:[%s5 + $0x48] sm:$0xf]
    %v2154 = vld [vmem:[%s5 + $0x4c] sm:$0xf]
    %v2155 = vld [vmem:[%s5 + $0x50] sm:$0xf]
    %v2156 = vld [vmem:[%s5 + $0x54] sm:$0xf]
    %v2157 = vld [vmem:[%s5 + $0x58] sm:$0xf]
    %v2158 = vld [vmem:[%s5 + $0x5c] sm:$0xf]
    %v2159 = vld [vmem:[%s5 + $0x60] sm:$0xf]
    %v2160 = vld [vmem:[%s5 + $0x64] sm:$0xf]
    %v2161 = vld [vmem:[%s5 + $0x68] sm:$0xf]
    %v2162 = vld [vmem:[%s5 + $0x6c] sm:$0xf]
    %v2163 = vld [vmem:[%s5 + $0x70] sm:$0xf]
    %v2164 = vld [vmem:[%s5 + $0x74] sm:$0xf]
    %v2165 = vld [vmem:[%s5 + $0x78] sm:$0xf]
    %v2166 = vld [vmem:[%s5 + $0x7c] sm:$0xf]
    %v2167 = vld [vmem:[%s6] sm:$0x1]
    %v2169 = vlaneseq
    %v2170 = vshrl.u32 %v2169, 7
    %v2171 = vsub.s32 0, %v2170
    %v2172 = vrot.slane %v2167, %v2171
    %v2206 = vunpack.c.l.b16 %v2135
    %v2207 = vunpack.c.l.b16 %v2136
    %v2208 = vunpack.c.l.b16 %v2137
    %v2209 = vunpack.c.l.b16 %v2138
    %v2210 = vunpack.c.l.b16 %v2139
    %v2211 = vunpack.c.l.b16 %v2140
    %v2212 = vunpack.c.l.b16 %v2141
    %v2213 = vunpack.c.l.b16 %v2142
    %v2214 = vunpack.c.l.b16 %v2143
    %v2215 = vunpack.c.l.b16 %v2144
    %v2216 = vunpack.c.l.b16 %v2145
    %v2217 = vunpack.c.l.b16 %v2146
    %v2218 = vunpack.c.l.b16 %v2147
    %v2219 = vunpack.c.l.b16 %v2148
    %v2220 = vunpack.c.l.b16 %v2149
    %v2221 = vunpack.c.l.b16 %v2150
    %v2222 = vunpack.c.l.b16 %v2151
    %v2223 = vunpack.c.l.b16 %v2152
    %v2224 = vunpack.c.l.b16 %v2153
    %v2225 = vunpack.c.l.b16 %v2154
    %v2226 = vunpack.c.l.b16 %v2155
    %v2227 = vunpack.c.l.b16 %v2156
    %v2228 = vunpack.c.l.b16 %v2157
    %v2229 = vunpack.c.l.b16 %v2158
    %v2230 = vunpack.c.l.b16 %v2159
    %v2231 = vunpack.c.l.b16 %v2160
    %v2232 = vunpack.c.l.b16 %v2161
    %v2233 = vunpack.c.l.b16 %v2162
    %v2234 = vunpack.c.l.b16 %v2163
    %v2235 = vunpack.c.l.b16 %v2164
    %v2236 = vunpack.c.l.b16 %v2165
    %v2237 = vunpack.c.l.b16 %v2166
    %v2238 = vpack.c.b16 %v2207, %v2206
    %v2239 = vpack.c.b16 %v2209, %v2208
    %v2240 = vpack.c.b16 %v2211, %v2210
    %v2241 = vpack.c.b16 %v2213, %v2212
    %v2242 = vpack.c.b16 %v2215, %v2214
    %v2243 = vpack.c.b16 %v2217, %v2216
    %v2244 = vpack.c.b16 %v2219, %v2218
    %v2245 = vpack.c.b16 %v2221, %v2220
    %v2246 = vpack.c.b16 %v2223, %v2222
    %v2247 = vpack.c.b16 %v2225, %v2224
    %v2248 = vpack.c.b16 %v2227, %v2226
    %v2249 = vpack.c.b16 %v2229, %v2228
    %v2250 = vpack.c.b16 %v2231, %v2230
    %v2251 = vpack.c.b16 %v2233, %v2232
    %v2252 = vpack.c.b16 %v2235, %v2234
    %v2253 = vpack.c.b16 %v2237, %v2236
    %2270 = vmatprep.subr.bf16.mxu0 0
    %2271 = vmatpush1.bf16.msra.mxu0 %v2238
    %2272 = vmatprep.subr.bf16.mxu0 0
    %2273 = vmatpush1.bf16.msra.mxu0 %v2239
    %2274 = vmatprep.subr.bf16.mxu0 0
    %2275 = vmatpush1.bf16.msra.mxu0 %v2240
    %2276 = vmatprep.subr.bf16.mxu0 0
    %2277 = vmatpush1.bf16.msra.mxu0 %v2241
    %2278 = vmatprep.subr.bf16.mxu0 0
    %2279 = vmatpush1.bf16.msra.mxu0 %v2242
    %2280 = vmatprep.subr.bf16.mxu0 0
    %2281 = vmatpush1.bf16.msra.mxu0 %v2243
    %2282 = vmatprep.subr.bf16.mxu0 0
    %2283 = vmatpush1.bf16.msra.mxu0 %v2244
    %2284 = vmatprep.subr.bf16.mxu0 0
    %2285 = vmatpush1.bf16.msra.mxu0 %v2245
    %2286 = vmatprep.subr.bf16.mxu0 0
    %2287 = vmatpush1.bf16.msra.mxu0 %v2246
    %2288 = vmatprep.subr.bf16.mxu0 0
    %2289 = vmatpush1.bf16.msra.mxu0 %v2247
    %2290 = vmatprep.subr.bf16.mxu0 0
    %2291 = vmatpush1.bf16.msra.mxu0 %v2248
    %2292 = vmatprep.subr.bf16.mxu0 0
    %2293 = vmatpush1.bf16.msra.mxu0 %v2249
    %2294 = vmatprep.subr.bf16.mxu0 0
    %2295 = vmatpush1.bf16.msra.mxu0 %v2250
    %2296 = vmatprep.subr.bf16.mxu0 0
    %2297 = vmatpush1.bf16.msra.mxu0 %v2251
    %2298 = vmatprep.subr.bf16.mxu0 0
    %2299 = vmatpush1.bf16.msra.mxu0 %v2252
    %2300 = vmatprep.subr.bf16.mxu0 0
    %2301 = vmatpush1.bf16.msra.mxu0 %v2253
    %2302 = vmatprep.mubr.bf16.mxu0 %v2134
    %2303 = vmatmul.mubr.bf16.gmra.mrb[0].mxu0 %v2133
    %v2304 = vpop.f32.mrb[0].mxu0
    %v2305 = vadd.f32 %v2172, %v2304
    %v2306 = vpop.f32.mrb[0].mxu0
    %v2307 = vpop.f32.mrb[0].mxu0
    %v2308 = vpop.f32.mrb[0].mxu0
    %2309 = vdwg.mxu0
    %vm2310 = vcmask 254976
    %2311 = vst.msk [vmem:[#allocation2] sm:$0x3] %vm2310, %v2305
    %v2312 = vpack.c.bf16 %v2305, %v2305
    %v2313 = vld [vmem:[%s7] sm:$0xff]
    %v2314 = vld [vmem:[%s7 + $0x8] sm:$0xff]
    %v2315 = vld [vmem:[%s7 + $0x10] sm:$0xff]
    %v2316 = vld [vmem:[%s7 + $0x18] sm:$0xff]
    %v2317 = vld [vmem:[%s8] sm:$0x3]
    %v2319 = vlaneseq
    %v2320 = vshrl.u32 %v2319, 7
    %v2321 = vsub.s32 0, %v2320
    %v2322 = vrot.slane %v2317, %v2321
    %v2323 = vlaneseq
    %v2324 = vshrl.u32 %v2323, 7
    %v2325 = vsub.s32 1, %v2324
    %v2326 = vrot.slane %v2317, %v2325
    %v2333 = vunpack.c.l.b16 %v2313
    %v2334 = vunpack.c.h.b16 %v2313
    %v2335 = vunpack.c.l.b16 %v2314
    %v2336 = vunpack.c.h.b16 %v2314
    %v2337 = vunpack.c.l.b16 %v2315
    %v2338 = vunpack.c.h.b16 %v2315
    %v2339 = vunpack.c.l.b16 %v2316
    %v2340 = vunpack.c.h.b16 %v2316
    %v2341 = vpack.c.b16 %v2335, %v2333
    %v2342 = vpack.c.b16 %v2336, %v2334
    %v2343 = vpack.c.b16 %v2339, %v2337
    %v2344 = vpack.c.b16 %v2340, %v2338
    %vm2349 = vcmask 261120
    %v2351 = vsel %vm2349, %v2312, 0
    %2353 = vmatprep.subr.bf16.mxu0 %v2342
    %2354 = vmatpush1.bf16.msra.mxu0 %v2341
    %2355 = vmatprep.subr.bf16.mxu0 %v2344
    %2356 = vmatpush1.bf16.msra.mxu0 %v2343
    %2357 = vmatprep.subr.bf16.mxu0 0
    %2358 = vmatpush1.bf16.msra.mxu0 0
    %2359 = vmatprep.subr.bf16.mxu0 0
    %2360 = vmatpush1.bf16.msra.mxu0 0
    %2361 = vmatprep.subr.bf16.mxu0 0
    %2362 = vmatpush1.bf16.msra.mxu0 0
    %2363 = vmatprep.subr.bf16.mxu0 0
    %2364 = vmatpush1.bf16.msra.mxu0 0
    %2365 = vmatprep.subr.bf16.mxu0 0
    %2366 = vmatpush1.bf16.msra.mxu0 0
    %2367 = vmatprep.subr.bf16.mxu0 0
    %2368 = vmatpush1.bf16.msra.mxu0 0
    %2369 = vmatprep.subr.bf16.mxu0 0
    %2370 = vmatpush1.bf16.msra.mxu0 0
    %2371 = vmatprep.subr.bf16.mxu0 0
    %2372 = vmatpush1.bf16.msra.mxu0 0
    %2373 = vmatprep.subr.bf16.mxu0 0
    %2374 = vmatpush1.bf16.msra.mxu0 0
    %2375 = vmatprep.subr.bf16.mxu0 0
    %2376 = vmatpush1.bf16.msra.mxu0 0
    %2377 = vmatprep.subr.bf16.mxu0 0
    %2378 = vmatpush1.bf16.msra.mxu0 0
    %2379 = vmatprep.subr.bf16.mxu0 0
    %2380 = vmatpush1.bf16.msra.mxu0 0
    %2381 = vmatprep.subr.bf16.mxu0 0
    %2382 = vmatpush1.bf16.msra.mxu0 0
    %2383 = vmatprep.subr.bf16.mxu0 0
    %2384 = vmatpush1.bf16.msra.mxu0 0
    %2385 = vmatprep.mubr.bf16.mxu0 0
    %2386 = vmatmul.mubr.bf16.gmra.mrb[0].mxu0 %v2351
    %v2387 = vpop.f32.mrb[0].mxu0
    %v2388 = vadd.f32 %v2322, %v2387
    %v2389 = vpop.f32.mrb[0].mxu0
    %v2390 = vadd.f32 %v2326, %v2389
    %v2391 = vpop.f32.mrb[0].mxu0
    %v2392 = vpop.f32.mrb[0].mxu0
    %2393 = vdwg.mxu0
    %v2394 = vld [vmem:[%s9] sm:$0x3]
    %v2395 = vld [vmem:[%s10] sm:$0x3]
    %v2396 = vsel %vm2052, %v2388, 0.0
    %v2397 = vrot.slane %v2396, 4
    %v2398 = vadd.f32 %v2396, %v2397
    %v2399 = vrot.slane %v2398, 2
    %v2400 = vadd.f32 %v2398, %v2399
    %v2401 = vrot.slane %v2400, 1
    %v2402 = vadd.f32 %v2400, %v2401
    %v2403 = vsel %vm2052, %v2390, 0.0
    %v2404 = vrot.slane %v2403, 4
    %v2405 = vadd.f32 %v2403, %v2404
    %v2406 = vrot.slane %v2405, 2
    %v2407 = vadd.f32 %v2405, %v2406
    %v2408 = vrot.slane %v2407, 1
    %v2409 = vadd.f32 %v2407, %v2408
    %v2410 = vmul.f32 %v2402, 0.5
    %v2411 = vmul.f32 %v2409, 0.5
    %v2412 = vmul.f32 %v2388, %v2388
    %v2413 = vmul.f32 %v2390, %v2390
    %v2414 = vsel %vm2052, %v2412, 0.0
    %v2415 = vrot.slane %v2414, 4
    %v2416 = vadd.f32 %v2414, %v2415
    %v2417 = vrot.slane %v2416, 2
    %v2418 = vadd.f32 %v2416, %v2417
    %v2419 = vrot.slane %v2418, 1
    %v2420 = vadd.f32 %v2418, %v2419
    %v2421 = vsel %vm2052, %v2413, 0.0
    %v2422 = vrot.slane %v2421, 4
    %v2423 = vadd.f32 %v2421, %v2422
    %v2424 = vrot.slane %v2423, 2
    %v2425 = vadd.f32 %v2423, %v2424
    %v2426 = vrot.slane %v2425, 1
    %v2427 = vadd.f32 %v2425, %v2426
    %v2428 = vmul.f32 %v2420, 0.5
    %v2429 = vmul.f32 %v2427, 0.5
    %v2430 = vmul.f32 %v2410, %v2410
    %v2431 = vmul.f32 %v2411, %v2411
    %v2432 = vsub.f32 %v2428, %v2430
    %v2433 = vsub.f32 %v2429, %v2431
    %v2434 = vsub.f32 %v2388, %v2410
    %v2435 = vsub.f32 %v2390, %v2411
    %v2436 = vadd.f32 %v2432, 1e-05
    %v2437 = vadd.f32 %v2433, 1e-05
    %v2438 = vrsqrt.pop %v2436
    %v2439 = vrsqrt.pop %v2437
    %v2441 = vlaneseq
    %v2442 = vshrl.u32 %v2441, 7
    %v2443 = vsub.s32 0, %v2442
    %v2444 = vrot.slane %v2394, %v2443
    %v2445 = vlaneseq
    %v2446 = vshrl.u32 %v2445, 7
    %v2447 = vsub.s32 1, %v2446
    %v2448 = vrot.slane %v2394, %v2447
    %v2451 = vmul.f32 %v2438, %v2444
    %v2452 = vmul.f32 %v2439, %v2448
    %v2453 = vlaneseq
    %v2454 = vshrl.u32 %v2453, 7
    %v2455 = vsub.s32 0, %v2454
    %v2456 = vrot.slane %v2451, %v2455
    %v2457 = vlaneseq
    %v2458 = vshrl.u32 %v2457, 7
    %v2459 = vsub.s32 0, %v2458
    %v2460 = vrot.slane %v2452, %v2459
    %v2461 = vmul.f32 %v2434, %v2456
    %v2462 = vmul.f32 %v2435, %v2460
    %v2464 = vlaneseq
    %v2465 = vshrl.u32 %v2464, 7
    %v2466 = vsub.s32 0, %v2465
    %v2467 = vrot.slane %v2395, %v2466
    %v2468 = vlaneseq
    %v2469 = vshrl.u32 %v2468, 7
    %v2470 = vsub.s32 1, %v2469
    %v2471 = vrot.slane %v2395, %v2470
    %v2474 = vadd.f32 %v2461, %v2467
    %v2475 = vadd.f32 %v2462, %v2471
    %v2476 = vmax.f32 %v2474, 0.0
    %v2477 = vmax.f32 %v2475, 0.0
    %v2478 = vpack.c.bf16 %v2476, %v2476
    %v2479 = vpack.c.bf16 %v2477, %v2477
    %v2480 = vld [vmem:[%s11] sm:$0xff]
    %v2481 = vld [vmem:[%s11 + $0x8] sm:$0xff]
    %v2482 = vld [vmem:[%s11 + $0x10] sm:$0xff]
    %v2483 = vld [vmem:[%s11 + $0x18] sm:$0xff]
    %v2484 = vld [vmem:[%s11 + $0x20] sm:$0xff]
    %v2485 = vld [vmem:[%s11 + $0x28] sm:$0xff]
    %v2486 = vld [vmem:[%s11 + $0x30] sm:$0xff]
    %v2487 = vld [vmem:[%s11 + $0x38] sm:$0xff]
    %v2488 = vld [vmem:[%s11 + $0x40] sm:$0xff]
    %v2489 = vld [vmem:[%s11 + $0x48] sm:$0xff]
    %v2490 = vld [vmem:[%s11 + $0x50] sm:$0xff]
    %v2491 = vld [vmem:[%s11 + $0x58] sm:$0xff]
    %v2492 = vld [vmem:[%s11 + $0x60] sm:$0xff]
    %v2493 = vld [vmem:[%s11 + $0x68] sm:$0xff]
    %v2494 = vld [vmem:[%s11 + $0x70] sm:$0xff]
    %v2495 = vld [vmem:[%s11 + $0x78] sm:$0xff]
    %v2496 = vld [vmem:[%s11 + $0x80] sm:$0xff]
    %v2497 = vld [vmem:[%s11 + $0x88] sm:$0xff]
    %v2498 = vld [vmem:[%s11 + $0x90] sm:$0xff]
    %v2499 = vld [vmem:[%s11 + $0x98] sm:$0xff]
    %v2500 = vld [vmem:[%s11 + $0xa0] sm:$0xff]
    %v2501 = vld [vmem:[%s11 + $0xa8] sm:$0xff]
    %v2502 = vld [vmem:[%s11 + $0xb0] sm:$0xff]
    %v2503 = vld [vmem:[%s11 + $0xb8] sm:$0xff]
    %v2504 = vld [vmem:[%s11 + $0xc0] sm:$0xff]
    %v2505 = vld [vmem:[%s11 + $0xc8] sm:$0xff]
    %v2506 = vld [vmem:[%s11 + $0xd0] sm:$0xff]
    %v2507 = vld [vmem:[%s11 + $0xd8] sm:$0xff]
    %v2508 = vld [vmem:[%s11 + $0xe0] sm:$0xff]
    %v2509 = vld [vmem:[%s11 + $0xe8] sm:$0xff]
    %v2510 = vld [vmem:[%s11 + $0xf0] sm:$0xff]
    %v2511 = vld [vmem:[%s11 + $0xf8] sm:$0xff]
    %v2512 = vld [vmem:[%s11 + $0x100] sm:$0xff]
    %v2513 = vld [vmem:[%s11 + $0x108] sm:$0xff]
    %v2514 = vld [vmem:[%s11 + $0x110] sm:$0xff]
    %v2515 = vld [vmem:[%s11 + $0x118] sm:$0xff]
    %v2516 = vld [vmem:[%s11 + $0x120] sm:$0xff]
    %v2517 = vld [vmem:[%s11 + $0x128] sm:$0xff]
    %v2518 = vld [vmem:[%s11 + $0x130] sm:$0xff]
    %v2519 = vld [vmem:[%s11 + $0x138] sm:$0xff]
    %v2520 = vld [vmem:[%s11 + $0x140] sm:$0xff]
    %v2521 = vld [vmem:[%s11 + $0x148] sm:$0xff]
    %v2522 = vld [vmem:[%s11 + $0x150] sm:$0xff]
    %v2523 = vld [vmem:[%s11 + $0x158] sm:$0xff]
    %v2524 = vld [vmem:[%s11 + $0x160] sm:$0xff]
    %v2525 = vld [vmem:[%s11 + $0x168] sm:$0xff]
    %v2526 = vld [vmem:[%s11 + $0x170] sm:$0xff]
    %v2527 = vld [vmem:[%s11 + $0x178] sm:$0xff]
    %v2528 = vld [vmem:[%s11 + $0x180] sm:$0xff]
    %v2529 = vld [vmem:[%s11 + $0x188] sm:$0xff]
    %v2530 = vld [vmem:[%s11 + $0x190] sm:$0xff]
    %v2531 = vld [vmem:[%s11 + $0x198] sm:$0xff]
    %v2532 = vld [vmem:[%s11 + $0x1a0] sm:$0xff]
    %v2533 = vld [vmem:[%s11 + $0x1a8] sm:$0xff]
    %v2534 = vld [vmem:[%s11 + $0x1b0] sm:$0xff]
    %v2535 = vld [vmem:[%s11 + $0x1b8] sm:$0xff]
    %v2536 = vld [vmem:[%s11 + $0x1c0] sm:$0xff]
    %v2537 = vld [vmem:[%s11 + $0x1c8] sm:$0xff]
    %v2538 = vld [vmem:[%s11 + $0x1d0] sm:$0xff]
    %v2539 = vld [vmem:[%s11 + $0x1d8] sm:$0xff]
    %v2540 = vld [vmem:[%s11 + $0x1e0] sm:$0xff]
    %v2541 = vld [vmem:[%s11 + $0x1e8] sm:$0xff]
    %v2542 = vld [vmem:[%s11 + $0x1f0] sm:$0xff]
    %v2543 = vld [vmem:[%s11 + $0x1f8] sm:$0xff]
    %v2544 = vld [vmem:[%s12] sm:$0xf]
    %v2546 = vlaneseq
    %v2547 = vshrl.u32 %v2546, 7
    %v2548 = vsub.s32 0, %v2547
    %v2549 = vrot.slane %v2544, %v2548
    %v2550 = vlaneseq
    %v2551 = vshrl.u32 %v2550, 7
    %v2552 = vsub.s32 1, %v2551
    %v2553 = vrot.slane %v2544, %v2552
    %v2554 = vlaneseq
    %v2555 = vshrl.u32 %v2554, 7
    %v2556 = vsub.s32 2, %v2555
    %v2557 = vrot.slane %v2544, %v2556
    %v2558 = vlaneseq
    %v2559 = vshrl.u32 %v2558, 7
    %v2560 = vsub.s32 3, %v2559
    %v2561 = vrot.slane %v2544, %v2560
    %v2630 = vunpack.c.l.b16 %v2480
    %v2631 = vunpack.c.h.b16 %v2480
    %v2632 = vunpack.c.l.b16 %v2481
    %v2633 = vunpack.c.h.b16 %v2481
    %v2634 = vunpack.c.l.b16 %v2482
    %v2635 = vunpack.c.h.b16 %v2482
    %v2636 = vunpack.c.l.b16 %v2483
    %v2637 = vunpack.c.h.b16 %v2483
    %v2638 = vunpack.c.l.b16 %v2484
    %v2639 = vunpack.c.h.b16 %v2484
    %v2640 = vunpack.c.l.b16 %v2485
    %v2641 = vunpack.c.h.b16 %v2485
    %v2642 = vunpack.c.l.b16 %v2486
    %v2643 = vunpack.c.h.b16 %v2486
    %v2644 = vunpack.c.l.b16 %v2487
    %v2645 = vunpack.c.h.b16 %v2487
    %v2646 = vunpack.c.l.b16 %v2488
    %v2647 = vunpack.c.h.b16 %v2488
    %v2648 = vunpack.c.l.b16 %v2489
    %v2649 = vunpack.c.h.b16 %v2489
    %v2650 = vunpack.c.l.b16 %v2490
    %v2651 = vunpack.c.h.b16 %v2490
    %v2652 = vunpack.c.l.b16 %v2491
    %v2653 = vunpack.c.h.b16 %v2491
    %v2654 = vunpack.c.l.b16 %v2492
    %v2655 = vunpack.c.h.b16 %v2492
    %v2656 = vunpack.c.l.b16 %v2493
    %v2657 = vunpack.c.h.b16 %v2493
    %v2658 = vunpack.c.l.b16 %v2494
    %v2659 = vunpack.c.h.b16 %v2494
    %v2660 = vunpack.c.l.b16 %v2495
    %v2661 = vunpack.c.h.b16 %v2495
    %v2662 = vunpack.c.l.b16 %v2496
    %v2663 = vunpack.c.h.b16 %v2496
    %v2664 = vunpack.c.l.b16 %v2497
    %v2665 = vunpack.c.h.b16 %v2497
    %v2666 = vunpack.c.l.b16 %v2498
    %v2667 = vunpack.c.h.b16 %v2498
    %v2668 = vunpack.c.l.b16 %v2499
    %v2669 = vunpack.c.h.b16 %v2499
    %v2670 = vunpack.c.l.b16 %v2500
    %v2671 = vunpack.c.h.b16 %v2500
    %v2672 = vunpack.c.l.b16 %v2501
    %v2673 = vunpack.c.h.b16 %v2501
    %v2674 = vunpack.c.l.b16 %v2502
    %v2675 = vunpack.c.h.b16 %v2502
    %v2676 = vunpack.c.l.b16 %v2503
    %v2677 = vunpack.c.h.b16 %v2503
    %v2678 = vunpack.c.l.b16 %v2504
    %v2679 = vunpack.c.h.b16 %v2504
    %v2680 = vunpack.c.l.b16 %v2505
    %v2681 = vunpack.c.h.b16 %v2505
    %v2682 = vunpack.c.l.b16 %v2506
    %v2683 = vunpack.c.h.b16 %v2506
    %v2684 = vunpack.c.l.b16 %v2507
    %v2685 = vunpack.c.h.b16 %v2507
    %v2686 = vunpack.c.l.b16 %v2508
    %v2687 = vunpack.c.h.b16 %v2508
    %v2688 = vunpack.c.l.b16 %v2509
    %v2689 = vunpack.c.h.b16 %v2509
    %v2690 = vunpack.c.l.b16 %v2510
    %v2691 = vunpack.c.h.b16 %v2510
    %v2692 = vunpack.c.l.b16 %v2511
    %v2693 = vunpack.c.h.b16 %v2511
    %v2694 = vunpack.c.l.b16 %v2512
    %v2695 = vunpack.c.h.b16 %v2512
    %v2696 = vunpack.c.l.b16 %v2513
    %v2697 = vunpack.c.h.b16 %v2513
    %v2698 = vunpack.c.l.b16 %v2514
    %v2699 = vunpack.c.h.b16 %v2514
    %v2700 = vunpack.c.l.b16 %v2515
    %v2701 = vunpack.c.h.b16 %v2515
    %v2702 = vunpack.c.l.b16 %v2516
    %v2703 = vunpack.c.h.b16 %v2516
    %v2704 = vunpack.c.l.b16 %v2517
    %v2705 = vunpack.c.h.b16 %v2517
    %v2706 = vunpack.c.l.b16 %v2518
    %v2707 = vunpack.c.h.b16 %v2518
    %v2708 = vunpack.c.l.b16 %v2519
    %v2709 = vunpack.c.h.b16 %v2519
    %v2710 = vunpack.c.l.b16 %v2520
    %v2711 = vunpack.c.h.b16 %v2520
    %v2712 = vunpack.c.l.b16 %v2521
    %v2713 = vunpack.c.h.b16 %v2521
    %v2714 = vunpack.c.l.b16 %v2522
    %v2715 = vunpack.c.h.b16 %v2522
    %v2716 = vunpack.c.l.b16 %v2523
    %v2717 = vunpack.c.h.b16 %v2523
    %v2718 = vunpack.c.l.b16 %v2524
    %v2719 = vunpack.c.h.b16 %v2524
    %v2720 = vunpack.c.l.b16 %v2525
    %v2721 = vunpack.c.h.b16 %v2525
    %v2722 = vunpack.c.l.b16 %v2526
    %v2723 = vunpack.c.h.b16 %v2526
    %v2724 = vunpack.c.l.b16 %v2527
    %v2725 = vunpack.c.h.b16 %v2527
    %v2726 = vunpack.c.l.b16 %v2528
    %v2727 = vunpack.c.h.b16 %v2528
    %v2728 = vunpack.c.l.b16 %v2529
    %v2729 = vunpack.c.h.b16 %v2529
    %v2730 = vunpack.c.l.b16 %v2530
    %v2731 = vunpack.c.h.b16 %v2530
    %v2732 = vunpack.c.l.b16 %v2531
    %v2733 = vunpack.c.h.b16 %v2531
    %v2734 = vunpack.c.l.b16 %v2532
    %v2735 = vunpack.c.h.b16 %v2532
    %v2736 = vunpack.c.l.b16 %v2533
    %v2737 = vunpack.c.h.b16 %v2533
    %v2738 = vunpack.c.l.b16 %v2534
    %v2739 = vunpack.c.h.b16 %v2534
    %v2740 = vunpack.c.l.b16 %v2535
    %v2741 = vunpack.c.h.b16 %v2535
    %v2742 = vunpack.c.l.b16 %v2536
    %v2743 = vunpack.c.h.b16 %v2536
    %v2744 = vunpack.c.l.b16 %v2537
    %v2745 = vunpack.c.h.b16 %v2537
    %v2746 = vunpack.c.l.b16 %v2538
    %v2747 = vunpack.c.h.b16 %v2538
    %v2748 = vunpack.c.l.b16 %v2539
    %v2749 = vunpack.c.h.b16 %v2539
    %v2750 = vunpack.c.l.b16 %v2540
    %v2751 = vunpack.c.h.b16 %v2540
    %v2752 = vunpack.c.l.b16 %v2541
    %v2753 = vunpack.c.h.b16 %v2541
    %v2754 = vunpack.c.l.b16 %v2542
    %v2755 = vunpack.c.h.b16 %v2542
    %v2756 = vunpack.c.l.b16 %v2543
    %v2757 = vunpack.c.h.b16 %v2543
    %v2758 = vpack.c.b16 %v2634, %v2630
    %v2759 = vpack.c.b16 %v2635, %v2631
    %v2760 = vpack.c.b16 %v2636, %v2632
    %v2761 = vpack.c.b16 %v2637, %v2633
    %v2762 = vpack.c.b16 %v2642, %v2638
    %v2763 = vpack.c.b16 %v2643, %v2639
    %v2764 = vpack.c.b16 %v2644, %v2640
    %v2765 = vpack.c.b16 %v2645, %v2641
    %v2766 = vpack.c.b16 %v2650, %v2646
    %v2767 = vpack.c.b16 %v2651, %v2647
    %v2768 = vpack.c.b16 %v2652, %v2648
    %v2769 = vpack.c.b16 %v2653, %v2649
    %v2770 = vpack.c.b16 %v2658, %v2654
    %v2771 = vpack.c.b16 %v2659, %v2655
    %v2772 = vpack.c.b16 %v2660, %v2656
    %v2773 = vpack.c.b16 %v2661, %v2657
    %v2774 = vpack.c.b16 %v2666, %v2662
    %v2775 = vpack.c.b16 %v2667, %v2663
    %v2776 = vpack.c.b16 %v2668, %v2664
    %v2777 = vpack.c.b16 %v2669, %v2665
    %v2778 = vpack.c.b16 %v2674, %v2670
    %v2779 = vpack.c.b16 %v2675, %v2671
    %v2780 = vpack.c.b16 %v2676, %v2672
    %v2781 = vpack.c.b16 %v2677, %v2673
    %v2782 = vpack.c.b16 %v2682, %v2678
    %v2783 = vpack.c.b16 %v2683, %v2679
    %v2784 = vpack.c.b16 %v2684, %v2680
    %v2785 = vpack.c.b16 %v2685, %v2681
    %v2786 = vpack.c.b16 %v2690, %v2686
    %v2787 = vpack.c.b16 %v2691, %v2687
    %v2788 = vpack.c.b16 %v2692, %v2688
    %v2789 = vpack.c.b16 %v2693, %v2689
    %v2790 = vpack.c.b16 %v2698, %v2694
    %v2791 = vpack.c.b16 %v2699, %v2695
    %v2792 = vpack.c.b16 %v2700, %v2696
    %v2793 = vpack.c.b16 %v2701, %v2697
    %v2794 = vpack.c.b16 %v2706, %v2702
    %v2795 = vpack.c.b16 %v2707, %v2703
    %v2796 = vpack.c.b16 %v2708, %v2704
    %v2797 = vpack.c.b16 %v2709, %v2705
    %v2798 = vpack.c.b16 %v2714, %v2710
    %v2799 = vpack.c.b16 %v2715, %v2711
    %v2800 = vpack.c.b16 %v2716, %v2712
    %v2801 = vpack.c.b16 %v2717, %v2713
    %v2802 = vpack.c.b16 %v2722, %v2718
    %v2803 = vpack.c.b16 %v2723, %v2719
    %v2804 = vpack.c.b16 %v2724, %v2720
    %v2805 = vpack.c.b16 %v2725, %v2721
    %v2806 = vpack.c.b16 %v2730, %v2726
    %v2807 = vpack.c.b16 %v2731, %v2727
    %v2808 = vpack.c.b16 %v2732, %v2728
    %v2809 = vpack.c.b16 %v2733, %v2729
    %v2810 = vpack.c.b16 %v2738, %v2734
    %v2811 = vpack.c.b16 %v2739, %v2735
    %v2812 = vpack.c.b16 %v2740, %v2736
    %v2813 = vpack.c.b16 %v2741, %v2737
    %v2814 = vpack.c.b16 %v2746, %v2742
    %v2815 = vpack.c.b16 %v2747, %v2743
    %v2816 = vpack.c.b16 %v2748, %v2744
    %v2817 = vpack.c.b16 %v2749, %v2745
    %v2818 = vpack.c.b16 %v2754, %v2750
    %v2819 = vpack.c.b16 %v2755, %v2751
    %v2820 = vpack.c.b16 %v2756, %v2752
    %v2821 = vpack.c.b16 %v2757, %v2753
    %2886 = vmatprep.subr.bf16.mxu0 %v2759
    %2887 = vmatpush1.bf16.msra.mxu0 %v2758
    %2888 = vmatprep.subr.bf16.mxu0 %v2763
    %2889 = vmatpush1.bf16.msra.mxu0 %v2762
    %2890 = vmatprep.subr.bf16.mxu0 %v2767
    %2891 = vmatpush1.bf16.msra.mxu0 %v2766
    %2892 = vmatprep.subr.bf16.mxu0 %v2771
    %2893 = vmatpush1.bf16.msra.mxu0 %v2770
    %2894 = vmatprep.subr.bf16.mxu0 %v2775
    %2895 = vmatpush1.bf16.msra.mxu0 %v2774
    %2896 = vmatprep.subr.bf16.mxu0 %v2779
    %2897 = vmatpush1.bf16.msra.mxu0 %v2778
    %2898 = vmatprep.subr.bf16.mxu0 %v2783
    %2899 = vmatpush1.bf16.msra.mxu0 %v2782
    %2900 = vmatprep.subr.bf16.mxu0 %v2787
    %2901 = vmatpush1.bf16.msra.mxu0 %v2786
    %2902 = vmatprep.subr.bf16.mxu0 %v2791
    %2903 = vmatpush1.bf16.msra.mxu0 %v2790
    %2904 = vmatprep.subr.bf16.mxu0 %v2795
    %2905 = vmatpush1.bf16.msra.mxu0 %v2794
    %2906 = vmatprep.subr.bf16.mxu0 %v2799
    %2907 = vmatpush1.bf16.msra.mxu0 %v2798
    %2908 = vmatprep.subr.bf16.mxu0 %v2803
    %2909 = vmatpush1.bf16.msra.mxu0 %v2802
    %2910 = vmatprep.subr.bf16.mxu0 %v2807
    %2911 = vmatpush1.bf16.msra.mxu0 %v2806
    %2912 = vmatprep.subr.bf16.mxu0 %v2811
    %2913 = vmatpush1.bf16.msra.mxu0 %v2810
    %2914 = vmatprep.subr.bf16.mxu0 %v2815
    %2915 = vmatpush1.bf16.msra.mxu0 %v2814
    %2916 = vmatprep.subr.bf16.mxu0 %v2819
    %2917 = vmatpush1.bf16.msra.mxu0 %v2818
    %2918 = vmatprep.mubr.bf16.mxu0 %v2479
    %2919 = vmatmul.mubr.bf16.gmra.mrb[0].mxu0 %v2478
    %v2920 = vpop.f32.mrb[0].mxu0
    %v2921 = vadd.f32 %v2549, %v2920
    %v2922 = vpop.f32.mrb[0].mxu0
    %v2923 = vadd.f32 %v2553, %v2922
    %v2924 = vpop.f32.mrb[0].mxu0
    %v2925 = vpop.f32.mrb[0].mxu0
    %2926 = vdwg.mxu0
    %2927 = vmatprep.subr.bf16.mxu0 %v2761
    %2928 = vmatpush1.bf16.msra.mxu0 %v2760
    %2929 = vmatprep.subr.bf16.mxu0 %v2765
    %2930 = vmatpush1.bf16.msra.mxu0 %v2764
    %2931 = vmatprep.subr.bf16.mxu0 %v2769
    %2932 = vmatpush1.bf16.msra.mxu0 %v2768
    %2933 = vmatprep.subr.bf16.mxu0 %v2773
    %2934 = vmatpush1.bf16.msra.mxu0 %v2772
    %2935 = vmatprep.subr.bf16.mxu0 %v2777
    %2936 = vmatpush1.bf16.msra.mxu0 %v2776
    %2937 = vmatprep.subr.bf16.mxu0 %v2781
    %2938 = vmatpush1.bf16.msra.mxu0 %v2780
    %2939 = vmatprep.subr.bf16.mxu0 %v2785
    %2940 = vmatpush1.bf16.msra.mxu0 %v2784
    %2941 = vmatprep.subr.bf16.mxu0 %v2789
    %2942 = vmatpush1.bf16.msra.mxu0 %v2788
    %2943 = vmatprep.subr.bf16.mxu0 %v2793
    %2944 = vmatpush1.bf16.msra.mxu0 %v2792
    %2945 = vmatprep.subr.bf16.mxu0 %v2797
    %2946 = vmatpush1.bf16.msra.mxu0 %v2796
    %2947 = vmatprep.subr.bf16.mxu0 %v2801
    %2948 = vmatpush1.bf16.msra.mxu0 %v2800
    %2949 = vmatprep.subr.bf16.mxu0 %v2805
    %2950 = vmatpush1.bf16.msra.mxu0 %v2804
    %2951 = vmatprep.subr.bf16.mxu0 %v2809
    %2952 = vmatpush1.bf16.msra.mxu0 %v2808
    %2953 = vmatprep.subr.bf16.mxu0 %v2813
    %2954 = vmatpush1.bf16.msra.mxu0 %v2812
    %2955 = vmatprep.subr.bf16.mxu0 %v2817
    %2956 = vmatpush1.bf16.msra.mxu0 %v2816
    %2957 = vmatprep.subr.bf16.mxu0 %v2821
    %2958 = vmatpush1.bf16.msra.mxu0 %v2820
    %2959 = vmatprep.mubr.bf16.mxu0 %v2479
    %2960 = vmatmul.mubr.bf16.gmra.mrb[0].mxu0 %v2478
    %v2961 = vpop.f32.mrb[0].mxu0
    %v2962 = vadd.f32 %v2557, %v2961
    %v2963 = vpop.f32.mrb[0].mxu0
    %v2964 = vadd.f32 %v2561, %v2963
    %v2965 = vpop.f32.mrb[0].mxu0
    %v2966 = vpop.f32.mrb[0].mxu0
    %2967 = vdwg.mxu0
    %v2968 = vpack.c.bf16 %v2921, %v2921
    %v2969 = vpack.c.bf16 %v2923, %v2923
    %v2970 = vpack.c.bf16 %v2962, %v2962
    %v2971 = vpack.c.bf16 %v2964, %v2964
    %v2972 = vld [vmem:[%s13] sm:$0xff]
    %v2973 = vld [vmem:[%s13 + $0x8] sm:$0xff]
    %v2974 = vld [vmem:[%s13 + $0x10] sm:$0xff]
    %v2975 = vld [vmem:[%s13 + $0x18] sm:$0xff]
    %v2976 = vld [vmem:[%s13 + $0x20] sm:$0xff]
    %v2977 = vld [vmem:[%s13 + $0x28] sm:$0xff]
    %v2978 = vld [vmem:[%s13 + $0x30] sm:$0xff]
    %v2979 = vld [vmem:[%s13 + $0x38] sm:$0xff]
    %v2980 = vld [vmem:[%s13 + $0x40] sm:$0xff]
    %v2981 = vld [vmem:[%s13 + $0x48] sm:$0xff]
    %v2982 = vld [vmem:[%s13 + $0x50] sm:$0xff]
    %v2983 = vld [vmem:[%s13 + $0x58] sm:$0xff]
    %v2984 = vld [vmem:[%s13 + $0x60] sm:$0xff]
    %v2985 = vld [vmem:[%s13 + $0x68] sm:$0xff]
    %v2986 = vld [vmem:[%s13 + $0x70] sm:$0xff]
    %v2987 = vld [vmem:[%s13 + $0x78] sm:$0xff]
    %v2988 = vld [vmem:[%s13 + $0x80] sm:$0xff]
    %v2989 = vld [vmem:[%s13 + $0x88] sm:$0xff]
    %v2990 = vld [vmem:[%s13 + $0x90] sm:$0xff]
    %v2991 = vld [vmem:[%s13 + $0x98] sm:$0xff]
    %v2992 = vld [vmem:[%s13 + $0xa0] sm:$0xff]
    %v2993 = vld [vmem:[%s13 + $0xa8] sm:$0xff]
    %v2994 = vld [vmem:[%s13 + $0xb0] sm:$0xff]
    %v2995 = vld [vmem:[%s13 + $0xb8] sm:$0xff]
    %v2996 = vld [vmem:[%s13 + $0xc0] sm:$0xff]
    %v2997 = vld [vmem:[%s13 + $0xc8] sm:$0xff]
    %v2998 = vld [vmem:[%s13 + $0xd0] sm:$0xff]
    %v2999 = vld [vmem:[%s13 + $0xd8] sm:$0xff]
    %v3000 = vld [vmem:[%s13 + $0xe0] sm:$0xff]
    %v3001 = vld [vmem:[%s13 + $0xe8] sm:$0xff]
    %v3002 = vld [vmem:[%s13 + $0xf0] sm:$0xff]
    %v3003 = vld [vmem:[%s13 + $0xf8] sm:$0xff]
    %v3004 = vld [vmem:[%s13 + $0x100] sm:$0xff]
    %v3005 = vld [vmem:[%s13 + $0x108] sm:$0xff]
    %v3006 = vld [vmem:[%s13 + $0x110] sm:$0xff]
    %v3007 = vld [vmem:[%s13 + $0x118] sm:$0xff]
    %v3008 = vld [vmem:[%s13 + $0x120] sm:$0xff]
    %v3009 = vld [vmem:[%s13 + $0x128] sm:$0xff]
    %v3010 = vld [vmem:[%s13 + $0x130] sm:$0xff]
    %v3011 = vld [vmem:[%s13 + $0x138] sm:$0xff]
    %v3012 = vld [vmem:[%s13 + $0x140] sm:$0xff]
    %v3013 = vld [vmem:[%s13 + $0x148] sm:$0xff]
    %v3014 = vld [vmem:[%s13 + $0x150] sm:$0xff]
    %v3015 = vld [vmem:[%s13 + $0x158] sm:$0xff]
    %v3016 = vld [vmem:[%s13 + $0x160] sm:$0xff]
    %v3017 = vld [vmem:[%s13 + $0x168] sm:$0xff]
    %v3018 = vld [vmem:[%s13 + $0x170] sm:$0xff]
    %v3019 = vld [vmem:[%s13 + $0x178] sm:$0xff]
    %v3020 = vld [vmem:[%s13 + $0x180] sm:$0xff]
    %v3021 = vld [vmem:[%s13 + $0x188] sm:$0xff]
    %v3022 = vld [vmem:[%s13 + $0x190] sm:$0xff]
    %v3023 = vld [vmem:[%s13 + $0x198] sm:$0xff]
    %v3024 = vld [vmem:[%s13 + $0x1a0] sm:$0xff]
    %v3025 = vld [vmem:[%s13 + $0x1a8] sm:$0xff]
    %v3026 = vld [vmem:[%s13 + $0x1b0] sm:$0xff]
    %v3027 = vld [vmem:[%s13 + $0x1b8] sm:$0xff]
    %v3028 = vld [vmem:[%s13 + $0x1c0] sm:$0xff]
    %v3029 = vld [vmem:[%s13 + $0x1c8] sm:$0xff]
    %v3030 = vld [vmem:[%s13 + $0x1d0] sm:$0xff]
    %v3031 = vld [vmem:[%s13 + $0x1d8] sm:$0xff]
    %v3032 = vld [vmem:[%s13 + $0x1e0] sm:$0xff]
    %v3033 = vld [vmem:[%s13 + $0x1e8] sm:$0xff]
    %v3034 = vld [vmem:[%s13 + $0x1f0] sm:$0xff]
    %v3035 = vld [vmem:[%s13 + $0x1f8] sm:$0xff]
    %v3036 = vld [vmem:[%s13 + $0x200] sm:$0xff]
    %v3037 = vld [vmem:[%s13 + $0x208] sm:$0xff]
    %v3038 = vld [vmem:[%s13 + $0x210] sm:$0xff]
    %v3039 = vld [vmem:[%s13 + $0x218] sm:$0xff]
    %v3040 = vld [vmem:[%s13 + $0x220] sm:$0xff]
    %v3041 = vld [vmem:[%s13 + $0x228] sm:$0xff]
    %v3042 = vld [vmem:[%s13 + $0x230] sm:$0xff]
    %v3043 = vld [vmem:[%s13 + $0x238] sm:$0xff]
    %v3044 = vld [vmem:[%s13 + $0x240] sm:$0xff]
    %v3045 = vld [vmem:[%s13 + $0x248] sm:$0xff]
    %v3046 = vld [vmem:[%s13 + $0x250] sm:$0xff]
    %v3047 = vld [vmem:[%s13 + $0x258] sm:$0xff]
    %v3048 = vld [vmem:[%s13 + $0x260] sm:$0xff]
    %v3049 = vld [vmem:[%s13 + $0x268] sm:$0xff]
    %v3050 = vld [vmem:[%s13 + $0x270] sm:$0xff]
    %v3051 = vld [vmem:[%s13 + $0x278] sm:$0xff]
    %v3052 = vld [vmem:[%s13 + $0x280] sm:$0xff]
    %v3053 = vld [vmem:[%s13 + $0x288] sm:$0xff]
    %v3054 = vld [vmem:[%s13 + $0x290] sm:$0xff]
    %v3055 = vld [vmem:[%s13 + $0x298] sm:$0xff]
    %v3056 = vld [vmem:[%s13 + $0x2a0] sm:$0xff]
    %v3057 = vld [vmem:[%s13 + $0x2a8] sm:$0xff]
    %v3058 = vld [vmem:[%s13 + $0x2b0] sm:$0xff]
    %v3059 = vld [vmem:[%s13 + $0x2b8] sm:$0xff]
    %v3060 = vld [vmem:[%s13 + $0x2c0] sm:$0xff]
    %v3061 = vld [vmem:[%s13 + $0x2c8] sm:$0xff]
    %v3062 = vld [vmem:[%s13 + $0x2d0] sm:$0xff]
    %v3063 = vld [vmem:[%s13 + $0x2d8] sm:$0xff]
    %v3064 = vld [vmem:[%s13 + $0x2e0] sm:$0xff]
    %v3065 = vld [vmem:[%s13 + $0x2e8] sm:$0xff]
    %v3066 = vld [vmem:[%s13 + $0x2f0] sm:$0xff]
    %v3067 = vld [vmem:[%s13 + $0x2f8] sm:$0xff]
    %v3068 = vld [vmem:[%s13 + $0x300] sm:$0xff]
    %v3069 = vld [vmem:[%s13 + $0x308] sm:$0xff]
    %v3070 = vld [vmem:[%s13 + $0x310] sm:$0xff]
    %v3071 = vld [vmem:[%s13 + $0x318] sm:$0xff]
    %v3072 = vld [vmem:[%s13 + $0x320] sm:$0xff]
    %v3073 = vld [vmem:[%s13 + $0x328] sm:$0xff]
    %v3074 = vld [vmem:[%s13 + $0x330] sm:$0xff]
    %v3075 = vld [vmem:[%s13 + $0x338] sm:$0xff]
    %v3076 = vld [vmem:[%s13 + $0x340] sm:$0xff]
    %v3077 = vld [vmem:[%s13 + $0x348] sm:$0xff]
    %v3078 = vld [vmem:[%s13 + $0x350] sm:$0xff]
    %v3079 = vld [vmem:[%s13 + $0x358] sm:$0xff]
    %v3080 = vld [vmem:[%s13 + $0x360] sm:$0xff]
    %v3081 = vld [vmem:[%s13 + $0x368] sm:$0xff]
    %v3082 = vld [vmem:[%s13 + $0x370] sm:$0xff]
    %v3083 = vld [vmem:[%s13 + $0x378] sm:$0xff]
    %v3084 = vld [vmem:[%s13 + $0x380] sm:$0xff]
    %v3085 = vld [vmem:[%s13 + $0x388] sm:$0xff]
    %v3086 = vld [vmem:[%s13 + $0x390] sm:$0xff]
    %v3087 = vld [vmem:[%s13 + $0x398] sm:$0xff]
    %v3088 = vld [vmem:[%s13 + $0x3a0] sm:$0xff]
    %v3089 = vld [vmem:[%s13 + $0x3a8] sm:$0xff]
    %v3090 = vld [vmem:[%s13 + $0x3b0] sm:$0xff]
    %v3091 = vld [vmem:[%s13 + $0x3b8] sm:$0xff]
    %v3092 = vld [vmem:[%s13 + $0x3c0] sm:$0xff]
    %v3093 = vld [vmem:[%s13 + $0x3c8] sm:$0xff]
    %v3094 = vld [vmem:[%s13 + $0x3d0] sm:$0xff]
    %v3095 = vld [vmem:[%s13 + $0x3d8] sm:$0xff]
    %v3096 = vld [vmem:[%s13 + $0x3e0] sm:$0xff]
    %v3097 = vld [vmem:[%s13 + $0x3e8] sm:$0xff]
    %v3098 = vld [vmem:[%s13 + $0x3f0] sm:$0xff]
    %v3099 = vld [vmem:[%s13 + $0x3f8] sm:$0xff]
    %v3100 = vld [vmem:[%s13 + $0x400] sm:$0xff]
    %v3101 = vld [vmem:[%s13 + $0x408] sm:$0xff]
    %v3102 = vld [vmem:[%s13 + $0x410] sm:$0xff]
    %v3103 = vld [vmem:[%s13 + $0x418] sm:$0xff]
    %v3104 = vld [vmem:[%s13 + $0x420] sm:$0xff]
    %v3105 = vld [vmem:[%s13 + $0x428] sm:$0xff]
    %v3106 = vld [vmem:[%s13 + $0x430] sm:$0xff]
    %v3107 = vld [vmem:[%s13 + $0x438] sm:$0xff]
    %v3108 = vld [vmem:[%s13 + $0x440] sm:$0xff]
    %v3109 = vld [vmem:[%s13 + $0x448] sm:$0xff]
    %v3110 = vld [vmem:[%s13 + $0x450] sm:$0xff]
    %v3111 = vld [vmem:[%s13 + $0x458] sm:$0xff]
    %v3112 = vld [vmem:[%s13 + $0x460] sm:$0xff]
    %v3113 = vld [vmem:[%s13 + $0x468] sm:$0xff]
    %v3114 = vld [vmem:[%s13 + $0x470] sm:$0xff]
    %v3115 = vld [vmem:[%s13 + $0x478] sm:$0xff]
    %v3116 = vld [vmem:[%s13 + $0x480] sm:$0xff]
    %v3117 = vld [vmem:[%s13 + $0x488] sm:$0xff]
    %v3118 = vld [vmem:[%s13 + $0x490] sm:$0xff]
    %v3119 = vld [vmem:[%s13 + $0x498] sm:$0xff]
    %v3120 = vld [vmem:[%s13 + $0x4a0] sm:$0xff]
    %v3121 = vld [vmem:[%s13 + $0x4a8] sm:$0xff]
    %v3122 = vld [vmem:[%s13 + $0x4b0] sm:$0xff]
    %v3123 = vld [vmem:[%s13 + $0x4b8] sm:$0xff]
    %v3124 = vld [vmem:[%s13 + $0x4c0] sm:$0xff]
    %v3125 = vld [vmem:[%s13 + $0x4c8] sm:$0xff]
    %v3126 = vld [vmem:[%s13 + $0x4d0] sm:$0xff]
    %v3127 = vld [vmem:[%s13 + $0x4d8] sm:$0xff]
    %v3128 = vld [vmem:[%s13 + $0x4e0] sm:$0xff]
    %v3129 = vld [vmem:[%s13 + $0x4e8] sm:$0xff]
    %v3130 = vld [vmem:[%s13 + $0x4f0] sm:$0xff]
    %v3131 = vld [vmem:[%s13 + $0x4f8] sm:$0xff]
    %v3132 = vld [vmem:[%s13 + $0x500] sm:$0xff]
    %v3133 = vld [vmem:[%s13 + $0x508] sm:$0xff]
    %v3134 = vld [vmem:[%s13 + $0x510] sm:$0xff]
    %v3135 = vld [vmem:[%s13 + $0x518] sm:$0xff]
    %v3136 = vld [vmem:[%s13 + $0x520] sm:$0xff]
    %v3137 = vld [vmem:[%s13 + $0x528] sm:$0xff]
    %v3138 = vld [vmem:[%s13 + $0x530] sm:$0xff]
    %v3139 = vld [vmem:[%s13 + $0x538] sm:$0xff]
    %v3140 = vld [vmem:[%s13 + $0x540] sm:$0xff]
    %v3141 = vld [vmem:[%s13 + $0x548] sm:$0xff]
    %v3142 = vld [vmem:[%s13 + $0x550] sm:$0xff]
    %v3143 = vld [vmem:[%s13 + $0x558] sm:$0xff]
    %v3144 = vld [vmem:[%s13 + $0x560] sm:$0xff]
    %v3145 = vld [vmem:[%s13 + $0x568] sm:$0xff]
    %v3146 = vld [vmem:[%s13 + $0x570] sm:$0xff]
    %v3147 = vld [vmem:[%s13 + $0x578] sm:$0xff]
    %v3148 = vld [vmem:[%s13 + $0x580] sm:$0xff]
    %v3149 = vld [vmem:[%s13 + $0x588] sm:$0xff]
    %v3150 = vld [vmem:[%s13 + $0x590] sm:$0xff]
    %v3151 = vld [vmem:[%s13 + $0x598] sm:$0xff]
    %v3152 = vld [vmem:[%s13 + $0x5a0] sm:$0xff]
    %v3153 = vld [vmem:[%s13 + $0x5a8] sm:$0xff]
    %v3154 = vld [vmem:[%s13 + $0x5b0] sm:$0xff]
    %v3155 = vld [vmem:[%s13 + $0x5b8] sm:$0xff]
    %v3156 = vld [vmem:[%s13 + $0x5c0] sm:$0xff]
    %v3157 = vld [vmem:[%s13 + $0x5c8] sm:$0xff]
    %v3158 = vld [vmem:[%s13 + $0x5d0] sm:$0xff]
    %v3159 = vld [vmem:[%s13 + $0x5d8] sm:$0xff]
    %v3160 = vld [vmem:[%s13 + $0x5e0] sm:$0xff]
    %v3161 = vld [vmem:[%s13 + $0x5e8] sm:$0xff]
    %v3162 = vld [vmem:[%s13 + $0x5f0] sm:$0xff]
    %v3163 = vld [vmem:[%s13 + $0x5f8] sm:$0xff]
    %v3164 = vld [vmem:[%s13 + $0x600] sm:$0xff]
    %v3165 = vld [vmem:[%s13 + $0x608] sm:$0xff]
    %v3166 = vld [vmem:[%s13 + $0x610] sm:$0xff]
    %v3167 = vld [vmem:[%s13 + $0x618] sm:$0xff]
    %v3168 = vld [vmem:[%s13 + $0x620] sm:$0xff]
    %v3169 = vld [vmem:[%s13 + $0x628] sm:$0xff]
    %v3170 = vld [vmem:[%s13 + $0x630] sm:$0xff]
    %v3171 = vld [vmem:[%s13 + $0x638] sm:$0xff]
    %v3172 = vld [vmem:[%s13 + $0x640] sm:$0xff]
    %v3173 = vld [vmem:[%s13 + $0x648] sm:$0xff]
    %v3174 = vld [vmem:[%s13 + $0x650] sm:$0xff]
    %v3175 = vld [vmem:[%s13 + $0x658] sm:$0xff]
    %v3176 = vld [vmem:[%s13 + $0x660] sm:$0xff]
    %v3177 = vld [vmem:[%s13 + $0x668] sm:$0xff]
    %v3178 = vld [vmem:[%s13 + $0x670] sm:$0xff]
    %v3179 = vld [vmem:[%s13 + $0x678] sm:$0xff]
    %v3180 = vld [vmem:[%s13 + $0x680] sm:$0xff]
    %v3181 = vld [vmem:[%s13 + $0x688] sm:$0xff]
    %v3182 = vld [vmem:[%s13 + $0x690] sm:$0xff]
    %v3183 = vld [vmem:[%s13 + $0x698] sm:$0xff]
    %v3184 = vld [vmem:[%s13 + $0x6a0] sm:$0xff]
    %v3185 = vld [vmem:[%s13 + $0x6a8] sm:$0xff]
    %v3186 = vld [vmem:[%s13 + $0x6b0] sm:$0xff]
    %v3187 = vld [vmem:[%s13 + $0x6b8] sm:$0xff]
    %v3188 = vld [vmem:[%s13 + $0x6c0] sm:$0xff]
    %v3189 = vld [vmem:[%s13 + $0x6c8] sm:$0xff]
    %v3190 = vld [vmem:[%s13 + $0x6d0] sm:$0xff]
    %v3191 = vld [vmem:[%s13 + $0x6d8] sm:$0xff]
    %v3192 = vld [vmem:[%s13 + $0x6e0] sm:$0xff]
    %v3193 = vld [vmem:[%s13 + $0x6e8] sm:$0xff]
    %v3194 = vld [vmem:[%s13 + $0x6f0] sm:$0xff]
    %v3195 = vld [vmem:[%s13 + $0x6f8] sm:$0xff]
    %v3196 = vld [vmem:[%s13 + $0x700] sm:$0xff]
    %v3197 = vld [vmem:[%s13 + $0x708] sm:$0xff]
    %v3198 = vld [vmem:[%s13 + $0x710] sm:$0xff]
    %v3199 = vld [vmem:[%s13 + $0x718] sm:$0xff]
    %v3200 = vld [vmem:[%s13 + $0x720] sm:$0xff]
    %v3201 = vld [vmem:[%s13 + $0x728] sm:$0xff]
    %v3202 = vld [vmem:[%s13 + $0x730] sm:$0xff]
    %v3203 = vld [vmem:[%s13 + $0x738] sm:$0xff]
    %v3204 = vld [vmem:[%s13 + $0x740] sm:$0xff]
    %v3205 = vld [vmem:[%s13 + $0x748] sm:$0xff]
    %v3206 = vld [vmem:[%s13 + $0x750] sm:$0xff]
    %v3207 = vld [vmem:[%s13 + $0x758] sm:$0xff]
    %v3208 = vld [vmem:[%s13 + $0x760] sm:$0xff]
    %v3209 = vld [vmem:[%s13 + $0x768] sm:$0xff]
    %v3210 = vld [vmem:[%s13 + $0x770] sm:$0xff]
    %v3211 = vld [vmem:[%s13 + $0x778] sm:$0xff]
    %v3212 = vld [vmem:[%s13 + $0x780] sm:$0xff]
    %v3213 = vld [vmem:[%s13 + $0x788] sm:$0xff]
    %v3214 = vld [vmem:[%s13 + $0x790] sm:$0xff]
    %v3215 = vld [vmem:[%s13 + $0x798] sm:$0xff]
    %v3216 = vld [vmem:[%s13 + $0x7a0] sm:$0xff]
    %v3217 = vld [vmem:[%s13 + $0x7a8] sm:$0xff]
    %v3218 = vld [vmem:[%s13 + $0x7b0] sm:$0xff]
    %v3219 = vld [vmem:[%s13 + $0x7b8] sm:$0xff]
    %v3220 = vld [vmem:[%s13 + $0x7c0] sm:$0xff]
    %v3221 = vld [vmem:[%s13 + $0x7c8] sm:$0xff]
    %v3222 = vld [vmem:[%s13 + $0x7d0] sm:$0xff]
    %v3223 = vld [vmem:[%s13 + $0x7d8] sm:$0xff]
    %v3224 = vld [vmem:[%s13 + $0x7e0] sm:$0xff]
    %v3225 = vld [vmem:[%s13 + $0x7e8] sm:$0xff]
    %v3226 = vld [vmem:[%s13 + $0x7f0] sm:$0xff]
    %v3227 = vld [vmem:[%s13 + $0x7f8] sm:$0xff]
    %v3228 = vld [vmem:[%s13 + $0x800] sm:$0xff]
    %v3229 = vld [vmem:[%s13 + $0x808] sm:$0xff]
    %v3230 = vld [vmem:[%s13 + $0x810] sm:$0xff]
    %v3231 = vld [vmem:[%s13 + $0x818] sm:$0xff]
    %v3232 = vld [vmem:[%s13 + $0x820] sm:$0xff]
    %v3233 = vld [vmem:[%s13 + $0x828] sm:$0xff]
    %v3234 = vld [vmem:[%s13 + $0x830] sm:$0xff]
    %v3235 = vld [vmem:[%s13 + $0x838] sm:$0xff]
    %v3236 = vld [vmem:[%s13 + $0x840] sm:$0xff]
    %v3237 = vld [vmem:[%s13 + $0x848] sm:$0xff]
    %v3238 = vld [vmem:[%s13 + $0x850] sm:$0xff]
    %v3239 = vld [vmem:[%s13 + $0x858] sm:$0xff]
    %v3240 = vld [vmem:[%s13 + $0x860] sm:$0xff]
    %v3241 = vld [vmem:[%s13 + $0x868] sm:$0xff]
    %v3242 = vld [vmem:[%s13 + $0x870] sm:$0xff]
    %v3243 = vld [vmem:[%s13 + $0x878] sm:$0xff]
    %v3244 = vld [vmem:[%s13 + $0x880] sm:$0xff]
    %v3245 = vld [vmem:[%s13 + $0x888] sm:$0xff]
    %v3246 = vld [vmem:[%s13 + $0x890] sm:$0xff]
    %v3247 = vld [vmem:[%s13 + $0x898] sm:$0xff]
    %v3248 = vld [vmem:[%s13 + $0x8a0] sm:$0xff]
    %v3249 = vld [vmem:[%s13 + $0x8a8] sm:$0xff]
    %v3250 = vld [vmem:[%s13 + $0x8b0] sm:$0xff]
    %v3251 = vld [vmem:[%s13 + $0x8b8] sm:$0xff]
    %v3252 = vld [vmem:[%s13 + $0x8c0] sm:$0xff]
    %v3253 = vld [vmem:[%s13 + $0x8c8] sm:$0xff]
    %v3254 = vld [vmem:[%s13 + $0x8d0] sm:$0xff]
    %v3255 = vld [vmem:[%s13 + $0x8d8] sm:$0xff]
    %v3256 = vld [vmem:[%s13 + $0x8e0] sm:$0xff]
    %v3257 = vld [vmem:[%s13 + $0x8e8] sm:$0xff]
    %v3258 = vld [vmem:[%s13 + $0x8f0] sm:$0xff]
    %v3259 = vld [vmem:[%s13 + $0x8f8] sm:$0xff]
    %v3260 = vld [vmem:[%s13 + $0x900] sm:$0xff]
    %v3261 = vld [vmem:[%s13 + $0x908] sm:$0xff]
    %v3262 = vld [vmem:[%s13 + $0x910] sm:$0xff]
    %v3263 = vld [vmem:[%s13 + $0x918] sm:$0xff]
    %v3264 = vld [vmem:[%s13 + $0x920] sm:$0xff]
    %v3265 = vld [vmem:[%s13 + $0x928] sm:$0xff]
    %v3266 = vld [vmem:[%s13 + $0x930] sm:$0xff]
    %v3267 = vld [vmem:[%s13 + $0x938] sm:$0xff]
    %v3268 = vld [vmem:[%s13 + $0x940] sm:$0xff]
    %v3269 = vld [vmem:[%s13 + $0x948] sm:$0xff]
    %v3270 = vld [vmem:[%s13 + $0x950] sm:$0xff]
    %v3271 = vld [vmem:[%s13 + $0x958] sm:$0xff]
    %v3272 = vld [vmem:[%s13 + $0x960] sm:$0xff]
    %v3273 = vld [vmem:[%s13 + $0x968] sm:$0xff]
    %v3274 = vld [vmem:[%s13 + $0x970] sm:$0xff]
    %v3275 = vld [vmem:[%s13 + $0x978] sm:$0xff]
    %v3276 = vld [vmem:[%s13 + $0x980] sm:$0xff]
    %v3277 = vld [vmem:[%s13 + $0x988] sm:$0xff]
    %v3278 = vld [vmem:[%s13 + $0x990] sm:$0xff]
    %v3279 = vld [vmem:[%s13 + $0x998] sm:$0xff]
    %v3280 = vld [vmem:[%s13 + $0x9a0] sm:$0xff]
    %v3281 = vld [vmem:[%s13 + $0x9a8] sm:$0xff]
    %v3282 = vld [vmem:[%s13 + $0x9b0] sm:$0xff]
    %v3283 = vld [vmem:[%s13 + $0x9b8] sm:$0xff]
    %v3284 = vld [vmem:[%s13 + $0x9c0] sm:$0xff]
    %v3285 = vld [vmem:[%s13 + $0x9c8] sm:$0xff]
    %v3286 = vld [vmem:[%s13 + $0x9d0] sm:$0xff]
    %v3287 = vld [vmem:[%s13 + $0x9d8] sm:$0xff]
    %v3288 = vld [vmem:[%s13 + $0x9e0] sm:$0xff]
    %v3289 = vld [vmem:[%s13 + $0x9e8] sm:$0xff]
    %v3290 = vld [vmem:[%s13 + $0x9f0] sm:$0xff]
    %v3291 = vld [vmem:[%s13 + $0x9f8] sm:$0xff]
    %v3292 = vld [vmem:[%s13 + $0xa00] sm:$0xff]
    %v3293 = vld [vmem:[%s13 + $0xa08] sm:$0xff]
    %v3294 = vld [vmem:[%s13 + $0xa10] sm:$0xff]
    %v3295 = vld [vmem:[%s13 + $0xa18] sm:$0xff]
    %v3296 = vld [vmem:[%s13 + $0xa20] sm:$0xff]
    %v3297 = vld [vmem:[%s13 + $0xa28] sm:$0xff]
    %v3298 = vld [vmem:[%s13 + $0xa30] sm:$0xff]
    %v3299 = vld [vmem:[%s13 + $0xa38] sm:$0xff]
    %v3300 = vld [vmem:[%s13 + $0xa40] sm:$0xff]
    %v3301 = vld [vmem:[%s13 + $0xa48] sm:$0xff]
    %v3302 = vld [vmem:[%s13 + $0xa50] sm:$0xff]
    %v3303 = vld [vmem:[%s13 + $0xa58] sm:$0xff]
    %v3304 = vld [vmem:[%s13 + $0xa60] sm:$0xff]
    %v3305 = vld [vmem:[%s13 + $0xa68] sm:$0xff]
    %v3306 = vld [vmem:[%s13 + $0xa70] sm:$0xff]
    %v3307 = vld [vmem:[%s13 + $0xa78] sm:$0xff]
    %v3308 = vld [vmem:[%s13 + $0xa80] sm:$0xff]
    %v3309 = vld [vmem:[%s13 + $0xa88] sm:$0xff]
    %v3310 = vld [vmem:[%s13 + $0xa90] sm:$0xff]
    %v3311 = vld [vmem:[%s13 + $0xa98] sm:$0xff]
    %v3312 = vld [vmem:[%s13 + $0xaa0] sm:$0xff]
    %v3313 = vld [vmem:[%s13 + $0xaa8] sm:$0xff]
    %v3314 = vld [vmem:[%s13 + $0xab0] sm:$0xff]
    %v3315 = vld [vmem:[%s13 + $0xab8] sm:$0xff]
    %v3316 = vld [vmem:[%s13 + $0xac0] sm:$0xff]
    %v3317 = vld [vmem:[%s13 + $0xac8] sm:$0xff]
    %v3318 = vld [vmem:[%s13 + $0xad0] sm:$0xff]
    %v3319 = vld [vmem:[%s13 + $0xad8] sm:$0xff]
    %v3320 = vld [vmem:[%s13 + $0xae0] sm:$0xff]
    %v3321 = vld [vmem:[%s13 + $0xae8] sm:$0xff]
    %v3322 = vld [vmem:[%s13 + $0xaf0] sm:$0xff]
    %v3323 = vld [vmem:[%s13 + $0xaf8] sm:$0xff]
    %v3324 = vld [vmem:[%s13 + $0xb00] sm:$0xff]
    %v3325 = vld [vmem:[%s13 + $0xb08] sm:$0xff]
    %v3326 = vld [vmem:[%s13 + $0xb10] sm:$0xff]
    %v3327 = vld [vmem:[%s13 + $0xb18] sm:$0xff]
    %v3328 = vld [vmem:[%s13 + $0xb20] sm:$0xff]
    %v3329 = vld [vmem:[%s13 + $0xb28] sm:$0xff]
    %v3330 = vld [vmem:[%s13 + $0xb30] sm:$0xff]
    %v3331 = vld [vmem:[%s13 + $0xb38] sm:$0xff]
    %v3332 = vld [vmem:[%s13 + $0xb40] sm:$0xff]
    %v3333 = vld [vmem:[%s13 + $0xb48] sm:$0xff]
    %v3334 = vld [vmem:[%s13 + $0xb50] sm:$0xff]
    %v3335 = vld [vmem:[%s13 + $0xb58] sm:$0xff]
    %v3336 = vld [vmem:[%s13 + $0xb60] sm:$0xff]
    %v3337 = vld [vmem:[%s13 + $0xb68] sm:$0xff]
    %v3338 = vld [vmem:[%s13 + $0xb70] sm:$0xff]
    %v3339 = vld [vmem:[%s13 + $0xb78] sm:$0xff]
    %v3340 = vld [vmem:[%s13 + $0xb80] sm:$0xff]
    %v3341 = vld [vmem:[%s13 + $0xb88] sm:$0xff]
    %v3342 = vld [vmem:[%s13 + $0xb90] sm:$0xff]
    %v3343 = vld [vmem:[%s13 + $0xb98] sm:$0xff]
    %v3344 = vld [vmem:[%s13 + $0xba0] sm:$0xff]
    %v3345 = vld [vmem:[%s13 + $0xba8] sm:$0xff]
    %v3346 = vld [vmem:[%s13 + $0xbb0] sm:$0xff]
    %v3347 = vld [vmem:[%s13 + $0xbb8] sm:$0xff]
    %v3348 = vld [vmem:[%s13 + $0xbc0] sm:$0xff]
    %v3349 = vld [vmem:[%s13 + $0xbc8] sm:$0xff]
    %v3350 = vld [vmem:[%s13 + $0xbd0] sm:$0xff]
    %v3351 = vld [vmem:[%s13 + $0xbd8] sm:$0xff]
    %v3352 = vld [vmem:[%s13 + $0xbe0] sm:$0xff]
    %v3353 = vld [vmem:[%s13 + $0xbe8] sm:$0xff]
    %v3354 = vld [vmem:[%s13 + $0xbf0] sm:$0xff]
    %v3355 = vld [vmem:[%s13 + $0xbf8] sm:$0xff]
    %v3356 = vld [vmem:[%s13 + $0xc00] sm:$0xff]
    %v3357 = vld [vmem:[%s13 + $0xc08] sm:$0xff]
    %v3358 = vld [vmem:[%s13 + $0xc10] sm:$0xff]
    %v3359 = vld [vmem:[%s13 + $0xc18] sm:$0xff]
    %v3360 = vld [vmem:[%s13 + $0xc20] sm:$0xff]
    %v3361 = vld [vmem:[%s13 + $0xc28] sm:$0xff]
    %v3362 = vld [vmem:[%s13 + $0xc30] sm:$0xff]
    %v3363 = vld [vmem:[%s13 + $0xc38] sm:$0xff]
    %v3364 = vld [vmem:[%s13 + $0xc40] sm:$0xff]
    %v3365 = vld [vmem:[%s13 + $0xc48] sm:$0xff]
    %v3366 = vld [vmem:[%s13 + $0xc50] sm:$0xff]
    %v3367 = vld [vmem:[%s13 + $0xc58] sm:$0xff]
    %v3368 = vld [vmem:[%s13 + $0xc60] sm:$0xff]
    %v3369 = vld [vmem:[%s13 + $0xc68] sm:$0xff]
    %v3370 = vld [vmem:[%s13 + $0xc70] sm:$0xff]
    %v3371 = vld [vmem:[%s13 + $0xc78] sm:$0xff]
    %v3372 = vld [vmem:[%s13 + $0xc80] sm:$0xff]
    %v3373 = vld [vmem:[%s13 + $0xc88] sm:$0xff]
    %v3374 = vld [vmem:[%s13 + $0xc90] sm:$0xff]
    %v3375 = vld [vmem:[%s13 + $0xc98] sm:$0xff]
    %v3376 = vld [vmem:[%s13 + $0xca0] sm:$0xff]
    %v3377 = vld [vmem:[%s13 + $0xca8] sm:$0xff]
    %v3378 = vld [vmem:[%s13 + $0xcb0] sm:$0xff]
    %v3379 = vld [vmem:[%s13 + $0xcb8] sm:$0xff]
    %v3380 = vld [vmem:[%s13 + $0xcc0] sm:$0xff]
    %v3381 = vld [vmem:[%s13 + $0xcc8] sm:$0xff]
    %v3382 = vld [vmem:[%s13 + $0xcd0] sm:$0xff]
    %v3383 = vld [vmem:[%s13 + $0xcd8] sm:$0xff]
    %v3384 = vld [vmem:[%s13 + $0xce0] sm:$0xff]
    %v3385 = vld [vmem:[%s13 + $0xce8] sm:$0xff]
    %v3386 = vld [vmem:[%s13 + $0xcf0] sm:$0xff]
    %v3387 = vld [vmem:[%s13 + $0xcf8] sm:$0xff]
    %v3388 = vld [vmem:[%s13 + $0xd00] sm:$0xff]
    %v3389 = vld [vmem:[%s13 + $0xd08] sm:$0xff]
    %v3390 = vld [vmem:[%s13 + $0xd10] sm:$0xff]
    %v3391 = vld [vmem:[%s13 + $0xd18] sm:$0xff]
    %v3392 = vld [vmem:[%s13 + $0xd20] sm:$0xff]
    %v3393 = vld [vmem:[%s13 + $0xd28] sm:$0xff]
    %v3394 = vld [vmem:[%s13 + $0xd30] sm:$0xff]
    %v3395 = vld [vmem:[%s13 + $0xd38] sm:$0xff]
    %v3396 = vld [vmem:[%s13 + $0xd40] sm:$0xff]
    %v3397 = vld [vmem:[%s13 + $0xd48] sm:$0xff]
    %v3398 = vld [vmem:[%s13 + $0xd50] sm:$0xff]
    %v3399 = vld [vmem:[%s13 + $0xd58] sm:$0xff]
    %v3400 = vld [vmem:[%s13 + $0xd60] sm:$0xff]
    %v3401 = vld [vmem:[%s13 + $0xd68] sm:$0xff]
    %v3402 = vld [vmem:[%s13 + $0xd70] sm:$0xff]
    %v3403 = vld [vmem:[%s13 + $0xd78] sm:$0xff]
    %v3404 = vld [vmem:[%s13 + $0xd80] sm:$0xff]
    %v3405 = vld [vmem:[%s13 + $0xd88] sm:$0xff]
    %v3406 = vld [vmem:[%s13 + $0xd90] sm:$0xff]
    %v3407 = vld [vmem:[%s13 + $0xd98] sm:$0xff]
    %v3408 = vld [vmem:[%s13 + $0xda0] sm:$0xff]
    %v3409 = vld [vmem:[%s13 + $0xda8] sm:$0xff]
    %v3410 = vld [vmem:[%s13 + $0xdb0] sm:$0xff]
    %v3411 = vld [vmem:[%s13 + $0xdb8] sm:$0xff]
    %v3412 = vld [vmem:[%s13 + $0xdc0] sm:$0xff]
    %v3413 = vld [vmem:[%s13 + $0xdc8] sm:$0xff]
    %v3414 = vld [vmem:[%s13 + $0xdd0] sm:$0xff]
    %v3415 = vld [vmem:[%s13 + $0xdd8] sm:$0xff]
    %v3416 = vld [vmem:[%s13 + $0xde0] sm:$0xff]
    %v3417 = vld [vmem:[%s13 + $0xde8] sm:$0xff]
    %v3418 = vld [vmem:[%s13 + $0xdf0] sm:$0xff]
    %v3419 = vld [vmem:[%s13 + $0xdf8] sm:$0xff]
    %v3420 = vld [vmem:[%s13 + $0xe00] sm:$0xff]
    %v3421 = vld [vmem:[%s13 + $0xe08] sm:$0xff]
    %v3422 = vld [vmem:[%s13 + $0xe10] sm:$0xff]
    %v3423 = vld [vmem:[%s13 + $0xe18] sm:$0xff]
    %v3424 = vld [vmem:[%s13 + $0xe20] sm:$0xff]
    %v3425 = vld [vmem:[%s13 + $0xe28] sm:$0xff]
    %v3426 = vld [vmem:[%s13 + $0xe30] sm:$0xff]
    %v3427 = vld [vmem:[%s13 + $0xe38] sm:$0xff]
    %v3428 = vld [vmem:[%s13 + $0xe40] sm:$0xff]
    %v3429 = vld [vmem:[%s13 + $0xe48] sm:$0xff]
    %v3430 = vld [vmem:[%s13 + $0xe50] sm:$0xff]
    %v3431 = vld [vmem:[%s13 + $0xe58] sm:$0xff]
    %v3432 = vld [vmem:[%s13 + $0xe60] sm:$0xff]
    %v3433 = vld [vmem:[%s13 + $0xe68] sm:$0xff]
    %v3434 = vld [vmem:[%s13 + $0xe70] sm:$0xff]
    %v3435 = vld [vmem:[%s13 + $0xe78] sm:$0xff]
    %v3436 = vld [vmem:[%s13 + $0xe80] sm:$0xff]
    %v3437 = vld [vmem:[%s13 + $0xe88] sm:$0xff]
    %v3438 = vld [vmem:[%s13 + $0xe90] sm:$0xff]
    %v3439 = vld [vmem:[%s13 + $0xe98] sm:$0xff]
    %v3440 = vld [vmem:[%s13 + $0xea0] sm:$0xff]
    %v3441 = vld [vmem:[%s13 + $0xea8] sm:$0xff]
    %v3442 = vld [vmem:[%s13 + $0xeb0] sm:$0xff]
    %v3443 = vld [vmem:[%s13 + $0xeb8] sm:$0xff]
    %v3444 = vld [vmem:[%s13 + $0xec0] sm:$0xff]
    %v3445 = vld [vmem:[%s13 + $0xec8] sm:$0xff]
    %v3446 = vld [vmem:[%s13 + $0xed0] sm:$0xff]
    %v3447 = vld [vmem:[%s13 + $0xed8] sm:$0xff]
    %v3448 = vld [vmem:[%s13 + $0xee0] sm:$0xff]
    %v3449 = vld [vmem:[%s13 + $0xee8] sm:$0xff]
    %v3450 = vld [vmem:[%s13 + $0xef0] sm:$0xff]
    %v3451 = vld [vmem:[%s13 + $0xef8] sm:$0xff]
    %v3452 = vld [vmem:[%s13 + $0xf00] sm:$0xff]
    %v3453 = vld [vmem:[%s13 + $0xf08] sm:$0xff]
    %v3454 = vld [vmem:[%s13 + $0xf10] sm:$0xff]
    %v3455 = vld [vmem:[%s13 + $0xf18] sm:$0xff]
    %v3456 = vld [vmem:[%s13 + $0xf20] sm:$0xff]
    %v3457 = vld [vmem:[%s13 + $0xf28] sm:$0xff]
    %v3458 = vld [vmem:[%s13 + $0xf30] sm:$0xff]
    %v3459 = vld [vmem:[%s13 + $0xf38] sm:$0xff]
    %v3460 = vld [vmem:[%s13 + $0xf40] sm:$0xff]
    %v3461 = vld [vmem:[%s13 + $0xf48] sm:$0xff]
    %v3462 = vld [vmem:[%s13 + $0xf50] sm:$0xff]
    %v3463 = vld [vmem:[%s13 + $0xf58] sm:$0xff]
    %v3464 = vld [vmem:[%s13 + $0xf60] sm:$0xff]
    %v3465 = vld [vmem:[%s13 + $0xf68] sm:$0xff]
    %v3466 = vld [vmem:[%s13 + $0xf70] sm:$0xff]
    %v3467 = vld [vmem:[%s13 + $0xf78] sm:$0xff]
    %v3468 = vld [vmem:[%s13 + $0xf80] sm:$0xff]
    %v3469 = vld [vmem:[%s13 + $0xf88] sm:$0xff]
    %v3470 = vld [vmem:[%s13 + $0xf90] sm:$0xff]
    %v3471 = vld [vmem:[%s13 + $0xf98] sm:$0xff]
    %v3472 = vld [vmem:[%s13 + $0xfa0] sm:$0xff]
    %v3473 = vld [vmem:[%s13 + $0xfa8] sm:$0xff]
    %v3474 = vld [vmem:[%s13 + $0xfb0] sm:$0xff]
    %v3475 = vld [vmem:[%s13 + $0xfb8] sm:$0xff]
    %v3476 = vld [vmem:[%s13 + $0xfc0] sm:$0xff]
    %v3477 = vld [vmem:[%s13 + $0xfc8] sm:$0xff]
    %v3478 = vld [vmem:[%s13 + $0xfd0] sm:$0xff]
    %v3479 = vld [vmem:[%s13 + $0xfd8] sm:$0xff]
    %v3480 = vld [vmem:[%s13 + $0xfe0] sm:$0xff]
    %v3481 = vld [vmem:[%s13 + $0xfe8] sm:$0xff]
    %v3482 = vld [vmem:[%s13 + $0xff0] sm:$0xff]
    %v3483 = vld [vmem:[%s13 + $0xff8] sm:$0xff]
    %v3484 = vld [vmem:[%s13 + $0x1000] sm:$0xff]
    %v3485 = vld [vmem:[%s13 + $0x1008] sm:$0xff]
    %v3486 = vld [vmem:[%s13 + $0x1010] sm:$0xff]
    %v3487 = vld [vmem:[%s13 + $0x1018] sm:$0xff]
    %v3488 = vld [vmem:[%s13 + $0x1020] sm:$0xff]
    %v3489 = vld [vmem:[%s13 + $0x1028] sm:$0xff]
    %v3490 = vld [vmem:[%s13 + $0x1030] sm:$0xff]
    %v3491 = vld [vmem:[%s13 + $0x1038] sm:$0xff]
    %v3492 = vld [vmem:[%s13 + $0x1040] sm:$0xff]
    %v3493 = vld [vmem:[%s13 + $0x1048] sm:$0xff]
    %v3494 = vld [vmem:[%s13 + $0x1050] sm:$0xff]
    %v3495 = vld [vmem:[%s13 + $0x1058] sm:$0xff]
    %v3496 = vld [vmem:[%s13 + $0x1060] sm:$0xff]
    %v3497 = vld [vmem:[%s13 + $0x1068] sm:$0xff]
    %v3498 = vld [vmem:[%s13 + $0x1070] sm:$0xff]
    %v3499 = vld [vmem:[%s13 + $0x1078] sm:$0xff]
    %v3500 = vld [vmem:[%s13 + $0x1080] sm:$0xff]
    %v3501 = vld [vmem:[%s13 + $0x1088] sm:$0xff]
    %v3502 = vld [vmem:[%s13 + $0x1090] sm:$0xff]
    %v3503 = vld [vmem:[%s13 + $0x1098] sm:$0xff]
    %v3504 = vld [vmem:[%s13 + $0x10a0] sm:$0xff]
    %v3505 = vld [vmem:[%s13 + $0x10a8] sm:$0xff]
    %v3506 = vld [vmem:[%s13 + $0x10b0] sm:$0xff]
    %v3507 = vld [vmem:[%s13 + $0x10b8] sm:$0xff]
    %v3508 = vld [vmem:[%s13 + $0x10c0] sm:$0xff]
    %v3509 = vld [vmem:[%s13 + $0x10c8] sm:$0xff]
    %v3510 = vld [vmem:[%s13 + $0x10d0] sm:$0xff]
    %v3511 = vld [vmem:[%s13 + $0x10d8] sm:$0xff]
    %v3512 = vld [vmem:[%s13 + $0x10e0] sm:$0xff]
    %v3513 = vld [vmem:[%s13 + $0x10e8] sm:$0xff]
    %v3514 = vld [vmem:[%s13 + $0x10f0] sm:$0xff]
    %v3515 = vld [vmem:[%s13 + $0x10f8] sm:$0xff]
    %v3516 = vld [vmem:[%s13 + $0x1100] sm:$0xff]
    %v3517 = vld [vmem:[%s13 + $0x1108] sm:$0xff]
    %v3518 = vld [vmem:[%s13 + $0x1110] sm:$0xff]
    %v3519 = vld [vmem:[%s13 + $0x1118] sm:$0xff]
    %v3520 = vld [vmem:[%s13 + $0x1120] sm:$0xff]
    %v3521 = vld [vmem:[%s13 + $0x1128] sm:$0xff]
    %v3522 = vld [vmem:[%s13 + $0x1130] sm:$0xff]
    %v3523 = vld [vmem:[%s13 + $0x1138] sm:$0xff]
    %v3524 = vld [vmem:[%s13 + $0x1140] sm:$0xff]
    %v3525 = vld [vmem:[%s13 + $0x1148] sm:$0xff]
    %v3526 = vld [vmem:[%s13 + $0x1150] sm:$0xff]
    %v3527 = vld [vmem:[%s13 + $0x1158] sm:$0xff]
    %v3528 = vld [vmem:[%s13 + $0x1160] sm:$0xff]
    %v3529 = vld [vmem:[%s13 + $0x1168] sm:$0xff]
    %v3530 = vld [vmem:[%s13 + $0x1170] sm:$0xff]
    %v3531 = vld [vmem:[%s13 + $0x1178] sm:$0xff]
    %v3532 = vld [vmem:[%s13 + $0x1180] sm:$0xff]
    %v3533 = vld [vmem:[%s13 + $0x1188] sm:$0xff]
    %v3534 = vld [vmem:[%s13 + $0x1190] sm:$0xff]
    %v3535 = vld [vmem:[%s13 + $0x1198] sm:$0xff]
    %v3536 = vld [vmem:[%s13 + $0x11a0] sm:$0xff]
    %v3537 = vld [vmem:[%s13 + $0x11a8] sm:$0xff]
    %v3538 = vld [vmem:[%s13 + $0x11b0] sm:$0xff]
    %v3539 = vld [vmem:[%s13 + $0x11b8] sm:$0xff]
    %v3540 = vld [vmem:[%s13 + $0x11c0] sm:$0xff]
    %v3541 = vld [vmem:[%s13 + $0x11c8] sm:$0xff]
    %v3542 = vld [vmem:[%s13 + $0x11d0] sm:$0xff]
    %v3543 = vld [vmem:[%s13 + $0x11d8] sm:$0xff]
    %v3544 = vld [vmem:[%s13 + $0x11e0] sm:$0xff]
    %v3545 = vld [vmem:[%s13 + $0x11e8] sm:$0xff]
    %v3546 = vld [vmem:[%s13 + $0x11f0] sm:$0xff]
    %v3547 = vld [vmem:[%s13 + $0x11f8] sm:$0xff]
    %v3548 = vld [vmem:[%s13 + $0x1200] sm:$0xff]
    %v3549 = vld [vmem:[%s13 + $0x1208] sm:$0xff]
    %v3550 = vld [vmem:[%s13 + $0x1210] sm:$0xff]
    %v3551 = vld [vmem:[%s13 + $0x1218] sm:$0xff]
    %v3552 = vld [vmem:[%s13 + $0x1220] sm:$0xff]
    %v3553 = vld [vmem:[%s13 + $0x1228] sm:$0xff]
    %v3554 = vld [vmem:[%s13 + $0x1230] sm:$0xff]
    %v3555 = vld [vmem:[%s13 + $0x1238] sm:$0xff]
    %v3556 = vld [vmem:[%s13 + $0x1240] sm:$0xff]
    %v3557 = vld [vmem:[%s13 + $0x1248] sm:$0xff]
    %v3558 = vld [vmem:[%s13 + $0x1250] sm:$0xff]
    %v3559 = vld [vmem:[%s13 + $0x1258] sm:$0xff]
    %v3560 = vld [vmem:[%s13 + $0x1260] sm:$0xff]
    %v3561 = vld [vmem:[%s13 + $0x1268] sm:$0xff]
    %v3562 = vld [vmem:[%s13 + $0x1270] sm:$0xff]
    %v3563 = vld [vmem:[%s13 + $0x1278] sm:$0xff]
    %v3564 = vld [vmem:[%s13 + $0x1280] sm:$0xff]
    %v3565 = vld [vmem:[%s13 + $0x1288] sm:$0xff]
    %v3566 = vld [vmem:[%s13 + $0x1290] sm:$0xff]
    %v3567 = vld [vmem:[%s13 + $0x1298] sm:$0xff]
    %v3568 = vld [vmem:[%s13 + $0x12a0] sm:$0xff]
    %v3569 = vld [vmem:[%s13 + $0x12a8] sm:$0xff]
    %v3570 = vld [vmem:[%s13 + $0x12b0] sm:$0xff]
    %v3571 = vld [vmem:[%s13 + $0x12b8] sm:$0xff]
    %v3572 = vld [vmem:[%s13 + $0x12c0] sm:$0xff]
    %v3573 = vld [vmem:[%s13 + $0x12c8] sm:$0xff]
    %v3574 = vld [vmem:[%s13 + $0x12d0] sm:$0xff]
    %v3575 = vld [vmem:[%s13 + $0x12d8] sm:$0xff]
    %v3576 = vld [vmem:[%s13 + $0x12e0] sm:$0xff]
    %v3577 = vld [vmem:[%s13 + $0x12e8] sm:$0xff]
    %v3578 = vld [vmem:[%s13 + $0x12f0] sm:$0xff]
    %v3579 = vld [vmem:[%s13 + $0x12f8] sm:$0xff]
    %v3580 = vld [vmem:[%s13 + $0x1300] sm:$0xff]
    %v3581 = vld [vmem:[%s13 + $0x1308] sm:$0xff]
    %v3582 = vld [vmem:[%s13 + $0x1310] sm:$0xff]
    %v3583 = vld [vmem:[%s13 + $0x1318] sm:$0xff]
    %v3584 = vld [vmem:[%s13 + $0x1320] sm:$0xff]
    %v3585 = vld [vmem:[%s13 + $0x1328] sm:$0xff]
    %v3586 = vld [vmem:[%s13 + $0x1330] sm:$0xff]
    %v3587 = vld [vmem:[%s13 + $0x1338] sm:$0xff]
    %v3588 = vld [vmem:[%s13 + $0x1340] sm:$0xff]
    %v3589 = vld [vmem:[%s13 + $0x1348] sm:$0xff]
    %v3590 = vld [vmem:[%s13 + $0x1350] sm:$0xff]
    %v3591 = vld [vmem:[%s13 + $0x1358] sm:$0xff]
    %v3592 = vld [vmem:[%s13 + $0x1360] sm:$0xff]
    %v3593 = vld [vmem:[%s13 + $0x1368] sm:$0xff]
    %v3594 = vld [vmem:[%s13 + $0x1370] sm:$0xff]
    %v3595 = vld [vmem:[%s13 + $0x1378] sm:$0xff]
    %v3596 = vld [vmem:[%s13 + $0x1380] sm:$0xff]
    %v3597 = vld [vmem:[%s13 + $0x1388] sm:$0xff]
    %v3598 = vld [vmem:[%s13 + $0x1390] sm:$0xff]
    %v3599 = vld [vmem:[%s13 + $0x1398] sm:$0xff]
    %v3600 = vld [vmem:[%s13 + $0x13a0] sm:$0xff]
    %v3601 = vld [vmem:[%s13 + $0x13a8] sm:$0xff]
    %v3602 = vld [vmem:[%s13 + $0x13b0] sm:$0xff]
    %v3603 = vld [vmem:[%s13 + $0x13b8] sm:$0xff]
    %v3604 = vld [vmem:[%s13 + $0x13c0] sm:$0xff]
    %v3605 = vld [vmem:[%s13 + $0x13c8] sm:$0xff]
    %v3606 = vld [vmem:[%s13 + $0x13d0] sm:$0xff]
    %v3607 = vld [vmem:[%s13 + $0x13d8] sm:$0xff]
    %v3608 = vld [vmem:[%s13 + $0x13e0] sm:$0xff]
    %v3609 = vld [vmem:[%s13 + $0x13e8] sm:$0xff]
    %v3610 = vld [vmem:[%s13 + $0x13f0] sm:$0xff]
    %v3611 = vld [vmem:[%s13 + $0x13f8] sm:$0xff]
    %v3612 = vld [vmem:[%s13 + $0x1400] sm:$0xff]
    %v3613 = vld [vmem:[%s13 + $0x1408] sm:$0xff]
    %v3614 = vld [vmem:[%s13 + $0x1410] sm:$0xff]
    %v3615 = vld [vmem:[%s13 + $0x1418] sm:$0xff]
    %v3616 = vld [vmem:[%s13 + $0x1420] sm:$0xff]
    %v3617 = vld [vmem:[%s13 + $0x1428] sm:$0xff]
    %v3618 = vld [vmem:[%s13 + $0x1430] sm:$0xff]
    %v3619 = vld [vmem:[%s13 + $0x1438] sm:$0xff]
    %v3620 = vld [vmem:[%s13 + $0x1440] sm:$0xff]
    %v3621 = vld [vmem:[%s13 + $0x1448] sm:$0xff]
    %v3622 = vld [vmem:[%s13 + $0x1450] sm:$0xff]
    %v3623 = vld [vmem:[%s13 + $0x1458] sm:$0xff]
    %v3624 = vld [vmem:[%s13 + $0x1460] sm:$0xff]
    %v3625 = vld [vmem:[%s13 + $0x1468] sm:$0xff]
    %v3626 = vld [vmem:[%s13 + $0x1470] sm:$0xff]
    %v3627 = vld [vmem:[%s13 + $0x1478] sm:$0xff]
    %v3628 = vld [vmem:[%s13 + $0x1480] sm:$0xff]
    %v3629 = vld [vmem:[%s13 + $0x1488] sm:$0xff]
    %v3630 = vld [vmem:[%s13 + $0x1490] sm:$0xff]
    %v3631 = vld [vmem:[%s13 + $0x1498] sm:$0xff]
    %v3632 = vld [vmem:[%s13 + $0x14a0] sm:$0xff]
    %v3633 = vld [vmem:[%s13 + $0x14a8] sm:$0xff]
    %v3634 = vld [vmem:[%s13 + $0x14b0] sm:$0xff]
    %v3635 = vld [vmem:[%s13 + $0x14b8] sm:$0xff]
    %v3636 = vld [vmem:[%s13 + $0x14c0] sm:$0xff]
    %v3637 = vld [vmem:[%s13 + $0x14c8] sm:$0xff]
    %v3638 = vld [vmem:[%s13 + $0x14d0] sm:$0xff]
    %v3639 = vld [vmem:[%s13 + $0x14d8] sm:$0xff]
    %v3640 = vld [vmem:[%s13 + $0x14e0] sm:$0xff]
    %v3641 = vld [vmem:[%s13 + $0x14e8] sm:$0xff]
    %v3642 = vld [vmem:[%s13 + $0x14f0] sm:$0xff]
    %v3643 = vld [vmem:[%s13 + $0x14f8] sm:$0xff]
    %v3644 = vld [vmem:[%s13 + $0x1500] sm:$0xff]
    %v3645 = vld [vmem:[%s13 + $0x1508] sm:$0xff]
    %v3646 = vld [vmem:[%s13 + $0x1510] sm:$0xff]
    %v3647 = vld [vmem:[%s13 + $0x1518] sm:$0xff]
    %v3648 = vld [vmem:[%s13 + $0x1520] sm:$0xff]
    %v3649 = vld [vmem:[%s13 + $0x1528] sm:$0xff]
    %v3650 = vld [vmem:[%s13 + $0x1530] sm:$0xff]
    %v3651 = vld [vmem:[%s13 + $0x1538] sm:$0xff]
    %v3652 = vld [vmem:[%s13 + $0x1540] sm:$0xff]
    %v3653 = vld [vmem:[%s13 + $0x1548] sm:$0xff]
    %v3654 = vld [vmem:[%s13 + $0x1550] sm:$0xff]
    %v3655 = vld [vmem:[%s13 + $0x1558] sm:$0xff]
    %v3656 = vld [vmem:[%s13 + $0x1560] sm:$0xff]
    %v3657 = vld [vmem:[%s13 + $0x1568] sm:$0xff]
    %v3658 = vld [vmem:[%s13 + $0x1570] sm:$0xff]
    %v3659 = vld [vmem:[%s13 + $0x1578] sm:$0xff]
    %v3660 = vld [vmem:[%s13 + $0x1580] sm:$0xff]
    %v3661 = vld [vmem:[%s13 + $0x1588] sm:$0xff]
    %v3662 = vld [vmem:[%s13 + $0x1590] sm:$0xff]
    %v3663 = vld [vmem:[%s13 + $0x1598] sm:$0xff]
    %v3664 = vld [vmem:[%s13 + $0x15a0] sm:$0xff]
    %v3665 = vld [vmem:[%s13 + $0x15a8] sm:$0xff]
    %v3666 = vld [vmem:[%s13 + $0x15b0] sm:$0xff]
    %v3667 = vld [vmem:[%s13 + $0x15b8] sm:$0xff]
    %v3668 = vld [vmem:[%s13 + $0x15c0] sm:$0xff]
    %v3669 = vld [vmem:[%s13 + $0x15c8] sm:$0xff]
    %v3670 = vld [vmem:[%s13 + $0x15d0] sm:$0xff]
    %v3671 = vld [vmem:[%s13 + $0x15d8] sm:$0xff]
    %v3672 = vld [vmem:[%s13 + $0x15e0] sm:$0xff]
    %v3673 = vld [vmem:[%s13 + $0x15e8] sm:$0xff]
    %v3674 = vld [vmem:[%s13 + $0x15f0] sm:$0xff]
    %v3675 = vld [vmem:[%s13 + $0x15f8] sm:$0xff]
    %v3676 = vld [vmem:[%s13 + $0x1600] sm:$0xff]
    %v3677 = vld [vmem:[%s13 + $0x1608] sm:$0xff]
    %v3678 = vld [vmem:[%s13 + $0x1610] sm:$0xff]
    %v3679 = vld [vmem:[%s13 + $0x1618] sm:$0xff]
    %v3680 = vld [vmem:[%s13 + $0x1620] sm:$0xff]
    %v3681 = vld [vmem:[%s13 + $0x1628] sm:$0xff]
    %v3682 = vld [vmem:[%s13 + $0x1630] sm:$0xff]
    %v3683 = vld [vmem:[%s13 + $0x1638] sm:$0xff]
    %v3684 = vld [vmem:[%s13 + $0x1640] sm:$0xff]
    %v3685 = vld [vmem:[%s13 + $0x1648] sm:$0xff]
    %v3686 = vld [vmem:[%s13 + $0x1650] sm:$0xff]
    %v3687 = vld [vmem:[%s13 + $0x1658] sm:$0xff]
    %v3688 = vld [vmem:[%s13 + $0x1660] sm:$0xff]
    %v3689 = vld [vmem:[%s13 + $0x1668] sm:$0xff]
    %v3690 = vld [vmem:[%s13 + $0x1670] sm:$0xff]
    %v3691 = vld [vmem:[%s13 + $0x1678] sm:$0xff]
    %v3692 = vld [vmem:[%s13 + $0x1680] sm:$0xff]
    %v3693 = vld [vmem:[%s13 + $0x1688] sm:$0xff]
    %v3694 = vld [vmem:[%s13 + $0x1690] sm:$0xff]
    %v3695 = vld [vmem:[%s13 + $0x1698] sm:$0xff]
    %v3696 = vld [vmem:[%s13 + $0x16a0] sm:$0xff]
    %v3697 = vld [vmem:[%s13 + $0x16a8] sm:$0xff]
    %v3698 = vld [vmem:[%s13 + $0x16b0] sm:$0xff]
    %v3699 = vld [vmem:[%s13 + $0x16b8] sm:$0xff]
    %v3700 = vld [vmem:[%s13 + $0x16c0] sm:$0xff]
    %v3701 = vld [vmem:[%s13 + $0x16c8] sm:$0xff]
    %v3702 = vld [vmem:[%s13 + $0x16d0] sm:$0xff]
    %v3703 = vld [vmem:[%s13 + $0x16d8] sm:$0xff]
    %v3704 = vld [vmem:[%s13 + $0x16e0] sm:$0xff]
    %v3705 = vld [vmem:[%s13 + $0x16e8] sm:$0xff]
    %v3706 = vld [vmem:[%s13 + $0x16f0] sm:$0xff]
    %v3707 = vld [vmem:[%s13 + $0x16f8] sm:$0xff]
    %v3708 = vld [vmem:[%s13 + $0x1700] sm:$0xff]
    %v3709 = vld [vmem:[%s13 + $0x1708] sm:$0xff]
    %v3710 = vld [vmem:[%s13 + $0x1710] sm:$0xff]
    %v3711 = vld [vmem:[%s13 + $0x1718] sm:$0xff]
    %v3712 = vld [vmem:[%s13 + $0x1720] sm:$0xff]
    %v3713 = vld [vmem:[%s13 + $0x1728] sm:$0xff]
    %v3714 = vld [vmem:[%s13 + $0x1730] sm:$0xff]
    %v3715 = vld [vmem:[%s13 + $0x1738] sm:$0xff]
    %v3716 = vld [vmem:[%s13 + $0x1740] sm:$0xff]
    %v3717 = vld [vmem:[%s13 + $0x1748] sm:$0xff]
    %v3718 = vld [vmem:[%s13 + $0x1750] sm:$0xff]
    %v3719 = vld [vmem:[%s13 + $0x1758] sm:$0xff]
    %v3720 = vld [vmem:[%s13 + $0x1760] sm:$0xff]
    %v3721 = vld [vmem:[%s13 + $0x1768] sm:$0xff]
    %v3722 = vld [vmem:[%s13 + $0x1770] sm:$0xff]
    %v3723 = vld [vmem:[%s13 + $0x1778] sm:$0xff]
    %v3724 = vld [vmem:[%s13 + $0x1780] sm:$0xff]
    %v3725 = vld [vmem:[%s13 + $0x1788] sm:$0xff]
    %v3726 = vld [vmem:[%s13 + $0x1790] sm:$0xff]
    %v3727 = vld [vmem:[%s13 + $0x1798] sm:$0xff]
    %v3728 = vld [vmem:[%s13 + $0x17a0] sm:$0xff]
    %v3729 = vld [vmem:[%s13 + $0x17a8] sm:$0xff]
    %v3730 = vld [vmem:[%s13 + $0x17b0] sm:$0xff]
    %v3731 = vld [vmem:[%s13 + $0x17b8] sm:$0xff]
    %v3732 = vld [vmem:[%s13 + $0x17c0] sm:$0xff]
    %v3733 = vld [vmem:[%s13 + $0x17c8] sm:$0xff]
    %v3734 = vld [vmem:[%s13 + $0x17d0] sm:$0xff]
    %v3735 = vld [vmem:[%s13 + $0x17d8] sm:$0xff]
    %v3736 = vld [vmem:[%s13 + $0x17e0] sm:$0xff]
    %v3737 = vld [vmem:[%s13 + $0x17e8] sm:$0xff]
    %v3738 = vld [vmem:[%s13 + $0x17f0] sm:$0xff]
    %v3739 = vld [vmem:[%s13 + $0x17f8] sm:$0xff]
    %v3740 = vld [vmem:[%s14] sm:$0xff]
    %v3741 = vld [vmem:[%s14 + $0x8] sm:$0xff]
    %v3742 = vld [vmem:[%s14 + $0x10] sm:$0xff]
    %v3746 = vlaneseq
    %v3747 = vshrl.u32 %v3746, 7
    %v3748 = vsub.s32 0, %v3747
    %v3749 = vrot.slane %v3740, %v3748
    %v3750 = vlaneseq
    %v3751 = vshrl.u32 %v3750, 7
    %v3752 = vsub.s32 1, %v3751
    %v3753 = vrot.slane %v3740, %v3752
    %v3754 = vlaneseq
    %v3755 = vshrl.u32 %v3754, 7
    %v3756 = vsub.s32 2, %v3755
    %v3757 = vrot.slane %v3740, %v3756
    %v3758 = vlaneseq
    %v3759 = vshrl.u32 %v3758, 7
    %v3760 = vsub.s32 3, %v3759
    %v3761 = vrot.slane %v3740, %v3760
    %v3762 = vlaneseq
    %v3763 = vshrl.u32 %v3762, 7
    %v3764 = vsub.s32 4, %v3763
    %v3765 = vrot.slane %v3740, %v3764
    %v3766 = vlaneseq
    %v3767 = vshrl.u32 %v3766, 7
    %v3768 = vsub.s32 5, %v3767
    %v3769 = vrot.slane %v3740, %v3768
    %v3770 = vlaneseq
    %v3771 = vshrl.u32 %v3770, 7
    %v3772 = vsub.s32 6, %v3771
    %v3773 = vrot.slane %v3740, %v3772
    %v3774 = vlaneseq
    %v3775 = vshrl.u32 %v3774, 7
    %v3776 = vsub.s32 7, %v3775
    %v3777 = vrot.slane %v3740, %v3776
    %v3778 = vlaneseq
    %v3779 = vshrl.u32 %v3778, 7
    %v3780 = vsub.s32 0, %v3779
    %v3781 = vrot.slane %v3741, %v3780
    %v3782 = vlaneseq
    %v3783 = vshrl.u32 %v3782, 7
    %v3784 = vsub.s32 1, %v3783
    %v3785 = vrot.slane %v3741, %v3784
    %v3786 = vlaneseq
    %v3787 = vshrl.u32 %v3786, 7
    %v3788 = vsub.s32 2, %v3787
    %v3789 = vrot.slane %v3741, %v3788
    %v3790 = vlaneseq
    %v3791 = vshrl.u32 %v3790, 7
    %v3792 = vsub.s32 3, %v3791
    %v3793 = vrot.slane %v3741, %v3792
    %v3794 = vlaneseq
    %v3795 = vshrl.u32 %v3794, 7
    %v3796 = vsub.s32 4, %v3795
    %v3797 = vrot.slane %v3741, %v3796
    %v3798 = vlaneseq
    %v3799 = vshrl.u32 %v3798, 7
    %v3800 = vsub.s32 5, %v3799
    %v3801 = vrot.slane %v3741, %v3800
    %v3802 = vlaneseq
    %v3803 = vshrl.u32 %v3802, 7
    %v3804 = vsub.s32 6, %v3803
    %v3805 = vrot.slane %v3741, %v3804
    %v3806 = vlaneseq
    %v3807 = vshrl.u32 %v3806, 7
    %v3808 = vsub.s32 7, %v3807
    %v3809 = vrot.slane %v3741, %v3808
    %v3810 = vlaneseq
    %v3811 = vshrl.u32 %v3810, 7
    %v3812 = vsub.s32 0, %v3811
    %v3813 = vrot.slane %v3742, %v3812
    %v3814 = vlaneseq
    %v3815 = vshrl.u32 %v3814, 7
    %v3816 = vsub.s32 1, %v3815
    %v3817 = vrot.slane %v3742, %v3816
    %v3818 = vlaneseq
    %v3819 = vshrl.u32 %v3818, 7
    %v3820 = vsub.s32 2, %v3819
    %v3821 = vrot.slane %v3742, %v3820
    %v3822 = vlaneseq
    %v3823 = vshrl.u32 %v3822, 7
    %v3824 = vsub.s32 3, %v3823
    %v3825 = vrot.slane %v3742, %v3824
    %v3826 = vlaneseq
    %v3827 = vshrl.u32 %v3826, 7
    %v3828 = vsub.s32 4, %v3827
    %v3829 = vrot.slane %v3742, %v3828
    %v3830 = vlaneseq
    %v3831 = vshrl.u32 %v3830, 7
    %v3832 = vsub.s32 5, %v3831
    %v3833 = vrot.slane %v3742, %v3832
    %v3834 = vlaneseq
    %v3835 = vshrl.u32 %v3834, 7
    %v3836 = vsub.s32 6, %v3835
    %v3837 = vrot.slane %v3742, %v3836
    %v3838 = vlaneseq
    %v3839 = vshrl.u32 %v3838, 7
    %v3840 = vsub.s32 7, %v3839
    %v3841 = vrot.slane %v3742, %v3840
    %v4634 = vunpack.c.l.b16 %v2972
    %v4635 = vunpack.c.h.b16 %v2972
    %v4636 = vunpack.c.l.b16 %v2973
    %v4637 = vunpack.c.h.b16 %v2973
    %v4638 = vunpack.c.l.b16 %v2974
    %v4639 = vunpack.c.h.b16 %v2974
    %v4640 = vunpack.c.l.b16 %v2975
    %v4641 = vunpack.c.h.b16 %v2975
    %v4642 = vunpack.c.l.b16 %v2976
    %v4643 = vunpack.c.h.b16 %v2976
    %v4644 = vunpack.c.l.b16 %v2977
    %v4645 = vunpack.c.h.b16 %v2977
    %v4646 = vunpack.c.l.b16 %v2978
    %v4647 = vunpack.c.h.b16 %v2978
    %v4648 = vunpack.c.l.b16 %v2979
    %v4649 = vunpack.c.h.b16 %v2979
    %v4650 = vunpack.c.l.b16 %v2980
    %v4651 = vunpack.c.h.b16 %v2980
    %v4652 = vunpack.c.l.b16 %v2981
    %v4653 = vunpack.c.h.b16 %v2981
    %v4654 = vunpack.c.l.b16 %v2982
    %v4655 = vunpack.c.h.b16 %v2982
    %v4656 = vunpack.c.l.b16 %v2983
    %v4657 = vunpack.c.h.b16 %v2983
    %v4658 = vunpack.c.l.b16 %v2984
    %v4659 = vunpack.c.h.b16 %v2984
    %v4660 = vunpack.c.l.b16 %v2985
    %v4661 = vunpack.c.h.b16 %v2985
    %v4662 = vunpack.c.l.b16 %v2986
    %v4663 = vunpack.c.h.b16 %v2986
    %v4664 = vunpack.c.l.b16 %v2987
    %v4665 = vunpack.c.h.b16 %v2987
    %v4666 = vunpack.c.l.b16 %v2988
    %v4667 = vunpack.c.h.b16 %v2988
    %v4668 = vunpack.c.l.b16 %v2989
    %v4669 = vunpack.c.h.b16 %v2989
    %v4670 = vunpack.c.l.b16 %v2990
    %v4671 = vunpack.c.h.b16 %v2990
    %v4672 = vunpack.c.l.b16 %v2991
    %v4673 = vunpack.c.h.b16 %v2991
    %v4674 = vunpack.c.l.b16 %v2992
    %v4675 = vunpack.c.h.b16 %v2992
    %v4676 = vunpack.c.l.b16 %v2993
    %v4677 = vunpack.c.h.b16 %v2993
    %v4678 = vunpack.c.l.b16 %v2994
    %v4679 = vunpack.c.h.b16 %v2994
    %v4680 = vunpack.c.l.b16 %v2995
    %v4681 = vunpack.c.h.b16 %v2995
    %v4682 = vunpack.c.l.b16 %v2996
    %v4683 = vunpack.c.h.b16 %v2996
    %v4684 = vunpack.c.l.b16 %v2997
    %v4685 = vunpack.c.h.b16 %v2997
    %v4686 = vunpack.c.l.b16 %v2998
    %v4687 = vunpack.c.h.b16 %v2998
    %v4688 = vunpack.c.l.b16 %v2999
    %v4689 = vunpack.c.h.b16 %v2999
    %v4690 = vunpack.c.l.b16 %v3000
    %v4691 = vunpack.c.h.b16 %v3000
    %v4692 = vunpack.c.l.b16 %v3001
    %v4693 = vunpack.c.h.b16 %v3001
    %v4694 = vunpack.c.l.b16 %v3002
    %v4695 = vunpack.c.h.b16 %v3002
    %v4696 = vunpack.c.l.b16 %v3003
    %v4697 = vunpack.c.h.b16 %v3003
    %v4698 = vunpack.c.l.b16 %v3004
    %v4699 = vunpack.c.h.b16 %v3004
    %v4700 = vunpack.c.l.b16 %v3005
    %v4701 = vunpack.c.h.b16 %v3005
    %v4702 = vunpack.c.l.b16 %v3006
    %v4703 = vunpack.c.h.b16 %v3006
    %v4704 = vunpack.c.l.b16 %v3007
    %v4705 = vunpack.c.h.b16 %v3007
    %v4706 = vunpack.c.l.b16 %v3008
    %v4707 = vunpack.c.h.b16 %v3008
    %v4708 = vunpack.c.l.b16 %v3009
    %v4709 = vunpack.c.h.b16 %v3009
    %v4710 = vunpack.c.l.b16 %v3010
    %v4711 = vunpack.c.h.b16 %v3010
    %v4712 = vunpack.c.l.b16 %v3011
    %v4713 = vunpack.c.h.b16 %v3011
    %v4714 = vunpack.c.l.b16 %v3012
    %v4715 = vunpack.c.h.b16 %v3012
    %v4716 = vunpack.c.l.b16 %v3013
    %v4717 = vunpack.c.h.b16 %v3013
    %v4718 = vunpack.c.l.b16 %v3014
    %v4719 = vunpack.c.h.b16 %v3014
    %v4720 = vunpack.c.l.b16 %v3015
    %v4721 = vunpack.c.h.b16 %v3015
    %v4722 = vunpack.c.l.b16 %v3016
    %v4723 = vunpack.c.h.b16 %v3016
    %v4724 = vunpack.c.l.b16 %v3017
    %v4725 = vunpack.c.h.b16 %v3017
    %v4726 = vunpack.c.l.b16 %v3018
    %v4727 = vunpack.c.h.b16 %v3018
    %v4728 = vunpack.c.l.b16 %v3019
    %v4729 = vunpack.c.h.b16 %v3019
    %v4730 = vunpack.c.l.b16 %v3020
    %v4731 = vunpack.c.h.b16 %v3020
    %v4732 = vunpack.c.l.b16 %v3021
    %v4733 = vunpack.c.h.b16 %v3021
    %v4734 = vunpack.c.l.b16 %v3022
    %v4735 = vunpack.c.h.b16 %v3022
    %v4736 = vunpack.c.l.b16 %v3023
    %v4737 = vunpack.c.h.b16 %v3023
    %v4738 = vunpack.c.l.b16 %v3024
    %v4739 = vunpack.c.h.b16 %v3024
    %v4740 = vunpack.c.l.b16 %v3025
    %v4741 = vunpack.c.h.b16 %v3025
    %v4742 = vunpack.c.l.b16 %v3026
    %v4743 = vunpack.c.h.b16 %v3026
    %v4744 = vunpack.c.l.b16 %v3027
    %v4745 = vunpack.c.h.b16 %v3027
    %v4746 = vunpack.c.l.b16 %v3028
    %v4747 = vunpack.c.h.b16 %v3028
    %v4748 = vunpack.c.l.b16 %v3029
    %v4749 = vunpack.c.h.b16 %v3029
    %v4750 = vunpack.c.l.b16 %v3030
    %v4751 = vunpack.c.h.b16 %v3030
    %v4752 = vunpack.c.l.b16 %v3031
    %v4753 = vunpack.c.h.b16 %v3031
    %v4754 = vunpack.c.l.b16 %v3032
    %v4755 = vunpack.c.h.b16 %v3032
    %v4756 = vunpack.c.l.b16 %v3033
    %v4757 = vunpack.c.h.b16 %v3033
    %v4758 = vunpack.c.l.b16 %v3034
    %v4759 = vunpack.c.h.b16 %v3034
    %v4760 = vunpack.c.l.b16 %v3035
    %v4761 = vunpack.c.h.b16 %v3035
    %v4762 = vunpack.c.l.b16 %v3036
    %v4763 = vunpack.c.h.b16 %v3036
    %v4764 = vunpack.c.l.b16 %v3037
    %v4765 = vunpack.c.h.b16 %v3037
    %v4766 = vunpack.c.l.b16 %v3038
    %v4767 = vunpack.c.h.b16 %v3038
    %v4768 = vunpack.c.l.b16 %v3039
    %v4769 = vunpack.c.h.b16 %v3039
    %v4770 = vunpack.c.l.b16 %v3040
    %v4771 = vunpack.c.h.b16 %v3040
    %v4772 = vunpack.c.l.b16 %v3041
    %v4773 = vunpack.c.h.b16 %v3041
    %v4774 = vunpack.c.l.b16 %v3042
    %v4775 = vunpack.c.h.b16 %v3042
    %v4776 = vunpack.c.l.b16 %v3043
    %v4777 = vunpack.c.h.b16 %v3043
    %v4778 = vunpack.c.l.b16 %v3044
    %v4779 = vunpack.c.h.b16 %v3044
    %v4780 = vunpack.c.l.b16 %v3045
    %v4781 = vunpack.c.h.b16 %v3045
    %v4782 = vunpack.c.l.b16 %v3046
    %v4783 = vunpack.c.h.b16 %v3046
    %v4784 = vunpack.c.l.b16 %v3047
    %v4785 = vunpack.c.h.b16 %v3047
    %v4786 = vunpack.c.l.b16 %v3048
    %v4787 = vunpack.c.h.b16 %v3048
    %v4788 = vunpack.c.l.b16 %v3049
    %v4789 = vunpack.c.h.b16 %v3049
    %v4790 = vunpack.c.l.b16 %v3050
    %v4791 = vunpack.c.h.b16 %v3050
    %v4792 = vunpack.c.l.b16 %v3051
    %v4793 = vunpack.c.h.b16 %v3051
    %v4794 = vunpack.c.l.b16 %v3052
    %v4795 = vunpack.c.h.b16 %v3052
    %v4796 = vunpack.c.l.b16 %v3053
    %v4797 = vunpack.c.h.b16 %v3053
    %v4798 = vunpack.c.l.b16 %v3054
    %v4799 = vunpack.c.h.b16 %v3054
    %v4800 = vunpack.c.l.b16 %v3055
    %v4801 = vunpack.c.h.b16 %v3055
    %v4802 = vunpack.c.l.b16 %v3056
    %v4803 = vunpack.c.h.b16 %v3056
    %v4804 = vunpack.c.l.b16 %v3057
    %v4805 = vunpack.c.h.b16 %v3057
    %v4806 = vunpack.c.l.b16 %v3058
    %v4807 = vunpack.c.h.b16 %v3058
    %v4808 = vunpack.c.l.b16 %v3059
    %v4809 = vunpack.c.h.b16 %v3059
    %v4810 = vunpack.c.l.b16 %v3060
    %v4811 = vunpack.c.h.b16 %v3060
    %v4812 = vunpack.c.l.b16 %v3061
    %v4813 = vunpack.c.h.b16 %v3061
    %v4814 = vunpack.c.l.b16 %v3062
    %v4815 = vunpack.c.h.b16 %v3062
    %v4816 = vunpack.c.l.b16 %v3063
    %v4817 = vunpack.c.h.b16 %v3063
    %v4818 = vunpack.c.l.b16 %v3064
    %v4819 = vunpack.c.h.b16 %v3064
    %v4820 = vunpack.c.l.b16 %v3065
    %v4821 = vunpack.c.h.b16 %v3065
    %v4822 = vunpack.c.l.b16 %v3066
    %v4823 = vunpack.c.h.b16 %v3066
    %v4824 = vunpack.c.l.b16 %v3067
    %v4825 = vunpack.c.h.b16 %v3067
    %v4826 = vunpack.c.l.b16 %v3068
    %v4827 = vunpack.c.h.b16 %v3068
    %v4828 = vunpack.c.l.b16 %v3069
    %v4829 = vunpack.c.h.b16 %v3069
    %v4830 = vunpack.c.l.b16 %v3070
    %v4831 = vunpack.c.h.b16 %v3070
    %v4832 = vunpack.c.l.b16 %v3071
    %v4833 = vunpack.c.h.b16 %v3071
    %v4834 = vunpack.c.l.b16 %v3072
    %v4835 = vunpack.c.h.b16 %v3072
    %v4836 = vunpack.c.l.b16 %v3073
    %v4837 = vunpack.c.h.b16 %v3073
    %v4838 = vunpack.c.l.b16 %v3074
    %v4839 = vunpack.c.h.b16 %v3074
    %v4840 = vunpack.c.l.b16 %v3075
    %v4841 = vunpack.c.h.b16 %v3075
    %v4842 = vunpack.c.l.b16 %v3076
    %v4843 = vunpack.c.h.b16 %v3076
    %v4844 = vunpack.c.l.b16 %v3077
    %v4845 = vunpack.c.h.b16 %v3077
    %v4846 = vunpack.c.l.b16 %v3078
    %v4847 = vunpack.c.h.b16 %v3078
    %v4848 = vunpack.c.l.b16 %v3079
    %v4849 = vunpack.c.h.b16 %v3079
    %v4850 = vunpack.c.l.b16 %v3080
    %v4851 = vunpack.c.h.b16 %v3080
    %v4852 = vunpack.c.l.b16 %v3081
    %v4853 = vunpack.c.h.b16 %v3081
    %v4854 = vunpack.c.l.b16 %v3082
    %v4855 = vunpack.c.h.b16 %v3082
    %v4856 = vunpack.c.l.b16 %v3083
    %v4857 = vunpack.c.h.b16 %v3083
    %v4858 = vunpack.c.l.b16 %v3084
    %v4859 = vunpack.c.h.b16 %v3084
    %v4860 = vunpack.c.l.b16 %v3085
    %v4861 = vunpack.c.h.b16 %v3085
    %v4862 = vunpack.c.l.b16 %v3086
    %v4863 = vunpack.c.h.b16 %v3086
    %v4864 = vunpack.c.l.b16 %v3087
    %v4865 = vunpack.c.h.b16 %v3087
    %v4866 = vunpack.c.l.b16 %v3088
    %v4867 = vunpack.c.h.b16 %v3088
    %v4868 = vunpack.c.l.b16 %v3089
    %v4869 = vunpack.c.h.b16 %v3089
    %v4870 = vunpack.c.l.b16 %v3090
    %v4871 = vunpack.c.h.b16 %v3090
    %v4872 = vunpack.c.l.b16 %v3091
    %v4873 = vunpack.c.h.b16 %v3091
    %v4874 = vunpack.c.l.b16 %v3092
    %v4875 = vunpack.c.h.b16 %v3092
    %v4876 = vunpack.c.l.b16 %v3093
    %v4877 = vunpack.c.h.b16 %v3093
    %v4878 = vunpack.c.l.b16 %v3094
    %v4879 = vunpack.c.h.b16 %v3094
    %v4880 = vunpack.c.l.b16 %v3095
    %v4881 = vunpack.c.h.b16 %v3095
    %v4882 = vunpack.c.l.b16 %v3096
    %v4883 = vunpack.c.h.b16 %v3096
    %v4884 = vunpack.c.l.b16 %v3097
    %v4885 = vunpack.c.h.b16 %v3097
    %v4886 = vunpack.c.l.b16 %v3098
    %v4887 = vunpack.c.h.b16 %v3098
    %v4888 = vunpack.c.l.b16 %v3099
    %v4889 = vunpack.c.h.b16 %v3099
    %v4890 = vunpack.c.l.b16 %v3100
    %v4891 = vunpack.c.h.b16 %v3100
    %v4892 = vunpack.c.l.b16 %v3101
    %v4893 = vunpack.c.h.b16 %v3101
    %v4894 = vunpack.c.l.b16 %v3102
    %v4895 = vunpack.c.h.b16 %v3102
    %v4896 = vunpack.c.l.b16 %v3103
    %v4897 = vunpack.c.h.b16 %v3103
    %v4898 = vunpack.c.l.b16 %v3104
    %v4899 = vunpack.c.h.b16 %v3104
    %v4900 = vunpack.c.l.b16 %v3105
    %v4901 = vunpack.c.h.b16 %v3105
    %v4902 = vunpack.c.l.b16 %v3106
    %v4903 = vunpack.c.h.b16 %v3106
    %v4904 = vunpack.c.l.b16 %v3107
    %v4905 = vunpack.c.h.b16 %v3107
    %v4906 = vunpack.c.l.b16 %v3108
    %v4907 = vunpack.c.h.b16 %v3108
    %v4908 = vunpack.c.l.b16 %v3109
    %v4909 = vunpack.c.h.b16 %v3109
    %v4910 = vunpack.c.l.b16 %v3110
    %v4911 = vunpack.c.h.b16 %v3110
    %v4912 = vunpack.c.l.b16 %v3111
    %v4913 = vunpack.c.h.b16 %v3111
    %v4914 = vunpack.c.l.b16 %v3112
    %v4915 = vunpack.c.h.b16 %v3112
    %v4916 = vunpack.c.l.b16 %v3113
    %v4917 = vunpack.c.h.b16 %v3113
    %v4918 = vunpack.c.l.b16 %v3114
    %v4919 = vunpack.c.h.b16 %v3114
    %v4920 = vunpack.c.l.b16 %v3115
    %v4921 = vunpack.c.h.b16 %v3115
    %v4922 = vunpack.c.l.b16 %v3116
    %v4923 = vunpack.c.h.b16 %v3116
    %v4924 = vunpack.c.l.b16 %v3117
    %v4925 = vunpack.c.h.b16 %v3117
    %v4926 = vunpack.c.l.b16 %v3118
    %v4927 = vunpack.c.h.b16 %v3118
    %v4928 = vunpack.c.l.b16 %v3119
    %v4929 = vunpack.c.h.b16 %v3119
    %v4930 = vunpack.c.l.b16 %v3120
    %v4931 = vunpack.c.h.b16 %v3120
    %v4932 = vunpack.c.l.b16 %v3121
    %v4933 = vunpack.c.h.b16 %v3121
    %v4934 = vunpack.c.l.b16 %v3122
    %v4935 = vunpack.c.h.b16 %v3122
    %v4936 = vunpack.c.l.b16 %v3123
    %v4937 = vunpack.c.h.b16 %v3123
    %v4938 = vunpack.c.l.b16 %v3124
    %v4939 = vunpack.c.h.b16 %v3124
    %v4940 = vunpack.c.l.b16 %v3125
    %v4941 = vunpack.c.h.b16 %v3125
    %v4942 = vunpack.c.l.b16 %v3126
    %v4943 = vunpack.c.h.b16 %v3126
    %v4944 = vunpack.c.l.b16 %v3127
    %v4945 = vunpack.c.h.b16 %v3127
    %v4946 = vunpack.c.l.b16 %v3128
    %v4947 = vunpack.c.h.b16 %v3128
    %v4948 = vunpack.c.l.b16 %v3129
    %v4949 = vunpack.c.h.b16 %v3129
    %v4950 = vunpack.c.l.b16 %v3130
    %v4951 = vunpack.c.h.b16 %v3130
    %v4952 = vunpack.c.l.b16 %v3131
    %v4953 = vunpack.c.h.b16 %v3131
    %v4954 = vunpack.c.l.b16 %v3132
    %v4955 = vunpack.c.h.b16 %v3132
    %v4956 = vunpack.c.l.b16 %v3133
    %v4957 = vunpack.c.h.b16 %v3133
    %v4958 = vunpack.c.l.b16 %v3134
    %v4959 = vunpack.c.h.b16 %v3134
    %v4960 = vunpack.c.l.b16 %v3135
    %v4961 = vunpack.c.h.b16 %v3135
    %v4962 = vunpack.c.l.b16 %v3136
    %v4963 = vunpack.c.h.b16 %v3136
    %v4964 = vunpack.c.l.b16 %v3137
    %v4965 = vunpack.c.h.b16 %v3137
    %v4966 = vunpack.c.l.b16 %v3138
    %v4967 = vunpack.c.h.b16 %v3138
    %v4968 = vunpack.c.l.b16 %v3139
    %v4969 = vunpack.c.h.b16 %v3139
    %v4970 = vunpack.c.l.b16 %v3140
    %v4971 = vunpack.c.h.b16 %v3140
    %v4972 = vunpack.c.l.b16 %v3141
    %v4973 = vunpack.c.h.b16 %v3141
    %v4974 = vunpack.c.l.b16 %v3142
    %v4975 = vunpack.c.h.b16 %v3142
    %v4976 = vunpack.c.l.b16 %v3143
    %v4977 = vunpack.c.h.b16 %v3143
    %v4978 = vunpack.c.l.b16 %v3144
    %v4979 = vunpack.c.h.b16 %v3144
    %v4980 = vunpack.c.l.b16 %v3145
    %v4981 = vunpack.c.h.b16 %v3145
    %v4982 = vunpack.c.l.b16 %v3146
    %v4983 = vunpack.c.h.b16 %v3146
    %v4984 = vunpack.c.l.b16 %v3147
    %v4985 = vunpack.c.h.b16 %v3147
    %v4986 = vunpack.c.l.b16 %v3148
    %v4987 = vunpack.c.h.b16 %v3148
    %v4988 = vunpack.c.l.b16 %v3149
    %v4989 = vunpack.c.h.b16 %v3149
    %v4990 = vunpack.c.l.b16 %v3150
    %v4991 = vunpack.c.h.b16 %v3150
    %v4992 = vunpack.c.l.b16 %v3151
    %v4993 = vunpack.c.h.b16 %v3151
    %v4994 = vunpack.c.l.b16 %v3152
    %v4995 = vunpack.c.h.b16 %v3152
    %v4996 = vunpack.c.l.b16 %v3153
    %v4997 = vunpack.c.h.b16 %v3153
    %v4998 = vunpack.c.l.b16 %v3154
    %v4999 = vunpack.c.h.b16 %v3154
    %v5000 = vunpack.c.l.b16 %v3155
    %v5001 = vunpack.c.h.b16 %v3155
    %v5002 = vunpack.c.l.b16 %v3156
    %v5003 = vunpack.c.h.b16 %v3156
    %v5004 = vunpack.c.l.b16 %v3157
    %v5005 = vunpack.c.h.b16 %v3157
    %v5006 = vunpack.c.l.b16 %v3158
    %v5007 = vunpack.c.h.b16 %v3158
    %v5008 = vunpack.c.l.b16 %v3159
    %v5009 = vunpack.c.h.b16 %v3159
    %v5010 = vunpack.c.l.b16 %v3160
    %v5011 = vunpack.c.h.b16 %v3160
    %v5012 = vunpack.c.l.b16 %v3161
    %v5013 = vunpack.c.h.b16 %v3161
    %v5014 = vunpack.c.l.b16 %v3162
    %v5015 = vunpack.c.h.b16 %v3162
    %v5016 = vunpack.c.l.b16 %v3163
    %v5017 = vunpack.c.h.b16 %v3163
    %v5018 = vunpack.c.l.b16 %v3164
    %v5019 = vunpack.c.h.b16 %v3164
    %v5020 = vunpack.c.l.b16 %v3165
    %v5021 = vunpack.c.h.b16 %v3165
    %v5022 = vunpack.c.l.b16 %v3166
    %v5023 = vunpack.c.h.b16 %v3166
    %v5024 = vunpack.c.l.b16 %v3167
    %v5025 = vunpack.c.h.b16 %v3167
    %v5026 = vunpack.c.l.b16 %v3168
    %v5027 = vunpack.c.h.b16 %v3168
    %v5028 = vunpack.c.l.b16 %v3169
    %v5029 = vunpack.c.h.b16 %v3169
    %v5030 = vunpack.c.l.b16 %v3170
    %v5031 = vunpack.c.h.b16 %v3170
    %v5032 = vunpack.c.l.b16 %v3171
    %v5033 = vunpack.c.h.b16 %v3171
    %v5034 = vunpack.c.l.b16 %v3172
    %v5035 = vunpack.c.h.b16 %v3172
    %v5036 = vunpack.c.l.b16 %v3173
    %v5037 = vunpack.c.h.b16 %v3173
    %v5038 = vunpack.c.l.b16 %v3174
    %v5039 = vunpack.c.h.b16 %v3174
    %v5040 = vunpack.c.l.b16 %v3175
    %v5041 = vunpack.c.h.b16 %v3175
    %v5042 = vunpack.c.l.b16 %v3176
    %v5043 = vunpack.c.h.b16 %v3176
    %v5044 = vunpack.c.l.b16 %v3177
    %v5045 = vunpack.c.h.b16 %v3177
    %v5046 = vunpack.c.l.b16 %v3178
    %v5047 = vunpack.c.h.b16 %v3178
    %v5048 = vunpack.c.l.b16 %v3179
    %v5049 = vunpack.c.h.b16 %v3179
    %v5050 = vunpack.c.l.b16 %v3180
    %v5051 = vunpack.c.h.b16 %v3180
    %v5052 = vunpack.c.l.b16 %v3181
    %v5053 = vunpack.c.h.b16 %v3181
    %v5054 = vunpack.c.l.b16 %v3182
    %v5055 = vunpack.c.h.b16 %v3182
    %v5056 = vunpack.c.l.b16 %v3183
    %v5057 = vunpack.c.h.b16 %v3183
    %v5058 = vunpack.c.l.b16 %v3184
    %v5059 = vunpack.c.h.b16 %v3184
    %v5060 = vunpack.c.l.b16 %v3185
    %v5061 = vunpack.c.h.b16 %v3185
    %v5062 = vunpack.c.l.b16 %v3186
    %v5063 = vunpack.c.h.b16 %v3186
    %v5064 = vunpack.c.l.b16 %v3187
    %v5065 = vunpack.c.h.b16 %v3187
    %v5066 = vunpack.c.l.b16 %v3188
    %v5067 = vunpack.c.h.b16 %v3188
    %v5068 = vunpack.c.l.b16 %v3189
    %v5069 = vunpack.c.h.b16 %v3189
    %v5070 = vunpack.c.l.b16 %v3190
    %v5071 = vunpack.c.h.b16 %v3190
    %v5072 = vunpack.c.l.b16 %v3191
    %v5073 = vunpack.c.h.b16 %v3191
    %v5074 = vunpack.c.l.b16 %v3192
    %v5075 = vunpack.c.h.b16 %v3192
    %v5076 = vunpack.c.l.b16 %v3193
    %v5077 = vunpack.c.h.b16 %v3193
    %v5078 = vunpack.c.l.b16 %v3194
    %v5079 = vunpack.c.h.b16 %v3194
    %v5080 = vunpack.c.l.b16 %v3195
    %v5081 = vunpack.c.h.b16 %v3195
    %v5082 = vunpack.c.l.b16 %v3196
    %v5083 = vunpack.c.h.b16 %v3196
    %v5084 = vunpack.c.l.b16 %v3197
    %v5085 = vunpack.c.h.b16 %v3197
    %v5086 = vunpack.c.l.b16 %v3198
    %v5087 = vunpack.c.h.b16 %v3198
    %v5088 = vunpack.c.l.b16 %v3199
    %v5089 = vunpack.c.h.b16 %v3199
    %v5090 = vunpack.c.l.b16 %v3200
    %v5091 = vunpack.c.h.b16 %v3200
    %v5092 = vunpack.c.l.b16 %v3201
    %v5093 = vunpack.c.h.b16 %v3201
    %v5094 = vunpack.c.l.b16 %v3202
    %v5095 = vunpack.c.h.b16 %v3202
    %v5096 = vunpack.c.l.b16 %v3203
    %v5097 = vunpack.c.h.b16 %v3203
    %v5098 = vunpack.c.l.b16 %v3204
    %v5099 = vunpack.c.h.b16 %v3204
    %v5100 = vunpack.c.l.b16 %v3205
    %v5101 = vunpack.c.h.b16 %v3205
    %v5102 = vunpack.c.l.b16 %v3206
    %v5103 = vunpack.c.h.b16 %v3206
    %v5104 = vunpack.c.l.b16 %v3207
    %v5105 = vunpack.c.h.b16 %v3207
    %v5106 = vunpack.c.l.b16 %v3208
    %v5107 = vunpack.c.h.b16 %v3208
    %v5108 = vunpack.c.l.b16 %v3209
    %v5109 = vunpack.c.h.b16 %v3209
    %v5110 = vunpack.c.l.b16 %v3210
    %v5111 = vunpack.c.h.b16 %v3210
    %v5112 = vunpack.c.l.b16 %v3211
    %v5113 = vunpack.c.h.b16 %v3211
    %v5114 = vunpack.c.l.b16 %v3212
    %v5115 = vunpack.c.h.b16 %v3212
    %v5116 = vunpack.c.l.b16 %v3213
    %v5117 = vunpack.c.h.b16 %v3213
    %v5118 = vunpack.c.l.b16 %v3214
    %v5119 = vunpack.c.h.b16 %v3214
    %v5120 = vunpack.c.l.b16 %v3215
    %v5121 = vunpack.c.h.b16 %v3215
    %v5122 = vunpack.c.l.b16 %v3216
    %v5123 = vunpack.c.h.b16 %v3216
    %v5124 = vunpack.c.l.b16 %v3217
    %v5125 = vunpack.c.h.b16 %v3217
    %v5126 = vunpack.c.l.b16 %v3218
    %v5127 = vunpack.c.h.b16 %v3218
    %v5128 = vunpack.c.l.b16 %v3219
    %v5129 = vunpack.c.h.b16 %v3219
    %v5130 = vunpack.c.l.b16 %v3220
    %v5131 = vunpack.c.h.b16 %v3220
    %v5132 = vunpack.c.l.b16 %v3221
    %v5133 = vunpack.c.h.b16 %v3221
    %v5134 = vunpack.c.l.b16 %v3222
    %v5135 = vunpack.c.h.b16 %v3222
    %v5136 = vunpack.c.l.b16 %v3223
    %v5137 = vunpack.c.h.b16 %v3223
    %v5138 = vunpack.c.l.b16 %v3224
    %v5139 = vunpack.c.h.b16 %v3224
    %v5140 = vunpack.c.l.b16 %v3225
    %v5141 = vunpack.c.h.b16 %v3225
    %v5142 = vunpack.c.l.b16 %v3226
    %v5143 = vunpack.c.h.b16 %v3226
    %v5144 = vunpack.c.l.b16 %v3227
    %v5145 = vunpack.c.h.b16 %v3227
    %v5146 = vunpack.c.l.b16 %v3228
    %v5147 = vunpack.c.h.b16 %v3228
    %v5148 = vunpack.c.l.b16 %v3229
    %v5149 = vunpack.c.h.b16 %v3229
    %v5150 = vunpack.c.l.b16 %v3230
    %v5151 = vunpack.c.h.b16 %v3230
    %v5152 = vunpack.c.l.b16 %v3231
    %v5153 = vunpack.c.h.b16 %v3231
    %v5154 = vunpack.c.l.b16 %v3232
    %v5155 = vunpack.c.h.b16 %v3232
    %v5156 = vunpack.c.l.b16 %v3233
    %v5157 = vunpack.c.h.b16 %v3233
    %v5158 = vunpack.c.l.b16 %v3234
    %v5159 = vunpack.c.h.b16 %v3234
    %v5160 = vunpack.c.l.b16 %v3235
    %v5161 = vunpack.c.h.b16 %v3235
    %v5162 = vunpack.c.l.b16 %v3236
    %v5163 = vunpack.c.h.b16 %v3236
    %v5164 = vunpack.c.l.b16 %v3237
    %v5165 = vunpack.c.h.b16 %v3237
    %v5166 = vunpack.c.l.b16 %v3238
    %v5167 = vunpack.c.h.b16 %v3238
    %v5168 = vunpack.c.l.b16 %v3239
    %v5169 = vunpack.c.h.b16 %v3239
    %v5170 = vunpack.c.l.b16 %v3240
    %v5171 = vunpack.c.h.b16 %v3240
    %v5172 = vunpack.c.l.b16 %v3241
    %v5173 = vunpack.c.h.b16 %v3241
    %v5174 = vunpack.c.l.b16 %v3242
    %v5175 = vunpack.c.h.b16 %v3242
    %v5176 = vunpack.c.l.b16 %v3243
    %v5177 = vunpack.c.h.b16 %v3243
    %v5178 = vunpack.c.l.b16 %v3244
    %v5179 = vunpack.c.h.b16 %v3244
    %v5180 = vunpack.c.l.b16 %v3245
    %v5181 = vunpack.c.h.b16 %v3245
    %v5182 = vunpack.c.l.b16 %v3246
    %v5183 = vunpack.c.h.b16 %v3246
    %v5184 = vunpack.c.l.b16 %v3247
    %v5185 = vunpack.c.h.b16 %v3247
    %v5186 = vunpack.c.l.b16 %v3248
    %v5187 = vunpack.c.h.b16 %v3248
    %v5188 = vunpack.c.l.b16 %v3249
    %v5189 = vunpack.c.h.b16 %v3249
    %v5190 = vunpack.c.l.b16 %v3250
    %v5191 = vunpack.c.h.b16 %v3250
    %v5192 = vunpack.c.l.b16 %v3251
    %v5193 = vunpack.c.h.b16 %v3251
    %v5194 = vunpack.c.l.b16 %v3252
    %v5195 = vunpack.c.h.b16 %v3252
    %v5196 = vunpack.c.l.b16 %v3253
    %v5197 = vunpack.c.h.b16 %v3253
    %v5198 = vunpack.c.l.b16 %v3254
    %v5199 = vunpack.c.h.b16 %v3254
    %v5200 = vunpack.c.l.b16 %v3255
    %v5201 = vunpack.c.h.b16 %v3255
    %v5202 = vunpack.c.l.b16 %v3256
    %v5203 = vunpack.c.h.b16 %v3256
    %v5204 = vunpack.c.l.b16 %v3257
    %v5205 = vunpack.c.h.b16 %v3257
    %v5206 = vunpack.c.l.b16 %v3258
    %v5207 = vunpack.c.h.b16 %v3258
    %v5208 = vunpack.c.l.b16 %v3259
    %v5209 = vunpack.c.h.b16 %v3259
    %v5210 = vunpack.c.l.b16 %v3260
    %v5211 = vunpack.c.h.b16 %v3260
    %v5212 = vunpack.c.l.b16 %v3261
    %v5213 = vunpack.c.h.b16 %v3261
    %v5214 = vunpack.c.l.b16 %v3262
    %v5215 = vunpack.c.h.b16 %v3262
    %v5216 = vunpack.c.l.b16 %v3263
    %v5217 = vunpack.c.h.b16 %v3263
    %v5218 = vunpack.c.l.b16 %v3264
    %v5219 = vunpack.c.h.b16 %v3264
    %v5220 = vunpack.c.l.b16 %v3265
    %v5221 = vunpack.c.h.b16 %v3265
    %v5222 = vunpack.c.l.b16 %v3266
    %v5223 = vunpack.c.h.b16 %v3266
    %v5224 = vunpack.c.l.b16 %v3267
    %v5225 = vunpack.c.h.b16 %v3267
    %v5226 = vunpack.c.l.b16 %v3268
    %v5227 = vunpack.c.h.b16 %v3268
    %v5228 = vunpack.c.l.b16 %v3269
    %v5229 = vunpack.c.h.b16 %v3269
    %v5230 = vunpack.c.l.b16 %v3270
    %v5231 = vunpack.c.h.b16 %v3270
    %v5232 = vunpack.c.l.b16 %v3271
    %v5233 = vunpack.c.h.b16 %v3271
    %v5234 = vunpack.c.l.b16 %v3272
    %v5235 = vunpack.c.h.b16 %v3272
    %v5236 = vunpack.c.l.b16 %v3273
    %v5237 = vunpack.c.h.b16 %v3273
    %v5238 = vunpack.c.l.b16 %v3274
    %v5239 = vunpack.c.h.b16 %v3274
    %v5240 = vunpack.c.l.b16 %v3275
    %v5241 = vunpack.c.h.b16 %v3275
    %v5242 = vunpack.c.l.b16 %v3276
    %v5243 = vunpack.c.h.b16 %v3276
    %v5244 = vunpack.c.l.b16 %v3277
    %v5245 = vunpack.c.h.b16 %v3277
    %v5246 = vunpack.c.l.b16 %v3278
    %v5247 = vunpack.c.h.b16 %v3278
    %v5248 = vunpack.c.l.b16 %v3279
    %v5249 = vunpack.c.h.b16 %v3279
    %v5250 = vunpack.c.l.b16 %v3280
    %v5251 = vunpack.c.h.b16 %v3280
    %v5252 = vunpack.c.l.b16 %v3281
    %v5253 = vunpack.c.h.b16 %v3281
    %v5254 = vunpack.c.l.b16 %v3282
    %v5255 = vunpack.c.h.b16 %v3282
    %v5256 = vunpack.c.l.b16 %v3283
    %v5257 = vunpack.c.h.b16 %v3283
    %v5258 = vunpack.c.l.b16 %v3284
    %v5259 = vunpack.c.h.b16 %v3284
    %v5260 = vunpack.c.l.b16 %v3285
    %v5261 = vunpack.c.h.b16 %v3285
    %v5262 = vunpack.c.l.b16 %v3286
    %v5263 = vunpack.c.h.b16 %v3286
    %v5264 = vunpack.c.l.b16 %v3287
    %v5265 = vunpack.c.h.b16 %v3287
    %v5266 = vunpack.c.l.b16 %v3288
    %v5267 = vunpack.c.h.b16 %v3288
    %v5268 = vunpack.c.l.b16 %v3289
    %v5269 = vunpack.c.h.b16 %v3289
    %v5270 = vunpack.c.l.b16 %v3290
    %v5271 = vunpack.c.h.b16 %v3290
    %v5272 = vunpack.c.l.b16 %v3291
    %v5273 = vunpack.c.h.b16 %v3291
    %v5274 = vunpack.c.l.b16 %v3292
    %v5275 = vunpack.c.h.b16 %v3292
    %v5276 = vunpack.c.l.b16 %v3293
    %v5277 = vunpack.c.h.b16 %v3293
    %v5278 = vunpack.c.l.b16 %v3294
    %v5279 = vunpack.c.h.b16 %v3294
    %v5280 = vunpack.c.l.b16 %v3295
    %v5281 = vunpack.c.h.b16 %v3295
    %v5282 = vunpack.c.l.b16 %v3296
    %v5283 = vunpack.c.h.b16 %v3296
    %v5284 = vunpack.c.l.b16 %v3297
    %v5285 = vunpack.c.h.b16 %v3297
    %v5286 = vunpack.c.l.b16 %v3298
    %v5287 = vunpack.c.h.b16 %v3298
    %v5288 = vunpack.c.l.b16 %v3299
    %v5289 = vunpack.c.h.b16 %v3299
    %v5290 = vunpack.c.l.b16 %v3300
    %v5291 = vunpack.c.h.b16 %v3300
    %v5292 = vunpack.c.l.b16 %v3301
    %v5293 = vunpack.c.h.b16 %v3301
    %v5294 = vunpack.c.l.b16 %v3302
    %v5295 = vunpack.c.h.b16 %v3302
    %v5296 = vunpack.c.l.b16 %v3303
    %v5297 = vunpack.c.h.b16 %v3303
    %v5298 = vunpack.c.l.b16 %v3304
    %v5299 = vunpack.c.h.b16 %v3304
    %v5300 = vunpack.c.l.b16 %v3305
    %v5301 = vunpack.c.h.b16 %v3305
    %v5302 = vunpack.c.l.b16 %v3306
    %v5303 = vunpack.c.h.b16 %v3306
    %v5304 = vunpack.c.l.b16 %v3307
    %v5305 = vunpack.c.h.b16 %v3307
    %v5306 = vunpack.c.l.b16 %v3308
    %v5307 = vunpack.c.h.b16 %v3308
    %v5308 = vunpack.c.l.b16 %v3309
    %v5309 = vunpack.c.h.b16 %v3309
    %v5310 = vunpack.c.l.b16 %v3310
    %v5311 = vunpack.c.h.b16 %v3310
    %v5312 = vunpack.c.l.b16 %v3311
    %v5313 = vunpack.c.h.b16 %v3311
    %v5314 = vunpack.c.l.b16 %v3312
    %v5315 = vunpack.c.h.b16 %v3312
    %v5316 = vunpack.c.l.b16 %v3313
    %v5317 = vunpack.c.h.b16 %v3313
    %v5318 = vunpack.c.l.b16 %v3314
    %v5319 = vunpack.c.h.b16 %v3314
    %v5320 = vunpack.c.l.b16 %v3315
    %v5321 = vunpack.c.h.b16 %v3315
    %v5322 = vunpack.c.l.b16 %v3316
    %v5323 = vunpack.c.h.b16 %v3316
    %v5324 = vunpack.c.l.b16 %v3317
    %v5325 = vunpack.c.h.b16 %v3317
    %v5326 = vunpack.c.l.b16 %v3318
    %v5327 = vunpack.c.h.b16 %v3318
    %v5328 = vunpack.c.l.b16 %v3319
    %v5329 = vunpack.c.h.b16 %v3319
    %v5330 = vunpack.c.l.b16 %v3320
    %v5331 = vunpack.c.h.b16 %v3320
    %v5332 = vunpack.c.l.b16 %v3321
    %v5333 = vunpack.c.h.b16 %v3321
    %v5334 = vunpack.c.l.b16 %v3322
    %v5335 = vunpack.c.h.b16 %v3322
    %v5336 = vunpack.c.l.b16 %v3323
    %v5337 = vunpack.c.h.b16 %v3323
    %v5338 = vunpack.c.l.b16 %v3324
    %v5339 = vunpack.c.h.b16 %v3324
    %v5340 = vunpack.c.l.b16 %v3325
    %v5341 = vunpack.c.h.b16 %v3325
    %v5342 = vunpack.c.l.b16 %v3326
    %v5343 = vunpack.c.h.b16 %v3326
    %v5344 = vunpack.c.l.b16 %v3327
    %v5345 = vunpack.c.h.b16 %v3327
    %v5346 = vunpack.c.l.b16 %v3328
    %v5347 = vunpack.c.h.b16 %v3328
    %v5348 = vunpack.c.l.b16 %v3329
    %v5349 = vunpack.c.h.b16 %v3329
    %v5350 = vunpack.c.l.b16 %v3330
    %v5351 = vunpack.c.h.b16 %v3330
    %v5352 = vunpack.c.l.b16 %v3331
    %v5353 = vunpack.c.h.b16 %v3331
    %v5354 = vunpack.c.l.b16 %v3332
    %v5355 = vunpack.c.h.b16 %v3332
    %v5356 = vunpack.c.l.b16 %v3333
    %v5357 = vunpack.c.h.b16 %v3333
    %v5358 = vunpack.c.l.b16 %v3334
    %v5359 = vunpack.c.h.b16 %v3334
    %v5360 = vunpack.c.l.b16 %v3335
    %v5361 = vunpack.c.h.b16 %v3335
    %v5362 = vunpack.c.l.b16 %v3336
    %v5363 = vunpack.c.h.b16 %v3336
    %v5364 = vunpack.c.l.b16 %v3337
    %v5365 = vunpack.c.h.b16 %v3337
    %v5366 = vunpack.c.l.b16 %v3338
    %v5367 = vunpack.c.h.b16 %v3338
    %v5368 = vunpack.c.l.b16 %v3339
    %v5369 = vunpack.c.h.b16 %v3339
    %v5370 = vunpack.c.l.b16 %v3340
    %v5371 = vunpack.c.h.b16 %v3340
    %v5372 = vunpack.c.l.b16 %v3341
    %v5373 = vunpack.c.h.b16 %v3341
    %v5374 = vunpack.c.l.b16 %v3342
    %v5375 = vunpack.c.h.b16 %v3342
    %v5376 = vunpack.c.l.b16 %v3343
    %v5377 = vunpack.c.h.b16 %v3343
    %v5378 = vunpack.c.l.b16 %v3344
    %v5379 = vunpack.c.h.b16 %v3344
    %v5380 = vunpack.c.l.b16 %v3345
    %v5381 = vunpack.c.h.b16 %v3345
    %v5382 = vunpack.c.l.b16 %v3346
    %v5383 = vunpack.c.h.b16 %v3346
    %v5384 = vunpack.c.l.b16 %v3347
    %v5385 = vunpack.c.h.b16 %v3347
    %v5386 = vunpack.c.l.b16 %v3348
    %v5387 = vunpack.c.h.b16 %v3348
    %v5388 = vunpack.c.l.b16 %v3349
    %v5389 = vunpack.c.h.b16 %v3349
    %v5390 = vunpack.c.l.b16 %v3350
    %v5391 = vunpack.c.h.b16 %v3350
    %v5392 = vunpack.c.l.b16 %v3351
    %v5393 = vunpack.c.h.b16 %v3351
    %v5394 = vunpack.c.l.b16 %v3352
    %v5395 = vunpack.c.h.b16 %v3352
    %v5396 = vunpack.c.l.b16 %v3353
    %v5397 = vunpack.c.h.b16 %v3353
    %v5398 = vunpack.c.l.b16 %v3354
    %v5399 = vunpack.c.h.b16 %v3354
    %v5400 = vunpack.c.l.b16 %v3355
    %v5401 = vunpack.c.h.b16 %v3355
    %v5402 = vunpack.c.l.b16 %v3356
    %v5403 = vunpack.c.h.b16 %v3356
    %v5404 = vunpack.c.l.b16 %v3357
    %v5405 = vunpack.c.h.b16 %v3357
    %v5406 = vunpack.c.l.b16 %v3358
    %v5407 = vunpack.c.h.b16 %v3358
    %v5408 = vunpack.c.l.b16 %v3359
    %v5409 = vunpack.c.h.b16 %v3359
    %v5410 = vunpack.c.l.b16 %v3360
    %v5411 = vunpack.c.h.b16 %v3360
    %v5412 = vunpack.c.l.b16 %v3361
    %v5413 = vunpack.c.h.b16 %v3361
    %v5414 = vunpack.c.l.b16 %v3362
    %v5415 = vunpack.c.h.b16 %v3362
    %v5416 = vunpack.c.l.b16 %v3363
    %v5417 = vunpack.c.h.b16 %v3363
    %v5418 = vunpack.c.l.b16 %v3364
    %v5419 = vunpack.c.h.b16 %v3364
    %v5420 = vunpack.c.l.b16 %v3365
    %v5421 = vunpack.c.h.b16 %v3365
    %v5422 = vunpack.c.l.b16 %v3366
    %v5423 = vunpack.c.h.b16 %v3366
    %v5424 = vunpack.c.l.b16 %v3367
    %v5425 = vunpack.c.h.b16 %v3367
    %v5426 = vunpack.c.l.b16 %v3368
    %v5427 = vunpack.c.h.b16 %v3368
    %v5428 = vunpack.c.l.b16 %v3369
    %v5429 = vunpack.c.h.b16 %v3369
    %v5430 = vunpack.c.l.b16 %v3370
    %v5431 = vunpack.c.h.b16 %v3370
    %v5432 = vunpack.c.l.b16 %v3371
    %v5433 = vunpack.c.h.b16 %v3371
    %v5434 = vunpack.c.l.b16 %v3372
    %v5435 = vunpack.c.h.b16 %v3372
    %v5436 = vunpack.c.l.b16 %v3373
    %v5437 = vunpack.c.h.b16 %v3373
    %v5438 = vunpack.c.l.b16 %v3374
    %v5439 = vunpack.c.h.b16 %v3374
    %v5440 = vunpack.c.l.b16 %v3375
    %v5441 = vunpack.c.h.b16 %v3375
    %v5442 = vunpack.c.l.b16 %v3376
    %v5443 = vunpack.c.h.b16 %v3376
    %v5444 = vunpack.c.l.b16 %v3377
    %v5445 = vunpack.c.h.b16 %v3377
    %v5446 = vunpack.c.l.b16 %v3378
    %v5447 = vunpack.c.h.b16 %v3378
    %v5448 = vunpack.c.l.b16 %v3379
    %v5449 = vunpack.c.h.b16 %v3379
    %v5450 = vunpack.c.l.b16 %v3380
    %v5451 = vunpack.c.h.b16 %v3380
    %v5452 = vunpack.c.l.b16 %v3381
    %v5453 = vunpack.c.h.b16 %v3381
    %v5454 = vunpack.c.l.b16 %v3382
    %v5455 = vunpack.c.h.b16 %v3382
    %v5456 = vunpack.c.l.b16 %v3383
    %v5457 = vunpack.c.h.b16 %v3383
    %v5458 = vunpack.c.l.b16 %v3384
    %v5459 = vunpack.c.h.b16 %v3384
    %v5460 = vunpack.c.l.b16 %v3385
    %v5461 = vunpack.c.h.b16 %v3385
    %v5462 = vunpack.c.l.b16 %v3386
    %v5463 = vunpack.c.h.b16 %v3386
    %v5464 = vunpack.c.l.b16 %v3387
    %v5465 = vunpack.c.h.b16 %v3387
    %v5466 = vunpack.c.l.b16 %v3388
    %v5467 = vunpack.c.h.b16 %v3388
    %v5468 = vunpack.c.l.b16 %v3389
    %v5469 = vunpack.c.h.b16 %v3389
    %v5470 = vunpack.c.l.b16 %v3390
    %v5471 = vunpack.c.h.b16 %v3390
    %v5472 = vunpack.c.l.b16 %v3391
    %v5473 = vunpack.c.h.b16 %v3391
    %v5474 = vunpack.c.l.b16 %v3392
    %v5475 = vunpack.c.h.b16 %v3392
    %v5476 = vunpack.c.l.b16 %v3393
    %v5477 = vunpack.c.h.b16 %v3393
    %v5478 = vunpack.c.l.b16 %v3394
    %v5479 = vunpack.c.h.b16 %v3394
    %v5480 = vunpack.c.l.b16 %v3395
    %v5481 = vunpack.c.h.b16 %v3395
    %v5482 = vunpack.c.l.b16 %v3396
    %v5483 = vunpack.c.h.b16 %v3396
    %v5484 = vunpack.c.l.b16 %v3397
    %v5485 = vunpack.c.h.b16 %v3397
    %v5486 = vunpack.c.l.b16 %v3398
    %v5487 = vunpack.c.h.b16 %v3398
    %v5488 = vunpack.c.l.b16 %v3399
    %v5489 = vunpack.c.h.b16 %v3399
    %v5490 = vunpack.c.l.b16 %v3400
    %v5491 = vunpack.c.h.b16 %v3400
    %v5492 = vunpack.c.l.b16 %v3401
    %v5493 = vunpack.c.h.b16 %v3401
    %v5494 = vunpack.c.l.b16 %v3402
    %v5495 = vunpack.c.h.b16 %v3402
    %v5496 = vunpack.c.l.b16 %v3403
    %v5497 = vunpack.c.h.b16 %v3403
    %v5498 = vunpack.c.l.b16 %v3404
    %v5499 = vunpack.c.h.b16 %v3404
    %v5500 = vunpack.c.l.b16 %v3405
    %v5501 = vunpack.c.h.b16 %v3405
    %v5502 = vunpack.c.l.b16 %v3406
    %v5503 = vunpack.c.h.b16 %v3406
    %v5504 = vunpack.c.l.b16 %v3407
    %v5505 = vunpack.c.h.b16 %v3407
    %v5506 = vunpack.c.l.b16 %v3408
    %v5507 = vunpack.c.h.b16 %v3408
    %v5508 = vunpack.c.l.b16 %v3409
    %v5509 = vunpack.c.h.b16 %v3409
    %v5510 = vunpack.c.l.b16 %v3410
    %v5511 = vunpack.c.h.b16 %v3410
    %v5512 = vunpack.c.l.b16 %v3411
    %v5513 = vunpack.c.h.b16 %v3411
    %v5514 = vunpack.c.l.b16 %v3412
    %v5515 = vunpack.c.h.b16 %v3412
    %v5516 = vunpack.c.l.b16 %v3413
    %v5517 = vunpack.c.h.b16 %v3413
    %v5518 = vunpack.c.l.b16 %v3414
    %v5519 = vunpack.c.h.b16 %v3414
    %v5520 = vunpack.c.l.b16 %v3415
    %v5521 = vunpack.c.h.b16 %v3415
    %v5522 = vunpack.c.l.b16 %v3416
    %v5523 = vunpack.c.h.b16 %v3416
    %v5524 = vunpack.c.l.b16 %v3417
    %v5525 = vunpack.c.h.b16 %v3417
    %v5526 = vunpack.c.l.b16 %v3418
    %v5527 = vunpack.c.h.b16 %v3418
    %v5528 = vunpack.c.l.b16 %v3419
    %v5529 = vunpack.c.h.b16 %v3419
    %v5530 = vunpack.c.l.b16 %v3420
    %v5531 = vunpack.c.h.b16 %v3420
    %v5532 = vunpack.c.l.b16 %v3421
    %v5533 = vunpack.c.h.b16 %v3421
    %v5534 = vunpack.c.l.b16 %v3422
    %v5535 = vunpack.c.h.b16 %v3422
    %v5536 = vunpack.c.l.b16 %v3423
    %v5537 = vunpack.c.h.b16 %v3423
    %v5538 = vunpack.c.l.b16 %v3424
    %v5539 = vunpack.c.h.b16 %v3424
    %v5540 = vunpack.c.l.b16 %v3425
    %v5541 = vunpack.c.h.b16 %v3425
    %v5542 = vunpack.c.l.b16 %v3426
    %v5543 = vunpack.c.h.b16 %v3426
    %v5544 = vunpack.c.l.b16 %v3427
    %v5545 = vunpack.c.h.b16 %v3427
    %v5546 = vunpack.c.l.b16 %v3428
    %v5547 = vunpack.c.h.b16 %v3428
    %v5548 = vunpack.c.l.b16 %v3429
    %v5549 = vunpack.c.h.b16 %v3429
    %v5550 = vunpack.c.l.b16 %v3430
    %v5551 = vunpack.c.h.b16 %v3430
    %v5552 = vunpack.c.l.b16 %v3431
    %v5553 = vunpack.c.h.b16 %v3431
    %v5554 = vunpack.c.l.b16 %v3432
    %v5555 = vunpack.c.h.b16 %v3432
    %v5556 = vunpack.c.l.b16 %v3433
    %v5557 = vunpack.c.h.b16 %v3433
    %v5558 = vunpack.c.l.b16 %v3434
    %v5559 = vunpack.c.h.b16 %v3434
    %v5560 = vunpack.c.l.b16 %v3435
    %v5561 = vunpack.c.h.b16 %v3435
    %v5562 = vunpack.c.l.b16 %v3436
    %v5563 = vunpack.c.h.b16 %v3436
    %v5564 = vunpack.c.l.b16 %v3437
    %v5565 = vunpack.c.h.b16 %v3437
    %v5566 = vunpack.c.l.b16 %v3438
    %v5567 = vunpack.c.h.b16 %v3438
    %v5568 = vunpack.c.l.b16 %v3439
    %v5569 = vunpack.c.h.b16 %v3439
    %v5570 = vunpack.c.l.b16 %v3440
    %v5571 = vunpack.c.h.b16 %v3440
    %v5572 = vunpack.c.l.b16 %v3441
    %v5573 = vunpack.c.h.b16 %v3441
    %v5574 = vunpack.c.l.b16 %v3442
    %v5575 = vunpack.c.h.b16 %v3442
    %v5576 = vunpack.c.l.b16 %v3443
    %v5577 = vunpack.c.h.b16 %v3443
    %v5578 = vunpack.c.l.b16 %v3444
    %v5579 = vunpack.c.h.b16 %v3444
    %v5580 = vunpack.c.l.b16 %v3445
    %v5581 = vunpack.c.h.b16 %v3445
    %v5582 = vunpack.c.l.b16 %v3446
    %v5583 = vunpack.c.h.b16 %v3446
    %v5584 = vunpack.c.l.b16 %v3447
    %v5585 = vunpack.c.h.b16 %v3447
    %v5586 = vunpack.c.l.b16 %v3448
    %v5587 = vunpack.c.h.b16 %v3448
    %v5588 = vunpack.c.l.b16 %v3449
    %v5589 = vunpack.c.h.b16 %v3449
    %v5590 = vunpack.c.l.b16 %v3450
    %v5591 = vunpack.c.h.b16 %v3450
    %v5592 = vunpack.c.l.b16 %v3451
    %v5593 = vunpack.c.h.b16 %v3451
    %v5594 = vunpack.c.l.b16 %v3452
    %v5595 = vunpack.c.h.b16 %v3452
    %v5596 = vunpack.c.l.b16 %v3453
    %v5597 = vunpack.c.h.b16 %v3453
    %v5598 = vunpack.c.l.b16 %v3454
    %v5599 = vunpack.c.h.b16 %v3454
    %v5600 = vunpack.c.l.b16 %v3455
    %v5601 = vunpack.c.h.b16 %v3455
    %v5602 = vunpack.c.l.b16 %v3456
    %v5603 = vunpack.c.h.b16 %v3456
    %v5604 = vunpack.c.l.b16 %v3457
    %v5605 = vunpack.c.h.b16 %v3457
    %v5606 = vunpack.c.l.b16 %v3458
    %v5607 = vunpack.c.h.b16 %v3458
    %v5608 = vunpack.c.l.b16 %v3459
    %v5609 = vunpack.c.h.b16 %v3459
    %v5610 = vunpack.c.l.b16 %v3460
    %v5611 = vunpack.c.h.b16 %v3460
    %v5612 = vunpack.c.l.b16 %v3461
    %v5613 = vunpack.c.h.b16 %v3461
    %v5614 = vunpack.c.l.b16 %v3462
    %v5615 = vunpack.c.h.b16 %v3462
    %v5616 = vunpack.c.l.b16 %v3463
    %v5617 = vunpack.c.h.b16 %v3463
    %v5618 = vunpack.c.l.b16 %v3464
    %v5619 = vunpack.c.h.b16 %v3464
    %v5620 = vunpack.c.l.b16 %v3465
    %v5621 = vunpack.c.h.b16 %v3465
    %v5622 = vunpack.c.l.b16 %v3466
    %v5623 = vunpack.c.h.b16 %v3466
    %v5624 = vunpack.c.l.b16 %v3467
    %v5625 = vunpack.c.h.b16 %v3467
    %v5626 = vunpack.c.l.b16 %v3468
    %v5627 = vunpack.c.h.b16 %v3468
    %v5628 = vunpack.c.l.b16 %v3469
    %v5629 = vunpack.c.h.b16 %v3469
    %v5630 = vunpack.c.l.b16 %v3470
    %v5631 = vunpack.c.h.b16 %v3470
    %v5632 = vunpack.c.l.b16 %v3471
    %v5633 = vunpack.c.h.b16 %v3471
    %v5634 = vunpack.c.l.b16 %v3472
    %v5635 = vunpack.c.h.b16 %v3472
    %v5636 = vunpack.c.l.b16 %v3473
    %v5637 = vunpack.c.h.b16 %v3473
    %v5638 = vunpack.c.l.b16 %v3474
    %v5639 = vunpack.c.h.b16 %v3474
    %v5640 = vunpack.c.l.b16 %v3475
    %v5641 = vunpack.c.h.b16 %v3475
    %v5642 = vunpack.c.l.b16 %v3476
    %v5643 = vunpack.c.h.b16 %v3476
    %v5644 = vunpack.c.l.b16 %v3477
    %v5645 = vunpack.c.h.b16 %v3477
    %v5646 = vunpack.c.l.b16 %v3478
    %v5647 = vunpack.c.h.b16 %v3478
    %v5648 = vunpack.c.l.b16 %v3479
    %v5649 = vunpack.c.h.b16 %v3479
    %v5650 = vunpack.c.l.b16 %v3480
    %v5651 = vunpack.c.h.b16 %v3480
    %v5652 = vunpack.c.l.b16 %v3481
    %v5653 = vunpack.c.h.b16 %v3481
    %v5654 = vunpack.c.l.b16 %v3482
    %v5655 = vunpack.c.h.b16 %v3482
    %v5656 = vunpack.c.l.b16 %v3483
    %v5657 = vunpack.c.h.b16 %v3483
    %v5658 = vunpack.c.l.b16 %v3484
    %v5659 = vunpack.c.h.b16 %v3484
    %v5660 = vunpack.c.l.b16 %v3485
    %v5661 = vunpack.c.h.b16 %v3485
    %v5662 = vunpack.c.l.b16 %v3486
    %v5663 = vunpack.c.h.b16 %v3486
    %v5664 = vunpack.c.l.b16 %v3487
    %v5665 = vunpack.c.h.b16 %v3487
    %v5666 = vunpack.c.l.b16 %v3488
    %v5667 = vunpack.c.h.b16 %v3488
    %v5668 = vunpack.c.l.b16 %v3489
    %v5669 = vunpack.c.h.b16 %v3489
    %v5670 = vunpack.c.l.b16 %v3490
    %v5671 = vunpack.c.h.b16 %v3490
    %v5672 = vunpack.c.l.b16 %v3491
    %v5673 = vunpack.c.h.b16 %v3491
    %v5674 = vunpack.c.l.b16 %v3492
    %v5675 = vunpack.c.h.b16 %v3492
    %v5676 = vunpack.c.l.b16 %v3493
    %v5677 = vunpack.c.h.b16 %v3493
    %v5678 = vunpack.c.l.b16 %v3494
    %v5679 = vunpack.c.h.b16 %v3494
    %v5680 = vunpack.c.l.b16 %v3495
    %v5681 = vunpack.c.h.b16 %v3495
    %v5682 = vunpack.c.l.b16 %v3496
    %v5683 = vunpack.c.h.b16 %v3496
    %v5684 = vunpack.c.l.b16 %v3497
    %v5685 = vunpack.c.h.b16 %v3497
    %v5686 = vunpack.c.l.b16 %v3498
    %v5687 = vunpack.c.h.b16 %v3498
    %v5688 = vunpack.c.l.b16 %v3499
    %v5689 = vunpack.c.h.b16 %v3499
    %v5690 = vunpack.c.l.b16 %v3500
    %v5691 = vunpack.c.h.b16 %v3500
    %v5692 = vunpack.c.l.b16 %v3501
    %v5693 = vunpack.c.h.b16 %v3501
    %v5694 = vunpack.c.l.b16 %v3502
    %v5695 = vunpack.c.h.b16 %v3502
    %v5696 = vunpack.c.l.b16 %v3503
    %v5697 = vunpack.c.h.b16 %v3503
    %v5698 = vunpack.c.l.b16 %v3504
    %v5699 = vunpack.c.h.b16 %v3504
    %v5700 = vunpack.c.l.b16 %v3505
    %v5701 = vunpack.c.h.b16 %v3505
    %v5702 = vunpack.c.l.b16 %v3506
    %v5703 = vunpack.c.h.b16 %v3506
    %v5704 = vunpack.c.l.b16 %v3507
    %v5705 = vunpack.c.h.b16 %v3507
    %v5706 = vunpack.c.l.b16 %v3508
    %v5707 = vunpack.c.h.b16 %v3508
    %v5708 = vunpack.c.l.b16 %v3509
    %v5709 = vunpack.c.h.b16 %v3509
    %v5710 = vunpack.c.l.b16 %v3510
    %v5711 = vunpack.c.h.b16 %v3510
    %v5712 = vunpack.c.l.b16 %v3511
    %v5713 = vunpack.c.h.b16 %v3511
    %v5714 = vunpack.c.l.b16 %v3512
    %v5715 = vunpack.c.h.b16 %v3512
    %v5716 = vunpack.c.l.b16 %v3513
    %v5717 = vunpack.c.h.b16 %v3513
    %v5718 = vunpack.c.l.b16 %v3514
    %v5719 = vunpack.c.h.b16 %v3514
    %v5720 = vunpack.c.l.b16 %v3515
    %v5721 = vunpack.c.h.b16 %v3515
    %v5722 = vunpack.c.l.b16 %v3516
    %v5723 = vunpack.c.h.b16 %v3516
    %v5724 = vunpack.c.l.b16 %v3517
    %v5725 = vunpack.c.h.b16 %v3517
    %v5726 = vunpack.c.l.b16 %v3518
    %v5727 = vunpack.c.h.b16 %v3518
    %v5728 = vunpack.c.l.b16 %v3519
    %v5729 = vunpack.c.h.b16 %v3519
    %v5730 = vunpack.c.l.b16 %v3520
    %v5731 = vunpack.c.h.b16 %v3520
    %v5732 = vunpack.c.l.b16 %v3521
    %v5733 = vunpack.c.h.b16 %v3521
    %v5734 = vunpack.c.l.b16 %v3522
    %v5735 = vunpack.c.h.b16 %v3522
    %v5736 = vunpack.c.l.b16 %v3523
    %v5737 = vunpack.c.h.b16 %v3523
    %v5738 = vunpack.c.l.b16 %v3524
    %v5739 = vunpack.c.h.b16 %v3524
    %v5740 = vunpack.c.l.b16 %v3525
    %v5741 = vunpack.c.h.b16 %v3525
    %v5742 = vunpack.c.l.b16 %v3526
    %v5743 = vunpack.c.h.b16 %v3526
    %v5744 = vunpack.c.l.b16 %v3527
    %v5745 = vunpack.c.h.b16 %v3527
    %v5746 = vunpack.c.l.b16 %v3528
    %v5747 = vunpack.c.h.b16 %v3528
    %v5748 = vunpack.c.l.b16 %v3529
    %v5749 = vunpack.c.h.b16 %v3529
    %v5750 = vunpack.c.l.b16 %v3530
    %v5751 = vunpack.c.h.b16 %v3530
    %v5752 = vunpack.c.l.b16 %v3531
    %v5753 = vunpack.c.h.b16 %v3531
    %v5754 = vunpack.c.l.b16 %v3532
    %v5755 = vunpack.c.h.b16 %v3532
    %v5756 = vunpack.c.l.b16 %v3533
    %v5757 = vunpack.c.h.b16 %v3533
    %v5758 = vunpack.c.l.b16 %v3534
    %v5759 = vunpack.c.h.b16 %v3534
    %v5760 = vunpack.c.l.b16 %v3535
    %v5761 = vunpack.c.h.b16 %v3535
    %v5762 = vunpack.c.l.b16 %v3536
    %v5763 = vunpack.c.h.b16 %v3536
    %v5764 = vunpack.c.l.b16 %v3537
    %v5765 = vunpack.c.h.b16 %v3537
    %v5766 = vunpack.c.l.b16 %v3538
    %v5767 = vunpack.c.h.b16 %v3538
    %v5768 = vunpack.c.l.b16 %v3539
    %v5769 = vunpack.c.h.b16 %v3539
    %v5770 = vunpack.c.l.b16 %v3540
    %v5771 = vunpack.c.h.b16 %v3540
    %v5772 = vunpack.c.l.b16 %v3541
    %v5773 = vunpack.c.h.b16 %v3541
    %v5774 = vunpack.c.l.b16 %v3542
    %v5775 = vunpack.c.h.b16 %v3542
    %v5776 = vunpack.c.l.b16 %v3543
    %v5777 = vunpack.c.h.b16 %v3543
    %v5778 = vunpack.c.l.b16 %v3544
    %v5779 = vunpack.c.h.b16 %v3544
    %v5780 = vunpack.c.l.b16 %v3545
    %v5781 = vunpack.c.h.b16 %v3545
    %v5782 = vunpack.c.l.b16 %v3546
    %v5783 = vunpack.c.h.b16 %v3546
    %v5784 = vunpack.c.l.b16 %v3547
    %v5785 = vunpack.c.h.b16 %v3547
    %v5786 = vunpack.c.l.b16 %v3548
    %v5787 = vunpack.c.h.b16 %v3548
    %v5788 = vunpack.c.l.b16 %v3549
    %v5789 = vunpack.c.h.b16 %v3549
    %v5790 = vunpack.c.l.b16 %v3550
    %v5791 = vunpack.c.h.b16 %v3550
    %v5792 = vunpack.c.l.b16 %v3551
    %v5793 = vunpack.c.h.b16 %v3551
    %v5794 = vunpack.c.l.b16 %v3552
    %v5795 = vunpack.c.h.b16 %v3552
    %v5796 = vunpack.c.l.b16 %v3553
    %v5797 = vunpack.c.h.b16 %v3553
    %v5798 = vunpack.c.l.b16 %v3554
    %v5799 = vunpack.c.h.b16 %v3554
    %v5800 = vunpack.c.l.b16 %v3555
    %v5801 = vunpack.c.h.b16 %v3555
    %v5802 = vunpack.c.l.b16 %v3556
    %v5803 = vunpack.c.h.b16 %v3556
    %v5804 = vunpack.c.l.b16 %v3557
    %v5805 = vunpack.c.h.b16 %v3557
    %v5806 = vunpack.c.l.b16 %v3558
    %v5807 = vunpack.c.h.b16 %v3558
    %v5808 = vunpack.c.l.b16 %v3559
    %v5809 = vunpack.c.h.b16 %v3559
    %v5810 = vunpack.c.l.b16 %v3560
    %v5811 = vunpack.c.h.b16 %v3560
    %v5812 = vunpack.c.l.b16 %v3561
    %v5813 = vunpack.c.h.b16 %v3561
    %v5814 = vunpack.c.l.b16 %v3562
    %v5815 = vunpack.c.h.b16 %v3562
    %v5816 = vunpack.c.l.b16 %v3563
    %v5817 = vunpack.c.h.b16 %v3563
    %v5818 = vunpack.c.l.b16 %v3564
    %v5819 = vunpack.c.h.b16 %v3564
    %v5820 = vunpack.c.l.b16 %v3565
    %v5821 = vunpack.c.h.b16 %v3565
    %v5822 = vunpack.c.l.b16 %v3566
    %v5823 = vunpack.c.h.b16 %v3566
    %v5824 = vunpack.c.l.b16 %v3567
    %v5825 = vunpack.c.h.b16 %v3567
    %v5826 = vunpack.c.l.b16 %v3568
    %v5827 = vunpack.c.h.b16 %v3568
    %v5828 = vunpack.c.l.b16 %v3569
    %v5829 = vunpack.c.h.b16 %v3569
    %v5830 = vunpack.c.l.b16 %v3570
    %v5831 = vunpack.c.h.b16 %v3570
    %v5832 = vunpack.c.l.b16 %v3571
    %v5833 = vunpack.c.h.b16 %v3571
    %v5834 = vunpack.c.l.b16 %v3572
    %v5835 = vunpack.c.h.b16 %v3572
    %v5836 = vunpack.c.l.b16 %v3573
    %v5837 = vunpack.c.h.b16 %v3573
    %v5838 = vunpack.c.l.b16 %v3574
    %v5839 = vunpack.c.h.b16 %v3574
    %v5840 = vunpack.c.l.b16 %v3575
    %v5841 = vunpack.c.h.b16 %v3575
    %v5842 = vunpack.c.l.b16 %v3576
    %v5843 = vunpack.c.h.b16 %v3576
    %v5844 = vunpack.c.l.b16 %v3577
    %v5845 = vunpack.c.h.b16 %v3577
    %v5846 = vunpack.c.l.b16 %v3578
    %v5847 = vunpack.c.h.b16 %v3578
    %v5848 = vunpack.c.l.b16 %v3579
    %v5849 = vunpack.c.h.b16 %v3579
    %v5850 = vunpack.c.l.b16 %v3580
    %v5851 = vunpack.c.h.b16 %v3580
    %v5852 = vunpack.c.l.b16 %v3581
    %v5853 = vunpack.c.h.b16 %v3581
    %v5854 = vunpack.c.l.b16 %v3582
    %v5855 = vunpack.c.h.b16 %v3582
    %v5856 = vunpack.c.l.b16 %v3583
    %v5857 = vunpack.c.h.b16 %v3583
    %v5858 = vunpack.c.l.b16 %v3584
    %v5859 = vunpack.c.h.b16 %v3584
    %v5860 = vunpack.c.l.b16 %v3585
    %v5861 = vunpack.c.h.b16 %v3585
    %v5862 = vunpack.c.l.b16 %v3586
    %v5863 = vunpack.c.h.b16 %v3586
    %v5864 = vunpack.c.l.b16 %v3587
    %v5865 = vunpack.c.h.b16 %v3587
    %v5866 = vunpack.c.l.b16 %v3588
    %v5867 = vunpack.c.h.b16 %v3588
    %v5868 = vunpack.c.l.b16 %v3589
    %v5869 = vunpack.c.h.b16 %v3589
    %v5870 = vunpack.c.l.b16 %v3590
    %v5871 = vunpack.c.h.b16 %v3590
    %v5872 = vunpack.c.l.b16 %v3591
    %v5873 = vunpack.c.h.b16 %v3591
    %v5874 = vunpack.c.l.b16 %v3592
    %v5875 = vunpack.c.h.b16 %v3592
    %v5876 = vunpack.c.l.b16 %v3593
    %v5877 = vunpack.c.h.b16 %v3593
    %v5878 = vunpack.c.l.b16 %v3594
    %v5879 = vunpack.c.h.b16 %v3594
    %v5880 = vunpack.c.l.b16 %v3595
    %v5881 = vunpack.c.h.b16 %v3595
    %v5882 = vunpack.c.l.b16 %v3596
    %v5883 = vunpack.c.h.b16 %v3596
    %v5884 = vunpack.c.l.b16 %v3597
    %v5885 = vunpack.c.h.b16 %v3597
    %v5886 = vunpack.c.l.b16 %v3598
    %v5887 = vunpack.c.h.b16 %v3598
    %v5888 = vunpack.c.l.b16 %v3599
    %v5889 = vunpack.c.h.b16 %v3599
    %v5890 = vunpack.c.l.b16 %v3600
    %v5891 = vunpack.c.h.b16 %v3600
    %v5892 = vunpack.c.l.b16 %v3601
    %v5893 = vunpack.c.h.b16 %v3601
    %v5894 = vunpack.c.l.b16 %v3602
    %v5895 = vunpack.c.h.b16 %v3602
    %v5896 = vunpack.c.l.b16 %v3603
    %v5897 = vunpack.c.h.b16 %v3603
    %v5898 = vunpack.c.l.b16 %v3604
    %v5899 = vunpack.c.h.b16 %v3604
    %v5900 = vunpack.c.l.b16 %v3605
    %v5901 = vunpack.c.h.b16 %v3605
    %v5902 = vunpack.c.l.b16 %v3606
    %v5903 = vunpack.c.h.b16 %v3606
    %v5904 = vunpack.c.l.b16 %v3607
    %v5905 = vunpack.c.h.b16 %v3607
    %v5906 = vunpack.c.l.b16 %v3608
    %v5907 = vunpack.c.h.b16 %v3608
    %v5908 = vunpack.c.l.b16 %v3609
    %v5909 = vunpack.c.h.b16 %v3609
    %v5910 = vunpack.c.l.b16 %v3610
    %v5911 = vunpack.c.h.b16 %v3610
    %v5912 = vunpack.c.l.b16 %v3611
    %v5913 = vunpack.c.h.b16 %v3611
    %v5914 = vunpack.c.l.b16 %v3612
    %v5915 = vunpack.c.h.b16 %v3612
    %v5916 = vunpack.c.l.b16 %v3613
    %v5917 = vunpack.c.h.b16 %v3613
    %v5918 = vunpack.c.l.b16 %v3614
    %v5919 = vunpack.c.h.b16 %v3614
    %v5920 = vunpack.c.l.b16 %v3615
    %v5921 = vunpack.c.h.b16 %v3615
    %v5922 = vunpack.c.l.b16 %v3616
    %v5923 = vunpack.c.h.b16 %v3616
    %v5924 = vunpack.c.l.b16 %v3617
    %v5925 = vunpack.c.h.b16 %v3617
    %v5926 = vunpack.c.l.b16 %v3618
    %v5927 = vunpack.c.h.b16 %v3618
    %v5928 = vunpack.c.l.b16 %v3619
    %v5929 = vunpack.c.h.b16 %v3619
    %v5930 = vunpack.c.l.b16 %v3620
    %v5931 = vunpack.c.h.b16 %v3620
    %v5932 = vunpack.c.l.b16 %v3621
    %v5933 = vunpack.c.h.b16 %v3621
    %v5934 = vunpack.c.l.b16 %v3622
    %v5935 = vunpack.c.h.b16 %v3622
    %v5936 = vunpack.c.l.b16 %v3623
    %v5937 = vunpack.c.h.b16 %v3623
    %v5938 = vunpack.c.l.b16 %v3624
    %v5939 = vunpack.c.h.b16 %v3624
    %v5940 = vunpack.c.l.b16 %v3625
    %v5941 = vunpack.c.h.b16 %v3625
    %v5942 = vunpack.c.l.b16 %v3626
    %v5943 = vunpack.c.h.b16 %v3626
    %v5944 = vunpack.c.l.b16 %v3627
    %v5945 = vunpack.c.h.b16 %v3627
    %v5946 = vunpack.c.l.b16 %v3628
    %v5947 = vunpack.c.h.b16 %v3628
    %v5948 = vunpack.c.l.b16 %v3629
    %v5949 = vunpack.c.h.b16 %v3629
    %v5950 = vunpack.c.l.b16 %v3630
    %v5951 = vunpack.c.h.b16 %v3630
    %v5952 = vunpack.c.l.b16 %v3631
    %v5953 = vunpack.c.h.b16 %v3631
    %v5954 = vunpack.c.l.b16 %v3632
    %v5955 = vunpack.c.h.b16 %v3632
    %v5956 = vunpack.c.l.b16 %v3633
    %v5957 = vunpack.c.h.b16 %v3633
    %v5958 = vunpack.c.l.b16 %v3634
    %v5959 = vunpack.c.h.b16 %v3634
    %v5960 = vunpack.c.l.b16 %v3635
    %v5961 = vunpack.c.h.b16 %v3635
    %v5962 = vunpack.c.l.b16 %v3636
    %v5963 = vunpack.c.h.b16 %v3636
    %v5964 = vunpack.c.l.b16 %v3637
    %v5965 = vunpack.c.h.b16 %v3637
    %v5966 = vunpack.c.l.b16 %v3638
    %v5967 = vunpack.c.h.b16 %v3638
    %v5968 = vunpack.c.l.b16 %v3639
    %v5969 = vunpack.c.h.b16 %v3639
    %v5970 = vunpack.c.l.b16 %v3640
    %v5971 = vunpack.c.h.b16 %v3640
    %v5972 = vunpack.c.l.b16 %v3641
    %v5973 = vunpack.c.h.b16 %v3641
    %v5974 = vunpack.c.l.b16 %v3642
    %v5975 = vunpack.c.h.b16 %v3642
    %v5976 = vunpack.c.l.b16 %v3643
    %v5977 = vunpack.c.h.b16 %v3643
    %v5978 = vunpack.c.l.b16 %v3644
    %v5979 = vunpack.c.h.b16 %v3644
    %v5980 = vunpack.c.l.b16 %v3645
    %v5981 = vunpack.c.h.b16 %v3645
    %v5982 = vunpack.c.l.b16 %v3646
    %v5983 = vunpack.c.h.b16 %v3646
    %v5984 = vunpack.c.l.b16 %v3647
    %v5985 = vunpack.c.h.b16 %v3647
    %v5986 = vunpack.c.l.b16 %v3648
    %v5987 = vunpack.c.h.b16 %v3648
    %v5988 = vunpack.c.l.b16 %v3649
    %v5989 = vunpack.c.h.b16 %v3649
    %v5990 = vunpack.c.l.b16 %v3650
    %v5991 = vunpack.c.h.b16 %v3650
    %v5992 = vunpack.c.l.b16 %v3651
    %v5993 = vunpack.c.h.b16 %v3651
    %v5994 = vunpack.c.l.b16 %v3652
    %v5995 = vunpack.c.h.b16 %v3652
    %v5996 = vunpack.c.l.b16 %v3653
    %v5997 = vunpack.c.h.b16 %v3653
    %v5998 = vunpack.c.l.b16 %v3654
    %v5999 = vunpack.c.h.b16 %v3654
    %v6000 = vunpack.c.l.b16 %v3655
    %v6001 = vunpack.c.h.b16 %v3655
    %v6002 = vunpack.c.l.b16 %v3656
    %v6003 = vunpack.c.h.b16 %v3656
    %v6004 = vunpack.c.l.b16 %v3657
    %v6005 = vunpack.c.h.b16 %v3657
    %v6006 = vunpack.c.l.b16 %v3658
    %v6007 = vunpack.c.h.b16 %v3658
    %v6008 = vunpack.c.l.b16 %v3659
    %v6009 = vunpack.c.h.b16 %v3659
    %v6010 = vunpack.c.l.b16 %v3660
    %v6011 = vunpack.c.h.b16 %v3660
    %v6012 = vunpack.c.l.b16 %v3661
    %v6013 = vunpack.c.h.b16 %v3661
    %v6014 = vunpack.c.l.b16 %v3662
    %v6015 = vunpack.c.h.b16 %v3662
    %v6016 = vunpack.c.l.b16 %v3663
    %v6017 = vunpack.c.h.b16 %v3663
    %v6018 = vunpack.c.l.b16 %v3664
    %v6019 = vunpack.c.h.b16 %v3664
    %v6020 = vunpack.c.l.b16 %v3665
    %v6021 = vunpack.c.h.b16 %v3665
    %v6022 = vunpack.c.l.b16 %v3666
    %v6023 = vunpack.c.h.b16 %v3666
    %v6024 = vunpack.c.l.b16 %v3667
    %v6025 = vunpack.c.h.b16 %v3667
    %v6026 = vunpack.c.l.b16 %v3668
    %v6027 = vunpack.c.h.b16 %v3668
    %v6028 = vunpack.c.l.b16 %v3669
    %v6029 = vunpack.c.h.b16 %v3669
    %v6030 = vunpack.c.l.b16 %v3670
    %v6031 = vunpack.c.h.b16 %v3670
    %v6032 = vunpack.c.l.b16 %v3671
    %v6033 = vunpack.c.h.b16 %v3671
    %v6034 = vunpack.c.l.b16 %v3672
    %v6035 = vunpack.c.h.b16 %v3672
    %v6036 = vunpack.c.l.b16 %v3673
    %v6037 = vunpack.c.h.b16 %v3673
    %v6038 = vunpack.c.l.b16 %v3674
    %v6039 = vunpack.c.h.b16 %v3674
    %v6040 = vunpack.c.l.b16 %v3675
    %v6041 = vunpack.c.h.b16 %v3675
    %v6042 = vunpack.c.l.b16 %v3676
    %v6043 = vunpack.c.h.b16 %v3676
    %v6044 = vunpack.c.l.b16 %v3677
    %v6045 = vunpack.c.h.b16 %v3677
    %v6046 = vunpack.c.l.b16 %v3678
    %v6047 = vunpack.c.h.b16 %v3678
    %v6048 = vunpack.c.l.b16 %v3679
    %v6049 = vunpack.c.h.b16 %v3679
    %v6050 = vunpack.c.l.b16 %v3680
    %v6051 = vunpack.c.h.b16 %v3680
    %v6052 = vunpack.c.l.b16 %v3681
    %v6053 = vunpack.c.h.b16 %v3681
    %v6054 = vunpack.c.l.b16 %v3682
    %v6055 = vunpack.c.h.b16 %v3682
    %v6056 = vunpack.c.l.b16 %v3683
    %v6057 = vunpack.c.h.b16 %v3683
    %v6058 = vunpack.c.l.b16 %v3684
    %v6059 = vunpack.c.h.b16 %v3684
    %v6060 = vunpack.c.l.b16 %v3685
    %v6061 = vunpack.c.h.b16 %v3685
    %v6062 = vunpack.c.l.b16 %v3686
    %v6063 = vunpack.c.h.b16 %v3686
    %v6064 = vunpack.c.l.b16 %v3687
    %v6065 = vunpack.c.h.b16 %v3687
    %v6066 = vunpack.c.l.b16 %v3688
    %v6067 = vunpack.c.h.b16 %v3688
    %v6068 = vunpack.c.l.b16 %v3689
    %v6069 = vunpack.c.h.b16 %v3689
    %v6070 = vunpack.c.l.b16 %v3690
    %v6071 = vunpack.c.h.b16 %v3690
    %v6072 = vunpack.c.l.b16 %v3691
    %v6073 = vunpack.c.h.b16 %v3691
    %v6074 = vunpack.c.l.b16 %v3692
    %v6075 = vunpack.c.h.b16 %v3692
    %v6076 = vunpack.c.l.b16 %v3693
    %v6077 = vunpack.c.h.b16 %v3693
    %v6078 = vunpack.c.l.b16 %v3694
    %v6079 = vunpack.c.h.b16 %v3694
    %v6080 = vunpack.c.l.b16 %v3695
    %v6081 = vunpack.c.h.b16 %v3695
    %v6082 = vunpack.c.l.b16 %v3696
    %v6083 = vunpack.c.h.b16 %v3696
    %v6084 = vunpack.c.l.b16 %v3697
    %v6085 = vunpack.c.h.b16 %v3697
    %v6086 = vunpack.c.l.b16 %v3698
    %v6087 = vunpack.c.h.b16 %v3698
    %v6088 = vunpack.c.l.b16 %v3699
    %v6089 = vunpack.c.h.b16 %v3699
    %v6090 = vunpack.c.l.b16 %v3700
    %v6091 = vunpack.c.h.b16 %v3700
    %v6092 = vunpack.c.l.b16 %v3701
    %v6093 = vunpack.c.h.b16 %v3701
    %v6094 = vunpack.c.l.b16 %v3702
    %v6095 = vunpack.c.h.b16 %v3702
    %v6096 = vunpack.c.l.b16 %v3703
    %v6097 = vunpack.c.h.b16 %v3703
    %v6098 = vunpack.c.l.b16 %v3704
    %v6099 = vunpack.c.h.b16 %v3704
    %v6100 = vunpack.c.l.b16 %v3705
    %v6101 = vunpack.c.h.b16 %v3705
    %v6102 = vunpack.c.l.b16 %v3706
    %v6103 = vunpack.c.h.b16 %v3706
    %v6104 = vunpack.c.l.b16 %v3707
    %v6105 = vunpack.c.h.b16 %v3707
    %v6106 = vunpack.c.l.b16 %v3708
    %v6107 = vunpack.c.h.b16 %v3708
    %v6108 = vunpack.c.l.b16 %v3709
    %v6109 = vunpack.c.h.b16 %v3709
    %v6110 = vunpack.c.l.b16 %v3710
    %v6111 = vunpack.c.h.b16 %v3710
    %v6112 = vunpack.c.l.b16 %v3711
    %v6113 = vunpack.c.h.b16 %v3711
    %v6114 = vunpack.c.l.b16 %v3712
    %v6115 = vunpack.c.h.b16 %v3712
    %v6116 = vunpack.c.l.b16 %v3713
    %v6117 = vunpack.c.h.b16 %v3713
    %v6118 = vunpack.c.l.b16 %v3714
    %v6119 = vunpack.c.h.b16 %v3714
    %v6120 = vunpack.c.l.b16 %v3715
    %v6121 = vunpack.c.h.b16 %v3715
    %v6122 = vunpack.c.l.b16 %v3716
    %v6123 = vunpack.c.h.b16 %v3716
    %v6124 = vunpack.c.l.b16 %v3717
    %v6125 = vunpack.c.h.b16 %v3717
    %v6126 = vunpack.c.l.b16 %v3718
    %v6127 = vunpack.c.h.b16 %v3718
    %v6128 = vunpack.c.l.b16 %v3719
    %v6129 = vunpack.c.h.b16 %v3719
    %v6130 = vunpack.c.l.b16 %v3720
    %v6131 = vunpack.c.h.b16 %v3720
    %v6132 = vunpack.c.l.b16 %v3721
    %v6133 = vunpack.c.h.b16 %v3721
    %v6134 = vunpack.c.l.b16 %v3722
    %v6135 = vunpack.c.h.b16 %v3722
    %v6136 = vunpack.c.l.b16 %v3723
    %v6137 = vunpack.c.h.b16 %v3723
    %v6138 = vunpack.c.l.b16 %v3724
    %v6139 = vunpack.c.h.b16 %v3724
    %v6140 = vunpack.c.l.b16 %v3725
    %v6141 = vunpack.c.h.b16 %v3725
    %v6142 = vunpack.c.l.b16 %v3726
    %v6143 = vunpack.c.h.b16 %v3726
    %v6144 = vunpack.c.l.b16 %v3727
    %v6145 = vunpack.c.h.b16 %v3727
    %v6146 = vunpack.c.l.b16 %v3728
    %v6147 = vunpack.c.h.b16 %v3728
    %v6148 = vunpack.c.l.b16 %v3729
    %v6149 = vunpack.c.h.b16 %v3729
    %v6150 = vunpack.c.l.b16 %v3730
    %v6151 = vunpack.c.h.b16 %v3730
    %v6152 = vunpack.c.l.b16 %v3731
    %v6153 = vunpack.c.h.b16 %v3731
    %v6154 = vunpack.c.l.b16 %v3732
    %v6155 = vunpack.c.h.b16 %v3732
    %v6156 = vunpack.c.l.b16 %v3733
    %v6157 = vunpack.c.h.b16 %v3733
    %v6158 = vunpack.c.l.b16 %v3734
    %v6159 = vunpack.c.h.b16 %v3734
    %v6160 = vunpack.c.l.b16 %v3735
    %v6161 = vunpack.c.h.b16 %v3735
    %v6162 = vunpack.c.l.b16 %v3736
    %v6163 = vunpack.c.h.b16 %v3736
    %v6164 = vunpack.c.l.b16 %v3737
    %v6165 = vunpack.c.h.b16 %v3737
    %v6166 = vunpack.c.l.b16 %v3738
    %v6167 = vunpack.c.h.b16 %v3738
    %v6168 = vunpack.c.l.b16 %v3739
    %v6169 = vunpack.c.h.b16 %v3739
    %v6170 = vpack.c.b16 %v4658, %v4634
    %v6171 = vpack.c.b16 %v4659, %v4635
    %v6172 = vpack.c.b16 %v4660, %v4636
    %v6173 = vpack.c.b16 %v4661, %v4637
    %v6174 = vpack.c.b16 %v4662, %v4638
    %v6175 = vpack.c.b16 %v4663, %v4639
    %v6176 = vpack.c.b16 %v4664, %v4640
    %v6177 = vpack.c.b16 %v4665, %v4641
    %v6178 = vpack.c.b16 %v4666, %v4642
    %v6179 = vpack.c.b16 %v4667, %v4643
    %v6180 = vpack.c.b16 %v4668, %v4644
    %v6181 = vpack.c.b16 %v4669, %v4645
    %v6182 = vpack.c.b16 %v4670, %v4646
    %v6183 = vpack.c.b16 %v4671, %v4647
    %v6184 = vpack.c.b16 %v4672, %v4648
    %v6185 = vpack.c.b16 %v4673, %v4649
    %v6186 = vpack.c.b16 %v4674, %v4650
    %v6187 = vpack.c.b16 %v4675, %v4651
    %v6188 = vpack.c.b16 %v4676, %v4652
    %v6189 = vpack.c.b16 %v4677, %v4653
    %v6190 = vpack.c.b16 %v4678, %v4654
    %v6191 = vpack.c.b16 %v4679, %v4655
    %v6192 = vpack.c.b16 %v4680, %v4656
    %v6193 = vpack.c.b16 %v4681, %v4657
    %v6194 = vpack.c.b16 %v4706, %v4682
    %v6195 = vpack.c.b16 %v4707, %v4683
    %v6196 = vpack.c.b16 %v4708, %v4684
    %v6197 = vpack.c.b16 %v4709, %v4685
    %v6198 = vpack.c.b16 %v4710, %v4686
    %v6199 = vpack.c.b16 %v4711, %v4687
    %v6200 = vpack.c.b16 %v4712, %v4688
    %v6201 = vpack.c.b16 %v4713, %v4689
    %v6202 = vpack.c.b16 %v4714, %v4690
    %v6203 = vpack.c.b16 %v4715, %v4691
    %v6204 = vpack.c.b16 %v4716, %v4692
    %v6205 = vpack.c.b16 %v4717, %v4693
    %v6206 = vpack.c.b16 %v4718, %v4694
    %v6207 = vpack.c.b16 %v4719, %v4695
    %v6208 = vpack.c.b16 %v4720, %v4696
    %v6209 = vpack.c.b16 %v4721, %v4697
    %v6210 = vpack.c.b16 %v4722, %v4698
    %v6211 = vpack.c.b16 %v4723, %v4699
    %v6212 = vpack.c.b16 %v4724, %v4700
    %v6213 = vpack.c.b16 %v4725, %v4701
    %v6214 = vpack.c.b16 %v4726, %v4702
    %v6215 = vpack.c.b16 %v4727, %v4703
    %v6216 = vpack.c.b16 %v4728, %v4704
    %v6217 = vpack.c.b16 %v4729, %v4705
    %v6218 = vpack.c.b16 %v4754, %v4730
    %v6219 = vpack.c.b16 %v4755, %v4731
    %v6220 = vpack.c.b16 %v4756, %v4732
    %v6221 = vpack.c.b16 %v4757, %v4733
    %v6222 = vpack.c.b16 %v4758, %v4734
    %v6223 = vpack.c.b16 %v4759, %v4735
    %v6224 = vpack.c.b16 %v4760, %v4736
    %v6225 = vpack.c.b16 %v4761, %v4737
    %v6226 = vpack.c.b16 %v4762, %v4738
    %v6227 = vpack.c.b16 %v4763, %v4739
    %v6228 = vpack.c.b16 %v4764, %v4740
    %v6229 = vpack.c.b16 %v4765, %v4741
    %v6230 = vpack.c.b16 %v4766, %v4742
    %v6231 = vpack.c.b16 %v4767, %v4743
    %v6232 = vpack.c.b16 %v4768, %v4744
    %v6233 = vpack.c.b16 %v4769, %v4745
    %v6234 = vpack.c.b16 %v4770, %v4746
    %v6235 = vpack.c.b16 %v4771, %v4747
    %v6236 = vpack.c.b16 %v4772, %v4748
    %v6237 = vpack.c.b16 %v4773, %v4749
    %v6238 = vpack.c.b16 %v4774, %v4750
    %v6239 = vpack.c.b16 %v4775, %v4751
    %v6240 = vpack.c.b16 %v4776, %v4752
    %v6241 = vpack.c.b16 %v4777, %v4753
    %v6242 = vpack.c.b16 %v4802, %v4778
    %v6243 = vpack.c.b16 %v4803, %v4779
    %v6244 = vpack.c.b16 %v4804, %v4780
    %v6245 = vpack.c.b16 %v4805, %v4781
    %v6246 = vpack.c.b16 %v4806, %v4782
    %v6247 = vpack.c.b16 %v4807, %v4783
    %v6248 = vpack.c.b16 %v4808, %v4784
    %v6249 = vpack.c.b16 %v4809, %v4785
    %v6250 = vpack.c.b16 %v4810, %v4786
    %v6251 = vpack.c.b16 %v4811, %v4787
    %v6252 = vpack.c.b16 %v4812, %v4788
    %v6253 = vpack.c.b16 %v4813, %v4789
    %v6254 = vpack.c.b16 %v4814, %v4790
    %v6255 = vpack.c.b16 %v4815, %v4791
    %v6256 = vpack.c.b16 %v4816, %v4792
    %v6257 = vpack.c.b16 %v4817, %v4793
    %v6258 = vpack.c.b16 %v4818, %v4794
    %v6259 = vpack.c.b16 %v4819, %v4795
    %v6260 = vpack.c.b16 %v4820, %v4796
    %v6261 = vpack.c.b16 %v4821, %v4797
    %v6262 = vpack.c.b16 %v4822, %v4798
    %v6263 = vpack.c.b16 %v4823, %v4799
    %v6264 = vpack.c.b16 %v4824, %v4800
    %v6265 = vpack.c.b16 %v4825, %v4801
    %v6266 = vpack.c.b16 %v4850, %v4826
    %v6267 = vpack.c.b16 %v4851, %v4827
    %v6268 = vpack.c.b16 %v4852, %v4828
    %v6269 = vpack.c.b16 %v4853, %v4829
    %v6270 = vpack.c.b16 %v4854, %v4830
    %v6271 = vpack.c.b16 %v4855, %v4831
    %v6272 = vpack.c.b16 %v4856, %v4832
    %v6273 = vpack.c.b16 %v4857, %v4833
    %v6274 = vpack.c.b16 %v4858, %v4834
    %v6275 = vpack.c.b16 %v4859, %v4835
    %v6276 = vpack.c.b16 %v4860, %v4836
    %v6277 = vpack.c.b16 %v4861, %v4837
    %v6278 = vpack.c.b16 %v4862, %v4838
    %v6279 = vpack.c.b16 %v4863, %v4839
    %v6280 = vpack.c.b16 %v4864, %v4840
    %v6281 = vpack.c.b16 %v4865, %v4841
    %v6282 = vpack.c.b16 %v4866, %v4842
    %v6283 = vpack.c.b16 %v4867, %v4843
    %v6284 = vpack.c.b16 %v4868, %v4844
    %v6285 = vpack.c.b16 %v4869, %v4845
    %v6286 = vpack.c.b16 %v4870, %v4846
    %v6287 = vpack.c.b16 %v4871, %v4847
    %v6288 = vpack.c.b16 %v4872, %v4848
    %v6289 = vpack.c.b16 %v4873, %v4849
    %v6290 = vpack.c.b16 %v4898, %v4874
    %v6291 = vpack.c.b16 %v4899, %v4875
    %v6292 = vpack.c.b16 %v4900, %v4876
    %v6293 = vpack.c.b16 %v4901, %v4877
    %v6294 = vpack.c.b16 %v4902, %v4878
    %v6295 = vpack.c.b16 %v4903, %v4879
    %v6296 = vpack.c.b16 %v4904, %v4880
    %v6297 = vpack.c.b16 %v4905, %v4881
    %v6298 = vpack.c.b16 %v4906, %v4882
    %v6299 = vpack.c.b16 %v4907, %v4883
    %v6300 = vpack.c.b16 %v4908, %v4884
    %v6301 = vpack.c.b16 %v4909, %v4885
    %v6302 = vpack.c.b16 %v4910, %v4886
    %v6303 = vpack.c.b16 %v4911, %v4887
    %v6304 = vpack.c.b16 %v4912, %v4888
    %v6305 = vpack.c.b16 %v4913, %v4889
    %v6306 = vpack.c.b16 %v4914, %v4890
    %v6307 = vpack.c.b16 %v4915, %v4891
    %v6308 = vpack.c.b16 %v4916, %v4892
    %v6309 = vpack.c.b16 %v4917, %v4893
    %v6310 = vpack.c.b16 %v4918, %v4894
    %v6311 = vpack.c.b16 %v4919, %v4895
    %v6312 = vpack.c.b16 %v4920, %v4896
    %v6313 = vpack.c.b16 %v4921, %v4897
    %v6314 = vpack.c.b16 %v4946, %v4922
    %v6315 = vpack.c.b16 %v4947, %v4923
    %v6316 = vpack.c.b16 %v4948, %v4924
    %v6317 = vpack.c.b16 %v4949, %v4925
    %v6318 = vpack.c.b16 %v4950, %v4926
    %v6319 = vpack.c.b16 %v4951, %v4927
    %v6320 = vpack.c.b16 %v4952, %v4928
    %v6321 = vpack.c.b16 %v4953, %v4929
    %v6322 = vpack.c.b16 %v4954, %v4930
    %v6323 = vpack.c.b16 %v4955, %v4931
    %v6324 = vpack.c.b16 %v4956, %v4932
    %v6325 = vpack.c.b16 %v4957, %v4933
    %v6326 = vpack.c.b16 %v4958, %v4934
    %v6327 = vpack.c.b16 %v4959, %v4935
    %v6328 = vpack.c.b16 %v4960, %v4936
    %v6329 = vpack.c.b16 %v4961, %v4937
    %v6330 = vpack.c.b16 %v4962, %v4938
    %v6331 = vpack.c.b16 %v4963, %v4939
    %v6332 = vpack.c.b16 %v4964, %v4940
    %v6333 = vpack.c.b16 %v4965, %v4941
    %v6334 = vpack.c.b16 %v4966, %v4942
    %v6335 = vpack.c.b16 %v4967, %v4943
    %v6336 = vpack.c.b16 %v4968, %v4944
    %v6337 = vpack.c.b16 %v4969, %v4945
    %v6338 = vpack.c.b16 %v4994, %v4970
    %v6339 = vpack.c.b16 %v4995, %v4971
    %v6340 = vpack.c.b16 %v4996, %v4972
    %v6341 = vpack.c.b16 %v4997, %v4973
    %v6342 = vpack.c.b16 %v4998, %v4974
    %v6343 = vpack.c.b16 %v4999, %v4975
    %v6344 = vpack.c.b16 %v5000, %v4976
    %v6345 = vpack.c.b16 %v5001, %v4977
    %v6346 = vpack.c.b16 %v5002, %v4978
    %v6347 = vpack.c.b16 %v5003, %v4979
    %v6348 = vpack.c.b16 %v5004, %v4980
    %v6349 = vpack.c.b16 %v5005, %v4981
    %v6350 = vpack.c.b16 %v5006, %v4982
    %v6351 = vpack.c.b16 %v5007, %v4983
    %v6352 = vpack.c.b16 %v5008, %v4984
    %v6353 = vpack.c.b16 %v5009, %v4985
    %v6354 = vpack.c.b16 %v5010, %v4986
    %v6355 = vpack.c.b16 %v5011, %v4987
    %v6356 = vpack.c.b16 %v5012, %v4988
    %v6357 = vpack.c.b16 %v5013, %v4989
    %v6358 = vpack.c.b16 %v5014, %v4990
    %v6359 = vpack.c.b16 %v5015, %v4991
    %v6360 = vpack.c.b16 %v5016, %v4992
    %v6361 = vpack.c.b16 %v5017, %v4993
    %v6362 = vpack.c.b16 %v5042, %v5018
    %v6363 = vpack.c.b16 %v5043, %v5019
    %v6364 = vpack.c.b16 %v5044, %v5020
    %v6365 = vpack.c.b16 %v5045, %v5021
    %v6366 = vpack.c.b16 %v5046, %v5022
    %v6367 = vpack.c.b16 %v5047, %v5023
    %v6368 = vpack.c.b16 %v5048, %v5024
    %v6369 = vpack.c.b16 %v5049, %v5025
    %v6370 = vpack.c.b16 %v5050, %v5026
    %v6371 = vpack.c.b16 %v5051, %v5027
    %v6372 = vpack.c.b16 %v5052, %v5028
    %v6373 = vpack.c.b16 %v5053, %v5029
    %v6374 = vpack.c.b16 %v5054, %v5030
    %v6375 = vpack.c.b16 %v5055, %v5031
    %v6376 = vpack.c.b16 %v5056, %v5032
    %v6377 = vpack.c.b16 %v5057, %v5033
    %v6378 = vpack.c.b16 %v5058, %v5034
    %v6379 = vpack.c.b16 %v5059, %v5035
    %v6380 = vpack.c.b16 %v5060, %v5036
    %v6381 = vpack.c.b16 %v5061, %v5037
    %v6382 = vpack.c.b16 %v5062, %v5038
    %v6383 = vpack.c.b16 %v5063, %v5039
    %v6384 = vpack.c.b16 %v5064, %v5040
    %v6385 = vpack.c.b16 %v5065, %v5041
    %v6386 = vpack.c.b16 %v5090, %v5066
    %v6387 = vpack.c.b16 %v5091, %v5067
    %v6388 = vpack.c.b16 %v5092, %v5068
    %v6389 = vpack.c.b16 %v5093, %v5069
    %v6390 = vpack.c.b16 %v5094, %v5070
    %v6391 = vpack.c.b16 %v5095, %v5071
    %v6392 = vpack.c.b16 %v5096, %v5072
    %v6393 = vpack.c.b16 %v5097, %v5073
    %v6394 = vpack.c.b16 %v5098, %v5074
    %v6395 = vpack.c.b16 %v5099, %v5075
    %v6396 = vpack.c.b16 %v5100, %v5076
    %v6397 = vpack.c.b16 %v5101, %v5077
    %v6398 = vpack.c.b16 %v5102, %v5078
    %v6399 = vpack.c.b16 %v5103, %v5079
    %v6400 = vpack.c.b16 %v5104, %v5080
    %v6401 = vpack.c.b16 %v5105, %v5081
    %v6402 = vpack.c.b16 %v5106, %v5082
    %v6403 = vpack.c.b16 %v5107, %v5083
    %v6404 = vpack.c.b16 %v5108, %v5084
    %v6405 = vpack.c.b16 %v5109, %v5085
    %v6406 = vpack.c.b16 %v5110, %v5086
    %v6407 = vpack.c.b16 %v5111, %v5087
    %v6408 = vpack.c.b16 %v5112, %v5088
    %v6409 = vpack.c.b16 %v5113, %v5089
    %v6410 = vpack.c.b16 %v5138, %v5114
    %v6411 = vpack.c.b16 %v5139, %v5115
    %v6412 = vpack.c.b16 %v5140, %v5116
    %v6413 = vpack.c.b16 %v5141, %v5117
    %v6414 = vpack.c.b16 %v5142, %v5118
    %v6415 = vpack.c.b16 %v5143, %v5119
    %v6416 = vpack.c.b16 %v5144, %v5120
    %v6417 = vpack.c.b16 %v5145, %v5121
    %v6418 = vpack.c.b16 %v5146, %v5122
    %v6419 = vpack.c.b16 %v5147, %v5123
    %v6420 = vpack.c.b16 %v5148, %v5124
    %v6421 = vpack.c.b16 %v5149, %v5125
    %v6422 = vpack.c.b16 %v5150, %v5126
    %v6423 = vpack.c.b16 %v5151, %v5127
    %v6424 = vpack.c.b16 %v5152, %v5128
    %v6425 = vpack.c.b16 %v5153, %v5129
    %v6426 = vpack.c.b16 %v5154, %v5130
    %v6427 = vpack.c.b16 %v5155, %v5131
    %v6428 = vpack.c.b16 %v5156, %v5132
    %v6429 = vpack.c.b16 %v5157, %v5133
    %v6430 = vpack.c.b16 %v5158, %v5134
    %v6431 = vpack.c.b16 %v5159, %v5135
    %v6432 = vpack.c.b16 %v5160, %v5136
    %v6433 = vpack.c.b16 %v5161, %v5137
    %v6434 = vpack.c.b16 %v5186, %v5162
    %v6435 = vpack.c.b16 %v5187, %v5163
    %v6436 = vpack.c.b16 %v5188, %v5164
    %v6437 = vpack.c.b16 %v5189, %v5165
    %v6438 = vpack.c.b16 %v5190, %v5166
    %v6439 = vpack.c.b16 %v5191, %v5167
    %v6440 = vpack.c.b16 %v5192, %v5168
    %v6441 = vpack.c.b16 %v5193, %v5169
    %v6442 = vpack.c.b16 %v5194, %v5170
    %v6443 = vpack.c.b16 %v5195, %v5171
    %v6444 = vpack.c.b16 %v5196, %v5172
    %v6445 = vpack.c.b16 %v5197, %v5173
    %v6446 = vpack.c.b16 %v5198, %v5174
    %v6447 = vpack.c.b16 %v5199, %v5175
    %v6448 = vpack.c.b16 %v5200, %v5176
    %v6449 = vpack.c.b16 %v5201, %v5177
    %v6450 = vpack.c.b16 %v5202, %v5178
    %v6451 = vpack.c.b16 %v5203, %v5179
    %v6452 = vpack.c.b16 %v5204, %v5180
    %v6453 = vpack.c.b16 %v5205, %v5181
    %v6454 = vpack.c.b16 %v5206, %v5182
    %v6455 = vpack.c.b16 %v5207, %v5183
    %v6456 = vpack.c.b16 %v5208, %v5184
    %v6457 = vpack.c.b16 %v5209, %v5185
    %v6458 = vpack.c.b16 %v5234, %v5210
    %v6459 = vpack.c.b16 %v5235, %v5211
    %v6460 = vpack.c.b16 %v5236, %v5212
    %v6461 = vpack.c.b16 %v5237, %v5213
    %v6462 = vpack.c.b16 %v5238, %v5214
    %v6463 = vpack.c.b16 %v5239, %v5215
    %v6464 = vpack.c.b16 %v5240, %v5216
    %v6465 = vpack.c.b16 %v5241, %v5217
    %v6466 = vpack.c.b16 %v5242, %v5218
    %v6467 = vpack.c.b16 %v5243, %v5219
    %v6468 = vpack.c.b16 %v5244, %v5220
    %v6469 = vpack.c.b16 %v5245, %v5221
    %v6470 = vpack.c.b16 %v5246, %v5222
    %v6471 = vpack.c.b16 %v5247, %v5223
    %v6472 = vpack.c.b16 %v5248, %v5224
    %v6473 = vpack.c.b16 %v5249, %v5225
    %v6474 = vpack.c.b16 %v5250, %v5226
    %v6475 = vpack.c.b16 %v5251, %v5227
    %v6476 = vpack.c.b16 %v5252, %v5228
    %v6477 = vpack.c.b16 %v5253, %v5229
    %v6478 = vpack.c.b16 %v5254, %v5230
    %v6479 = vpack.c.b16 %v5255, %v5231
    %v6480 = vpack.c.b16 %v5256, %v5232
    %v6481 = vpack.c.b16 %v5257, %v5233
    %v6482 = vpack.c.b16 %v5282, %v5258
    %v6483 = vpack.c.b16 %v5283, %v5259
    %v6484 = vpack.c.b16 %v5284, %v5260
    %v6485 = vpack.c.b16 %v5285, %v5261
    %v6486 = vpack.c.b16 %v5286, %v5262
    %v6487 = vpack.c.b16 %v5287, %v5263
    %v6488 = vpack.c.b16 %v5288, %v5264
    %v6489 = vpack.c.b16 %v5289, %v5265
    %v6490 = vpack.c.b16 %v5290, %v5266
    %v6491 = vpack.c.b16 %v5291, %v5267
    %v6492 = vpack.c.b16 %v5292, %v5268
    %v6493 = vpack.c.b16 %v5293, %v5269
    %v6494 = vpack.c.b16 %v5294, %v5270
    %v6495 = vpack.c.b16 %v5295, %v5271
    %v6496 = vpack.c.b16 %v5296, %v5272
    %v6497 = vpack.c.b16 %v5297, %v5273
    %v6498 = vpack.c.b16 %v5298, %v5274
    %v6499 = vpack.c.b16 %v5299, %v5275
    %v6500 = vpack.c.b16 %v5300, %v5276
    %v6501 = vpack.c.b16 %v5301, %v5277
    %v6502 = vpack.c.b16 %v5302, %v5278
    %v6503 = vpack.c.b16 %v5303, %v5279
    %v6504 = vpack.c.b16 %v5304, %v5280
    %v6505 = vpack.c.b16 %v5305, %v5281
    %v6506 = vpack.c.b16 %v5330, %v5306
    %v6507 = vpack.c.b16 %v5331, %v5307
    %v6508 = vpack.c.b16 %v5332, %v5308
    %v6509 = vpack.c.b16 %v5333, %v5309
    %v6510 = vpack.c.b16 %v5334, %v5310
    %v6511 = vpack.c.b16 %v5335, %v5311
    %v6512 = vpack.c.b16 %v5336, %v5312
    %v6513 = vpack.c.b16 %v5337, %v5313
    %v6514 = vpack.c.b16 %v5338, %v5314
    %v6515 = vpack.c.b16 %v5339, %v5315
    %v6516 = vpack.c.b16 %v5340, %v5316
    %v6517 = vpack.c.b16 %v5341, %v5317
    %v6518 = vpack.c.b16 %v5342, %v5318
    %v6519 = vpack.c.b16 %v5343, %v5319
    %v6520 = vpack.c.b16 %v5344, %v5320
    %v6521 = vpack.c.b16 %v5345, %v5321
    %v6522 = vpack.c.b16 %v5346, %v5322
    %v6523 = vpack.c.b16 %v5347, %v5323
    %v6524 = vpack.c.b16 %v5348, %v5324
    %v6525 = vpack.c.b16 %v5349, %v5325
    %v6526 = vpack.c.b16 %v5350, %v5326
    %v6527 = vpack.c.b16 %v5351, %v5327
    %v6528 = vpack.c.b16 %v5352, %v5328
    %v6529 = vpack.c.b16 %v5353, %v5329
    %v6530 = vpack.c.b16 %v5378, %v5354
    %v6531 = vpack.c.b16 %v5379, %v5355
    %v6532 = vpack.c.b16 %v5380, %v5356
    %v6533 = vpack.c.b16 %v5381, %v5357
    %v6534 = vpack.c.b16 %v5382, %v5358
    %v6535 = vpack.c.b16 %v5383, %v5359
    %v6536 = vpack.c.b16 %v5384, %v5360
    %v6537 = vpack.c.b16 %v5385, %v5361
    %v6538 = vpack.c.b16 %v5386, %v5362
    %v6539 = vpack.c.b16 %v5387, %v5363
    %v6540 = vpack.c.b16 %v5388, %v5364
    %v6541 = vpack.c.b16 %v5389, %v5365
    %v6542 = vpack.c.b16 %v5390, %v5366
    %v6543 = vpack.c.b16 %v5391, %v5367
    %v6544 = vpack.c.b16 %v5392, %v5368
    %v6545 = vpack.c.b16 %v5393, %v5369
    %v6546 = vpack.c.b16 %v5394, %v5370
    %v6547 = vpack.c.b16 %v5395, %v5371
    %v6548 = vpack.c.b16 %v5396, %v5372
    %v6549 = vpack.c.b16 %v5397, %v5373
    %v6550 = vpack.c.b16 %v5398, %v5374
    %v6551 = vpack.c.b16 %v5399, %v5375
    %v6552 = vpack.c.b16 %v5400, %v5376
    %v6553 = vpack.c.b16 %v5401, %v5377
    %v6554 = vpack.c.b16 %v5426, %v5402
    %v6555 = vpack.c.b16 %v5427, %v5403
    %v6556 = vpack.c.b16 %v5428, %v5404
    %v6557 = vpack.c.b16 %v5429, %v5405
    %v6558 = vpack.c.b16 %v5430, %v5406
    %v6559 = vpack.c.b16 %v5431, %v5407
    %v6560 = vpack.c.b16 %v5432, %v5408
    %v6561 = vpack.c.b16 %v5433, %v5409
    %v6562 = vpack.c.b16 %v5434, %v5410
    %v6563 = vpack.c.b16 %v5435, %v5411
    %v6564 = vpack.c.b16 %v5436, %v5412
    %v6565 = vpack.c.b16 %v5437, %v5413
    %v6566 = vpack.c.b16 %v5438, %v5414
    %v6567 = vpack.c.b16 %v5439, %v5415
    %v6568 = vpack.c.b16 %v5440, %v5416
    %v6569 = vpack.c.b16 %v5441, %v5417
    %v6570 = vpack.c.b16 %v5442, %v5418
    %v6571 = vpack.c.b16 %v5443, %v5419
    %v6572 = vpack.c.b16 %v5444, %v5420
    %v6573 = vpack.c.b16 %v5445, %v5421
    %v6574 = vpack.c.b16 %v5446, %v5422
    %v6575 = vpack.c.b16 %v5447, %v5423
    %v6576 = vpack.c.b16 %v5448, %v5424
    %v6577 = vpack.c.b16 %v5449, %v5425
    %v6578 = vpack.c.b16 %v5474, %v5450
    %v6579 = vpack.c.b16 %v5475, %v5451
    %v6580 = vpack.c.b16 %v5476, %v5452
    %v6581 = vpack.c.b16 %v5477, %v5453
    %v6582 = vpack.c.b16 %v5478, %v5454
    %v6583 = vpack.c.b16 %v5479, %v5455
    %v6584 = vpack.c.b16 %v5480, %v5456
    %v6585 = vpack.c.b16 %v5481, %v5457
    %v6586 = vpack.c.b16 %v5482, %v5458
    %v6587 = vpack.c.b16 %v5483, %v5459
    %v6588 = vpack.c.b16 %v5484, %v5460
    %v6589 = vpack.c.b16 %v5485, %v5461
    %v6590 = vpack.c.b16 %v5486, %v5462
    %v6591 = vpack.c.b16 %v5487, %v5463
    %v6592 = vpack.c.b16 %v5488, %v5464
    %v6593 = vpack.c.b16 %v5489, %v5465
    %v6594 = vpack.c.b16 %v5490, %v5466
    %v6595 = vpack.c.b16 %v5491, %v5467
    %v6596 = vpack.c.b16 %v5492, %v5468
    %v6597 = vpack.c.b16 %v5493, %v5469
    %v6598 = vpack.c.b16 %v5494, %v5470
    %v6599 = vpack.c.b16 %v5495, %v5471
    %v6600 = vpack.c.b16 %v5496, %v5472
    %v6601 = vpack.c.b16 %v5497, %v5473
    %v6602 = vpack.c.b16 %v5522, %v5498
    %v6603 = vpack.c.b16 %v5523, %v5499
    %v6604 = vpack.c.b16 %v5524, %v5500
    %v6605 = vpack.c.b16 %v5525, %v5501
    %v6606 = vpack.c.b16 %v5526, %v5502
    %v6607 = vpack.c.b16 %v5527, %v5503
    %v6608 = vpack.c.b16 %v5528, %v5504
    %v6609 = vpack.c.b16 %v5529, %v5505
    %v6610 = vpack.c.b16 %v5530, %v5506
    %v6611 = vpack.c.b16 %v5531, %v5507
    %v6612 = vpack.c.b16 %v5532, %v5508
    %v6613 = vpack.c.b16 %v5533, %v5509
    %v6614 = vpack.c.b16 %v5534, %v5510
    %v6615 = vpack.c.b16 %v5535, %v5511
    %v6616 = vpack.c.b16 %v5536, %v5512
    %v6617 = vpack.c.b16 %v5537, %v5513
    %v6618 = vpack.c.b16 %v5538, %v5514
    %v6619 = vpack.c.b16 %v5539, %v5515
    %v6620 = vpack.c.b16 %v5540, %v5516
    %v6621 = vpack.c.b16 %v5541, %v5517
    %v6622 = vpack.c.b16 %v5542, %v5518
    %v6623 = vpack.c.b16 %v5543, %v5519
    %v6624 = vpack.c.b16 %v5544, %v5520
    %v6625 = vpack.c.b16 %v5545, %v5521
    %v6626 = vpack.c.b16 %v5570, %v5546
    %v6627 = vpack.c.b16 %v5571, %v5547
    %v6628 = vpack.c.b16 %v5572, %v5548
    %v6629 = vpack.c.b16 %v5573, %v5549
    %v6630 = vpack.c.b16 %v5574, %v5550
    %v6631 = vpack.c.b16 %v5575, %v5551
    %v6632 = vpack.c.b16 %v5576, %v5552
    %v6633 = vpack.c.b16 %v5577, %v5553
    %v6634 = vpack.c.b16 %v5578, %v5554
    %v6635 = vpack.c.b16 %v5579, %v5555
    %v6636 = vpack.c.b16 %v5580, %v5556
    %v6637 = vpack.c.b16 %v5581, %v5557
    %v6638 = vpack.c.b16 %v5582, %v5558
    %v6639 = vpack.c.b16 %v5583, %v5559
    %v6640 = vpack.c.b16 %v5584, %v5560
    %v6641 = vpack.c.b16 %v5585, %v5561
    %v6642 = vpack.c.b16 %v5586, %v5562
    %v6643 = vpack.c.b16 %v5587, %v5563
    %v6644 = vpack.c.b16 %v5588, %v5564
    %v6645 = vpack.c.b16 %v5589, %v5565
    %v6646 = vpack.c.b16 %v5590, %v5566
    %v6647 = vpack.c.b16 %v5591, %v5567
    %v6648 = vpack.c.b16 %v5592, %v5568
    %v6649 = vpack.c.b16 %v5593, %v5569
    %v6650 = vpack.c.b16 %v5618, %v5594
    %v6651 = vpack.c.b16 %v5619, %v5595
    %v6652 = vpack.c.b16 %v5620, %v5596
    %v6653 = vpack.c.b16 %v5621, %v5597
    %v6654 = vpack.c.b16 %v5622, %v5598
    %v6655 = vpack.c.b16 %v5623, %v5599
    %v6656 = vpack.c.b16 %v5624, %v5600
    %v6657 = vpack.c.b16 %v5625, %v5601
    %v6658 = vpack.c.b16 %v5626, %v5602
    %v6659 = vpack.c.b16 %v5627, %v5603
    %v6660 = vpack.c.b16 %v5628, %v5604
    %v6661 = vpack.c.b16 %v5629, %v5605
    %v6662 = vpack.c.b16 %v5630, %v5606
    %v6663 = vpack.c.b16 %v5631, %v5607
    %v6664 = vpack.c.b16 %v5632, %v5608
    %v6665 = vpack.c.b16 %v5633, %v5609
    %v6666 = vpack.c.b16 %v5634, %v5610
    %v6667 = vpack.c.b16 %v5635, %v5611
    %v6668 = vpack.c.b16 %v5636, %v5612
    %v6669 = vpack.c.b16 %v5637, %v5613
    %v6670 = vpack.c.b16 %v5638, %v5614
    %v6671 = vpack.c.b16 %v5639, %v5615
    %v6672 = vpack.c.b16 %v5640, %v5616
    %v6673 = vpack.c.b16 %v5641, %v5617
    %v6674 = vpack.c.b16 %v5666, %v5642
    %v6675 = vpack.c.b16 %v5667, %v5643
    %v6676 = vpack.c.b16 %v5668, %v5644
    %v6677 = vpack.c.b16 %v5669, %v5645
    %v6678 = vpack.c.b16 %v5670, %v5646
    %v6679 = vpack.c.b16 %v5671, %v5647
    %v6680 = vpack.c.b16 %v5672, %v5648
    %v6681 = vpack.c.b16 %v5673, %v5649
    %v6682 = vpack.c.b16 %v5674, %v5650
    %v6683 = vpack.c.b16 %v5675, %v5651
    %v6684 = vpack.c.b16 %v5676, %v5652
    %v6685 = vpack.c.b16 %v5677, %v5653
    %v6686 = vpack.c.b16 %v5678, %v5654
    %v6687 = vpack.c.b16 %v5679, %v5655
    %v6688 = vpack.c.b16 %v5680, %v5656
    %v6689 = vpack.c.b16 %v5681, %v5657
    %v6690 = vpack.c.b16 %v5682, %v5658
    %v6691 = vpack.c.b16 %v5683, %v5659
    %v6692 = vpack.c.b16 %v5684, %v5660
    %v6693 = vpack.c.b16 %v5685, %v5661
    %v6694 = vpack.c.b16 %v5686, %v5662
    %v6695 = vpack.c.b16 %v5687, %v5663
    %v6696 = vpack.c.b16 %v5688, %v5664
    %v6697 = vpack.c.b16 %v5689, %v5665
    %v6698 = vpack.c.b16 %v5714, %v5690
    %v6699 = vpack.c.b16 %v5715, %v5691
    %v6700 = vpack.c.b16 %v5716, %v5692
    %v6701 = vpack.c.b16 %v5717, %v5693
    %v6702 = vpack.c.b16 %v5718, %v5694
    %v6703 = vpack.c.b16 %v5719, %v5695
    %v6704 = vpack.c.b16 %v5720, %v5696
    %v6705 = vpack.c.b16 %v5721, %v5697
    %v6706 = vpack.c.b16 %v5722, %v5698
    %v6707 = vpack.c.b16 %v5723, %v5699
    %v6708 = vpack.c.b16 %v5724, %v5700
    %v6709 = vpack.c.b16 %v5725, %v5701
    %v6710 = vpack.c.b16 %v5726, %v5702
    %v6711 = vpack.c.b16 %v5727, %v5703
    %v6712 = vpack.c.b16 %v5728, %v5704
    %v6713 = vpack.c.b16 %v5729, %v5705
    %v6714 = vpack.c.b16 %v5730, %v5706
    %v6715 = vpack.c.b16 %v5731, %v5707
    %v6716 = vpack.c.b16 %v5732, %v5708
    %v6717 = vpack.c.b16 %v5733, %v5709
    %v6718 = vpack.c.b16 %v5734, %v5710
    %v6719 = vpack.c.b16 %v5735, %v5711
    %v6720 = vpack.c.b16 %v5736, %v5712
    %v6721 = vpack.c.b16 %v5737, %v5713
    %v6722 = vpack.c.b16 %v5762, %v5738
    %v6723 = vpack.c.b16 %v5763, %v5739
    %v6724 = vpack.c.b16 %v5764, %v5740
    %v6725 = vpack.c.b16 %v5765, %v5741
    %v6726 = vpack.c.b16 %v5766, %v5742
    %v6727 = vpack.c.b16 %v5767, %v5743
    %v6728 = vpack.c.b16 %v5768, %v5744
    %v6729 = vpack.c.b16 %v5769, %v5745
    %v6730 = vpack.c.b16 %v5770, %v5746
    %v6731 = vpack.c.b16 %v5771, %v5747
    %v6732 = vpack.c.b16 %v5772, %v5748
    %v6733 = vpack.c.b16 %v5773, %v5749
    %v6734 = vpack.c.b16 %v5774, %v5750
    %v6735 = vpack.c.b16 %v5775, %v5751
    %v6736 = vpack.c.b16 %v5776, %v5752
    %v6737 = vpack.c.b16 %v5777, %v5753
    %v6738 = vpack.c.b16 %v5778, %v5754
    %v6739 = vpack.c.b16 %v5779, %v5755
    %v6740 = vpack.c.b16 %v5780, %v5756
    %v6741 = vpack.c.b16 %v5781, %v5757
    %v6742 = vpack.c.b16 %v5782, %v5758
    %v6743 = vpack.c.b16 %v5783, %v5759
    %v6744 = vpack.c.b16 %v5784, %v5760
    %v6745 = vpack.c.b16 %v5785, %v5761
    %v6746 = vpack.c.b16 %v5810, %v5786
    %v6747 = vpack.c.b16 %v5811, %v5787
    %v6748 = vpack.c.b16 %v5812, %v5788
    %v6749 = vpack.c.b16 %v5813, %v5789
    %v6750 = vpack.c.b16 %v5814, %v5790
    %v6751 = vpack.c.b16 %v5815, %v5791
    %v6752 = vpack.c.b16 %v5816, %v5792
    %v6753 = vpack.c.b16 %v5817, %v5793
    %v6754 = vpack.c.b16 %v5818, %v5794
    %v6755 = vpack.c.b16 %v5819, %v5795
    %v6756 = vpack.c.b16 %v5820, %v5796
    %v6757 = vpack.c.b16 %v5821, %v5797
    %v6758 = vpack.c.b16 %v5822, %v5798
    %v6759 = vpack.c.b16 %v5823, %v5799
    %v6760 = vpack.c.b16 %v5824, %v5800
    %v6761 = vpack.c.b16 %v5825, %v5801
    %v6762 = vpack.c.b16 %v5826, %v5802
    %v6763 = vpack.c.b16 %v5827, %v5803
    %v6764 = vpack.c.b16 %v5828, %v5804
    %v6765 = vpack.c.b16 %v5829, %v5805
    %v6766 = vpack.c.b16 %v5830, %v5806
    %v6767 = vpack.c.b16 %v5831, %v5807
    %v6768 = vpack.c.b16 %v5832, %v5808
    %v6769 = vpack.c.b16 %v5833, %v5809
    %v6770 = vpack.c.b16 %v5858, %v5834
    %v6771 = vpack.c.b16 %v5859, %v5835
    %v6772 = vpack.c.b16 %v5860, %v5836
    %v6773 = vpack.c.b16 %v5861, %v5837
    %v6774 = vpack.c.b16 %v5862, %v5838
    %v6775 = vpack.c.b16 %v5863, %v5839
    %v6776 = vpack.c.b16 %v5864, %v5840
    %v6777 = vpack.c.b16 %v5865, %v5841
    %v6778 = vpack.c.b16 %v5866, %v5842
    %v6779 = vpack.c.b16 %v5867, %v5843
    %v6780 = vpack.c.b16 %v5868, %v5844
    %v6781 = vpack.c.b16 %v5869, %v5845
    %v6782 = vpack.c.b16 %v5870, %v5846
    %v6783 = vpack.c.b16 %v5871, %v5847
    %v6784 = vpack.c.b16 %v5872, %v5848
    %v6785 = vpack.c.b16 %v5873, %v5849
    %v6786 = vpack.c.b16 %v5874, %v5850
    %v6787 = vpack.c.b16 %v5875, %v5851
    %v6788 = vpack.c.b16 %v5876, %v5852
    %v6789 = vpack.c.b16 %v5877, %v5853
    %v6790 = vpack.c.b16 %v5878, %v5854
    %v6791 = vpack.c.b16 %v5879, %v5855
    %v6792 = vpack.c.b16 %v5880, %v5856
    %v6793 = vpack.c.b16 %v5881, %v5857
    %v6794 = vpack.c.b16 %v5906, %v5882
    %v6795 = vpack.c.b16 %v5907, %v5883
    %v6796 = vpack.c.b16 %v5908, %v5884
    %v6797 = vpack.c.b16 %v5909, %v5885
    %v6798 = vpack.c.b16 %v5910, %v5886
    %v6799 = vpack.c.b16 %v5911, %v5887
    %v6800 = vpack.c.b16 %v5912, %v5888
    %v6801 = vpack.c.b16 %v5913, %v5889
    %v6802 = vpack.c.b16 %v5914, %v5890
    %v6803 = vpack.c.b16 %v5915, %v5891
    %v6804 = vpack.c.b16 %v5916, %v5892
    %v6805 = vpack.c.b16 %v5917, %v5893
    %v6806 = vpack.c.b16 %v5918, %v5894
    %v6807 = vpack.c.b16 %v5919, %v5895
    %v6808 = vpack.c.b16 %v5920, %v5896
    %v6809 = vpack.c.b16 %v5921, %v5897
    %v6810 = vpack.c.b16 %v5922, %v5898
    %v6811 = vpack.c.b16 %v5923, %v5899
    %v6812 = vpack.c.b16 %v5924, %v5900
    %v6813 = vpack.c.b16 %v5925, %v5901
    %v6814 = vpack.c.b16 %v5926, %v5902
    %v6815 = vpack.c.b16 %v5927, %v5903
    %v6816 = vpack.c.b16 %v5928, %v5904
    %v6817 = vpack.c.b16 %v5929, %v5905
    %v6818 = vpack.c.b16 %v5954, %v5930
    %v6819 = vpack.c.b16 %v5955, %v5931
    %v6820 = vpack.c.b16 %v5956, %v5932
    %v6821 = vpack.c.b16 %v5957, %v5933
    %v6822 = vpack.c.b16 %v5958, %v5934
    %v6823 = vpack.c.b16 %v5959, %v5935
    %v6824 = vpack.c.b16 %v5960, %v5936
    %v6825 = vpack.c.b16 %v5961, %v5937
    %v6826 = vpack.c.b16 %v5962, %v5938
    %v6827 = vpack.c.b16 %v5963, %v5939
    %v6828 = vpack.c.b16 %v5964, %v5940
    %v6829 = vpack.c.b16 %v5965, %v5941
    %v6830 = vpack.c.b16 %v5966, %v5942
    %v6831 = vpack.c.b16 %v5967, %v5943
    %v6832 = vpack.c.b16 %v5968, %v5944
    %v6833 = vpack.c.b16 %v5969, %v5945
    %v6834 = vpack.c.b16 %v5970, %v5946
    %v6835 = vpack.c.b16 %v5971, %v5947
    %v6836 = vpack.c.b16 %v5972, %v5948
    %v6837 = vpack.c.b16 %v5973, %v5949
    %v6838 = vpack.c.b16 %v5974, %v5950
    %v6839 = vpack.c.b16 %v5975, %v5951
    %v6840 = vpack.c.b16 %v5976, %v5952
    %v6841 = vpack.c.b16 %v5977, %v5953
    %v6842 = vpack.c.b16 %v6002, %v5978
    %v6843 = vpack.c.b16 %v6003, %v5979
    %v6844 = vpack.c.b16 %v6004, %v5980
    %v6845 = vpack.c.b16 %v6005, %v5981
    %v6846 = vpack.c.b16 %v6006, %v5982
    %v6847 = vpack.c.b16 %v6007, %v5983
    %v6848 = vpack.c.b16 %v6008, %v5984
    %v6849 = vpack.c.b16 %v6009, %v5985
    %v6850 = vpack.c.b16 %v6010, %v5986
    %v6851 = vpack.c.b16 %v6011, %v5987
    %v6852 = vpack.c.b16 %v6012, %v5988
    %v6853 = vpack.c.b16 %v6013, %v5989
    %v6854 = vpack.c.b16 %v6014, %v5990
    %v6855 = vpack.c.b16 %v6015, %v5991
    %v6856 = vpack.c.b16 %v6016, %v5992
    %v6857 = vpack.c.b16 %v6017, %v5993
    %v6858 = vpack.c.b16 %v6018, %v5994
    %v6859 = vpack.c.b16 %v6019, %v5995
    %v6860 = vpack.c.b16 %v6020, %v5996
    %v6861 = vpack.c.b16 %v6021, %v5997
    %v6862 = vpack.c.b16 %v6022, %v5998
    %v6863 = vpack.c.b16 %v6023, %v5999
    %v6864 = vpack.c.b16 %v6024, %v6000
    %v6865 = vpack.c.b16 %v6025, %v6001
    %v6866 = vpack.c.b16 %v6050, %v6026
    %v6867 = vpack.c.b16 %v6051, %v6027
    %v6868 = vpack.c.b16 %v6052, %v6028
    %v6869 = vpack.c.b16 %v6053, %v6029
    %v6870 = vpack.c.b16 %v6054, %v6030
    %v6871 = vpack.c.b16 %v6055, %v6031
    %v6872 = vpack.c.b16 %v6056, %v6032
    %v6873 = vpack.c.b16 %v6057, %v6033
    %v6874 = vpack.c.b16 %v6058, %v6034
    %v6875 = vpack.c.b16 %v6059, %v6035
    %v6876 = vpack.c.b16 %v6060, %v6036
    %v6877 = vpack.c.b16 %v6061, %v6037
    %v6878 = vpack.c.b16 %v6062, %v6038
    %v6879 = vpack.c.b16 %v6063, %v6039
    %v6880 = vpack.c.b16 %v6064, %v6040
    %v6881 = vpack.c.b16 %v6065, %v6041
    %v6882 = vpack.c.b16 %v6066, %v6042
    %v6883 = vpack.c.b16 %v6067, %v6043
    %v6884 = vpack.c.b16 %v6068, %v6044
    %v6885 = vpack.c.b16 %v6069, %v6045
    %v6886 = vpack.c.b16 %v6070, %v6046
    %v6887 = vpack.c.b16 %v6071, %v6047
    %v6888 = vpack.c.b16 %v6072, %v6048
    %v6889 = vpack.c.b16 %v6073, %v6049
    %v6890 = vpack.c.b16 %v6098, %v6074
    %v6891 = vpack.c.b16 %v6099, %v6075
    %v6892 = vpack.c.b16 %v6100, %v6076
    %v6893 = vpack.c.b16 %v6101, %v6077
    %v6894 = vpack.c.b16 %v6102, %v6078
    %v6895 = vpack.c.b16 %v6103, %v6079
    %v6896 = vpack.c.b16 %v6104, %v6080
    %v6897 = vpack.c.b16 %v6105, %v6081
    %v6898 = vpack.c.b16 %v6106, %v6082
    %v6899 = vpack.c.b16 %v6107, %v6083
    %v6900 = vpack.c.b16 %v6108, %v6084
    %v6901 = vpack.c.b16 %v6109, %v6085
    %v6902 = vpack.c.b16 %v6110, %v6086
    %v6903 = vpack.c.b16 %v6111, %v6087
    %v6904 = vpack.c.b16 %v6112, %v6088
    %v6905 = vpack.c.b16 %v6113, %v6089
    %v6906 = vpack.c.b16 %v6114, %v6090
    %v6907 = vpack.c.b16 %v6115, %v6091
    %v6908 = vpack.c.b16 %v6116, %v6092
    %v6909 = vpack.c.b16 %v6117, %v6093
    %v6910 = vpack.c.b16 %v6118, %v6094
    %v6911 = vpack.c.b16 %v6119, %v6095
    %v6912 = vpack.c.b16 %v6120, %v6096
    %v6913 = vpack.c.b16 %v6121, %v6097
    %v6914 = vpack.c.b16 %v6146, %v6122
    %v6915 = vpack.c.b16 %v6147, %v6123
    %v6916 = vpack.c.b16 %v6148, %v6124
    %v6917 = vpack.c.b16 %v6149, %v6125
    %v6918 = vpack.c.b16 %v6150, %v6126
    %v6919 = vpack.c.b16 %v6151, %v6127
    %v6920 = vpack.c.b16 %v6152, %v6128
    %v6921 = vpack.c.b16 %v6153, %v6129
    %v6922 = vpack.c.b16 %v6154, %v6130
    %v6923 = vpack.c.b16 %v6155, %v6131
    %v6924 = vpack.c.b16 %v6156, %v6132
    %v6925 = vpack.c.b16 %v6157, %v6133
    %v6926 = vpack.c.b16 %v6158, %v6134
    %v6927 = vpack.c.b16 %v6159, %v6135
    %v6928 = vpack.c.b16 %v6160, %v6136
    %v6929 = vpack.c.b16 %v6161, %v6137
    %v6930 = vpack.c.b16 %v6162, %v6138
    %v6931 = vpack.c.b16 %v6163, %v6139
    %v6932 = vpack.c.b16 %v6164, %v6140
    %v6933 = vpack.c.b16 %v6165, %v6141
    %v6934 = vpack.c.b16 %v6166, %v6142
    %v6935 = vpack.c.b16 %v6167, %v6143
    %v6936 = vpack.c.b16 %v6168, %v6144
    %v6937 = vpack.c.b16 %v6169, %v6145
    %7706 = vmatprep.subr.bf16.mxu0 %v6171
    %7707 = vmatpush1.bf16.msra.mxu0 %v6170
    %7708 = vmatprep.subr.bf16.mxu0 %v6195
    %7709 = vmatpush1.bf16.msra.mxu0 %v6194
    %7710 = vmatprep.subr.bf16.mxu0 %v6219
    %7711 = vmatpush1.bf16.msra.mxu0 %v6218
    %7712 = vmatprep.subr.bf16.mxu0 %v6243
    %7713 = vmatpush1.bf16.msra.mxu0 %v6242
    %7714 = vmatprep.subr.bf16.mxu0 %v6267
    %7715 = vmatpush1.bf16.msra.mxu0 %v6266
    %7716 = vmatprep.subr.bf16.mxu0 %v6291
    %7717 = vmatpush1.bf16.msra.mxu0 %v6290
    %7718 = vmatprep.subr.bf16.mxu0 %v6315
    %7719 = vmatpush1.bf16.msra.mxu0 %v6314
    %7720 = vmatprep.subr.bf16.mxu0 %v6339
    %7721 = vmatpush1.bf16.msra.mxu0 %v6338
    %7722 = vmatprep.subr.bf16.mxu0 %v6363
    %7723 = vmatpush1.bf16.msra.mxu0 %v6362
    %7724 = vmatprep.subr.bf16.mxu0 %v6387
    %7725 = vmatpush1.bf16.msra.mxu0 %v6386
    %7726 = vmatprep.subr.bf16.mxu0 %v6411
    %7727 = vmatpush1.bf16.msra.mxu0 %v6410
    %7728 = vmatprep.subr.bf16.mxu0 %v6435
    %7729 = vmatpush1.bf16.msra.mxu0 %v6434
    %7730 = vmatprep.subr.bf16.mxu0 %v6459
    %7731 = vmatpush1.bf16.msra.mxu0 %v6458
    %7732 = vmatprep.subr.bf16.mxu0 %v6483
    %7733 = vmatpush1.bf16.msra.mxu0 %v6482
    %7734 = vmatprep.subr.bf16.mxu0 %v6507
    %7735 = vmatpush1.bf16.msra.mxu0 %v6506
    %7736 = vmatprep.subr.bf16.mxu0 %v6531
    %7737 = vmatpush1.bf16.msra.mxu0 %v6530
    %7738 = vmatprep.mubr.bf16.mxu0 %v2969
    %7739 = vmatmul.mubr.bf16.gmra.mrb[0].mxu0 %v2968
    %v7740 = vpop.f32.mrb[0].mxu0
    %v7741 = vadd.f32 %v3749, %v7740
    %v7742 = vpop.f32.mrb[0].mxu0
    %v7743 = vadd.f32 %v3753, %v7742
    %v7744 = vpop.f32.mrb[0].mxu0
    %v7745 = vpop.f32.mrb[0].mxu0
    %7746 = vdwg.mxu0
    %7747 = vmatprep.subr.bf16.mxu0 %v6555
    %7748 = vmatpush1.bf16.msra.mxu0 %v6554
    %7749 = vmatprep.subr.bf16.mxu0 %v6579
    %7750 = vmatpush1.bf16.msra.mxu0 %v6578
    %7751 = vmatprep.subr.bf16.mxu0 %v6603
    %7752 = vmatpush1.bf16.msra.mxu0 %v6602
    %7753 = vmatprep.subr.bf16.mxu0 %v6627
    %7754 = vmatpush1.bf16.msra.mxu0 %v6626
    %7755 = vmatprep.subr.bf16.mxu0 %v6651
    %7756 = vmatpush1.bf16.msra.mxu0 %v6650
    %7757 = vmatprep.subr.bf16.mxu0 %v6675
    %7758 = vmatpush1.bf16.msra.mxu0 %v6674
    %7759 = vmatprep.subr.bf16.mxu0 %v6699
    %7760 = vmatpush1.bf16.msra.mxu0 %v6698
    %7761 = vmatprep.subr.bf16.mxu0 %v6723
    %7762 = vmatpush1.bf16.msra.mxu0 %v6722
    %7763 = vmatprep.subr.bf16.mxu0 %v6747
    %7764 = vmatpush1.bf16.msra.mxu0 %v6746
    %7765 = vmatprep.subr.bf16.mxu0 %v6771
    %7766 = vmatpush1.bf16.msra.mxu0 %v6770
    %7767 = vmatprep.subr.bf16.mxu0 %v6795
    %7768 = vmatpush1.bf16.msra.mxu0 %v6794
    %7769 = vmatprep.subr.bf16.mxu0 %v6819
    %7770 = vmatpush1.bf16.msra.mxu0 %v6818
    %7771 = vmatprep.subr.bf16.mxu0 %v6843
    %7772 = vmatpush1.bf16.msra.mxu0 %v6842
    %7773 = vmatprep.subr.bf16.mxu0 %v6867
    %7774 = vmatpush1.bf16.msra.mxu0 %v6866
    %7775 = vmatprep.subr.bf16.mxu0 %v6891
    %7776 = vmatpush1.bf16.msra.mxu0 %v6890
    %7777 = vmatprep.subr.bf16.mxu0 %v6915
    %7778 = vmatpush1.bf16.msra.mxu0 %v6914
    %7779 = vmatprep.mubr.bf16.mxu0 %v2971
    %7780 = vmatmul.mubr.bf16.gmra.mrb[0].mxu0 %v2970
    %v7781 = vpop.f32.mrb[0].mxu0
    %v7782 = vadd.f32 %v7741, %v7781
    %v7783 = vpop.f32.mrb[0].mxu0
    %v7784 = vadd.f32 %v7743, %v7783
    %v7785 = vpop.f32.mrb[0].mxu0
    %v7786 = vpop.f32.mrb[0].mxu0
    %7787 = vdwg.mxu0
    %7788 = vmatprep.subr.bf16.mxu0 %v6173
    %7789 = vmatpush1.bf16.msra.mxu0 %v6172
    %7790 = vmatprep.subr.bf16.mxu0 %v6197
    %7791 = vmatpush1.bf16.msra.mxu0 %v6196
    %7792 = vmatprep.subr.bf16.mxu0 %v6221
    %7793 = vmatpush1.bf16.msra.mxu0 %v6220
    %7794 = vmatprep.subr.bf16.mxu0 %v6245
    %7795 = vmatpush1.bf16.msra.mxu0 %v6244
    %7796 = vmatprep.subr.bf16.mxu0 %v6269
    %7797 = vmatpush1.bf16.msra.mxu0 %v6268
    %7798 = vmatprep.subr.bf16.mxu0 %v6293
    %7799 = vmatpush1.bf16.msra.mxu0 %v6292
    %7800 = vmatprep.subr.bf16.mxu0 %v6317
    %7801 = vmatpush1.bf16.msra.mxu0 %v6316
    %7802 = vmatprep.subr.bf16.mxu0 %v6341
    %7803 = vmatpush1.bf16.msra.mxu0 %v6340
    %7804 = vmatprep.subr.bf16.mxu0 %v6365
    %7805 = vmatpush1.bf16.msra.mxu0 %v6364
    %7806 = vmatprep.subr.bf16.mxu0 %v6389
    %7807 = vmatpush1.bf16.msra.mxu0 %v6388
    %7808 = vmatprep.subr.bf16.mxu0 %v6413
    %7809 = vmatpush1.bf16.msra.mxu0 %v6412
    %7810 = vmatprep.subr.bf16.mxu0 %v6437
    %7811 = vmatpush1.bf16.msra.mxu0 %v6436
    %7812 = vmatprep.subr.bf16.mxu0 %v6461
    %7813 = vmatpush1.bf16.msra.mxu0 %v6460
    %7814 = vmatprep.subr.bf16.mxu0 %v6485
    %7815 = vmatpush1.bf16.msra.mxu0 %v6484
    %7816 = vmatprep.subr.bf16.mxu0 %v6509
    %7817 = vmatpush1.bf16.msra.mxu0 %v6508
    %7818 = vmatprep.subr.bf16.mxu0 %v6533
    %7819 = vmatpush1.bf16.msra.mxu0 %v6532
    %7820 = vmatprep.mubr.bf16.mxu0 %v2969
    %7821 = vmatmul.mubr.bf16.gmra.mrb[0].mxu0 %v2968
    %v7822 = vpop.f32.mrb[0].mxu0
    %v7823 = vadd.f32 %v3757, %v7822
    %v7824 = vpop.f32.mrb[0].mxu0
    %v7825 = vadd.f32 %v3761, %v7824
    %v7826 = vpop.f32.mrb[0].mxu0
    %v7827 = vpop.f32.mrb[0].mxu0
    %7828 = vdwg.mxu0
    %7829 = vmatprep.subr.bf16.mxu0 %v6557
    %7830 = vmatpush1.bf16.msra.mxu0 %v6556
    %7831 = vmatprep.subr.bf16.mxu0 %v6581
    %7832 = vmatpush1.bf16.msra.mxu0 %v6580
    %7833 = vmatprep.subr.bf16.mxu0 %v6605
    %7834 = vmatpush1.bf16.msra.mxu0 %v6604
    %7835 = vmatprep.subr.bf16.mxu0 %v6629
    %7836 = vmatpush1.bf16.msra.mxu0 %v6628
    %7837 = vmatprep.subr.bf16.mxu0 %v6653
    %7838 = vmatpush1.bf16.msra.mxu0 %v6652
    %7839 = vmatprep.subr.bf16.mxu0 %v6677
    %7840 = vmatpush1.bf16.msra.mxu0 %v6676
    %7841 = vmatprep.subr.bf16.mxu0 %v6701
    %7842 = vmatpush1.bf16.msra.mxu0 %v6700
    %7843 = vmatprep.subr.bf16.mxu0 %v6725
    %7844 = vmatpush1.bf16.msra.mxu0 %v6724
    %7845 = vmatprep.subr.bf16.mxu0 %v6749
    %7846 = vmatpush1.bf16.msra.mxu0 %v6748
    %7847 = vmatprep.subr.bf16.mxu0 %v6773
    %7848 = vmatpush1.bf16.msra.mxu0 %v6772
    %7849 = vmatprep.subr.bf16.mxu0 %v6797
    %7850 = vmatpush1.bf16.msra.mxu0 %v6796
    %7851 = vmatprep.subr.bf16.mxu0 %v6821
    %7852 = vmatpush1.bf16.msra.mxu0 %v6820
    %7853 = vmatprep.subr.bf16.mxu0 %v6845
    %7854 = vmatpush1.bf16.msra.mxu0 %v6844
    %7855 = vmatprep.subr.bf16.mxu0 %v6869
    %7856 = vmatpush1.bf16.msra.mxu0 %v6868
    %7857 = vmatprep.subr.bf16.mxu0 %v6893
    %7858 = vmatpush1.bf16.msra.mxu0 %v6892
    %7859 = vmatprep.subr.bf16.mxu0 %v6917
    %7860 = vmatpush1.bf16.msra.mxu0 %v6916
    %7861 = vmatprep.mubr.bf16.mxu0 %v2971
    %7862 = vmatmul.mubr.bf16.gmra.mrb[0].mxu0 %v2970
    %v7863 = vpop.f32.mrb[0].mxu0
    %v7864 = vadd.f32 %v7823, %v7863
    %v7865 = vpop.f32.mrb[0].mxu0
    %v7866 = vadd.f32 %v7825, %v7865
    %v7867 = vpop.f32.mrb[0].mxu0
    %v7868 = vpop.f32.mrb[0].mxu0
    %7869 = vdwg.mxu0
    %7870 = vmatprep.subr.bf16.mxu0 %v6175
    %7871 = vmatpush1.bf16.msra.mxu0 %v6174
    %7872 = vmatprep.subr.bf16.mxu0 %v6199
    %7873 = vmatpush1.bf16.msra.mxu0 %v6198
    %7874 = vmatprep.subr.bf16.mxu0 %v6223
    %7875 = vmatpush1.bf16.msra.mxu0 %v6222
    %7876 = vmatprep.subr.bf16.mxu0 %v6247
    %7877 = vmatpush1.bf16.msra.mxu0 %v6246
    %7878 = vmatprep.subr.bf16.mxu0 %v6271
    %7879 = vmatpush1.bf16.msra.mxu0 %v6270
    %7880 = vmatprep.subr.bf16.mxu0 %v6295
    %7881 = vmatpush1.bf16.msra.mxu0 %v6294
    %7882 = vmatprep.subr.bf16.mxu0 %v6319
    %7883 = vmatpush1.bf16.msra.mxu0 %v6318
    %7884 = vmatprep.subr.bf16.mxu0 %v6343
    %7885 = vmatpush1.bf16.msra.mxu0 %v6342
    %7886 = vmatprep.subr.bf16.mxu0 %v6367
    %7887 = vmatpush1.bf16.msra.mxu0 %v6366
    %7888 = vmatprep.subr.bf16.mxu0 %v6391
    %7889 = vmatpush1.bf16.msra.mxu0 %v6390
    %7890 = vmatprep.subr.bf16.mxu0 %v6415
    %7891 = vmatpush1.bf16.msra.mxu0 %v6414
    %7892 = vmatprep.subr.bf16.mxu0 %v6439
    %7893 = vmatpush1.bf16.msra.mxu0 %v6438
    %7894 = vmatprep.subr.bf16.mxu0 %v6463
    %7895 = vmatpush1.bf16.msra.mxu0 %v6462
    %7896 = vmatprep.subr.bf16.mxu0 %v6487
    %7897 = vmatpush1.bf16.msra.mxu0 %v6486
    %7898 = vmatprep.subr.bf16.mxu0 %v6511
    %7899 = vmatpush1.bf16.msra.mxu0 %v6510
    %7900 = vmatprep.subr.bf16.mxu0 %v6535
    %7901 = vmatpush1.bf16.msra.mxu0 %v6534
    %7902 = vmatprep.mubr.bf16.mxu0 %v2969
    %7903 = vmatmul.mubr.bf16.gmra.mrb[0].mxu0 %v2968
    %v7904 = vpop.f32.mrb[0].mxu0
    %v7905 = vadd.f32 %v3765, %v7904
    %v7906 = vpop.f32.mrb[0].mxu0
    %v7907 = vadd.f32 %v3769, %v7906
    %v7908 = vpop.f32.mrb[0].mxu0
    %v7909 = vpop.f32.mrb[0].mxu0
    %7910 = vdwg.mxu0
    %7911 = vmatprep.subr.bf16.mxu0 %v6559
    %7912 = vmatpush1.bf16.msra.mxu0 %v6558
    %7913 = vmatprep.subr.bf16.mxu0 %v6583
    %7914 = vmatpush1.bf16.msra.mxu0 %v6582
    %7915 = vmatprep.subr.bf16.mxu0 %v6607
    %7916 = vmatpush1.bf16.msra.mxu0 %v6606
    %7917 = vmatprep.subr.bf16.mxu0 %v6631
    %7918 = vmatpush1.bf16.msra.mxu0 %v6630
    %7919 = vmatprep.subr.bf16.mxu0 %v6655
    %7920 = vmatpush1.bf16.msra.mxu0 %v6654
    %7921 = vmatprep.subr.bf16.mxu0 %v6679
    %7922 = vmatpush1.bf16.msra.mxu0 %v6678
    %7923 = vmatprep.subr.bf16.mxu0 %v6703
    %7924 = vmatpush1.bf16.msra.mxu0 %v6702
    %7925 = vmatprep.subr.bf16.mxu0 %v6727
    %7926 = vmatpush1.bf16.msra.mxu0 %v6726
    %7927 = vmatprep.subr.bf16.mxu0 %v6751
    %7928 = vmatpush1.bf16.msra.mxu0 %v6750
    %7929 = vmatprep.subr.bf16.mxu0 %v6775
    %7930 = vmatpush1.bf16.msra.mxu0 %v6774
    %7931 = vmatprep.subr.bf16.mxu0 %v6799
    %7932 = vmatpush1.bf16.msra.mxu0 %v6798
    %7933 = vmatprep.subr.bf16.mxu0 %v6823
    %7934 = vmatpush1.bf16.msra.mxu0 %v6822
    %7935 = vmatprep.subr.bf16.mxu0 %v6847
    %7936 = vmatpush1.bf16.msra.mxu0 %v6846
    %7937 = vmatprep.subr.bf16.mxu0 %v6871
    %7938 = vmatpush1.bf16.msra.mxu0 %v6870
    %7939 = vmatprep.subr.bf16.mxu0 %v6895
    %7940 = vmatpush1.bf16.msra.mxu0 %v6894
    %7941 = vmatprep.subr.bf16.mxu0 %v6919
    %7942 = vmatpush1.bf16.msra.mxu0 %v6918
    %7943 = vmatprep.mubr.bf16.mxu0 %v2971
    %7944 = vmatmul.mubr.bf16.gmra.mrb[0].mxu0 %v2970
    %v7945 = vpop.f32.mrb[0].mxu0
    %v7946 = vadd.f32 %v7905, %v7945
    %v7947 = vpop.f32.mrb[0].mxu0
    %v7948 = vadd.f32 %v7907, %v7947
    %v7949 = vpop.f32.mrb[0].mxu0
    %v7950 = vpop.f32.mrb[0].mxu0
    %7951 = vdwg.mxu0
    %7952 = vmatprep.subr.bf16.mxu0 %v6177
    %7953 = vmatpush1.bf16.msra.mxu0 %v6176
    %7954 = vmatprep.subr.bf16.mxu0 %v6201
    %7955 = vmatpush1.bf16.msra.mxu0 %v6200
    %7956 = vmatprep.subr.bf16.mxu0 %v6225
    %7957 = vmatpush1.bf16.msra.mxu0 %v6224
    %7958 = vmatprep.subr.bf16.mxu0 %v6249
    %7959 = vmatpush1.bf16.msra.mxu0 %v6248
    %7960 = vmatprep.subr.bf16.mxu0 %v6273
    %7961 = vmatpush1.bf16.msra.mxu0 %v6272
    %7962 = vmatprep.subr.bf16.mxu0 %v6297
    %7963 = vmatpush1.bf16.msra.mxu0 %v6296
    %7964 = vmatprep.subr.bf16.mxu0 %v6321
    %7965 = vmatpush1.bf16.msra.mxu0 %v6320
    %7966 = vmatprep.subr.bf16.mxu0 %v6345
    %7967 = vmatpush1.bf16.msra.mxu0 %v6344
    %7968 = vmatprep.subr.bf16.mxu0 %v6369
    %7969 = vmatpush1.bf16.msra.mxu0 %v6368
    %7970 = vmatprep.subr.bf16.mxu0 %v6393
    %7971 = vmatpush1.bf16.msra.mxu0 %v6392
    %7972 = vmatprep.subr.bf16.mxu0 %v6417
    %7973 = vmatpush1.bf16.msra.mxu0 %v6416
    %7974 = vmatprep.subr.bf16.mxu0 %v6441
    %7975 = vmatpush1.bf16.msra.mxu0 %v6440
    %7976 = vmatprep.subr.bf16.mxu0 %v6465
    %7977 = vmatpush1.bf16.msra.mxu0 %v6464
    %7978 = vmatprep.subr.bf16.mxu0 %v6489
    %7979 = vmatpush1.bf16.msra.mxu0 %v6488
    %7980 = vmatprep.subr.bf16.mxu0 %v6513
    %7981 = vmatpush1.bf16.msra.mxu0 %v6512
    %7982 = vmatprep.subr.bf16.mxu0 %v6537
    %7983 = vmatpush1.bf16.msra.mxu0 %v6536
    %7984 = vmatprep.mubr.bf16.mxu0 %v2969
    %7985 = vmatmul.mubr.bf16.gmra.mrb[0].mxu0 %v2968
    %v7986 = vpop.f32.mrb[0].mxu0
    %v7987 = vadd.f32 %v3773, %v7986
    %v7988 = vpop.f32.mrb[0].mxu0
    %v7989 = vadd.f32 %v3777, %v7988
    %v7990 = vpop.f32.mrb[0].mxu0
    %v7991 = vpop.f32.mrb[0].mxu0
    %7992 = vdwg.mxu0
    %7993 = vmatprep.subr.bf16.mxu0 %v6561
    %7994 = vmatpush1.bf16.msra.mxu0 %v6560
    %7995 = vmatprep.subr.bf16.mxu0 %v6585
    %7996 = vmatpush1.bf16.msra.mxu0 %v6584
    %7997 = vmatprep.subr.bf16.mxu0 %v6609
    %7998 = vmatpush1.bf16.msra.mxu0 %v6608
    %7999 = vmatprep.subr.bf16.mxu0 %v6633
    %8000 = vmatpush1.bf16.msra.mxu0 %v6632
    %8001 = vmatprep.subr.bf16.mxu0 %v6657
    %8002 = vmatpush1.bf16.msra.mxu0 %v6656
    %8003 = vmatprep.subr.bf16.mxu0 %v6681
    %8004 = vmatpush1.bf16.msra.mxu0 %v6680
    %8005 = vmatprep.subr.bf16.mxu0 %v6705
    %8006 = vmatpush1.bf16.msra.mxu0 %v6704
    %8007 = vmatprep.subr.bf16.mxu0 %v6729
    %8008 = vmatpush1.bf16.msra.mxu0 %v6728
    %8009 = vmatprep.subr.bf16.mxu0 %v6753
    %8010 = vmatpush1.bf16.msra.mxu0 %v6752
    %8011 = vmatprep.subr.bf16.mxu0 %v6777
    %8012 = vmatpush1.bf16.msra.mxu0 %v6776
    %8013 = vmatprep.subr.bf16.mxu0 %v6801
    %8014 = vmatpush1.bf16.msra.mxu0 %v6800
    %8015 = vmatprep.subr.bf16.mxu0 %v6825
    %8016 = vmatpush1.bf16.msra.mxu0 %v6824
    %8017 = vmatprep.subr.bf16.mxu0 %v6849
    %8018 = vmatpush1.bf16.msra.mxu0 %v6848
    %8019 = vmatprep.subr.bf16.mxu0 %v6873
    %8020 = vmatpush1.bf16.msra.mxu0 %v6872
    %8021 = vmatprep.subr.bf16.mxu0 %v6897
    %8022 = vmatpush1.bf16.msra.mxu0 %v6896
    %8023 = vmatprep.subr.bf16.mxu0 %v6921
    %8024 = vmatpush1.bf16.msra.mxu0 %v6920
    %8025 = vmatprep.mubr.bf16.mxu0 %v2971
    %8026 = vmatmul.mubr.bf16.gmra.mrb[0].mxu0 %v2970
    %v8027 = vpop.f32.mrb[0].mxu0
    %v8028 = vadd.f32 %v7987, %v8027
    %v8029 = vpop.f32.mrb[0].mxu0
    %v8030 = vadd.f32 %v7989, %v8029
    %v8031 = vpop.f32.mrb[0].mxu0
    %v8032 = vpop.f32.mrb[0].mxu0
    %8033 = vdwg.mxu0
    %8034 = vmatprep.subr.bf16.mxu0 %v6179
    %8035 = vmatpush1.bf16.msra.mxu0 %v6178
    %8036 = vmatprep.subr.bf16.mxu0 %v6203
    %8037 = vmatpush1.bf16.msra.mxu0 %v6202
    %8038 = vmatprep.subr.bf16.mxu0 %v6227
    %8039 = vmatpush1.bf16.msra.mxu0 %v6226
    %8040 = vmatprep.subr.bf16.mxu0 %v6251
    %8041 = vmatpush1.bf16.msra.mxu0 %v6250
    %8042 = vmatprep.subr.bf16.mxu0 %v6275
    %8043 = vmatpush1.bf16.msra.mxu0 %v6274
    %8044 = vmatprep.subr.bf16.mxu0 %v6299
    %8045 = vmatpush1.bf16.msra.mxu0 %v6298
    %8046 = vmatprep.subr.bf16.mxu0 %v6323
    %8047 = vmatpush1.bf16.msra.mxu0 %v6322
    %8048 = vmatprep.subr.bf16.mxu0 %v6347
    %8049 = vmatpush1.bf16.msra.mxu0 %v6346
    %8050 = vmatprep.subr.bf16.mxu0 %v6371
    %8051 = vmatpush1.bf16.msra.mxu0 %v6370
    %8052 = vmatprep.subr.bf16.mxu0 %v6395
    %8053 = vmatpush1.bf16.msra.mxu0 %v6394
    %8054 = vmatprep.subr.bf16.mxu0 %v6419
    %8055 = vmatpush1.bf16.msra.mxu0 %v6418
    %8056 = vmatprep.subr.bf16.mxu0 %v6443
    %8057 = vmatpush1.bf16.msra.mxu0 %v6442
    %8058 = vmatprep.subr.bf16.mxu0 %v6467
    %8059 = vmatpush1.bf16.msra.mxu0 %v6466
    %8060 = vmatprep.subr.bf16.mxu0 %v6491
    %8061 = vmatpush1.bf16.msra.mxu0 %v6490
    %8062 = vmatprep.subr.bf16.mxu0 %v6515
    %8063 = vmatpush1.bf16.msra.mxu0 %v6514
    %8064 = vmatprep.subr.bf16.mxu0 %v6539
    %8065 = vmatpush1.bf16.msra.mxu0 %v6538
    %8066 = vmatprep.mubr.bf16.mxu0 %v2969
    %8067 = vmatmul.mubr.bf16.gmra.mrb[0].mxu0 %v2968
    %v8068 = vpop.f32.mrb[0].mxu0
    %v8069 = vadd.f32 %v3781, %v8068
    %v8070 = vpop.f32.mrb[0].mxu0
    %v8071 = vadd.f32 %v3785, %v8070
    %v8072 = vpop.f32.mrb[0].mxu0
    %v8073 = vpop.f32.mrb[0].mxu0
    %8074 = vdwg.mxu0
    %8075 = vmatprep.subr.bf16.mxu0 %v6563
    %8076 = vmatpush1.bf16.msra.mxu0 %v6562
    %8077 = vmatprep.subr.bf16.mxu0 %v6587
    %8078 = vmatpush1.bf16.msra.mxu0 %v6586
    %8079 = vmatprep.subr.bf16.mxu0 %v6611
    %8080 = vmatpush1.bf16.msra.mxu0 %v6610
    %8081 = vmatprep.subr.bf16.mxu0 %v6635
    %8082 = vmatpush1.bf16.msra.mxu0 %v6634
    %8083 = vmatprep.subr.bf16.mxu0 %v6659
    %8084 = vmatpush1.bf16.msra.mxu0 %v6658
    %8085 = vmatprep.subr.bf16.mxu0 %v6683
    %8086 = vmatpush1.bf16.msra.mxu0 %v6682
    %8087 = vmatprep.subr.bf16.mxu0 %v6707
    %8088 = vmatpush1.bf16.msra.mxu0 %v6706
    %8089 = vmatprep.subr.bf16.mxu0 %v6731
    %8090 = vmatpush1.bf16.msra.mxu0 %v6730
    %8091 = vmatprep.subr.bf16.mxu0 %v6755
    %8092 = vmatpush1.bf16.msra.mxu0 %v6754
    %8093 = vmatprep.subr.bf16.mxu0 %v6779
    %8094 = vmatpush1.bf16.msra.mxu0 %v6778
    %8095 = vmatprep.subr.bf16.mxu0 %v6803
    %8096 = vmatpush1.bf16.msra.mxu0 %v6802
    %8097 = vmatprep.subr.bf16.mxu0 %v6827
    %8098 = vmatpush1.bf16.msra.mxu0 %v6826
    %8099 = vmatprep.subr.bf16.mxu0 %v6851
    %8100 = vmatpush1.bf16.msra.mxu0 %v6850
    %8101 = vmatprep.subr.bf16.mxu0 %v6875
    %8102 = vmatpush1.bf16.msra.mxu0 %v6874
    %8103 = vmatprep.subr.bf16.mxu0 %v6899
    %8104 = vmatpush1.bf16.msra.mxu0 %v6898
    %8105 = vmatprep.subr.bf16.mxu0 %v6923
    %8106 = vmatpush1.bf16.msra.mxu0 %v6922
    %8107 = vmatprep.mubr.bf16.mxu0 %v2971
    %8108 = vmatmul.mubr.bf16.gmra.mrb[0].mxu0 %v2970
    %v8109 = vpop.f32.mrb[0].mxu0
    %v8110 = vadd.f32 %v8069, %v8109
    %v8111 = vpop.f32.mrb[0].mxu0
    %v8112 = vadd.f32 %v8071, %v8111
    %v8113 = vpop.f32.mrb[0].mxu0
    %v8114 = vpop.f32.mrb[0].mxu0
    %8115 = vdwg.mxu0
    %8116 = vmatprep.subr.bf16.mxu0 %v6181
    %8117 = vmatpush1.bf16.msra.mxu0 %v6180
    %8118 = vmatprep.subr.bf16.mxu0 %v6205
    %8119 = vmatpush1.bf16.msra.mxu0 %v6204
    %8120 = vmatprep.subr.bf16.mxu0 %v6229
    %8121 = vmatpush1.bf16.msra.mxu0 %v6228
    %8122 = vmatprep.subr.bf16.mxu0 %v6253
    %8123 = vmatpush1.bf16.msra.mxu0 %v6252
    %8124 = vmatprep.subr.bf16.mxu0 %v6277
    %8125 = vmatpush1.bf16.msra.mxu0 %v6276
    %8126 = vmatprep.subr.bf16.mxu0 %v6301
    %8127 = vmatpush1.bf16.msra.mxu0 %v6300
    %8128 = vmatprep.subr.bf16.mxu0 %v6325
    %8129 = vmatpush1.bf16.msra.mxu0 %v6324
    %8130 = vmatprep.subr.bf16.mxu0 %v6349
    %8131 = vmatpush1.bf16.msra.mxu0 %v6348
    %8132 = vmatprep.subr.bf16.mxu0 %v6373
    %8133 = vmatpush1.bf16.msra.mxu0 %v6372
    %8134 = vmatprep.subr.bf16.mxu0 %v6397
    %8135 = vmatpush1.bf16.msra.mxu0 %v6396
    %8136 = vmatprep.subr.bf16.mxu0 %v6421
    %8137 = vmatpush1.bf16.msra.mxu0 %v6420
    %8138 = vmatprep.subr.bf16.mxu0 %v6445
    %8139 = vmatpush1.bf16.msra.mxu0 %v6444
    %8140 = vmatprep.subr.bf16.mxu0 %v6469
    %8141 = vmatpush1.bf16.msra.mxu0 %v6468
    %8142 = vmatprep.subr.bf16.mxu0 %v6493
    %8143 = vmatpush1.bf16.msra.mxu0 %v6492
    %8144 = vmatprep.subr.bf16.mxu0 %v6517
    %8145 = vmatpush1.bf16.msra.mxu0 %v6516
    %8146 = vmatprep.subr.bf16.mxu0 %v6541
    %8147 = vmatpush1.bf16.msra.mxu0 %v6540
    %8148 = vmatprep.mubr.bf16.mxu0 %v2969
    %8149 = vmatmul.mubr.bf16.gmra.mrb[0].mxu0 %v2968
    %v8150 = vpop.f32.mrb[0].mxu0
    %v8151 = vadd.f32 %v3789, %v8150
    %v8152 = vpop.f32.mrb[0].mxu0
    %v8153 = vadd.f32 %v3793, %v8152
    %v8154 = vpop.f32.mrb[0].mxu0
    %v8155 = vpop.f32.mrb[0].mxu0
    %8156 = vdwg.mxu0
    %8157 = vmatprep.subr.bf16.mxu0 %v6565
    %8158 = vmatpush1.bf16.msra.mxu0 %v6564
    %8159 = vmatprep.subr.bf16.mxu0 %v6589
    %8160 = vmatpush1.bf16.msra.mxu0 %v6588
    %8161 = vmatprep.subr.bf16.mxu0 %v6613
    %8162 = vmatpush1.bf16.msra.mxu0 %v6612
    %8163 = vmatprep.subr.bf16.mxu0 %v6637
    %8164 = vmatpush1.bf16.msra.mxu0 %v6636
    %8165 = vmatprep.subr.bf16.mxu0 %v6661
    %8166 = vmatpush1.bf16.msra.mxu0 %v6660
    %8167 = vmatprep.subr.bf16.mxu0 %v6685
    %8168 = vmatpush1.bf16.msra.mxu0 %v6684
    %8169 = vmatprep.subr.bf16.mxu0 %v6709
    %8170 = vmatpush1.bf16.msra.mxu0 %v6708
    %8171 = vmatprep.subr.bf16.mxu0 %v6733
    %8172 = vmatpush1.bf16.msra.mxu0 %v6732
    %8173 = vmatprep.subr.bf16.mxu0 %v6757
    %8174 = vmatpush1.bf16.msra.mxu0 %v6756
    %8175 = vmatprep.subr.bf16.mxu0 %v6781
    %8176 = vmatpush1.bf16.msra.mxu0 %v6780
    %8177 = vmatprep.subr.bf16.mxu0 %v6805
    %8178 = vmatpush1.bf16.msra.mxu0 %v6804
    %8179 = vmatprep.subr.bf16.mxu0 %v6829
    %8180 = vmatpush1.bf16.msra.mxu0 %v6828
    %8181 = vmatprep.subr.bf16.mxu0 %v6853
    %8182 = vmatpush1.bf16.msra.mxu0 %v6852
    %8183 = vmatprep.subr.bf16.mxu0 %v6877
    %8184 = vmatpush1.bf16.msra.mxu0 %v6876
    %8185 = vmatprep.subr.bf16.mxu0 %v6901
    %8186 = vmatpush1.bf16.msra.mxu0 %v6900
    %8187 = vmatprep.subr.bf16.mxu0 %v6925
    %8188 = vmatpush1.bf16.msra.mxu0 %v6924
    %8189 = vmatprep.mubr.bf16.mxu0 %v2971
    %8190 = vmatmul.mubr.bf16.gmra.mrb[0].mxu0 %v2970
    %v8191 = vpop.f32.mrb[0].mxu0
    %v8192 = vadd.f32 %v8151, %v8191
    %v8193 = vpop.f32.mrb[0].mxu0
    %v8194 = vadd.f32 %v8153, %v8193
    %v8195 = vpop.f32.mrb[0].mxu0
    %v8196 = vpop.f32.mrb[0].mxu0
    %8197 = vdwg.mxu0
    %8198 = vmatprep.subr.bf16.mxu0 %v6183
    %8199 = vmatpush1.bf16.msra.mxu0 %v6182
    %8200 = vmatprep.subr.bf16.mxu0 %v6207
    %8201 = vmatpush1.bf16.msra.mxu0 %v6206
    %8202 = vmatprep.subr.bf16.mxu0 %v6231
    %8203 = vmatpush1.bf16.msra.mxu0 %v6230
    %8204 = vmatprep.subr.bf16.mxu0 %v6255
    %8205 = vmatpush1.bf16.msra.mxu0 %v6254
    %8206 = vmatprep.subr.bf16.mxu0 %v6279
    %8207 = vmatpush1.bf16.msra.mxu0 %v6278
    %8208 = vmatprep.subr.bf16.mxu0 %v6303
    %8209 = vmatpush1.bf16.msra.mxu0 %v6302
    %8210 = vmatprep.subr.bf16.mxu0 %v6327
    %8211 = vmatpush1.bf16.msra.mxu0 %v6326
    %8212 = vmatprep.subr.bf16.mxu0 %v6351
    %8213 = vmatpush1.bf16.msra.mxu0 %v6350
    %8214 = vmatprep.subr.bf16.mxu0 %v6375
    %8215 = vmatpush1.bf16.msra.mxu0 %v6374
    %8216 = vmatprep.subr.bf16.mxu0 %v6399
    %8217 = vmatpush1.bf16.msra.mxu0 %v6398
    %8218 = vmatprep.subr.bf16.mxu0 %v6423
    %8219 = vmatpush1.bf16.msra.mxu0 %v6422
    %8220 = vmatprep.subr.bf16.mxu0 %v6447
    %8221 = vmatpush1.bf16.msra.mxu0 %v6446
    %8222 = vmatprep.subr.bf16.mxu0 %v6471
    %8223 = vmatpush1.bf16.msra.mxu0 %v6470
    %8224 = vmatprep.subr.bf16.mxu0 %v6495
    %8225 = vmatpush1.bf16.msra.mxu0 %v6494
    %8226 = vmatprep.subr.bf16.mxu0 %v6519
    %8227 = vmatpush1.bf16.msra.mxu0 %v6518
    %8228 = vmatprep.subr.bf16.mxu0 %v6543
    %8229 = vmatpush1.bf16.msra.mxu0 %v6542
    %8230 = vmatprep.mubr.bf16.mxu0 %v2969
    %8231 = vmatmul.mubr.bf16.gmra.mrb[0].mxu0 %v2968
    %v8232 = vpop.f32.mrb[0].mxu0
    %v8233 = vadd.f32 %v3797, %v8232
    %v8234 = vpop.f32.mrb[0].mxu0
    %v8235 = vadd.f32 %v3801, %v8234
    %v8236 = vpop.f32.mrb[0].mxu0
    %v8237 = vpop.f32.mrb[0].mxu0
    %8238 = vdwg.mxu0
    %8239 = vmatprep.subr.bf16.mxu0 %v6567
    %8240 = vmatpush1.bf16.msra.mxu0 %v6566
    %8241 = vmatprep.subr.bf16.mxu0 %v6591
    %8242 = vmatpush1.bf16.msra.mxu0 %v6590
    %8243 = vmatprep.subr.bf16.mxu0 %v6615
    %8244 = vmatpush1.bf16.msra.mxu0 %v6614
    %8245 = vmatprep.subr.bf16.mxu0 %v6639
    %8246 = vmatpush1.bf16.msra.mxu0 %v6638
    %8247 = vmatprep.subr.bf16.mxu0 %v6663
    %8248 = vmatpush1.bf16.msra.mxu0 %v6662
    %8249 = vmatprep.subr.bf16.mxu0 %v6687
    %8250 = vmatpush1.bf16.msra.mxu0 %v6686
    %8251 = vmatprep.subr.bf16.mxu0 %v6711
    %8252 = vmatpush1.bf16.msra.mxu0 %v6710
    %8253 = vmatprep.subr.bf16.mxu0 %v6735
    %8254 = vmatpush1.bf16.msra.mxu0 %v6734
    %8255 = vmatprep.subr.bf16.mxu0 %v6759
    %8256 = vmatpush1.bf16.msra.mxu0 %v6758
    %8257 = vmatprep.subr.bf16.mxu0 %v6783
    %8258 = vmatpush1.bf16.msra.mxu0 %v6782
    %8259 = vmatprep.subr.bf16.mxu0 %v6807
    %8260 = vmatpush1.bf16.msra.mxu0 %v6806
    %8261 = vmatprep.subr.bf16.mxu0 %v6831
    %8262 = vmatpush1.bf16.msra.mxu0 %v6830
    %8263 = vmatprep.subr.bf16.mxu0 %v6855
    %8264 = vmatpush1.bf16.msra.mxu0 %v6854
    %8265 = vmatprep.subr.bf16.mxu0 %v6879
    %8266 = vmatpush1.bf16.msra.mxu0 %v6878
    %8267 = vmatprep.subr.bf16.mxu0 %v6903
    %8268 = vmatpush1.bf16.msra.mxu0 %v6902
    %8269 = vmatprep.subr.bf16.mxu0 %v6927
    %8270 = vmatpush1.bf16.msra.mxu0 %v6926
    %8271 = vmatprep.mubr.bf16.mxu0 %v2971
    %8272 = vmatmul.mubr.bf16.gmra.mrb[0].mxu0 %v2970
    %v8273 = vpop.f32.mrb[0].mxu0
    %v8274 = vadd.f32 %v8233, %v8273
    %v8275 = vpop.f32.mrb[0].mxu0
    %v8276 = vadd.f32 %v8235, %v8275
    %v8277 = vpop.f32.mrb[0].mxu0
    %v8278 = vpop.f32.mrb[0].mxu0
    %8279 = vdwg.mxu0
    %8280 = vmatprep.subr.bf16.mxu0 %v6185
    %8281 = vmatpush1.bf16.msra.mxu0 %v6184
    %8282 = vmatprep.subr.bf16.mxu0 %v6209
    %8283 = vmatpush1.bf16.msra.mxu0 %v6208
    %8284 = vmatprep.subr.bf16.mxu0 %v6233
    %8285 = vmatpush1.bf16.msra.mxu0 %v6232
    %8286 = vmatprep.subr.bf16.mxu0 %v6257
    %8287 = vmatpush1.bf16.msra.mxu0 %v6256
    %8288 = vmatprep.subr.bf16.mxu0 %v6281
    %8289 = vmatpush1.bf16.msra.mxu0 %v6280
    %8290 = vmatprep.subr.bf16.mxu0 %v6305
    %8291 = vmatpush1.bf16.msra.mxu0 %v6304
    %8292 = vmatprep.subr.bf16.mxu0 %v6329
    %8293 = vmatpush1.bf16.msra.mxu0 %v6328
    %8294 = vmatprep.subr.bf16.mxu0 %v6353
    %8295 = vmatpush1.bf16.msra.mxu0 %v6352
    %8296 = vmatprep.subr.bf16.mxu0 %v6377
    %8297 = vmatpush1.bf16.msra.mxu0 %v6376
    %8298 = vmatprep.subr.bf16.mxu0 %v6401
    %8299 = vmatpush1.bf16.msra.mxu0 %v6400
    %8300 = vmatprep.subr.bf16.mxu0 %v6425
    %8301 = vmatpush1.bf16.msra.mxu0 %v6424
    %8302 = vmatprep.subr.bf16.mxu0 %v6449
    %8303 = vmatpush1.bf16.msra.mxu0 %v6448
    %8304 = vmatprep.subr.bf16.mxu0 %v6473
    %8305 = vmatpush1.bf16.msra.mxu0 %v6472
    %8306 = vmatprep.subr.bf16.mxu0 %v6497
    %8307 = vmatpush1.bf16.msra.mxu0 %v6496
    %8308 = vmatprep.subr.bf16.mxu0 %v6521
    %8309 = vmatpush1.bf16.msra.mxu0 %v6520
    %8310 = vmatprep.subr.bf16.mxu0 %v6545
    %8311 = vmatpush1.bf16.msra.mxu0 %v6544
    %8312 = vmatprep.mubr.bf16.mxu0 %v2969
    %8313 = vmatmul.mubr.bf16.gmra.mrb[0].mxu0 %v2968
    %v8314 = vpop.f32.mrb[0].mxu0
    %v8315 = vadd.f32 %v3805, %v8314
    %v8316 = vpop.f32.mrb[0].mxu0
    %v8317 = vadd.f32 %v3809, %v8316
    %v8318 = vpop.f32.mrb[0].mxu0
    %v8319 = vpop.f32.mrb[0].mxu0
    %8320 = vdwg.mxu0
    %8321 = vmatprep.subr.bf16.mxu0 %v6569
    %8322 = vmatpush1.bf16.msra.mxu0 %v6568
    %8323 = vmatprep.subr.bf16.mxu0 %v6593
    %8324 = vmatpush1.bf16.msra.mxu0 %v6592
    %8325 = vmatprep.subr.bf16.mxu0 %v6617
    %8326 = vmatpush1.bf16.msra.mxu0 %v6616
    %8327 = vmatprep.subr.bf16.mxu0 %v6641
    %8328 = vmatpush1.bf16.msra.mxu0 %v6640
    %8329 = vmatprep.subr.bf16.mxu0 %v6665
    %8330 = vmatpush1.bf16.msra.mxu0 %v6664
    %8331 = vmatprep.subr.bf16.mxu0 %v6689
    %8332 = vmatpush1.bf16.msra.mxu0 %v6688
    %8333 = vmatprep.subr.bf16.mxu0 %v6713
    %8334 = vmatpush1.bf16.msra.mxu0 %v6712
    %8335 = vmatprep.subr.bf16.mxu0 %v6737
    %8336 = vmatpush1.bf16.msra.mxu0 %v6736
    %8337 = vmatprep.subr.bf16.mxu0 %v6761
    %8338 = vmatpush1.bf16.msra.mxu0 %v6760
    %8339 = vmatprep.subr.bf16.mxu0 %v6785
    %8340 = vmatpush1.bf16.msra.mxu0 %v6784
    %8341 = vmatprep.subr.bf16.mxu0 %v6809
    %8342 = vmatpush1.bf16.msra.mxu0 %v6808
    %8343 = vmatprep.subr.bf16.mxu0 %v6833
    %8344 = vmatpush1.bf16.msra.mxu0 %v6832
    %8345 = vmatprep.subr.bf16.mxu0 %v6857
    %8346 = vmatpush1.bf16.msra.mxu0 %v6856
    %8347 = vmatprep.subr.bf16.mxu0 %v6881
    %8348 = vmatpush1.bf16.msra.mxu0 %v6880
    %8349 = vmatprep.subr.bf16.mxu0 %v6905
    %8350 = vmatpush1.bf16.msra.mxu0 %v6904
    %8351 = vmatprep.subr.bf16.mxu0 %v6929
    %8352 = vmatpush1.bf16.msra.mxu0 %v6928
    %8353 = vmatprep.mubr.bf16.mxu0 %v2971
    %8354 = vmatmul.mubr.bf16.gmra.mrb[0].mxu0 %v2970
    %v8355 = vpop.f32.mrb[0].mxu0
    %v8356 = vadd.f32 %v8315, %v8355
    %v8357 = vpop.f32.mrb[0].mxu0
    %v8358 = vadd.f32 %v8317, %v8357
    %v8359 = vpop.f32.mrb[0].mxu0
    %v8360 = vpop.f32.mrb[0].mxu0
    %8361 = vdwg.mxu0
    %8362 = vmatprep.subr.bf16.mxu0 %v6187
    %8363 = vmatpush1.bf16.msra.mxu0 %v6186
    %8364 = vmatprep.subr.bf16.mxu0 %v6211
    %8365 = vmatpush1.bf16.msra.mxu0 %v6210
    %8366 = vmatprep.subr.bf16.mxu0 %v6235
    %8367 = vmatpush1.bf16.msra.mxu0 %v6234
    %8368 = vmatprep.subr.bf16.mxu0 %v6259
    %8369 = vmatpush1.bf16.msra.mxu0 %v6258
    %8370 = vmatprep.subr.bf16.mxu0 %v6283
    %8371 = vmatpush1.bf16.msra.mxu0 %v6282
    %8372 = vmatprep.subr.bf16.mxu0 %v6307
    %8373 = vmatpush1.bf16.msra.mxu0 %v6306
    %8374 = vmatprep.subr.bf16.mxu0 %v6331
    %8375 = vmatpush1.bf16.msra.mxu0 %v6330
    %8376 = vmatprep.subr.bf16.mxu0 %v6355
    %8377 = vmatpush1.bf16.msra.mxu0 %v6354
    %8378 = vmatprep.subr.bf16.mxu0 %v6379
    %8379 = vmatpush1.bf16.msra.mxu0 %v6378
    %8380 = vmatprep.subr.bf16.mxu0 %v6403
    %8381 = vmatpush1.bf16.msra.mxu0 %v6402
    %8382 = vmatprep.subr.bf16.mxu0 %v6427
    %8383 = vmatpush1.bf16.msra.mxu0 %v6426
    %8384 = vmatprep.subr.bf16.mxu0 %v6451
    %8385 = vmatpush1.bf16.msra.mxu0 %v6450
    %8386 = vmatprep.subr.bf16.mxu0 %v6475
    %8387 = vmatpush1.bf16.msra.mxu0 %v6474
    %8388 = vmatprep.subr.bf16.mxu0 %v6499
    %8389 = vmatpush1.bf16.msra.mxu0 %v6498
    %8390 = vmatprep.subr.bf16.mxu0 %v6523
    %8391 = vmatpush1.bf16.msra.mxu0 %v6522
    %8392 = vmatprep.subr.bf16.mxu0 %v6547
    %8393 = vmatpush1.bf16.msra.mxu0 %v6546
    %8394 = vmatprep.mubr.bf16.mxu0 %v2969
    %8395 = vmatmul.mubr.bf16.gmra.mrb[0].mxu0 %v2968
    %v8396 = vpop.f32.mrb[0].mxu0
    %v8397 = vadd.f32 %v3813, %v8396
    %v8398 = vpop.f32.mrb[0].mxu0
    %v8399 = vadd.f32 %v3817, %v8398
    %v8400 = vpop.f32.mrb[0].mxu0
    %v8401 = vpop.f32.mrb[0].mxu0
    %8402 = vdwg.mxu0
    %8403 = vmatprep.subr.bf16.mxu0 %v6571
    %8404 = vmatpush1.bf16.msra.mxu0 %v6570
    %8405 = vmatprep.subr.bf16.mxu0 %v6595
    %8406 = vmatpush1.bf16.msra.mxu0 %v6594
    %8407 = vmatprep.subr.bf16.mxu0 %v6619
    %8408 = vmatpush1.bf16.msra.mxu0 %v6618
    %8409 = vmatprep.subr.bf16.mxu0 %v6643
    %8410 = vmatpush1.bf16.msra.mxu0 %v6642
    %8411 = vmatprep.subr.bf16.mxu0 %v6667
    %8412 = vmatpush1.bf16.msra.mxu0 %v6666
    %8413 = vmatprep.subr.bf16.mxu0 %v6691
    %8414 = vmatpush1.bf16.msra.mxu0 %v6690
    %8415 = vmatprep.subr.bf16.mxu0 %v6715
    %8416 = vmatpush1.bf16.msra.mxu0 %v6714
    %8417 = vmatprep.subr.bf16.mxu0 %v6739
    %8418 = vmatpush1.bf16.msra.mxu0 %v6738
    %8419 = vmatprep.subr.bf16.mxu0 %v6763
    %8420 = vmatpush1.bf16.msra.mxu0 %v6762
    %8421 = vmatprep.subr.bf16.mxu0 %v6787
    %8422 = vmatpush1.bf16.msra.mxu0 %v6786
    %8423 = vmatprep.subr.bf16.mxu0 %v6811
    %8424 = vmatpush1.bf16.msra.mxu0 %v6810
    %8425 = vmatprep.subr.bf16.mxu0 %v6835
    %8426 = vmatpush1.bf16.msra.mxu0 %v6834
    %8427 = vmatprep.subr.bf16.mxu0 %v6859
    %8428 = vmatpush1.bf16.msra.mxu0 %v6858
    %8429 = vmatprep.subr.bf16.mxu0 %v6883
    %8430 = vmatpush1.bf16.msra.mxu0 %v6882
    %8431 = vmatprep.subr.bf16.mxu0 %v6907
    %8432 = vmatpush1.bf16.msra.mxu0 %v6906
    %8433 = vmatprep.subr.bf16.mxu0 %v6931
    %8434 = vmatpush1.bf16.msra.mxu0 %v6930
    %8435 = vmatprep.mubr.bf16.mxu0 %v2971
    %8436 = vmatmul.mubr.bf16.gmra.mrb[0].mxu0 %v2970
    %v8437 = vpop.f32.mrb[0].mxu0
    %v8438 = vadd.f32 %v8397, %v8437
    %v8439 = vpop.f32.mrb[0].mxu0
    %v8440 = vadd.f32 %v8399, %v8439
    %v8441 = vpop.f32.mrb[0].mxu0
    %v8442 = vpop.f32.mrb[0].mxu0
    %8443 = vdwg.mxu0
    %8444 = vmatprep.subr.bf16.mxu0 %v6189
    %8445 = vmatpush1.bf16.msra.mxu0 %v6188
    %8446 = vmatprep.subr.bf16.mxu0 %v6213
    %8447 = vmatpush1.bf16.msra.mxu0 %v6212
    %8448 = vmatprep.subr.bf16.mxu0 %v6237
    %8449 = vmatpush1.bf16.msra.mxu0 %v6236
    %8450 = vmatprep.subr.bf16.mxu0 %v6261
    %8451 = vmatpush1.bf16.msra.mxu0 %v6260
    %8452 = vmatprep.subr.bf16.mxu0 %v6285
    %8453 = vmatpush1.bf16.msra.mxu0 %v6284
    %8454 = vmatprep.subr.bf16.mxu0 %v6309
    %8455 = vmatpush1.bf16.msra.mxu0 %v6308
    %8456 = vmatprep.subr.bf16.mxu0 %v6333
    %8457 = vmatpush1.bf16.msra.mxu0 %v6332
    %8458 = vmatprep.subr.bf16.mxu0 %v6357
    %8459 = vmatpush1.bf16.msra.mxu0 %v6356
    %8460 = vmatprep.subr.bf16.mxu0 %v6381
    %8461 = vmatpush1.bf16.msra.mxu0 %v6380
    %8462 = vmatprep.subr.bf16.mxu0 %v6405
    %8463 = vmatpush1.bf16.msra.mxu0 %v6404
    %8464 = vmatprep.subr.bf16.mxu0 %v6429
    %8465 = vmatpush1.bf16.msra.mxu0 %v6428
    %8466 = vmatprep.subr.bf16.mxu0 %v6453
    %8467 = vmatpush1.bf16.msra.mxu0 %v6452
    %8468 = vmatprep.subr.bf16.mxu0 %v6477
    %8469 = vmatpush1.bf16.msra.mxu0 %v6476
    %8470 = vmatprep.subr.bf16.mxu0 %v6501
    %8471 = vmatpush1.bf16.msra.mxu0 %v6500
    %8472 = vmatprep.subr.bf16.mxu0 %v6525
    %8473 = vmatpush1.bf16.msra.mxu0 %v6524
    %8474 = vmatprep.subr.bf16.mxu0 %v6549
    %8475 = vmatpush1.bf16.msra.mxu0 %v6548
    %8476 = vmatprep.mubr.bf16.mxu0 %v2969
    %8477 = vmatmul.mubr.bf16.gmra.mrb[0].mxu0 %v2968
    %v8478 = vpop.f32.mrb[0].mxu0
    %v8479 = vadd.f32 %v3821, %v8478
    %v8480 = vpop.f32.mrb[0].mxu0
    %v8481 = vadd.f32 %v3825, %v8480
    %v8482 = vpop.f32.mrb[0].mxu0
    %v8483 = vpop.f32.mrb[0].mxu0
    %8484 = vdwg.mxu0
    %8485 = vmatprep.subr.bf16.mxu0 %v6573
    %8486 = vmatpush1.bf16.msra.mxu0 %v6572
    %8487 = vmatprep.subr.bf16.mxu0 %v6597
    %8488 = vmatpush1.bf16.msra.mxu0 %v6596
    %8489 = vmatprep.subr.bf16.mxu0 %v6621
    %8490 = vmatpush1.bf16.msra.mxu0 %v6620
    %8491 = vmatprep.subr.bf16.mxu0 %v6645
    %8492 = vmatpush1.bf16.msra.mxu0 %v6644
    %8493 = vmatprep.subr.bf16.mxu0 %v6669
    %8494 = vmatpush1.bf16.msra.mxu0 %v6668
    %8495 = vmatprep.subr.bf16.mxu0 %v6693
    %8496 = vmatpush1.bf16.msra.mxu0 %v6692
    %8497 = vmatprep.subr.bf16.mxu0 %v6717
    %8498 = vmatpush1.bf16.msra.mxu0 %v6716
    %8499 = vmatprep.subr.bf16.mxu0 %v6741
    %8500 = vmatpush1.bf16.msra.mxu0 %v6740
    %8501 = vmatprep.subr.bf16.mxu0 %v6765
    %8502 = vmatpush1.bf16.msra.mxu0 %v6764
    %8503 = vmatprep.subr.bf16.mxu0 %v6789
    %8504 = vmatpush1.bf16.msra.mxu0 %v6788
    %8505 = vmatprep.subr.bf16.mxu0 %v6813
    %8506 = vmatpush1.bf16.msra.mxu0 %v6812
    %8507 = vmatprep.subr.bf16.mxu0 %v6837
    %8508 = vmatpush1.bf16.msra.mxu0 %v6836
    %8509 = vmatprep.subr.bf16.mxu0 %v6861
    %8510 = vmatpush1.bf16.msra.mxu0 %v6860
    %8511 = vmatprep.subr.bf16.mxu0 %v6885
    %8512 = vmatpush1.bf16.msra.mxu0 %v6884
    %8513 = vmatprep.subr.bf16.mxu0 %v6909
    %8514 = vmatpush1.bf16.msra.mxu0 %v6908
    %8515 = vmatprep.subr.bf16.mxu0 %v6933
    %8516 = vmatpush1.bf16.msra.mxu0 %v6932
    %8517 = vmatprep.mubr.bf16.mxu0 %v2971
    %8518 = vmatmul.mubr.bf16.gmra.mrb[0].mxu0 %v2970
    %v8519 = vpop.f32.mrb[0].mxu0
    %v8520 = vadd.f32 %v8479, %v8519
    %v8521 = vpop.f32.mrb[0].mxu0
    %v8522 = vadd.f32 %v8481, %v8521
    %v8523 = vpop.f32.mrb[0].mxu0
    %v8524 = vpop.f32.mrb[0].mxu0
    %8525 = vdwg.mxu0
    %8526 = vmatprep.subr.bf16.mxu0 %v6191
    %8527 = vmatpush1.bf16.msra.mxu0 %v6190
    %8528 = vmatprep.subr.bf16.mxu0 %v6215
    %8529 = vmatpush1.bf16.msra.mxu0 %v6214
    %8530 = vmatprep.subr.bf16.mxu0 %v6239
    %8531 = vmatpush1.bf16.msra.mxu0 %v6238
    %8532 = vmatprep.subr.bf16.mxu0 %v6263
    %8533 = vmatpush1.bf16.msra.mxu0 %v6262
    %8534 = vmatprep.subr.bf16.mxu0 %v6287
    %8535 = vmatpush1.bf16.msra.mxu0 %v6286
    %8536 = vmatprep.subr.bf16.mxu0 %v6311
    %8537 = vmatpush1.bf16.msra.mxu0 %v6310
    %8538 = vmatprep.subr.bf16.mxu0 %v6335
    %8539 = vmatpush1.bf16.msra.mxu0 %v6334
    %8540 = vmatprep.subr.bf16.mxu0 %v6359
    %8541 = vmatpush1.bf16.msra.mxu0 %v6358
    %8542 = vmatprep.subr.bf16.mxu0 %v6383
    %8543 = vmatpush1.bf16.msra.mxu0 %v6382
    %8544 = vmatprep.subr.bf16.mxu0 %v6407
    %8545 = vmatpush1.bf16.msra.mxu0 %v6406
    %8546 = vmatprep.subr.bf16.mxu0 %v6431
    %8547 = vmatpush1.bf16.msra.mxu0 %v6430
    %8548 = vmatprep.subr.bf16.mxu0 %v6455
    %8549 = vmatpush1.bf16.msra.mxu0 %v6454
    %8550 = vmatprep.subr.bf16.mxu0 %v6479
    %8551 = vmatpush1.bf16.msra.mxu0 %v6478
    %8552 = vmatprep.subr.bf16.mxu0 %v6503
    %8553 = vmatpush1.bf16.msra.mxu0 %v6502
    %8554 = vmatprep.subr.bf16.mxu0 %v6527
    %8555 = vmatpush1.bf16.msra.mxu0 %v6526
    %8556 = vmatprep.subr.bf16.mxu0 %v6551
    %8557 = vmatpush1.bf16.msra.mxu0 %v6550
    %8558 = vmatprep.mubr.bf16.mxu0 %v2969
    %8559 = vmatmul.mubr.bf16.gmra.mrb[0].mxu0 %v2968
    %v8560 = vpop.f32.mrb[0].mxu0
    %v8561 = vadd.f32 %v3829, %v8560
    %v8562 = vpop.f32.mrb[0].mxu0
    %v8563 = vadd.f32 %v3833, %v8562
    %v8564 = vpop.f32.mrb[0].mxu0
    %v8565 = vpop.f32.mrb[0].mxu0
    %8566 = vdwg.mxu0
    %8567 = vmatprep.subr.bf16.mxu0 %v6575
    %8568 = vmatpush1.bf16.msra.mxu0 %v6574
    %8569 = vmatprep.subr.bf16.mxu0 %v6599
    %8570 = vmatpush1.bf16.msra.mxu0 %v6598
    %8571 = vmatprep.subr.bf16.mxu0 %v6623
    %8572 = vmatpush1.bf16.msra.mxu0 %v6622
    %8573 = vmatprep.subr.bf16.mxu0 %v6647
    %8574 = vmatpush1.bf16.msra.mxu0 %v6646
    %8575 = vmatprep.subr.bf16.mxu0 %v6671
    %8576 = vmatpush1.bf16.msra.mxu0 %v6670
    %8577 = vmatprep.subr.bf16.mxu0 %v6695
    %8578 = vmatpush1.bf16.msra.mxu0 %v6694
    %8579 = vmatprep.subr.bf16.mxu0 %v6719
    %8580 = vmatpush1.bf16.msra.mxu0 %v6718
    %8581 = vmatprep.subr.bf16.mxu0 %v6743
    %8582 = vmatpush1.bf16.msra.mxu0 %v6742
    %8583 = vmatprep.subr.bf16.mxu0 %v6767
    %8584 = vmatpush1.bf16.msra.mxu0 %v6766
    %8585 = vmatprep.subr.bf16.mxu0 %v6791
    %8586 = vmatpush1.bf16.msra.mxu0 %v6790
    %8587 = vmatprep.subr.bf16.mxu0 %v6815
    %8588 = vmatpush1.bf16.msra.mxu0 %v6814
    %8589 = vmatprep.subr.bf16.mxu0 %v6839
    %8590 = vmatpush1.bf16.msra.mxu0 %v6838
    %8591 = vmatprep.subr.bf16.mxu0 %v6863
    %8592 = vmatpush1.bf16.msra.mxu0 %v6862
    %8593 = vmatprep.subr.bf16.mxu0 %v6887
    %8594 = vmatpush1.bf16.msra.mxu0 %v6886
    %8595 = vmatprep.subr.bf16.mxu0 %v6911
    %8596 = vmatpush1.bf16.msra.mxu0 %v6910
    %8597 = vmatprep.subr.bf16.mxu0 %v6935
    %8598 = vmatpush1.bf16.msra.mxu0 %v6934
    %8599 = vmatprep.mubr.bf16.mxu0 %v2971
    %8600 = vmatmul.mubr.bf16.gmra.mrb[0].mxu0 %v2970
    %v8601 = vpop.f32.mrb[0].mxu0
    %v8602 = vadd.f32 %v8561, %v8601
    %v8603 = vpop.f32.mrb[0].mxu0
    %v8604 = vadd.f32 %v8563, %v8603
    %v8605 = vpop.f32.mrb[0].mxu0
    %v8606 = vpop.f32.mrb[0].mxu0
    %8607 = vdwg.mxu0
    %8608 = vmatprep.subr.bf16.mxu0 %v6193
    %8609 = vmatpush1.bf16.msra.mxu0 %v6192
    %8610 = vmatprep.subr.bf16.mxu0 %v6217
    %8611 = vmatpush1.bf16.msra.mxu0 %v6216
    %8612 = vmatprep.subr.bf16.mxu0 %v6241
    %8613 = vmatpush1.bf16.msra.mxu0 %v6240
    %8614 = vmatprep.subr.bf16.mxu0 %v6265
    %8615 = vmatpush1.bf16.msra.mxu0 %v6264
    %8616 = vmatprep.subr.bf16.mxu0 %v6289
    %8617 = vmatpush1.bf16.msra.mxu0 %v6288
    %8618 = vmatprep.subr.bf16.mxu0 %v6313
    %8619 = vmatpush1.bf16.msra.mxu0 %v6312
    %8620 = vmatprep.subr.bf16.mxu0 %v6337
    %8621 = vmatpush1.bf16.msra.mxu0 %v6336
    %8622 = vmatprep.subr.bf16.mxu0 %v6361
    %8623 = vmatpush1.bf16.msra.mxu0 %v6360
    %8624 = vmatprep.subr.bf16.mxu0 %v6385
    %8625 = vmatpush1.bf16.msra.mxu0 %v6384
    %8626 = vmatprep.subr.bf16.mxu0 %v6409
    %8627 = vmatpush1.bf16.msra.mxu0 %v6408
    %8628 = vmatprep.subr.bf16.mxu0 %v6433
    %8629 = vmatpush1.bf16.msra.mxu0 %v6432
    %8630 = vmatprep.subr.bf16.mxu0 %v6457
    %8631 = vmatpush1.bf16.msra.mxu0 %v6456
    %8632 = vmatprep.subr.bf16.mxu0 %v6481
    %8633 = vmatpush1.bf16.msra.mxu0 %v6480
    %8634 = vmatprep.subr.bf16.mxu0 %v6505
    %8635 = vmatpush1.bf16.msra.mxu0 %v6504
    %8636 = vmatprep.subr.bf16.mxu0 %v6529
    %8637 = vmatpush1.bf16.msra.mxu0 %v6528
    %8638 = vmatprep.subr.bf16.mxu0 %v6553
    %8639 = vmatpush1.bf16.msra.mxu0 %v6552
    %8640 = vmatprep.mubr.bf16.mxu0 %v2969
    %8641 = vmatmul.mubr.bf16.gmra.mrb[0].mxu0 %v2968
    %v8642 = vpop.f32.mrb[0].mxu0
    %v8643 = vadd.f32 %v3837, %v8642
    %v8644 = vpop.f32.mrb[0].mxu0
    %v8645 = vadd.f32 %v3841, %v8644
    %v8646 = vpop.f32.mrb[0].mxu0
    %v8647 = vpop.f32.mrb[0].mxu0
    %8648 = vdwg.mxu0
    %8649 = vmatprep.subr.bf16.mxu0 %v6577
    %8650 = vmatpush1.bf16.msra.mxu0 %v6576
    %8651 = vmatprep.subr.bf16.mxu0 %v6601
    %8652 = vmatpush1.bf16.msra.mxu0 %v6600
    %8653 = vmatprep.subr.bf16.mxu0 %v6625
    %8654 = vmatpush1.bf16.msra.mxu0 %v6624
    %8655 = vmatprep.subr.bf16.mxu0 %v6649
    %8656 = vmatpush1.bf16.msra.mxu0 %v6648
    %8657 = vmatprep.subr.bf16.mxu0 %v6673
    %8658 = vmatpush1.bf16.msra.mxu0 %v6672
    %8659 = vmatprep.subr.bf16.mxu0 %v6697
    %8660 = vmatpush1.bf16.msra.mxu0 %v6696
    %8661 = vmatprep.subr.bf16.mxu0 %v6721
    %8662 = vmatpush1.bf16.msra.mxu0 %v6720
    %8663 = vmatprep.subr.bf16.mxu0 %v6745
    %8664 = vmatpush1.bf16.msra.mxu0 %v6744
    %8665 = vmatprep.subr.bf16.mxu0 %v6769
    %8666 = vmatpush1.bf16.msra.mxu0 %v6768
    %8667 = vmatprep.subr.bf16.mxu0 %v6793
    %8668 = vmatpush1.bf16.msra.mxu0 %v6792
    %8669 = vmatprep.subr.bf16.mxu0 %v6817
    %8670 = vmatpush1.bf16.msra.mxu0 %v6816
    %8671 = vmatprep.subr.bf16.mxu0 %v6841
    %8672 = vmatpush1.bf16.msra.mxu0 %v6840
    %8673 = vmatprep.subr.bf16.mxu0 %v6865
    %8674 = vmatpush1.bf16.msra.mxu0 %v6864
    %8675 = vmatprep.subr.bf16.mxu0 %v6889
    %8676 = vmatpush1.bf16.msra.mxu0 %v6888
    %8677 = vmatprep.subr.bf16.mxu0 %v6913
    %8678 = vmatpush1.bf16.msra.mxu0 %v6912
    %8679 = vmatprep.subr.bf16.mxu0 %v6937
    %8680 = vmatpush1.bf16.msra.mxu0 %v6936
    %8681 = vmatprep.mubr.bf16.mxu0 %v2971
    %8682 = vmatmul.mubr.bf16.gmra.mrb[0].mxu0 %v2970
    %v8683 = vpop.f32.mrb[0].mxu0
    %v8684 = vadd.f32 %v8643, %v8683
    %v8685 = vpop.f32.mrb[0].mxu0
    %v8686 = vadd.f32 %v8645, %v8685
    %v8687 = vpop.f32.mrb[0].mxu0
    %v8688 = vpop.f32.mrb[0].mxu0
    %8689 = vdwg.mxu0
    %v8690 = vtanh.pop %v7782
    %v8691 = vtanh.pop %v7784
    %v8692 = vtanh.pop %v7864
    %v8693 = vtanh.pop %v7866
    %v8694 = vtanh.pop %v7946
    %v8695 = vtanh.pop %v7948
    %v8696 = vtanh.pop %v8028
    %v8697 = vtanh.pop %v8030
    %v8698 = vtanh.pop %v8110
    %v8699 = vtanh.pop %v8112
    %v8700 = vtanh.pop %v8192
    %v8701 = vtanh.pop %v8194
    %v8702 = vtanh.pop %v8274
    %v8703 = vtanh.pop %v8276
    %v8704 = vtanh.pop %v8356
    %v8705 = vtanh.pop %v8358
    %v8706 = vtanh.pop %v8438
    %v8707 = vtanh.pop %v8440
    %v8708 = vtanh.pop %v8520
    %v8709 = vtanh.pop %v8522
    %v8710 = vtanh.pop %v8602
    %v8711 = vtanh.pop %v8604
    %v8712 = vtanh.pop %v8684
    %v8713 = vtanh.pop %v8686
    %v8738 = vcombine.low %v8690, %v8691
    %v8739 = vcombine.low %v8692, %v8693
    %v8741 = vunpack.c.l.s4 1983009808
    %v8742 = vunpack.c.0.s8 %v8741
    %v8743 = vlaneseq
    %v8744 = vshrl.u32 %v8743, 7
    %v8745 = vsub.s32 %v8742, %v8744
    %v8746 = vrot.slane %v8738, %v8745
    %v8748 = vunpack.c.l.s4 1983009808
    %v8749 = vunpack.c.0.s8 %v8748
    %v8750 = vlaneseq
    %v8751 = vshrl.u32 %v8750, 7
    %v8752 = vsub.s32 %v8749, %v8751
    %v8753 = vrot.slane %v8739, %v8752
    %v8754 = vcombine.low %v8746, %v8753
    %v8755 = vcombine.low %v8694, %v8695
    %v8756 = vcombine.low %v8696, %v8697
    %v8758 = vunpack.c.l.s4 1983009808
    %v8759 = vunpack.c.0.s8 %v8758
    %v8760 = vlaneseq
    %v8761 = vshrl.u32 %v8760, 7
    %v8762 = vsub.s32 %v8759, %v8761
    %v8763 = vrot.slane %v8755, %v8762
    %v8765 = vunpack.c.l.s4 1983009808
    %v8766 = vunpack.c.0.s8 %v8765
    %v8767 = vlaneseq
    %v8768 = vshrl.u32 %v8767, 7
    %v8769 = vsub.s32 %v8766, %v8768
    %v8770 = vrot.slane %v8756, %v8769
    %v8771 = vcombine.low %v8763, %v8770
    %v8772 = vcombine.low %v8698, %v8699
    %v8773 = vcombine.low %v8700, %v8701
    %v8775 = vunpack.c.l.s4 1983009808
    %v8776 = vunpack.c.0.s8 %v8775
    %v8777 = vlaneseq
    %v8778 = vshrl.u32 %v8777, 7
    %v8779 = vsub.s32 %v8776, %v8778
    %v8780 = vrot.slane %v8772, %v8779
    %v8782 = vunpack.c.l.s4 1983009808
    %v8783 = vunpack.c.0.s8 %v8782
    %v8784 = vlaneseq
    %v8785 = vshrl.u32 %v8784, 7
    %v8786 = vsub.s32 %v8783, %v8785
    %v8787 = vrot.slane %v8773, %v8786
    %v8788 = vcombine.low %v8780, %v8787
    %v8789 = vcombine.low %v8702, %v8703
    %v8790 = vcombine.low %v8704, %v8705
    %v8792 = vunpack.c.l.s4 1983009808
    %v8793 = vunpack.c.0.s8 %v8792
    %v8794 = vlaneseq
    %v8795 = vshrl.u32 %v8794, 7
    %v8796 = vsub.s32 %v8793, %v8795
    %v8797 = vrot.slane %v8789, %v8796
    %v8799 = vunpack.c.l.s4 1983009808
    %v8800 = vunpack.c.0.s8 %v8799
    %v8801 = vlaneseq
    %v8802 = vshrl.u32 %v8801, 7
    %v8803 = vsub.s32 %v8800, %v8802
    %v8804 = vrot.slane %v8790, %v8803
    %v8805 = vcombine.low %v8797, %v8804
    %v8806 = vcombine.low %v8706, %v8707
    %v8807 = vcombine.low %v8708, %v8709
    %v8809 = vunpack.c.l.s4 1983009808
    %v8810 = vunpack.c.0.s8 %v8809
    %v8811 = vlaneseq
    %v8812 = vshrl.u32 %v8811, 7
    %v8813 = vsub.s32 %v8810, %v8812
    %v8814 = vrot.slane %v8806, %v8813
    %v8816 = vunpack.c.l.s4 1983009808
    %v8817 = vunpack.c.0.s8 %v8816
    %v8818 = vlaneseq
    %v8819 = vshrl.u32 %v8818, 7
    %v8820 = vsub.s32 %v8817, %v8819
    %v8821 = vrot.slane %v8807, %v8820
    %v8822 = vcombine.low %v8814, %v8821
    %v8823 = vcombine.low %v8710, %v8711
    %v8824 = vcombine.low %v8712, %v8713
    %v8826 = vunpack.c.l.s4 1983009808
    %v8827 = vunpack.c.0.s8 %v8826
    %v8828 = vlaneseq
    %v8829 = vshrl.u32 %v8828, 7
    %v8830 = vsub.s32 %v8827, %v8829
    %v8831 = vrot.slane %v8823, %v8830
    %v8833 = vunpack.c.l.s4 1983009808
    %v8834 = vunpack.c.0.s8 %v8833
    %v8835 = vlaneseq
    %v8836 = vshrl.u32 %v8835, 7
    %v8837 = vsub.s32 %v8834, %v8836
    %v8838 = vrot.slane %v8824, %v8837
    %v8839 = vcombine.low %v8831, %v8838
    %8846 = vst [vmem:[%s16] sm:$0xff] %v8754
    %8847 = vst [vmem:[%s16 + $0x8] sm:$0xff] %v8771
    %8848 = vst [vmem:[%s16 + $0x10] sm:$0xff] %v8788
    %8849 = vst [vmem:[%s16 + $0x18] sm:$0xff] %v8805
    %8850 = vst [vmem:[%s16 + $0x20] sm:$0xff] %v8822
    %8851 = vst [vmem:[%s16 + $0x28] sm:$0xff] %v8839
    // Predicated region
    $region62: #{autoencoder_forward.7} parent=1 // pred_check
      _
    $region63: #{autoencoder_forward.7} parent=1 // pred_check_branch
      %8853 = sbr.rel (0) target = $region65
    $region64: #{autoencoder_forward.7} parent=1 // pred_region
      %s8855 = ssub.s32 32, 32
      %8856 = vsyncadd [#allocation3], %s8855
      %s8858 = sshll.u32 [#allocation2], 4
      %s8859 = int_to_ptr.vmem [resolvable:$true] %s8858
      %8861 = dma.vmem_to_hbm [thread:$0]  %s8859, 32, %s15, [#allocation3]
    $region65: #{autoencoder_forward.7} parent=1 // pred_fallthru
      _
    // Predicated region
    $region66: #{autoencoder_forward.7} parent=1 // pred_check
      _
    $region67: #{autoencoder_forward.7} parent=1 // pred_check_branch
      %8863 = sbr.rel (0) target = $region69
    $region68: #{autoencoder_forward.7} parent=1 // pred_region
      _
    $region69: #{autoencoder_forward.7} parent=1 // pred_fallthru
      _
    // Predicated region
    $region70: #{autoencoder_forward.7} parent=1 // pred_check
      _
    $region71: #{autoencoder_forward.7} parent=1 // pred_check_branch
      %8865 = sbr.rel (0) target = $region73
    $region72: #{autoencoder_forward.7} parent=1 // pred_region
      %8866 = dma.done [#allocation3], 32
    $region73: #{autoencoder_forward.7} parent=1 // pred_fallthru
      _
    // Predicated region
    $region74: #{autoencoder_forward.7} parent=1 // pred_check
      _
    $region75: #{autoencoder_forward.7} parent=1 // pred_check_branch
      %8868 = sbr.rel (0) target = $region77
    $region76: #{autoencoder_forward.7} parent=1 // pred_region
      _
    $region77: #{autoencoder_forward.7} parent=1 // pred_fallthru
      _
    %8869 = vsyncpa [#allocation3], 1

</llo_original>
